<compile_context>
chip_gen: v7x
topology: tpu7x:2x2x1
jax: 0.10.0
libtpu: 0.0.40
codegen_flags: <defaults>
</compile_context>

<pallas_src>
import functools
import math

import jax
import jax.numpy as jnp
from jax.experimental import pallas as pl
from jax.experimental.pallas import tpu as pltpu

_EPS = 1e-5                       # matches torch.nn.LayerNorm default
_VMEM_LIMIT = 48 * 1024 * 1024    # stays under v7x's 64 MiB physical VMEM


# ----------------------------------------------------------------------------
# Small helpers
# ----------------------------------------------------------------------------
def _gelu_tanh(y):
    # TODO(synk): nn.GELU default is exact erf; tanh approximation used so the activation
    # fuses into the matmul epilogue (EUP tanh), error ~1e-3.
    c = math.sqrt(2.0 / math.pi)
    return 0.5 * y * (1.0 + jnp.tanh(c * (y + 0.044715 * y * y * y)))


def _pick_rows_tile(m, cap=256):
    """Row (sublane) tile: multiple of 8, capped, preferring >=2 grid blocks (v7x 2 TCs)."""
    for t in (256, 128, 64, 32, 16, 8):
        if t <= cap and m % t == 0 and m // t >= 2:
            return t
    if m >= 16 and m % 16 == 0:
        return m // 2
    return m


def _pick_cols_tile(dim, cap=512):
    """Lane tile: full dim when small, otherwise a 128-multiple divisor."""
    if dim <= cap:
        return dim
    for t in (512, 256, 128):
        if t <= cap and dim % t == 0:
            return t
    return dim


def _pick_batch_tile(total, cap=8):
    """Batch/channel slabs per grid step; keep >=2 grid blocks when total >= 2."""
    if total <= 1:
        return 1
    best = 1
    for c in range(1, min(cap, total) + 1):
        if total % c == 0 and total // c >= 2:
            best = c
    return best


# ----------------------------------------------------------------------------
# Fused tiled matmul: [LN] -> bf16 matmul (f32 acc) -> +bias -> activation
# Used for patch embedding and decoder stage 1.
# ----------------------------------------------------------------------------
def _fused_matmul_kernel(x_ref, w_ref, b_ref, *rest, act, has_ln, eps):
    if has_ln:
        g_ref, bt_ref, o_ref, acc_ref = rest
    else:
        o_ref, acc_ref = rest

    k = pl.program_id(2)

    @pl.when(k == 0)
    def _():
        acc_ref[...] = jnp.zeros_like(acc_ref)

    x = x_ref[...]
    if has_ln:
        xf = x.astype(jnp.float32)
        mu = jnp.mean(xf, axis=-1, keepdims=True)
        xc = xf - mu
        var = jnp.mean(xc * xc, axis=-1, keepdims=True)
        x = (xc * jax.lax.rsqrt(var + eps)) * g_ref[...] + bt_ref[...]

    acc_ref[...] += jnp.dot(x.astype(jnp.bfloat16), w_ref[...],
                            preferred_element_type=jnp.float32)

    @pl.when(k == pl.num_programs(2) - 1)
    def _():
        y = acc_ref[...] + b_ref[...]
        if act == "relu":
            y = jnp.maximum(y, 0.0)
        elif act == "gelu":
            y = _gelu_tanh(y)
        o_ref[...] = y.astype(o_ref.dtype)


def fused_matmul(x, w, b, *, act="none", ln=None, out_dtype=jnp.bfloat16, eps=_EPS):
    """y = act(LN(x) @ w + b);  x:(M,K) bf16/f32, w:(K,N), b:(N,)."""
    M, K = x.shape
    K2, Nc = w.shape
    assert K == K2
    has_ln = ln is not None

    tm = _pick_rows_tile(M)
    if has_ln:
        tk = K                                    # LN needs the full feature row
        tn = Nc if Nc <= 1024 else _pick_cols_tile(Nc)  # full N avoids LN re-compute per j
    else:
        tk = K if K <= 1024 else _pick_cols_tile(K)
        tn = _pick_cols_tile(Nc)
    nm, nn, nk = M // tm, Nc // tn, K // tk

    in_specs = [
        pl.BlockSpec((tm, tk), lambda i, j, k: (i, k)),
        pl.BlockSpec((tk, tn), lambda i, j, k: (k, j)),
        pl.BlockSpec((1, tn), lambda i, j, k: (0, j)),
    ]
    args = [x, w.astype(jnp.bfloat16), b.reshape(1, Nc).astype(jnp.float32)]
    if has_ln:
        g, bt = ln
        in_specs += [pl.BlockSpec((1, tk), lambda i, j, k: (0, 0)),
                     pl.BlockSpec((1, tk), lambda i, j, k: (0, 0))]
        args += [g.reshape(1, K).astype(jnp.float32),
                 bt.reshape(1, K).astype(jnp.float32)]

    kernel = functools.partial(_fused_matmul_kernel, act=act, has_ln=has_ln, eps=eps)
    return pl.pallas_call(
        kernel,
        out_shape=jax.ShapeDtypeStruct((M, Nc), out_dtype),
        grid=(nm, nn, nk),
        in_specs=in_specs,
        out_specs=pl.BlockSpec((tm, tn), lambda i, j, k: (i, j)),
        scratch_shapes=[pltpu.VMEM((tm, tn), jnp.float32)],
        compiler_params=pltpu.CompilerParams(
            dimension_semantics=("parallel", "parallel", "arbitrary"),
            vmem_limit_bytes=_VMEM_LIMIT),
    )(*args)


# ----------------------------------------------------------------------------
# Fused attention block: LN1 -> qkv -> attention -> out-proj -> +residual, one kernel.
# Head weights are indexed along a leading head axis (no unaligned lane slices); the
# out-projection is accumulated per head so the head outputs never hit HBM.
# ----------------------------------------------------------------------------
def _attn_block_kernel(tok_ref, g_ref, bt_ref, wqkv_ref, bqkv_ref, wo_ref, bo_ref, o_ref,
                       *, Bt, N, nh, dh, scale, eps):
    tok = tok_ref[...].astype(jnp.float32)                       # (Bt*N, D)
    mu = jnp.mean(tok, axis=-1, keepdims=True)
    xc = tok - mu
    var = jnp.mean(xc * xc, axis=-1, keepdims=True)
    xn = ((xc * jax.lax.rsqrt(var + eps)) * g_ref[...] + bt_ref[...]).astype(jnp.bfloat16)

    acc = tok + bo_ref[...]                                      # residual + out bias (f32)
    for h in range(nh):
        q = (jnp.dot(xn, wqkv_ref[0, h], preferred_element_type=jnp.float32)
             + bqkv_ref[0, h]) * scale
        k = jnp.dot(xn, wqkv_ref[1, h], preferred_element_type=jnp.float32) + bqkv_ref[1, h]
        v = jnp.dot(xn, wqkv_ref[2, h], preferred_element_type=jnp.float32) + bqkv_ref[2, h]
        q3 = q.astype(jnp.bfloat16).reshape(Bt, N, dh)
        k3 = k.astype(jnp.bfloat16).reshape(Bt, N, dh)
        v3 = v.astype(jnp.bfloat16).reshape(Bt, N, dh)

        s = jnp.einsum("bqd,bkd->bqk", q3, k3, preferred_element_type=jnp.float32)
        s = s - jnp.max(s, axis=-1, keepdims=True)
        p = jnp.exp(s)
        l = jnp.sum(p, axis=-1, keepdims=True)
        o = jnp.einsum("bqk,bkd->bqd", p.astype(jnp.bfloat16), v3,
                       preferred_element_type=jnp.float32)
        o = o / l                                                # exact softmax normalize

        o2 = o.reshape(Bt * N, dh).astype(jnp.bfloat16)
        acc = acc + jnp.dot(o2, wo_ref[h], preferred_element_type=jnp.float32)

    o_ref[...] = acc.astype(o_ref.dtype)


def attention_block(tok, lp, *, B, N, nh, dh, eps=_EPS):
    """tok: (B*N, D) bf16 residual stream -> (B*N, D) bf16 (tok + MHSA(LN(tok)))."""
    D = nh * dh
    Bt = _pick_batch_tile(B, cap=8)
    rows = Bt * N
    kernel = functools.partial(_attn_block_kernel, Bt=Bt, N=N, nh=nh, dh=dh,
                               scale=1.0 / math.sqrt(dh), eps=eps)
    return pl.pallas_call(
        kernel,
        out_shape=jax.ShapeDtypeStruct((B * N, D), jnp.bfloat16),
        grid=(B // Bt,),
        in_specs=[
            pl.BlockSpec((rows, D), lambda i: (i, 0)),
            pl.BlockSpec((1, D), lambda i: (0, 0)),
            pl.BlockSpec((1, D), lambda i: (0, 0)),
            pl.BlockSpec((3, nh, D, dh), lambda i: (0, 0, 0, 0)),
            pl.BlockSpec((3, nh, 1, dh), lambda i: (0, 0, 0, 0)),
            pl.BlockSpec((nh, dh, D), lambda i: (0, 0, 0)),
            pl.BlockSpec((1, D), lambda i: (0, 0)),
        ],
        out_specs=pl.BlockSpec((rows, D), lambda i: (i, 0)),
        compiler_params=pltpu.CompilerParams(
            dimension_semantics=("parallel",), vmem_limit_bytes=_VMEM_LIMIT),
    )(tok, lp["ln1_g"].reshape(1, D), lp["ln1_b"].reshape(1, D),
      lp["wqkv"], lp["bqkv"], lp["wo"], lp["bo"].reshape(1, D))


# ----------------------------------------------------------------------------
# Fused two-matmul block: [LN] -> matmul1 -> act -> matmul2 [+residual], one kernel.
# Used for the transformer MLP (LN2/GELU/residual) and the fused dec2+dec3 decoder stage.
# ----------------------------------------------------------------------------
def _ffn_block_kernel(x_ref, *rest, act, has_ln, add_residual, eps):
    idx = 0
    if has_ln:
        g_ref, bt_ref = rest[0], rest[1]
        idx = 2
    w1_ref, b1_ref, w2_ref, b2_ref, o_ref = rest[idx:idx + 5]

    x = x_ref[...].astype(jnp.float32)
    if has_ln:
        mu = jnp.mean(x, axis=-1, keepdims=True)
        xc = x - mu
        var = jnp.mean(xc * xc, axis=-1, keepdims=True)
        xn = (xc * jax.lax.rsqrt(var + eps)) * g_ref[...] + bt_ref[...]
    else:
        xn = x

    h = jnp.dot(xn.astype(jnp.bfloat16), w1_ref[...],
                preferred_element_type=jnp.float32) + b1_ref[...]
    if act == "relu":
        h = jnp.maximum(h, 0.0)
    elif act == "gelu":
        h = _gelu_tanh(h)

    y = jnp.dot(h.astype(jnp.bfloat16), w2_ref[...],
                preferred_element_type=jnp.float32) + b2_ref[...]
    if add_residual:
        y = y + x
    o_ref[...] = y.astype(o_ref.dtype)


def ffn_block(x, w1, b1, w2, b2, *, act, ln=None, add_residual=False,
              out_dtype=jnp.bfloat16, eps=_EPS):
    M, K = x.shape
    F = w1.shape[1]
    Nout = w2.shape[1]
    tm = _pick_rows_tile(M)

    in_specs = [pl.BlockSpec((tm, K), lambda i: (i, 0))]
    args = [x]
    if ln is not None:
        g, bt = ln
        in_specs += [pl.BlockSpec((1, K), lambda i: (0, 0)),
                     pl.BlockSpec((1, K), lambda i: (0, 0))]
        args += [g.reshape(1, K).astype(jnp.float32),
                 bt.reshape(1, K).astype(jnp.float32)]
    in_specs += [pl.BlockSpec((K, F), lambda i: (0, 0)),
                 pl.BlockSpec((1, F), lambda i: (0, 0)),
                 pl.BlockSpec((F, Nout), lambda i: (0, 0)),
                 pl.BlockSpec((1, Nout), lambda i: (0, 0))]
    args += [w1.astype(jnp.bfloat16), b1.reshape(1, F).astype(jnp.float32),
             w2.astype(jnp.bfloat16), b2.reshape(1, Nout).astype(jnp.float32)]

    kernel = functools.partial(_ffn_block_kernel, act=act, has_ln=ln is not None,
                               add_residual=add_residual, eps=eps)
    return pl.pallas_call(
        kernel,
        out_shape=jax.ShapeDtypeStruct((M, Nout), out_dtype),
        grid=(M // tm,),
        in_specs=in_specs,
        out_specs=pl.BlockSpec((tm, Nout), lambda i: (i, 0)),
        compiler_params=pltpu.CompilerParams(
            dimension_semantics=("parallel",), vmem_limit_bytes=_VMEM_LIMIT),
    )(*args)


# ----------------------------------------------------------------------------
# Bilinear upsample (align_corners=True) as Rh @ X @ Rw^T, batched over channel slabs.
# ----------------------------------------------------------------------------
def _bilinear_matrix(n_in, n_out):
    if n_in == 1:
        return jnp.ones((n_out, 1), jnp.float32)
    i = jnp.arange(n_out, dtype=jnp.float32)
    src = i * (n_in - 1) / (n_out - 1)
    lo = jnp.floor(src).astype(jnp.int32)
    hi = jnp.minimum(lo + 1, n_in - 1)
    frac = src - lo.astype(jnp.float32)
    R = jnp.zeros((n_out, n_in), jnp.float32)
    rows = jnp.arange(n_out)
    R = R.at[rows, lo].add(1.0 - frac)
    R = R.at[rows, hi].add(frac)
    return R


def _upsample_kernel(x_ref, rh_ref, rwT_ref, o_ref, *, Cb):
    for c in range(Cb):                                   # back-to-back MXU pushes per step
        t = jnp.dot(rh_ref[...], x_ref[c], preferred_element_type=jnp.float32)
        o_ref[c] = jnp.dot(t, rwT_ref[...], preferred_element_type=jnp.float32)


def bilinear_upsample(x, Ho, Wo):
    """x: (B*C, h, w) f32 -> (B*C, Ho, Wo) f32."""
    BC, h, w = x.shape
    Rh = _bilinear_matrix(h, Ho)
    RwT = _bilinear_matrix(w, Wo).T
    Cb = _pick_batch_tile(BC, cap=8)
    kernel = functools.partial(_upsample_kernel, Cb=Cb)
    return pl.pallas_call(
        kernel,
        out_shape=jax.ShapeDtypeStruct((BC, Ho, Wo), jnp.float32),
        grid=(BC // Cb,),
        in_specs=[pl.BlockSpec((Cb, h, w), lambda i: (i, 0, 0)),
                  pl.BlockSpec((Ho, h), lambda i: (0, 0)),
                  pl.BlockSpec((w, Wo), lambda i: (0, 0))],
        out_specs=pl.BlockSpec((Cb, Ho, Wo), lambda i: (i, 0, 0)),
        compiler_params=pltpu.CompilerParams(
            dimension_semantics=("parallel",), vmem_limit_bytes=_VMEM_LIMIT),
    )(x, Rh, RwT)


# ----------------------------------------------------------------------------
# Model forward (reshapes / small transposes are plain-JAX glue)
# ----------------------------------------------------------------------------
def vit_forward(params, x_nchw, cfg):
    B, C, H, W = x_nchw.shape
    P = cfg["patch_size"]
    nh = cfg["num_heads"]
    D = cfg["hidden_dim"]
    dh = D // nh
    g = H // P
    N = g * g

    # Patch embedding: Conv2d(C, D, k=P, s=P) == matmul over flattened patches (bf16 DMA).
    xp = x_nchw.reshape(B, C, g, P, g, P).transpose(0, 2, 4, 1, 3, 5)
    xp = xp.reshape(B * N, C * P * P).astype(jnp.bfloat16)
    tok = fused_matmul(xp, params["patch_w"], params["patch_b"], out_dtype=jnp.float32)
    # pos-emb add stays one XLA pointwise op; token stream then lives in bf16.
    tok = (tok.reshape(B, N, D) + params["pos_emb"]).astype(jnp.bfloat16).reshape(B * N, D)

    for lp in params["layers"]:
        tok = attention_block(tok, lp, B=B, N=N, nh=nh, dh=dh)
        tok = ffn_block(tok, lp["fc1_w"], lp["fc1_b"], lp["fc2_w"], lp["fc2_b"],
                        act="gelu", ln=(lp["ln2_g"], lp["ln2_b"]), add_residual=True,
                        out_dtype=jnp.bfloat16)
    return tok  # (B*N, D) bf16; final LN is fused into the first decoder stage.


def segmentation_vit_forward(params, x, cfg):
    B, C, H, W = x.shape
    P = cfg["patch_size"]
    D = cfg["hidden_dim"]
    nc = cfg["n_classes"]
    d1, d2 = cfg["dec1"], cfg["dec2"]
    g = H // P

    tok = vit_forward(params, x, cfg)                                 # rows in (b, i, j) order

    # dec1: final encoder LN + ConvTranspose2d(k=2,s=2) as per-pixel matmul + ReLU.
    # Output columns are (di, dj, c1); rows stay in nested pixel order -> no XLA transpose.
    y1 = fused_matmul(tok, params["dec1_w"], jnp.tile(params["dec1_b"], 4),
                      act="relu", ln=(params["ln_f_g"], params["ln_f_b"]),
                      out_dtype=jnp.bfloat16)
    y1 = y1.reshape(B * g * g * 4, d1)                                # free reshape (b,i,j,di,dj)

    # dec2 (ConvT k=2,s=2) + ReLU + dec3 (1x1 ConvT) fused: dec3 applied per (ei,ej) cell via
    # a block-diagonal weight so the d2 activation map never leaves VMEM.
    w3bd = jnp.kron(jnp.eye(4, dtype=jnp.float32),
                    params["dec3_w"].astype(jnp.float32)).astype(jnp.bfloat16)
    z = ffn_block(y1, params["dec2_w"], jnp.tile(params["dec2_b"], 4),
                  w3bd, jnp.tile(params["dec3_b"], 4),
                  act="relu", out_dtype=jnp.float32)                  # (B*g*g*4, 4*nc)
    # TODO(synk): the 4*nc-wide output stays a small masked store; could be zero-padded to a
    # 128-lane multiple for fully dense stores at the cost of extra HBM bytes.

    # Single small un-nesting transpose to NCHW spatial order (smallest decoder tensor).
    z = z.reshape(B, g, g, 2, 2, 2, 2, nc).transpose(0, 7, 1, 3, 5, 2, 4, 6)
    z = z.reshape(B * nc, 4 * g, 4 * g)

    scale = cfg["img_size"] // (P * 2)
    Ho = 4 * g * scale
    out = bilinear_upsample(z, Ho, Ho)
    return out.reshape(B, nc, Ho, Ho)                                 # NCHW


# ----------------------------------------------------------------------------
# Deterministic parameter initialization (shapes follow the module's __init__)
# ----------------------------------------------------------------------------
# TODO(synk): weight layouts (patch (C,P,P)->C*P*P rows; qkv as (3, nh, D, dh); out-proj as
# (nh, dh, D); convT (Cin, di*dj*Cout) Cout-fastest) are self-consistent here; porting real
# PyTorch checkpoints requires matching reshapes of the torch weights.
def init_params(key, cfg):
    D, P, C = cfg["hidden_dim"], cfg["patch_size"], cfg["in_channels"]
    nh = cfg["num_heads"]
    dh = D // nh
    N = (cfg["img_size"] // P) ** 2
    mlp = cfg["mlp_dim"]
    d1, d2, nc = cfg["dec1"], cfg["dec2"], cfg["n_classes"]
    ks = iter(jax.random.split(key, 8 + 6 * cfg["num_layers"]))

    def w(shape, scale=0.02, dtype=jnp.bfloat16):
        return (scale * jax.random.normal(next(ks), shape, jnp.float32)).astype(dtype)

    params = {
        "patch_w": w((C * P * P, D)),
        "patch_b": jnp.zeros((D,), jnp.float32),
        "pos_emb": w((1, N, D), dtype=jnp.float32),
        "ln_f_g": jnp.ones((D,), jnp.float32),
        "ln_f_b": jnp.zeros((D,), jnp.float32),
        "layers": [],
    }
    for _ in range(cfg["num_layers"]):
        params["layers"].append({
            "ln1_g": jnp.ones((D,), jnp.float32), "ln1_b": jnp.zeros((D,), jnp.float32),
            "wqkv": w((3, nh, D, dh)),
            "bqkv": jnp.zeros((3, nh, 1, dh), jnp.float32),
            "wo": w((nh, dh, D)),
            "bo": jnp.zeros((D,), jnp.float32),
            "ln2_g": jnp.ones((D,), jnp.float32), "ln2_b": jnp.zeros((D,), jnp.float32),
            "fc1_w": w((D, mlp)), "fc1_b": jnp.zeros((mlp,), jnp.float32),
            "fc2_w": w((mlp, D)), "fc2_b": jnp.zeros((D,), jnp.float32),
        })
    params.update({
        "dec1_w": w((D, 4 * d1)), "dec1_b": jnp.zeros((d1,), jnp.float32),
        "dec2_w": w((d1, 4 * d2)), "dec2_b": jnp.zeros((d2,), jnp.float32),
        "dec3_w": w((d2, nc)), "dec3_b": jnp.zeros((nc,), jnp.float32),
    })
    return params


if __name__ == "__main__":
    # Small config consistent with the module geometry (module defaults: img=128, patch=16,
    # C=10, hidden=768, heads=4, layers=6, mlp=128, decoder 256->128->classes; scaled down).
    cfg = dict(img_size=32, patch_size=8, in_channels=4, n_classes=5,
               num_layers=2, num_heads=4, hidden_dim=128, mlp_dim=64,
               dec1=64, dec2=32)

    key = jax.random.PRNGKey(0)
    pkey, xkey = jax.random.split(key)
    params = init_params(pkey, cfg)

    B = 2
    x = jax.random.normal(
        xkey, (B, cfg["in_channels"], cfg["img_size"], cfg["img_size"]), jnp.float32)

    fwd = jax.jit(functools.partial(segmentation_vit_forward, cfg=cfg))
    out = jax.block_until_ready(fwd(params, x))

    assert out.shape == (B, cfg["n_classes"], cfg["img_size"], cfg["img_size"]), out.shape
    assert out.dtype == jnp.float32
    assert bool(jnp.isfinite(out).all())
    print("KERNEL_OK")
</pallas_src>

<mosaic_0001>
module attributes {stable_mosaic.version = 11 : i64} {
  func.func private @main(%arg0: i32) attributes {dimension_semantics = [#tpu.dimension_semantics<core_parallel>], iteration_bounds = array<i64: 2>, tpu.core_type = #tpu.core_type<sc_scalar_subcore>, window_params = []} {
    return
  }
}

module attributes {stable_mosaic.version = 11 : i64} {
  func.func private @main(%arg0: i32) attributes {dimension_semantics = [#tpu.dimension_semantics<core_parallel>], iteration_bounds = array<i64: 2>, tpu.core_type = #tpu.core_type<sc_scalar_subcore>, window_params = []} {
    return
  }
}

module attributes {stable_mosaic.version = 11 : i64} {
  func.func @_fused_matmul_kernel(%arg0: i32, %arg1: i32, %arg2: i32, %arg3: memref<16x256xbf16, #tpu.memory_space<vmem>>, %arg4: memref<256x128xbf16, #tpu.memory_space<vmem>>, %arg5: memref<1x128xf32, #tpu.memory_space<vmem>>, %arg6: memref<16x128xf32, #tpu.memory_space<vmem>>, %arg7: memref<16x128xf32, #tpu.memory_space<vmem>>) attributes {dimension_semantics = [#tpu.dimension_semantics<parallel>, #tpu.dimension_semantics<parallel>, #tpu.dimension_semantics<arbitrary>], iteration_bounds = array<i64: 2, 1, 1>, scalar_prefetch = 0 : i64, scratch_operands = 1 : i64, tpu.core_type = #tpu.core_type<tc>, window_params = [{transform_indices = @transform_0, window_bounds = array<i64: 16, 256>}, {transform_indices = @transform_1, window_bounds = array<i64: 256, 128>}, {transform_indices = @transform_2, window_bounds = array<i64: 1, 128>}, {transform_indices = @transform_3, window_bounds = array<i64: 16, 128>}]} {
    %c0_i32 = arith.constant 0 : i32
    %0 = arith.cmpi eq, %arg2, %c0_i32 : i32
    %1 = arith.extui %0 : i1 to i32
    %c0_i32_0 = arith.constant 0 : i32
    %2 = arith.cmpi ne, %1, %c0_i32_0 : i32
    scf.if %2 {
      %cst_10 = arith.constant 0.000000e+00 : f32
      %12 = vector.broadcast %cst_10 : f32 to vector<16x128xf32>
      %c0_11 = arith.constant 0 : index
      %c0_12 = arith.constant 0 : index
      %13 = vector.load %arg7[%c0_11, %c0_12] : memref<16x128xf32, #tpu.memory_space<vmem>>, vector<16x128xf32>
      tpu.vector_store %arg7[%c0_11, %c0_12], %12 {strides = array<i32>} : memref<16x128xf32, #tpu.memory_space<vmem>>, vector<16x128xf32>,
    } else {
    }
    %c0 = arith.constant 0 : index
    %c0_1 = arith.constant 0 : index
    %3 = vector.load %arg3[%c0, %c0_1] : memref<16x256xbf16, #tpu.memory_space<vmem>>, vector<16x256xbf16>
    %c0_2 = arith.constant 0 : index
    %c0_3 = arith.constant 0 : index
    %4 = vector.load %arg7[%c0_2, %c0_3] : memref<16x128xf32, #tpu.memory_space<vmem>>, vector<16x128xf32>
    %c0_4 = arith.constant 0 : index
    %c0_5 = arith.constant 0 : index
    %5 = vector.load %arg4[%c0_4, %c0_5] : memref<256x128xbf16, #tpu.memory_space<vmem>>, vector<256x128xbf16>
    %cst = arith.constant dense<0.000000e+00> : vector<16x128xf32>
    %6 = tpu.matmul %3, %5, %cst {dimension_numbers = #tpu.dot_dimension_numbers<[1], [0], [0], [1], [0, 0, 1, 1], [], []>} : vector<16x256xbf16>, vector<256x128xbf16>, vector<16x128xf32> -> vector<16x128xf32>
    %7 = arith.addf %4, %6 : vector<16x128xf32>
    %c0_6 = arith.constant 0 : index
    %c0_7 = arith.constant 0 : index
    %8 = vector.load %arg7[%c0_6, %c0_7] : memref<16x128xf32, #tpu.memory_space<vmem>>, vector<16x128xf32>
    tpu.vector_store %arg7[%c0_6, %c0_7], %7 {strides = array<i32>} : memref<16x128xf32, #tpu.memory_space<vmem>>, vector<16x128xf32>,
    %c0_i32_8 = arith.constant 0 : i32
    %9 = arith.cmpi eq, %arg2, %c0_i32_8 : i32
    %10 = arith.extui %9 : i1 to i32
    %c0_i32_9 = arith.constant 0 : i32
    %11 = arith.cmpi ne, %10, %c0_i32_9 : i32
    scf.if %11 {
      %c0_10 = arith.constant 0 : index
      %c0_11 = arith.constant 0 : index
      %12 = vector.load %arg7[%c0_10, %c0_11] : memref<16x128xf32, #tpu.memory_space<vmem>>, vector<16x128xf32>
      %c0_12 = arith.constant 0 : index
      %c0_13 = arith.constant 0 : index
      %13 = vector.load %arg5[%c0_12, %c0_13] : memref<1x128xf32, #tpu.memory_space<vmem>>, vector<1x128xf32>
      %14 = vector.broadcast %13 : vector<1x128xf32> to vector<16x128xf32>
      %15 = arith.addf %12, %14 : vector<16x128xf32>
      %c0_14 = arith.constant 0 : index
      %c0_15 = arith.constant 0 : index
      %16 = vector.load %arg6[%c0_14, %c0_15] : memref<16x128xf32, #tpu.memory_space<vmem>>, vector<16x128xf32>
      tpu.vector_store %arg6[%c0_14, %c0_15], %15 {strides = array<i32>} : memref<16x128xf32, #tpu.memory_space<vmem>>, vector<16x128xf32>,
    } else {
    }
    return
  }
  func.func @transform_0(%arg0: i32, %arg1: i32, %arg2: i32) -> (i32, i32) {
    %c0_i32 = arith.constant 0 : i32
    return %arg0, %arg2 : i32, i32
  }
  func.func @transform_1(%arg0: i32, %arg1: i32, %arg2: i32) -> (i32, i32) {
    %c0_i32 = arith.constant 0 : i32
    return %arg2, %arg1 : i32, i32
  }
  func.func @transform_2(%arg0: i32, %arg1: i32, %arg2: i32) -> (i32, i32) {
    %c0_i32 = arith.constant 0 : i32
    %c0_i32_0 = arith.constant 0 : i32
    return %c0_i32, %arg1 : i32, i32
  }
  func.func @transform_3(%arg0: i32, %arg1: i32, %arg2: i32) -> (i32, i32) {
    %c0_i32 = arith.constant 0 : i32
    return %arg0, %arg1 : i32, i32
  }
}

module attributes {stable_mosaic.version = 11 : i64} {
  func.func @_attn_block_kernel(%arg0: i32, %arg1: memref<16x128xbf16, #tpu.memory_space<vmem>>, %arg2: memref<1x128xf32, #tpu.memory_space<vmem>>, %arg3: memref<1x128xf32, #tpu.memory_space<vmem>>, %arg4: memref<3x4x128x32xbf16, #tpu.memory_space<vmem>>, %arg5: memref<3x4x1x32xf32, #tpu.memory_space<vmem>>, %arg6: memref<4x32x128xbf16, #tpu.memory_space<vmem>>, %arg7: memref<1x128xf32, #tpu.memory_space<vmem>>, %arg8: memref<16x128xbf16, #tpu.memory_space<vmem>>) attributes {dimension_semantics = [#tpu.dimension_semantics<parallel>], iteration_bounds = array<i64: 2>, scalar_prefetch = 0 : i64, scratch_operands = 0 : i64, tpu.core_type = #tpu.core_type<tc>, window_params = [{transform_indices = @transform_0, window_bounds = array<i64: 16, 128>}, {pipeline_mode = #tpu.pipeline_mode<synchronous>, transform_indices = @transform_1, window_bounds = array<i64: 1, 128>}, {pipeline_mode = #tpu.pipeline_mode<synchronous>, transform_indices = @transform_2, window_bounds = array<i64: 1, 128>}, {pipeline_mode = #tpu.pipeline_mode<synchronous>, transform_indices = @transform_3, window_bounds = array<i64: 3, 4, 128, 32>}, {pipeline_mode = #tpu.pipeline_mode<synchronous>, transform_indices = @transform_4, window_bounds = array<i64: 3, 4, 1, 32>}, {pipeline_mode = #tpu.pipeline_mode<synchronous>, transform_indices = @transform_5, window_bounds = array<i64: 4, 32, 128>}, {pipeline_mode = #tpu.pipeline_mode<synchronous>, transform_indices = @transform_6, window_bounds = array<i64: 1, 128>}, {transform_indices = @transform_7, window_bounds = array<i64: 16, 128>}]} {
    %c0 = arith.constant 0 : index
    %c0_0 = arith.constant 0 : index
    %0 = vector.load %arg1[%c0, %c0_0] : memref<16x128xbf16, #tpu.memory_space<vmem>>, vector<16x128xbf16>
    %1 = arith.extf %0 : vector<16x128xbf16> to vector<16x128xf32>
    %cst = arith.constant dense<0.000000e+00> : vector<16xf32>
    %2 = vector.multi_reduction <add>, %1, %cst [1] : vector<16x128xf32> to vector<16xf32>
    %3 = vector.shape_cast %2 : vector<16xf32> to vector<16x1xf32>
    %cst_1 = arith.constant 1.280000e+02 : f32
    %4 = vector.broadcast %cst_1 : f32 to vector<16x1xf32>
    %5 = arith.divf %3, %4 : vector<16x1xf32>
    %6 = vector.broadcast %5 : vector<16x1xf32> to vector<16x128xf32>
    %7 = arith.subf %1, %6 : vector<16x128xf32>
    %8 = arith.mulf %7, %7 : vector<16x128xf32>
    %cst_2 = arith.constant dense<0.000000e+00> : vector<16xf32>
    %9 = vector.multi_reduction <add>, %8, %cst_2 [1] : vector<16x128xf32> to vector<16xf32>
    %10 = vector.shape_cast %9 : vector<16xf32> to vector<16x1xf32>
    %cst_3 = arith.constant 1.280000e+02 : f32
    %11 = vector.broadcast %cst_3 : f32 to vector<16x1xf32>
    %12 = arith.divf %10, %11 : vector<16x1xf32>
    %cst_4 = arith.constant 9.99999974E-6 : f32
    %13 = vector.broadcast %cst_4 : f32 to vector<16x1xf32>
    %14 = arith.addf %12, %13 : vector<16x1xf32>
    %15 = math.rsqrt %14 : vector<16x1xf32>
    %16 = vector.broadcast %15 : vector<16x1xf32> to vector<16x128xf32>
    %17 = arith.mulf %7, %16 : vector<16x128xf32>
    %c0_5 = arith.constant 0 : index
    %c0_6 = arith.constant 0 : index
    %18 = vector.load %arg2[%c0_5, %c0_6] : memref<1x128xf32, #tpu.memory_space<vmem>>, vector<1x128xf32>
    %19 = vector.broadcast %18 : vector<1x128xf32> to vector<16x128xf32>
    %20 = arith.mulf %17, %19 : vector<16x128xf32>
    %c0_7 = arith.constant 0 : index
    %c0_8 = arith.constant 0 : index
    %21 = vector.load %arg3[%c0_7, %c0_8] : memref<1x128xf32, #tpu.memory_space<vmem>>, vector<1x128xf32>
    %22 = vector.broadcast %21 : vector<1x128xf32> to vector<16x128xf32>
    %23 = arith.addf %20, %22 : vector<16x128xf32>
    %24 = arith.truncf %23 : vector<16x128xf32> to vector<16x128xbf16>
    %c0_9 = arith.constant 0 : index
    %c0_10 = arith.constant 0 : index
    %25 = vector.load %arg7[%c0_9, %c0_10] : memref<1x128xf32, #tpu.memory_space<vmem>>, vector<1x128xf32>
    %26 = vector.broadcast %25 : vector<1x128xf32> to vector<16x128xf32>
    %27 = arith.addf %1, %26 : vector<16x128xf32>
    %c0_11 = arith.constant 0 : index
    %c0_12 = arith.constant 0 : index
    %c0_13 = arith.constant 0 : index
    %c0_14 = arith.constant 0 : index
    %28 = vector.load %arg4[%c0_11, %c0_12, %c0_13, %c0_14] : memref<3x4x128x32xbf16, #tpu.memory_space<vmem>>, vector<1x1x128x32xbf16>
    %29 = vector.shape_cast %28 : vector<1x1x128x32xbf16> to vector<128x32xbf16>
    %cst_15 = arith.constant dense<0.000000e+00> : vector<16x32xf32>
    %30 = tpu.matmul %24, %29, %cst_15 {dimension_numbers = #tpu.dot_dimension_numbers<[1], [0], [0], [1], [0, 0, 1, 1], [], []>} : vector<16x128xbf16>, vector<128x32xbf16>, vector<16x32xf32> -> vector<16x32xf32>
    %c0_16 = arith.constant 0 : index
    %c0_17 = arith.constant 0 : index
    %c0_18 = arith.constant 0 : index
    %c0_19 = arith.constant 0 : index
    %31 = vector.load %arg5[%c0_16, %c0_17, %c0_18, %c0_19] : memref<3x4x1x32xf32, #tpu.memory_space<vmem>>, vector<1x1x1x32xf32>
    %32 = vector.shape_cast %31 : vector<1x1x1x32xf32> to vector<1x32xf32>
    %33 = vector.broadcast %32 : vector<1x32xf32> to vector<16x32xf32>
    %34 = arith.addf %30, %33 : vector<16x32xf32>
    %cst_20 = arith.constant 0.176776692 : f32
    %35 = vector.broadcast %cst_20 : f32 to vector<16x32xf32>
    %36 = arith.mulf %34, %35 : vector<16x32xf32>
    %c1 = arith.constant 1 : index
    %c0_21 = arith.constant 0 : index
    %c0_22 = arith.constant 0 : index
    %c0_23 = arith.constant 0 : index
    %37 = vector.load %arg4[%c1, %c0_21, %c0_22, %c0_23] : memref<3x4x128x32xbf16, #tpu.memory_space<vmem>>, vector<1x1x128x32xbf16>
    %38 = vector.shape_cast %37 : vector<1x1x128x32xbf16> to vector<128x32xbf16>
    %cst_24 = arith.constant dense<0.000000e+00> : vector<16x32xf32>
    %39 = tpu.matmul %24, %38, %cst_24 {dimension_numbers = #tpu.dot_dimension_numbers<[1], [0], [0], [1], [0, 0, 1, 1], [], []>} : vector<16x128xbf16>, vector<128x32xbf16>, vector<16x32xf32> -> vector<16x32xf32>
    %c1_25 = arith.constant 1 : index
    %c0_26 = arith.constant 0 : index
    %c0_27 = arith.constant 0 : index
    %c0_28 = arith.constant 0 : index
    %40 = vector.load %arg5[%c1_25, %c0_26, %c0_27, %c0_28] : memref<3x4x1x32xf32, #tpu.memory_space<vmem>>, vector<1x1x1x32xf32>
    %41 = vector.shape_cast %40 : vector<1x1x1x32xf32> to vector<1x32xf32>
    %42 = vector.broadcast %41 : vector<1x32xf32> to vector<16x32xf32>
    %43 = arith.addf %39, %42 : vector<16x32xf32>
    %c2 = arith.constant 2 : index
    %c0_29 = arith.constant 0 : index
    %c0_30 = arith.constant 0 : index
    %c0_31 = arith.constant 0 : index
    %44 = vector.load %arg4[%c2, %c0_29, %c0_30, %c0_31] : memref<3x4x128x32xbf16, #tpu.memory_space<vmem>>, vector<1x1x128x32xbf16>
    %45 = vector.shape_cast %44 : vector<1x1x128x32xbf16> to vector<128x32xbf16>
    %cst_32 = arith.constant dense<0.000000e+00> : vector<16x32xf32>
    %46 = tpu.matmul %24, %45, %cst_32 {dimension_numbers = #tpu.dot_dimension_numbers<[1], [0], [0], [1], [0, 0, 1, 1], [], []>} : vector<16x128xbf16>, vector<128x32xbf16>, vector<16x32xf32> -> vector<16x32xf32>
    %c2_33 = arith.constant 2 : index
    %c0_34 = arith.constant 0 : index
    %c0_35 = arith.constant 0 : index
    %c0_36 = arith.constant 0 : index
    %47 = vector.load %arg5[%c2_33, %c0_34, %c0_35, %c0_36] : memref<3x4x1x32xf32, #tpu.memory_space<vmem>>, vector<1x1x1x32xf32>
    %48 = vector.shape_cast %47 : vector<1x1x1x32xf32> to vector<1x32xf32>
    %49 = vector.broadcast %48 : vector<1x32xf32> to vector<16x32xf32>
    %50 = arith.addf %46, %49 : vector<16x32xf32>
    %51 = arith.truncf %36 : vector<16x32xf32> to vector<16x32xbf16>
    %52 = vector.shape_cast %51 : vector<16x32xbf16> to vector<1x16x32xbf16>
    %53 = arith.truncf %43 : vector<16x32xf32> to vector<16x32xbf16>
    %54 = vector.shape_cast %53 : vector<16x32xbf16> to vector<1x16x32xbf16>
    %55 = arith.truncf %50 : vector<16x32xf32> to vector<16x32xbf16>
    %56 = vector.shape_cast %55 : vector<16x32xbf16> to vector<1x16x32xbf16>
    "tpu.trace_start"() <{level = 10 : i32, message = "bqd,bkd->bqk"}> : () -> ()
    %cst_37 = arith.constant dense<0.000000e+00> : vector<1x16x16xf32>
    %57 = tpu.matmul %52, %54, %cst_37 {dimension_numbers = #tpu.dot_dimension_numbers<[2], [2], [1], [1], [0, 0, 0, 1, 1, 1], [0], [0]>} : vector<1x16x32xbf16>, vector<1x16x32xbf16>, vector<1x16x16xf32> -> vector<1x16x16xf32>
    "tpu.trace_stop"() : () -> ()
    %cst_38 = arith.constant dense<0xFF800000> : vector<1x16xf32>
    %58 = vector.multi_reduction <maximumf>, %57, %cst_38 [2] : vector<1x16x16xf32> to vector<1x16xf32>
    %59 = vector.shape_cast %58 : vector<1x16xf32> to vector<1x16x1xf32>
    %60 = vector.broadcast %59 : vector<1x16x1xf32> to vector<1x16x16xf32>
    %61 = arith.subf %57, %60 : vector<1x16x16xf32>
    %62 = math.exp %61 : vector<1x16x16xf32>
    %cst_39 = arith.constant dense<0.000000e+00> : vector<1x16xf32>
    %63 = vector.multi_reduction <add>, %62, %cst_39 [2] : vector<1x16x16xf32> to vector<1x16xf32>
    %64 = vector.shape_cast %63 : vector<1x16xf32> to vector<1x16x1xf32>
    %65 = arith.truncf %62 : vector<1x16x16xf32> to vector<1x16x16xbf16>
    "tpu.trace_start"() <{level = 10 : i32, message = "bqk,bkd->bqd"}> : () -> ()
    %cst_40 = arith.constant dense<0.000000e+00> : vector<1x16x32xf32>
    %66 = tpu.matmul %65, %56, %cst_40 {dimension_numbers = #tpu.dot_dimension_numbers<[2], [1], [1], [2], [0, 0, 0, 1, 1, 2], [0], [0]>} : vector<1x16x16xbf16>, vector<1x16x32xbf16>, vector<1x16x32xf32> -> vector<1x16x32xf32>
    "tpu.trace_stop"() : () -> ()
    %67 = vector.broadcast %64 : vector<1x16x1xf32> to vector<1x16x32xf32>
    %68 = arith.divf %66, %67 : vector<1x16x32xf32>
    %69 = vector.shape_cast %68 : vector<1x16x32xf32> to vector<16x32xf32>
    %70 = arith.truncf %69 : vector<16x32xf32> to vector<16x32xbf16>
    %c0_41 = arith.constant 0 : index
    %c0_42 = arith.constant 0 : index
    %c0_43 = arith.constant 0 : index
    %71 = vector.load %arg6[%c0_41, %c0_42, %c0_43] : memref<4x32x128xbf16, #tpu.memory_space<vmem>>, vector<1x32x128xbf16>
    %72 = vector.shape_cast %71 : vector<1x32x128xbf16> to vector<32x128xbf16>
    %cst_44 = arith.constant dense<0.000000e+00> : vector<16x128xf32>
    %73 = tpu.matmul %70, %72, %cst_44 {dimension_numbers = #tpu.dot_dimension_numbers<[1], [0], [0], [1], [0, 0, 1, 1], [], []>} : vector<16x32xbf16>, vector<32x128xbf16>, vector<16x128xf32> -> vector<16x128xf32>
    %74 = arith.addf %27, %73 : vector<16x128xf32>
    %c0_45 = arith.constant 0 : index
    %c1_46 = arith.constant 1 : index
    %c0_47 = arith.constant 0 : index
    %c0_48 = arith.constant 0 : index
    %75 = vector.load %arg4[%c0_45, %c1_46, %c0_47, %c0_48] : memref<3x4x128x32xbf16, #tpu.memory_space<vmem>>, vector<1x1x128x32xbf16>
    %76 = vector.shape_cast %75 : vector<1x1x128x32xbf16> to vector<128x32xbf16>
    %cst_49 = arith.constant dense<0.000000e+00> : vector<16x32xf32>
    %77 = tpu.matmul %24, %76, %cst_49 {dimension_numbers = #tpu.dot_dimension_numbers<[1], [0], [0], [1], [0, 0, 1, 1], [], []>} : vector<16x128xbf16>, vector<128x32xbf16>, vector<16x32xf32> -> vector<16x32xf32>
    %c0_50 = arith.constant 0 : index
    %c1_51 = arith.constant 1 : index
    %c0_52 = arith.constant 0 : index
    %c0_53 = arith.constant 0 : index
    %78 = vector.load %arg5[%c0_50, %c1_51, %c0_52, %c0_53] : memref<3x4x1x32xf32, #tpu.memory_space<vmem>>, vector<1x1x1x32xf32>
    %79 = vector.shape_cast %78 : vector<1x1x1x32xf32> to vector<1x32xf32>
    %80 = vector.broadcast %79 : vector<1x32xf32> to vector<16x32xf32>
    %81 = arith.addf %77, %80 : vector<16x32xf32>
    %cst_54 = arith.constant 0.176776692 : f32
    %82 = vector.broadcast %cst_54 : f32 to vector<16x32xf32>
    %83 = arith.mulf %81, %82 : vector<16x32xf32>
    %c1_55 = arith.constant 1 : index
    %c1_56 = arith.constant 1 : index
    %c0_57 = arith.constant 0 : index
    %c0_58 = arith.constant 0 : index
    %84 = vector.load %arg4[%c1_55, %c1_56, %c0_57, %c0_58] : memref<3x4x128x32xbf16, #tpu.memory_space<vmem>>, vector<1x1x128x32xbf16>
    %85 = vector.shape_cast %84 : vector<1x1x128x32xbf16> to vector<128x32xbf16>
    %cst_59 = arith.constant dense<0.000000e+00> : vector<16x32xf32>
    %86 = tpu.matmul %24, %85, %cst_59 {dimension_numbers = #tpu.dot_dimension_numbers<[1], [0], [0], [1], [0, 0, 1, 1], [], []>} : vector<16x128xbf16>, vector<128x32xbf16>, vector<16x32xf32> -> vector<16x32xf32>
    %c1_60 = arith.constant 1 : index
    %c1_61 = arith.constant 1 : index
    %c0_62 = arith.constant 0 : index
    %c0_63 = arith.constant 0 : index
    %87 = vector.load %arg5[%c1_60, %c1_61, %c0_62, %c0_63] : memref<3x4x1x32xf32, #tpu.memory_space<vmem>>, vector<1x1x1x32xf32>
    %88 = vector.shape_cast %87 : vector<1x1x1x32xf32> to vector<1x32xf32>
    %89 = vector.broadcast %88 : vector<1x32xf32> to vector<16x32xf32>
    %90 = arith.addf %86, %89 : vector<16x32xf32>
    %c2_64 = arith.constant 2 : index
    %c1_65 = arith.constant 1 : index
    %c0_66 = arith.constant 0 : index
    %c0_67 = arith.constant 0 : index
    %91 = vector.load %arg4[%c2_64, %c1_65, %c0_66, %c0_67] : memref<3x4x128x32xbf16, #tpu.memory_space<vmem>>, vector<1x1x128x32xbf16>
    %92 = vector.shape_cast %91 : vector<1x1x128x32xbf16> to vector<128x32xbf16>
    %cst_68 = arith.constant dense<0.000000e+00> : vector<16x32xf32>
    %93 = tpu.matmul %24, %92, %cst_68 {dimension_numbers = #tpu.dot_dimension_numbers<[1], [0], [0], [1], [0, 0, 1, 1], [], []>} : vector<16x128xbf16>, vector<128x32xbf16>, vector<16x32xf32> -> vector<16x32xf32>
    %c2_69 = arith.constant 2 : index
    %c1_70 = arith.constant 1 : index
    %c0_71 = arith.constant 0 : index
    %c0_72 = arith.constant 0 : index
    %94 = vector.load %arg5[%c2_69, %c1_70, %c0_71, %c0_72] : memref<3x4x1x32xf32, #tpu.memory_space<vmem>>, vector<1x1x1x32xf32>
    %95 = vector.shape_cast %94 : vector<1x1x1x32xf32> to vector<1x32xf32>
    %96 = vector.broadcast %95 : vector<1x32xf32> to vector<16x32xf32>
    %97 = arith.addf %93, %96 : vector<16x32xf32>
    %98 = arith.truncf %83 : vector<16x32xf32> to vector<16x32xbf16>
    %99 = vector.shape_cast %98 : vector<16x32xbf16> to vector<1x16x32xbf16>
    %100 = arith.truncf %90 : vector<16x32xf32> to vector<16x32xbf16>
    %101 = vector.shape_cast %100 : vector<16x32xbf16> to vector<1x16x32xbf16>
    %102 = arith.truncf %97 : vector<16x32xf32> to vector<16x32xbf16>
    %103 = vector.shape_cast %102 : vector<16x32xbf16> to vector<1x16x32xbf16>
    "tpu.trace_start"() <{level = 10 : i32, message = "bqd,bkd->bqk"}> : () -> ()
    %cst_73 = arith.constant dense<0.000000e+00> : vector<1x16x16xf32>
    %104 = tpu.matmul %99, %101, %cst_73 {dimension_numbers = #tpu.dot_dimension_numbers<[2], [2], [1], [1], [0, 0, 0, 1, 1, 1], [0], [0]>} : vector<1x16x32xbf16>, vector<1x16x32xbf16>, vector<1x16x16xf32> -> vector<1x16x16xf32>
    "tpu.trace_stop"() : () -> ()
    %cst_74 = arith.constant dense<0xFF800000> : vector<1x16xf32>
    %105 = vector.multi_reduction <maximumf>, %104, %cst_74 [2] : vector<1x16x16xf32> to vector<1x16xf32>
    %106 = vector.shape_cast %105 : vector<1x16xf32> to vector<1x16x1xf32>
    %107 = vector.broadcast %106 : vector<1x16x1xf32> to vector<1x16x16xf32>
    %108 = arith.subf %104, %107 : vector<1x16x16xf32>
    %109 = math.exp %108 : vector<1x16x16xf32>
    %cst_75 = arith.constant dense<0.000000e+00> : vector<1x16xf32>
    %110 = vector.multi_reduction <add>, %109, %cst_75 [2] : vector<1x16x16xf32> to vector<1x16xf32>
    %111 = vector.shape_cast %110 : vector<1x16xf32> to vector<1x16x1xf32>
    %112 = arith.truncf %109 : vector<1x16x16xf32> to vector<1x16x16xbf16>
    "tpu.trace_start"() <{level = 10 : i32, message = "bqk,bkd->bqd"}> : () -> ()
    %cst_76 = arith.constant dense<0.000000e+00> : vector<1x16x32xf32>
    %113 = tpu.matmul %112, %103, %cst_76 {dimension_numbers = #tpu.dot_dimension_numbers<[2], [1], [1], [2], [0, 0, 0, 1, 1, 2], [0], [0]>} : vector<1x16x16xbf16>, vector<1x16x32xbf16>, vector<1x16x32xf32> -> vector<1x16x32xf32>
    "tpu.trace_stop"() : () -> ()
    %114 = vector.broadcast %111 : vector<1x16x1xf32> to vector<1x16x32xf32>
    %115 = arith.divf %113, %114 : vector<1x16x32xf32>
    %116 = vector.shape_cast %115 : vector<1x16x32xf32> to vector<16x32xf32>
    %117 = arith.truncf %116 : vector<16x32xf32> to vector<16x32xbf16>
    %c1_77 = arith.constant 1 : index
    %c0_78 = arith.constant 0 : index
    %c0_79 = arith.constant 0 : index
    %118 = vector.load %arg6[%c1_77, %c0_78, %c0_79] : memref<4x32x128xbf16, #tpu.memory_space<vmem>>, vector<1x32x128xbf16>
    %119 = vector.shape_cast %118 : vector<1x32x128xbf16> to vector<32x128xbf16>
    %cst_80 = arith.constant dense<0.000000e+00> : vector<16x128xf32>
    %120 = tpu.matmul %117, %119, %cst_80 {dimension_numbers = #tpu.dot_dimension_numbers<[1], [0], [0], [1], [0, 0, 1, 1], [], []>} : vector<16x32xbf16>, vector<32x128xbf16>, vector<16x128xf32> -> vector<16x128xf32>
    %121 = arith.addf %74, %120 : vector<16x128xf32>
    %c0_81 = arith.constant 0 : index
    %c2_82 = arith.constant 2 : index
    %c0_83 = arith.constant 0 : index
    %c0_84 = arith.constant 0 : index
    %122 = vector.load %arg4[%c0_81, %c2_82, %c0_83, %c0_84] : memref<3x4x128x32xbf16, #tpu.memory_space<vmem>>, vector<1x1x128x32xbf16>
    %123 = vector.shape_cast %122 : vector<1x1x128x32xbf16> to vector<128x32xbf16>
    %cst_85 = arith.constant dense<0.000000e+00> : vector<16x32xf32>
    %124 = tpu.matmul %24, %123, %cst_85 {dimension_numbers = #tpu.dot_dimension_numbers<[1], [0], [0], [1], [0, 0, 1, 1], [], []>} : vector<16x128xbf16>, vector<128x32xbf16>, vector<16x32xf32> -> vector<16x32xf32>
    %c0_86 = arith.constant 0 : index
    %c2_87 = arith.constant 2 : index
    %c0_88 = arith.constant 0 : index
    %c0_89 = arith.constant 0 : index
    %125 = vector.load %arg5[%c0_86, %c2_87, %c0_88, %c0_89] : memref<3x4x1x32xf32, #tpu.memory_space<vmem>>, vector<1x1x1x32xf32>
    %126 = vector.shape_cast %125 : vector<1x1x1x32xf32> to vector<1x32xf32>
    %127 = vector.broadcast %126 : vector<1x32xf32> to vector<16x32xf32>
    %128 = arith.addf %124, %127 : vector<16x32xf32>
    %cst_90 = arith.constant 0.176776692 : f32
    %129 = vector.broadcast %cst_90 : f32 to vector<16x32xf32>
    %130 = arith.mulf %128, %129 : vector<16x32xf32>
    %c1_91 = arith.constant 1 : index
    %c2_92 = arith.constant 2 : index
    %c0_93 = arith.constant 0 : index
    %c0_94 = arith.constant 0 : index
    %131 = vector.load %arg4[%c1_91, %c2_92, %c0_93, %c0_94] : memref<3x4x128x32xbf16, #tpu.memory_space<vmem>>, vector<1x1x128x32xbf16>
    %132 = vector.shape_cast %131 : vector<1x1x128x32xbf16> to vector<128x32xbf16>
    %cst_95 = arith.constant dense<0.000000e+00> : vector<16x32xf32>
    %133 = tpu.matmul %24, %132, %cst_95 {dimension_numbers = #tpu.dot_dimension_numbers<[1], [0], [0], [1], [0, 0, 1, 1], [], []>} : vector<16x128xbf16>, vector<128x32xbf16>, vector<16x32xf32> -> vector<16x32xf32>
    %c1_96 = arith.constant 1 : index
    %c2_97 = arith.constant 2 : index
    %c0_98 = arith.constant 0 : index
    %c0_99 = arith.constant 0 : index
    %134 = vector.load %arg5[%c1_96, %c2_97, %c0_98, %c0_99] : memref<3x4x1x32xf32, #tpu.memory_space<vmem>>, vector<1x1x1x32xf32>
    %135 = vector.shape_cast %134 : vector<1x1x1x32xf32> to vector<1x32xf32>
    %136 = vector.broadcast %135 : vector<1x32xf32> to vector<16x32xf32>
    %137 = arith.addf %133, %136 : vector<16x32xf32>
    %c2_100 = arith.constant 2 : index
    %c2_101 = arith.constant 2 : index
    %c0_102 = arith.constant 0 : index
    %c0_103 = arith.constant 0 : index
    %138 = vector.load %arg4[%c2_100, %c2_101, %c0_102, %c0_103] : memref<3x4x128x32xbf16, #tpu.memory_space<vmem>>, vector<1x1x128x32xbf16>
    %139 = vector.shape_cast %138 : vector<1x1x128x32xbf16> to vector<128x32xbf16>
    %cst_104 = arith.constant dense<0.000000e+00> : vector<16x32xf32>
    %140 = tpu.matmul %24, %139, %cst_104 {dimension_numbers = #tpu.dot_dimension_numbers<[1], [0], [0], [1], [0, 0, 1, 1], [], []>} : vector<16x128xbf16>, vector<128x32xbf16>, vector<16x32xf32> -> vector<16x32xf32>
    %c2_105 = arith.constant 2 : index
    %c2_106 = arith.constant 2 : index
    %c0_107 = arith.constant 0 : index
    %c0_108 = arith.constant 0 : index
    %141 = vector.load %arg5[%c2_105, %c2_106, %c0_107, %c0_108] : memref<3x4x1x32xf32, #tpu.memory_space<vmem>>, vector<1x1x1x32xf32>
    %142 = vector.shape_cast %141 : vector<1x1x1x32xf32> to vector<1x32xf32>
    %143 = vector.broadcast %142 : vector<1x32xf32> to vector<16x32xf32>
    %144 = arith.addf %140, %143 : vector<16x32xf32>
    %145 = arith.truncf %130 : vector<16x32xf32> to vector<16x32xbf16>
    %146 = vector.shape_cast %145 : vector<16x32xbf16> to vector<1x16x32xbf16>
    %147 = arith.truncf %137 : vector<16x32xf32> to vector<16x32xbf16>
    %148 = vector.shape_cast %147 : vector<16x32xbf16> to vector<1x16x32xbf16>
    %149 = arith.truncf %144 : vector<16x32xf32> to vector<16x32xbf16>
    %150 = vector.shape_cast %149 : vector<16x32xbf16> to vector<1x16x32xbf16>
    "tpu.trace_start"() <{level = 10 : i32, message = "bqd,bkd->bqk"}> : () -> ()
    %cst_109 = arith.constant dense<0.000000e+00> : vector<1x16x16xf32>
    %151 = tpu.matmul %146, %148, %cst_109 {dimension_numbers = #tpu.dot_dimension_numbers<[2], [2], [1], [1], [0, 0, 0, 1, 1, 1], [0], [0]>} : vector<1x16x32xbf16>, vector<1x16x32xbf16>, vector<1x16x16xf32> -> vector<1x16x16xf32>
    "tpu.trace_stop"() : () -> ()
    %cst_110 = arith.constant dense<0xFF800000> : vector<1x16xf32>
    %152 = vector.multi_reduction <maximumf>, %151, %cst_110 [2] : vector<1x16x16xf32> to vector<1x16xf32>
    %153 = vector.shape_cast %152 : vector<1x16xf32> to vector<1x16x1xf32>
    %154 = vector.broadcast %153 : vector<1x16x1xf32> to vector<1x16x16xf32>
    %155 = arith.subf %151, %154 : vector<1x16x16xf32>
    %156 = math.exp %155 : vector<1x16x16xf32>
    %cst_111 = arith.constant dense<0.000000e+00> : vector<1x16xf32>
    %157 = vector.multi_reduction <add>, %156, %cst_111 [2] : vector<1x16x16xf32> to vector<1x16xf32>
    %158 = vector.shape_cast %157 : vector<1x16xf32> to vector<1x16x1xf32>
    %159 = arith.truncf %156 : vector<1x16x16xf32> to vector<1x16x16xbf16>
    "tpu.trace_start"() <{level = 10 : i32, message = "bqk,bkd->bqd"}> : () -> ()
    %cst_112 = arith.constant dense<0.000000e+00> : vector<1x16x32xf32>
    %160 = tpu.matmul %159, %150, %cst_112 {dimension_numbers = #tpu.dot_dimension_numbers<[2], [1], [1], [2], [0, 0, 0, 1, 1, 2], [0], [0]>} : vector<1x16x16xbf16>, vector<1x16x32xbf16>, vector<1x16x32xf32> -> vector<1x16x32xf32>
    "tpu.trace_stop"() : () -> ()
    %161 = vector.broadcast %158 : vector<1x16x1xf32> to vector<1x16x32xf32>
    %162 = arith.divf %160, %161 : vector<1x16x32xf32>
    %163 = vector.shape_cast %162 : vector<1x16x32xf32> to vector<16x32xf32>
    %164 = arith.truncf %163 : vector<16x32xf32> to vector<16x32xbf16>
    %c2_113 = arith.constant 2 : index
    %c0_114 = arith.constant 0 : index
    %c0_115 = arith.constant 0 : index
    %165 = vector.load %arg6[%c2_113, %c0_114, %c0_115] : memref<4x32x128xbf16, #tpu.memory_space<vmem>>, vector<1x32x128xbf16>
    %166 = vector.shape_cast %165 : vector<1x32x128xbf16> to vector<32x128xbf16>
    %cst_116 = arith.constant dense<0.000000e+00> : vector<16x128xf32>
    %167 = tpu.matmul %164, %166, %cst_116 {dimension_numbers = #tpu.dot_dimension_numbers<[1], [0], [0], [1], [0, 0, 1, 1], [], []>} : vector<16x32xbf16>, vector<32x128xbf16>, vector<16x128xf32> -> vector<16x128xf32>
    %168 = arith.addf %121, %167 : vector<16x128xf32>
    %c0_117 = arith.constant 0 : index
    %c3 = arith.constant 3 : index
    %c0_118 = arith.constant 0 : index
    %c0_119 = arith.constant 0 : index
    %169 = vector.load %arg4[%c0_117, %c3, %c0_118, %c0_119] : memref<3x4x128x32xbf16, #tpu.memory_space<vmem>>, vector<1x1x128x32xbf16>
    %170 = vector.shape_cast %169 : vector<1x1x128x32xbf16> to vector<128x32xbf16>
    %cst_120 = arith.constant dense<0.000000e+00> : vector<16x32xf32>
    %171 = tpu.matmul %24, %170, %cst_120 {dimension_numbers = #tpu.dot_dimension_numbers<[1], [0], [0], [1], [0, 0, 1, 1], [], []>} : vector<16x128xbf16>, vector<128x32xbf16>, vector<16x32xf32> -> vector<16x32xf32>
    %c0_121 = arith.constant 0 : index
    %c3_122 = arith.constant 3 : index
    %c0_123 = arith.constant 0 : index
    %c0_124 = arith.constant 0 : index
    %172 = vector.load %arg5[%c0_121, %c3_122, %c0_123, %c0_124] : memref<3x4x1x32xf32, #tpu.memory_space<vmem>>, vector<1x1x1x32xf32>
    %173 = vector.shape_cast %172 : vector<1x1x1x32xf32> to vector<1x32xf32>
    %174 = vector.broadcast %173 : vector<1x32xf32> to vector<16x32xf32>
    %175 = arith.addf %171, %174 : vector<16x32xf32>
    %cst_125 = arith.constant 0.176776692 : f32
    %176 = vector.broadcast %cst_125 : f32 to vector<16x32xf32>
    %177 = arith.mulf %175, %176 : vector<16x32xf32>
    %c1_126 = arith.constant 1 : index
    %c3_127 = arith.constant 3 : index
    %c0_128 = arith.constant 0 : index
    %c0_129 = arith.constant 0 : index
    %178 = vector.load %arg4[%c1_126, %c3_127, %c0_128, %c0_129] : memref<3x4x128x32xbf16, #tpu.memory_space<vmem>>, vector<1x1x128x32xbf16>
    %179 = vector.shape_cast %178 : vector<1x1x128x32xbf16> to vector<128x32xbf16>
    %cst_130 = arith.constant dense<0.000000e+00> : vector<16x32xf32>
    %180 = tpu.matmul %24, %179, %cst_130 {dimension_numbers = #tpu.dot_dimension_numbers<[1], [0], [0], [1], [0, 0, 1, 1], [], []>} : vector<16x128xbf16>, vector<128x32xbf16>, vector<16x32xf32> -> vector<16x32xf32>
    %c1_131 = arith.constant 1 : index
    %c3_132 = arith.constant 3 : index
    %c0_133 = arith.constant 0 : index
    %c0_134 = arith.constant 0 : index
    %181 = vector.load %arg5[%c1_131, %c3_132, %c0_133, %c0_134] : memref<3x4x1x32xf32, #tpu.memory_space<vmem>>, vector<1x1x1x32xf32>
    %182 = vector.shape_cast %181 : vector<1x1x1x32xf32> to vector<1x32xf32>
    %183 = vector.broadcast %182 : vector<1x32xf32> to vector<16x32xf32>
    %184 = arith.addf %180, %183 : vector<16x32xf32>
    %c2_135 = arith.constant 2 : index
    %c3_136 = arith.constant 3 : index
    %c0_137 = arith.constant 0 : index
    %c0_138 = arith.constant 0 : index
    %185 = vector.load %arg4[%c2_135, %c3_136, %c0_137, %c0_138] : memref<3x4x128x32xbf16, #tpu.memory_space<vmem>>, vector<1x1x128x32xbf16>
    %186 = vector.shape_cast %185 : vector<1x1x128x32xbf16> to vector<128x32xbf16>
    %cst_139 = arith.constant dense<0.000000e+00> : vector<16x32xf32>
    %187 = tpu.matmul %24, %186, %cst_139 {dimension_numbers = #tpu.dot_dimension_numbers<[1], [0], [0], [1], [0, 0, 1, 1], [], []>} : vector<16x128xbf16>, vector<128x32xbf16>, vector<16x32xf32> -> vector<16x32xf32>
    %c2_140 = arith.constant 2 : index
    %c3_141 = arith.constant 3 : index
    %c0_142 = arith.constant 0 : index
    %c0_143 = arith.constant 0 : index
    %188 = vector.load %arg5[%c2_140, %c3_141, %c0_142, %c0_143] : memref<3x4x1x32xf32, #tpu.memory_space<vmem>>, vector<1x1x1x32xf32>
    %189 = vector.shape_cast %188 : vector<1x1x1x32xf32> to vector<1x32xf32>
    %190 = vector.broadcast %189 : vector<1x32xf32> to vector<16x32xf32>
    %191 = arith.addf %187, %190 : vector<16x32xf32>
    %192 = arith.truncf %177 : vector<16x32xf32> to vector<16x32xbf16>
    %193 = vector.shape_cast %192 : vector<16x32xbf16> to vector<1x16x32xbf16>
    %194 = arith.truncf %184 : vector<16x32xf32> to vector<16x32xbf16>
    %195 = vector.shape_cast %194 : vector<16x32xbf16> to vector<1x16x32xbf16>
    %196 = arith.truncf %191 : vector<16x32xf32> to vector<16x32xbf16>
    %197 = vector.shape_cast %196 : vector<16x32xbf16> to vector<1x16x32xbf16>
    "tpu.trace_start"() <{level = 10 : i32, message = "bqd,bkd->bqk"}> : () -> ()
    %cst_144 = arith.constant dense<0.000000e+00> : vector<1x16x16xf32>
    %198 = tpu.matmul %193, %195, %cst_144 {dimension_numbers = #tpu.dot_dimension_numbers<[2], [2], [1], [1], [0, 0, 0, 1, 1, 1], [0], [0]>} : vector<1x16x32xbf16>, vector<1x16x32xbf16>, vector<1x16x16xf32> -> vector<1x16x16xf32>
    "tpu.trace_stop"() : () -> ()
    %cst_145 = arith.constant dense<0xFF800000> : vector<1x16xf32>
    %199 = vector.multi_reduction <maximumf>, %198, %cst_145 [2] : vector<1x16x16xf32> to vector<1x16xf32>
    %200 = vector.shape_cast %199 : vector<1x16xf32> to vector<1x16x1xf32>
    %201 = vector.broadcast %200 : vector<1x16x1xf32> to vector<1x16x16xf32>
    %202 = arith.subf %198, %201 : vector<1x16x16xf32>
    %203 = math.exp %202 : vector<1x16x16xf32>
    %cst_146 = arith.constant dense<0.000000e+00> : vector<1x16xf32>
    %204 = vector.multi_reduction <add>, %203, %cst_146 [2] : vector<1x16x16xf32> to vector<1x16xf32>
    %205 = vector.shape_cast %204 : vector<1x16xf32> to vector<1x16x1xf32>
    %206 = arith.truncf %203 : vector<1x16x16xf32> to vector<1x16x16xbf16>
    "tpu.trace_start"() <{level = 10 : i32, message = "bqk,bkd->bqd"}> : () -> ()
    %cst_147 = arith.constant dense<0.000000e+00> : vector<1x16x32xf32>
    %207 = tpu.matmul %206, %197, %cst_147 {dimension_numbers = #tpu.dot_dimension_numbers<[2], [1], [1], [2], [0, 0, 0, 1, 1, 2], [0], [0]>} : vector<1x16x16xbf16>, vector<1x16x32xbf16>, vector<1x16x32xf32> -> vector<1x16x32xf32>
    "tpu.trace_stop"() : () -> ()
    %208 = vector.broadcast %205 : vector<1x16x1xf32> to vector<1x16x32xf32>
    %209 = arith.divf %207, %208 : vector<1x16x32xf32>
    %210 = vector.shape_cast %209 : vector<1x16x32xf32> to vector<16x32xf32>
    %211 = arith.truncf %210 : vector<16x32xf32> to vector<16x32xbf16>
    %c3_148 = arith.constant 3 : index
    %c0_149 = arith.constant 0 : index
    %c0_150 = arith.constant 0 : index
    %212 = vector.load %arg6[%c3_148, %c0_149, %c0_150] : memref<4x32x128xbf16, #tpu.memory_space<vmem>>, vector<1x32x128xbf16>
    %213 = vector.shape_cast %212 : vector<1x32x128xbf16> to vector<32x128xbf16>
    %cst_151 = arith.constant dense<0.000000e+00> : vector<16x128xf32>
    %214 = tpu.matmul %211, %213, %cst_151 {dimension_numbers = #tpu.dot_dimension_numbers<[1], [0], [0], [1], [0, 0, 1, 1], [], []>} : vector<16x32xbf16>, vector<32x128xbf16>, vector<16x128xf32> -> vector<16x128xf32>
    %215 = arith.addf %168, %214 : vector<16x128xf32>
    %216 = arith.truncf %215 : vector<16x128xf32> to vector<16x128xbf16>
    %c0_152 = arith.constant 0 : index
    %c0_153 = arith.constant 0 : index
    %217 = vector.load %arg8[%c0_152, %c0_153] : memref<16x128xbf16, #tpu.memory_space<vmem>>, vector<16x128xbf16>
    tpu.vector_store %arg8[%c0_152, %c0_153], %216 {strides = array<i32>} : memref<16x128xbf16, #tpu.memory_space<vmem>>, vector<16x128xbf16>,
    return
  }
  func.func @transform_0(%arg0: i32) -> (i32, i32) {
    %c0_i32 = arith.constant 0 : i32
    %c0_i32_0 = arith.constant 0 : i32
    return %arg0, %c0_i32 : i32, i32
  }
  func.func @transform_1(%arg0: i32) -> (i32, i32) {
    %c0_i32 = arith.constant 0 : i32
    %c0_i32_0 = arith.constant 0 : i32
    %c0_i32_1 = arith.constant 0 : i32
    return %c0_i32, %c0_i32_0 : i32, i32
  }
  func.func @transform_2(%arg0: i32) -> (i32, i32) {
    %c0_i32 = arith.constant 0 : i32
    %c0_i32_0 = arith.constant 0 : i32
    %c0_i32_1 = arith.constant 0 : i32
    return %c0_i32, %c0_i32_0 : i32, i32
  }
  func.func @transform_3(%arg0: i32) -> (i32, i32, i32, i32) {
    %c0_i32 = arith.constant 0 : i32
    %c0_i32_0 = arith.constant 0 : i32
    %c0_i32_1 = arith.constant 0 : i32
    %c0_i32_2 = arith.constant 0 : i32
    %c0_i32_3 = arith.constant 0 : i32
    return %c0_i32, %c0_i32_0, %c0_i32_1, %c0_i32_2 : i32, i32, i32, i32
  }
  func.func @transform_4(%arg0: i32) -> (i32, i32, i32, i32) {
    %c0_i32 = arith.constant 0 : i32
    %c0_i32_0 = arith.constant 0 : i32
    %c0_i32_1 = arith.constant 0 : i32
    %c0_i32_2 = arith.constant 0 : i32
    %c0_i32_3 = arith.constant 0 : i32
    return %c0_i32, %c0_i32_0, %c0_i32_1, %c0_i32_2 : i32, i32, i32, i32
  }
  func.func @transform_5(%arg0: i32) -> (i32, i32, i32) {
    %c0_i32 = arith.constant 0 : i32
    %c0_i32_0 = arith.constant 0 : i32
    %c0_i32_1 = arith.constant 0 : i32
    %c0_i32_2 = arith.constant 0 : i32
    return %c0_i32, %c0_i32_0, %c0_i32_1 : i32, i32, i32
  }
  func.func @transform_6(%arg0: i32) -> (i32, i32) {
    %c0_i32 = arith.constant 0 : i32
    %c0_i32_0 = arith.constant 0 : i32
    %c0_i32_1 = arith.constant 0 : i32
    return %c0_i32, %c0_i32_0 : i32, i32
  }
  func.func @transform_7(%arg0: i32) -> (i32, i32) {
    %c0_i32 = arith.constant 0 : i32
    %c0_i32_0 = arith.constant 0 : i32
    return %arg0, %c0_i32 : i32, i32
  }
}

module attributes {stable_mosaic.version = 11 : i64} {
  func.func @_ffn_block_kernel(%arg0: i32, %arg1: memref<16x128xbf16, #tpu.memory_space<vmem>>, %arg2: memref<1x128xf32, #tpu.memory_space<vmem>>, %arg3: memref<1x128xf32, #tpu.memory_space<vmem>>, %arg4: memref<128x64xbf16, #tpu.memory_space<vmem>>, %arg5: memref<1x64xf32, #tpu.memory_space<vmem>>, %arg6: memref<64x128xbf16, #tpu.memory_space<vmem>>, %arg7: memref<1x128xf32, #tpu.memory_space<vmem>>, %arg8: memref<16x128xbf16, #tpu.memory_space<vmem>>) attributes {dimension_semantics = [#tpu.dimension_semantics<parallel>], iteration_bounds = array<i64: 2>, scalar_prefetch = 0 : i64, scratch_operands = 0 : i64, tpu.core_type = #tpu.core_type<tc>, window_params = [{transform_indices = @transform_0, window_bounds = array<i64: 16, 128>}, {pipeline_mode = #tpu.pipeline_mode<synchronous>, transform_indices = @transform_1, window_bounds = array<i64: 1, 128>}, {pipeline_mode = #tpu.pipeline_mode<synchronous>, transform_indices = @transform_2, window_bounds = array<i64: 1, 128>}, {pipeline_mode = #tpu.pipeline_mode<synchronous>, transform_indices = @transform_3, window_bounds = array<i64: 128, 64>}, {pipeline_mode = #tpu.pipeline_mode<synchronous>, transform_indices = @transform_4, window_bounds = array<i64: 1, 64>}, {pipeline_mode = #tpu.pipeline_mode<synchronous>, transform_indices = @transform_5, window_bounds = array<i64: 64, 128>}, {pipeline_mode = #tpu.pipeline_mode<synchronous>, transform_indices = @transform_6, window_bounds = array<i64: 1, 128>}, {transform_indices = @transform_7, window_bounds = array<i64: 16, 128>}]} {
    %c0 = arith.constant 0 : index
    %c0_0 = arith.constant 0 : index
    %0 = vector.load %arg1[%c0, %c0_0] : memref<16x128xbf16, #tpu.memory_space<vmem>>, vector<16x128xbf16>
    %1 = arith.extf %0 : vector<16x128xbf16> to vector<16x128xf32>
    %cst = arith.constant dense<0.000000e+00> : vector<16xf32>
    %2 = vector.multi_reduction <add>, %1, %cst [1] : vector<16x128xf32> to vector<16xf32>
    %3 = vector.shape_cast %2 : vector<16xf32> to vector<16x1xf32>
    %cst_1 = arith.constant 1.280000e+02 : f32
    %4 = vector.broadcast %cst_1 : f32 to vector<16x1xf32>
    %5 = arith.divf %3, %4 : vector<16x1xf32>
    %6 = vector.broadcast %5 : vector<16x1xf32> to vector<16x128xf32>
    %7 = arith.subf %1, %6 : vector<16x128xf32>
    %8 = arith.mulf %7, %7 : vector<16x128xf32>
    %cst_2 = arith.constant dense<0.000000e+00> : vector<16xf32>
    %9 = vector.multi_reduction <add>, %8, %cst_2 [1] : vector<16x128xf32> to vector<16xf32>
    %10 = vector.shape_cast %9 : vector<16xf32> to vector<16x1xf32>
    %cst_3 = arith.constant 1.280000e+02 : f32
    %11 = vector.broadcast %cst_3 : f32 to vector<16x1xf32>
    %12 = arith.divf %10, %11 : vector<16x1xf32>
    %cst_4 = arith.constant 9.99999974E-6 : f32
    %13 = vector.broadcast %cst_4 : f32 to vector<16x1xf32>
    %14 = arith.addf %12, %13 : vector<16x1xf32>
    %15 = math.rsqrt %14 : vector<16x1xf32>
    %16 = vector.broadcast %15 : vector<16x1xf32> to vector<16x128xf32>
    %17 = arith.mulf %7, %16 : vector<16x128xf32>
    %c0_5 = arith.constant 0 : index
    %c0_6 = arith.constant 0 : index
    %18 = vector.load %arg2[%c0_5, %c0_6] : memref<1x128xf32, #tpu.memory_space<vmem>>, vector<1x128xf32>
    %19 = vector.broadcast %18 : vector<1x128xf32> to vector<16x128xf32>
    %20 = arith.mulf %17, %19 : vector<16x128xf32>
    %c0_7 = arith.constant 0 : index
    %c0_8 = arith.constant 0 : index
    %21 = vector.load %arg3[%c0_7, %c0_8] : memref<1x128xf32, #tpu.memory_space<vmem>>, vector<1x128xf32>
    %22 = vector.broadcast %21 : vector<1x128xf32> to vector<16x128xf32>
    %23 = arith.addf %20, %22 : vector<16x128xf32>
    %24 = arith.truncf %23 : vector<16x128xf32> to vector<16x128xbf16>
    %c0_9 = arith.constant 0 : index
    %c0_10 = arith.constant 0 : index
    %25 = vector.load %arg4[%c0_9, %c0_10] : memref<128x64xbf16, #tpu.memory_space<vmem>>, vector<128x64xbf16>
    %cst_11 = arith.constant dense<0.000000e+00> : vector<16x64xf32>
    %26 = tpu.matmul %24, %25, %cst_11 {dimension_numbers = #tpu.dot_dimension_numbers<[1], [0], [0], [1], [0, 0, 1, 1], [], []>} : vector<16x128xbf16>, vector<128x64xbf16>, vector<16x64xf32> -> vector<16x64xf32>
    %c0_12 = arith.constant 0 : index
    %c0_13 = arith.constant 0 : index
    %27 = vector.load %arg5[%c0_12, %c0_13] : memref<1x64xf32, #tpu.memory_space<vmem>>, vector<1x64xf32>
    %28 = vector.broadcast %27 : vector<1x64xf32> to vector<16x64xf32>
    %29 = arith.addf %26, %28 : vector<16x64xf32>
    %cst_14 = arith.constant 5.000000e-01 : f32
    %30 = vector.broadcast %cst_14 : f32 to vector<16x64xf32>
    %31 = arith.mulf %30, %29 : vector<16x64xf32>
    %cst_15 = arith.constant 4.471500e-02 : f32
    %32 = vector.broadcast %cst_15 : f32 to vector<16x64xf32>
    %33 = arith.mulf %32, %29 : vector<16x64xf32>
    %34 = arith.mulf %33, %29 : vector<16x64xf32>
    %35 = arith.mulf %34, %29 : vector<16x64xf32>
    %36 = arith.addf %29, %35 : vector<16x64xf32>
    %cst_16 = arith.constant 0.797884583 : f32
    %37 = vector.broadcast %cst_16 : f32 to vector<16x64xf32>
    %38 = arith.mulf %37, %36 : vector<16x64xf32>
    %39 = math.tanh %38 : vector<16x64xf32>
    %cst_17 = arith.constant 1.000000e+00 : f32
    %40 = vector.broadcast %cst_17 : f32 to vector<16x64xf32>
    %41 = arith.addf %40, %39 : vector<16x64xf32>
    %42 = arith.mulf %31, %41 : vector<16x64xf32>
    %43 = arith.truncf %42 : vector<16x64xf32> to vector<16x64xbf16>
    %c0_18 = arith.constant 0 : index
    %c0_19 = arith.constant 0 : index
    %44 = vector.load %arg6[%c0_18, %c0_19] : memref<64x128xbf16, #tpu.memory_space<vmem>>, vector<64x128xbf16>
    %cst_20 = arith.constant dense<0.000000e+00> : vector<16x128xf32>
    %45 = tpu.matmul %43, %44, %cst_20 {dimension_numbers = #tpu.dot_dimension_numbers<[1], [0], [0], [1], [0, 0, 1, 1], [], []>} : vector<16x64xbf16>, vector<64x128xbf16>, vector<16x128xf32> -> vector<16x128xf32>
    %c0_21 = arith.constant 0 : index
    %c0_22 = arith.constant 0 : index
    %46 = vector.load %arg7[%c0_21, %c0_22] : memref<1x128xf32, #tpu.memory_space<vmem>>, vector<1x128xf32>
    %47 = vector.broadcast %46 : vector<1x128xf32> to vector<16x128xf32>
    %48 = arith.addf %45, %47 : vector<16x128xf32>
    %49 = arith.addf %48, %1 : vector<16x128xf32>
    %50 = arith.truncf %49 : vector<16x128xf32> to vector<16x128xbf16>
    %c0_23 = arith.constant 0 : index
    %c0_24 = arith.constant 0 : index
    %51 = vector.load %arg8[%c0_23, %c0_24] : memref<16x128xbf16, #tpu.memory_space<vmem>>, vector<16x128xbf16>
    tpu.vector_store %arg8[%c0_23, %c0_24], %50 {strides = array<i32>} : memref<16x128xbf16, #tpu.memory_space<vmem>>, vector<16x128xbf16>,
    return
  }
  func.func @transform_0(%arg0: i32) -> (i32, i32) {
    %c0_i32 = arith.constant 0 : i32
    %c0_i32_0 = arith.constant 0 : i32
    return %arg0, %c0_i32 : i32, i32
  }
  func.func @transform_1(%arg0: i32) -> (i32, i32) {
    %c0_i32 = arith.constant 0 : i32
    %c0_i32_0 = arith.constant 0 : i32
    %c0_i32_1 = arith.constant 0 : i32
    return %c0_i32, %c0_i32_0 : i32, i32
  }
  func.func @transform_2(%arg0: i32) -> (i32, i32) {
    %c0_i32 = arith.constant 0 : i32
    %c0_i32_0 = arith.constant 0 : i32
    %c0_i32_1 = arith.constant 0 : i32
    return %c0_i32, %c0_i32_0 : i32, i32
  }
  func.func @transform_3(%arg0: i32) -> (i32, i32) {
    %c0_i32 = arith.constant 0 : i32
    %c0_i32_0 = arith.constant 0 : i32
    %c0_i32_1 = arith.constant 0 : i32
    return %c0_i32, %c0_i32_0 : i32, i32
  }
  func.func @transform_4(%arg0: i32) -> (i32, i32) {
    %c0_i32 = arith.constant 0 : i32
    %c0_i32_0 = arith.constant 0 : i32
    %c0_i32_1 = arith.constant 0 : i32
    return %c0_i32, %c0_i32_0 : i32, i32
  }
  func.func @transform_5(%arg0: i32) -> (i32, i32) {
    %c0_i32 = arith.constant 0 : i32
    %c0_i32_0 = arith.constant 0 : i32
    %c0_i32_1 = arith.constant 0 : i32
    return %c0_i32, %c0_i32_0 : i32, i32
  }
  func.func @transform_6(%arg0: i32) -> (i32, i32) {
    %c0_i32 = arith.constant 0 : i32
    %c0_i32_0 = arith.constant 0 : i32
    %c0_i32_1 = arith.constant 0 : i32
    return %c0_i32, %c0_i32_0 : i32, i32
  }
  func.func @transform_7(%arg0: i32) -> (i32, i32) {
    %c0_i32 = arith.constant 0 : i32
    %c0_i32_0 = arith.constant 0 : i32
    return %arg0, %c0_i32 : i32, i32
  }
}

module attributes {stable_mosaic.version = 11 : i64} {
  func.func @_fused_matmul_kernel(%arg0: i32, %arg1: i32, %arg2: i32, %arg3: memref<16x128xbf16, #tpu.memory_space<vmem>>, %arg4: memref<128x256xbf16, #tpu.memory_space<vmem>>, %arg5: memref<1x256xf32, #tpu.memory_space<vmem>>, %arg6: memref<1x128xf32, #tpu.memory_space<vmem>>, %arg7: memref<1x128xf32, #tpu.memory_space<vmem>>, %arg8: memref<16x256xbf16, #tpu.memory_space<vmem>>, %arg9: memref<16x256xf32, #tpu.memory_space<vmem>>) attributes {dimension_semantics = [#tpu.dimension_semantics<parallel>, #tpu.dimension_semantics<parallel>, #tpu.dimension_semantics<arbitrary>], iteration_bounds = array<i64: 2, 1, 1>, scalar_prefetch = 0 : i64, scratch_operands = 1 : i64, tpu.core_type = #tpu.core_type<tc>, window_params = [{transform_indices = @transform_0, window_bounds = array<i64: 16, 128>}, {transform_indices = @transform_1, window_bounds = array<i64: 128, 256>}, {transform_indices = @transform_2, window_bounds = array<i64: 1, 256>}, {pipeline_mode = #tpu.pipeline_mode<synchronous>, transform_indices = @transform_3, window_bounds = array<i64: 1, 128>}, {pipeline_mode = #tpu.pipeline_mode<synchronous>, transform_indices = @transform_4, window_bounds = array<i64: 1, 128>}, {transform_indices = @transform_5, window_bounds = array<i64: 16, 256>}]} {
    %c0_i32 = arith.constant 0 : i32
    %0 = arith.cmpi eq, %arg2, %c0_i32 : i32
    %1 = arith.extui %0 : i1 to i32
    %c0_i32_0 = arith.constant 0 : i32
    %2 = arith.cmpi ne, %1, %c0_i32_0 : i32
    scf.if %2 {
      %cst_19 = arith.constant 0.000000e+00 : f32
      %36 = vector.broadcast %cst_19 : f32 to vector<16x256xf32>
      %c0_20 = arith.constant 0 : index
      %c0_21 = arith.constant 0 : index
      %37 = vector.load %arg9[%c0_20, %c0_21] : memref<16x256xf32, #tpu.memory_space<vmem>>, vector<16x256xf32>
      tpu.vector_store %arg9[%c0_20, %c0_21], %36 {strides = array<i32>} : memref<16x256xf32, #tpu.memory_space<vmem>>, vector<16x256xf32>,
    } else {
    }
    %c0 = arith.constant 0 : index
    %c0_1 = arith.constant 0 : index
    %3 = vector.load %arg3[%c0, %c0_1] : memref<16x128xbf16, #tpu.memory_space<vmem>>, vector<16x128xbf16>
    %4 = arith.extf %3 : vector<16x128xbf16> to vector<16x128xf32>
    %cst = arith.constant dense<0.000000e+00> : vector<16xf32>
    %5 = vector.multi_reduction <add>, %4, %cst [1] : vector<16x128xf32> to vector<16xf32>
    %6 = vector.shape_cast %5 : vector<16xf32> to vector<16x1xf32>
    %cst_2 = arith.constant 1.280000e+02 : f32
    %7 = vector.broadcast %cst_2 : f32 to vector<16x1xf32>
    %8 = arith.divf %6, %7 : vector<16x1xf32>
    %9 = vector.broadcast %8 : vector<16x1xf32> to vector<16x128xf32>
    %10 = arith.subf %4, %9 : vector<16x128xf32>
    %11 = arith.mulf %10, %10 : vector<16x128xf32>
    %cst_3 = arith.constant dense<0.000000e+00> : vector<16xf32>
    %12 = vector.multi_reduction <add>, %11, %cst_3 [1] : vector<16x128xf32> to vector<16xf32>
    %13 = vector.shape_cast %12 : vector<16xf32> to vector<16x1xf32>
    %cst_4 = arith.constant 1.280000e+02 : f32
    %14 = vector.broadcast %cst_4 : f32 to vector<16x1xf32>
    %15 = arith.divf %13, %14 : vector<16x1xf32>
    %cst_5 = arith.constant 9.99999974E-6 : f32
    %16 = vector.broadcast %cst_5 : f32 to vector<16x1xf32>
    %17 = arith.addf %15, %16 : vector<16x1xf32>
    %18 = math.rsqrt %17 : vector<16x1xf32>
    %19 = vector.broadcast %18 : vector<16x1xf32> to vector<16x128xf32>
    %20 = arith.mulf %10, %19 : vector<16x128xf32>
    %c0_6 = arith.constant 0 : index
    %c0_7 = arith.constant 0 : index
    %21 = vector.load %arg6[%c0_6, %c0_7] : memref<1x128xf32, #tpu.memory_space<vmem>>, vector<1x128xf32>
    %22 = vector.broadcast %21 : vector<1x128xf32> to vector<16x128xf32>
    %23 = arith.mulf %20, %22 : vector<16x128xf32>
    %c0_8 = arith.constant 0 : index
    %c0_9 = arith.constant 0 : index
    %24 = vector.load %arg7[%c0_8, %c0_9] : memref<1x128xf32, #tpu.memory_space<vmem>>, vector<1x128xf32>
    %25 = vector.broadcast %24 : vector<1x128xf32> to vector<16x128xf32>
    %26 = arith.addf %23, %25 : vector<16x128xf32>
    %c0_10 = arith.constant 0 : index
    %c0_11 = arith.constant 0 : index
    %27 = vector.load %arg9[%c0_10, %c0_11] : memref<16x256xf32, #tpu.memory_space<vmem>>, vector<16x256xf32>
    %28 = arith.truncf %26 : vector<16x128xf32> to vector<16x128xbf16>
    %c0_12 = arith.constant 0 : index
    %c0_13 = arith.constant 0 : index
    %29 = vector.load %arg4[%c0_12, %c0_13] : memref<128x256xbf16, #tpu.memory_space<vmem>>, vector<128x256xbf16>
    %cst_14 = arith.constant dense<0.000000e+00> : vector<16x256xf32>
    %30 = tpu.matmul %28, %29, %cst_14 {dimension_numbers = #tpu.dot_dimension_numbers<[1], [0], [0], [1], [0, 0, 1, 1], [], []>} : vector<16x128xbf16>, vector<128x256xbf16>, vector<16x256xf32> -> vector<16x256xf32>
    %31 = arith.addf %27, %30 : vector<16x256xf32>
    %c0_15 = arith.constant 0 : index
    %c0_16 = arith.constant 0 : index
    %32 = vector.load %arg9[%c0_15, %c0_16] : memref<16x256xf32, #tpu.memory_space<vmem>>, vector<16x256xf32>
    tpu.vector_store %arg9[%c0_15, %c0_16], %31 {strides = array<i32>} : memref<16x256xf32, #tpu.memory_space<vmem>>, vector<16x256xf32>,
    %c0_i32_17 = arith.constant 0 : i32
    %33 = arith.cmpi eq, %arg2, %c0_i32_17 : i32
    %34 = arith.extui %33 : i1 to i32
    %c0_i32_18 = arith.constant 0 : i32
    %35 = arith.cmpi ne, %34, %c0_i32_18 : i32
    scf.if %35 {
      %c0_19 = arith.constant 0 : index
      %c0_20 = arith.constant 0 : index
      %36 = vector.load %arg9[%c0_19, %c0_20] : memref<16x256xf32, #tpu.memory_space<vmem>>, vector<16x256xf32>
      %c0_21 = arith.constant 0 : index
      %c0_22 = arith.constant 0 : index
      %37 = vector.load %arg5[%c0_21, %c0_22] : memref<1x256xf32, #tpu.memory_space<vmem>>, vector<1x256xf32>
      %38 = vector.broadcast %37 : vector<1x256xf32> to vector<16x256xf32>
      %39 = arith.addf %36, %38 : vector<16x256xf32>
      %cst_23 = arith.constant 0.000000e+00 : f32
      %40 = vector.broadcast %cst_23 : f32 to vector<16x256xf32>
      %41 = arith.maximumf %39, %40 : vector<16x256xf32>
      %42 = arith.truncf %41 : vector<16x256xf32> to vector<16x256xbf16>
      %c0_24 = arith.constant 0 : index
      %c0_25 = arith.constant 0 : index
      %43 = vector.load %arg8[%c0_24, %c0_25] : memref<16x256xbf16, #tpu.memory_space<vmem>>, vector<16x256xbf16>
      tpu.vector_store %arg8[%c0_24, %c0_25], %42 {strides = array<i32>} : memref<16x256xbf16, #tpu.memory_space<vmem>>, vector<16x256xbf16>,
    } else {
    }
    return
  }
  func.func @transform_0(%arg0: i32, %arg1: i32, %arg2: i32) -> (i32, i32) {
    %c0_i32 = arith.constant 0 : i32
    return %arg0, %arg2 : i32, i32
  }
  func.func @transform_1(%arg0: i32, %arg1: i32, %arg2: i32) -> (i32, i32) {
    %c0_i32 = arith.constant 0 : i32
    return %arg2, %arg1 : i32, i32
  }
  func.func @transform_2(%arg0: i32, %arg1: i32, %arg2: i32) -> (i32, i32) {
    %c0_i32 = arith.constant 0 : i32
    %c0_i32_0 = arith.constant 0 : i32
    return %c0_i32, %arg1 : i32, i32
  }
  func.func @transform_3(%arg0: i32, %arg1: i32, %arg2: i32) -> (i32, i32) {
    %c0_i32 = arith.constant 0 : i32
    %c0_i32_0 = arith.constant 0 : i32
    %c0_i32_1 = arith.constant 0 : i32
    return %c0_i32, %c0_i32_0 : i32, i32
  }
  func.func @transform_4(%arg0: i32, %arg1: i32, %arg2: i32) -> (i32, i32) {
    %c0_i32 = arith.constant 0 : i32
    %c0_i32_0 = arith.constant 0 : i32
    %c0_i32_1 = arith.constant 0 : i32
    return %c0_i32, %c0_i32_0 : i32, i32
  }
  func.func @transform_5(%arg0: i32, %arg1: i32, %arg2: i32) -> (i32, i32) {
    %c0_i32 = arith.constant 0 : i32
    return %arg0, %arg1 : i32, i32
  }
}

module attributes {stable_mosaic.version = 11 : i64} {
  func.func @_ffn_block_kernel(%arg0: i32, %arg1: memref<64x64xbf16, #tpu.memory_space<vmem>>, %arg2: memref<64x128xbf16, #tpu.memory_space<vmem>>, %arg3: memref<1x128xf32, #tpu.memory_space<vmem>>, %arg4: memref<128x20xbf16, #tpu.memory_space<vmem>>, %arg5: memref<1x20xf32, #tpu.memory_space<vmem>>, %arg6: memref<64x20xf32, #tpu.memory_space<vmem>>) attributes {dimension_semantics = [#tpu.dimension_semantics<parallel>], iteration_bounds = array<i64: 2>, scalar_prefetch = 0 : i64, scratch_operands = 0 : i64, tpu.core_type = #tpu.core_type<tc>, window_params = [{transform_indices = @transform_0, window_bounds = array<i64: 64, 64>}, {pipeline_mode = #tpu.pipeline_mode<synchronous>, transform_indices = @transform_1, window_bounds = array<i64: 64, 128>}, {pipeline_mode = #tpu.pipeline_mode<synchronous>, transform_indices = @transform_2, window_bounds = array<i64: 1, 128>}, {pipeline_mode = #tpu.pipeline_mode<synchronous>, transform_indices = @transform_3, window_bounds = array<i64: 128, 20>}, {pipeline_mode = #tpu.pipeline_mode<synchronous>, transform_indices = @transform_4, window_bounds = array<i64: 1, 20>}, {transform_indices = @transform_5, window_bounds = array<i64: 64, 20>}]} {
    %c0 = arith.constant 0 : index
    %c0_0 = arith.constant 0 : index
    %0 = vector.load %arg1[%c0, %c0_0] : memref<64x64xbf16, #tpu.memory_space<vmem>>, vector<64x64xbf16>
    %1 = arith.extf %0 : vector<64x64xbf16> to vector<64x64xf32>
    %2 = arith.truncf %1 : vector<64x64xf32> to vector<64x64xbf16>
    %c0_1 = arith.constant 0 : index
    %c0_2 = arith.constant 0 : index
    %3 = vector.load %arg2[%c0_1, %c0_2] : memref<64x128xbf16, #tpu.memory_space<vmem>>, vector<64x128xbf16>
    %cst = arith.constant dense<0.000000e+00> : vector<64x128xf32>
    %4 = tpu.matmul %2, %3, %cst {dimension_numbers = #tpu.dot_dimension_numbers<[1], [0], [0], [1], [0, 0, 1, 1], [], []>} : vector<64x64xbf16>, vector<64x128xbf16>, vector<64x128xf32> -> vector<64x128xf32>
    %c0_3 = arith.constant 0 : index
    %c0_4 = arith.constant 0 : index
    %5 = vector.load %arg3[%c0_3, %c0_4] : memref<1x128xf32, #tpu.memory_space<vmem>>, vector<1x128xf32>
    %6 = vector.broadcast %5 : vector<1x128xf32> to vector<64x128xf32>
    %7 = arith.addf %4, %6 : vector<64x128xf32>
    %cst_5 = arith.constant 0.000000e+00 : f32
    %8 = vector.broadcast %cst_5 : f32 to vector<64x128xf32>
    %9 = arith.maximumf %7, %8 : vector<64x128xf32>
    %10 = arith.truncf %9 : vector<64x128xf32> to vector<64x128xbf16>
    %c0_6 = arith.constant 0 : index
    %c0_7 = arith.constant 0 : index
    %11 = vector.load %arg4[%c0_6, %c0_7] : memref<128x20xbf16, #tpu.memory_space<vmem>>, vector<128x20xbf16>
    %cst_8 = arith.constant dense<0.000000e+00> : vector<64x20xf32>
    %12 = tpu.matmul %10, %11, %cst_8 {dimension_numbers = #tpu.dot_dimension_numbers<[1], [0], [0], [1], [0, 0, 1, 1], [], []>} : vector<64x128xbf16>, vector<128x20xbf16>, vector<64x20xf32> -> vector<64x20xf32>
    %c0_9 = arith.constant 0 : index
    %c0_10 = arith.constant 0 : index
    %13 = vector.load %arg5[%c0_9, %c0_10] : memref<1x20xf32, #tpu.memory_space<vmem>>, vector<1x20xf32>
    %14 = vector.broadcast %13 : vector<1x20xf32> to vector<64x20xf32>
    %15 = arith.addf %12, %14 : vector<64x20xf32>
    %c0_11 = arith.constant 0 : index
    %c0_12 = arith.constant 0 : index
    %16 = vector.load %arg6[%c0_11, %c0_12] : memref<64x20xf32, #tpu.memory_space<vmem>>, vector<64x20xf32>
    tpu.vector_store %arg6[%c0_11, %c0_12], %15 {strides = array<i32>} : memref<64x20xf32, #tpu.memory_space<vmem>>, vector<64x20xf32>,
    return
  }
  func.func @transform_0(%arg0: i32) -> (i32, i32) {
    %c0_i32 = arith.constant 0 : i32
    %c0_i32_0 = arith.constant 0 : i32
    return %arg0, %c0_i32 : i32, i32
  }
  func.func @transform_1(%arg0: i32) -> (i32, i32) {
    %c0_i32 = arith.constant 0 : i32
    %c0_i32_0 = arith.constant 0 : i32
    %c0_i32_1 = arith.constant 0 : i32
    return %c0_i32, %c0_i32_0 : i32, i32
  }
  func.func @transform_2(%arg0: i32) -> (i32, i32) {
    %c0_i32 = arith.constant 0 : i32
    %c0_i32_0 = arith.constant 0 : i32
    %c0_i32_1 = arith.constant 0 : i32
    return %c0_i32, %c0_i32_0 : i32, i32
  }
  func.func @transform_3(%arg0: i32) -> (i32, i32) {
    %c0_i32 = arith.constant 0 : i32
    %c0_i32_0 = arith.constant 0 : i32
    %c0_i32_1 = arith.constant 0 : i32
    return %c0_i32, %c0_i32_0 : i32, i32
  }
  func.func @transform_4(%arg0: i32) -> (i32, i32) {
    %c0_i32 = arith.constant 0 : i32
    %c0_i32_0 = arith.constant 0 : i32
    %c0_i32_1 = arith.constant 0 : i32
    return %c0_i32, %c0_i32_0 : i32, i32
  }
  func.func @transform_5(%arg0: i32) -> (i32, i32) {
    %c0_i32 = arith.constant 0 : i32
    %c0_i32_0 = arith.constant 0 : i32
    return %arg0, %c0_i32 : i32, i32
  }
}

module attributes {stable_mosaic.version = 11 : i64} {
  func.func @_upsample_kernel(%arg0: i32, %arg1: memref<5x16x16xf32, #tpu.memory_space<vmem>>, %arg2: memref<32x16xf32, #tpu.memory_space<vmem>>, %arg3: memref<16x32xf32, #tpu.memory_space<vmem>>, %arg4: memref<5x32x32xf32, #tpu.memory_space<vmem>>) attributes {dimension_semantics = [#tpu.dimension_semantics<parallel>], iteration_bounds = array<i64: 2>, scalar_prefetch = 0 : i64, scratch_operands = 0 : i64, tpu.core_type = #tpu.core_type<tc>, window_params = [{transform_indices = @transform_0, window_bounds = array<i64: 5, 16, 16>}, {pipeline_mode = #tpu.pipeline_mode<synchronous>, transform_indices = @transform_1, window_bounds = array<i64: 32, 16>}, {pipeline_mode = #tpu.pipeline_mode<synchronous>, transform_indices = @transform_2, window_bounds = array<i64: 16, 32>}, {transform_indices = @transform_3, window_bounds = array<i64: 5, 32, 32>}]} {
    %c0 = arith.constant 0 : index
    %c0_0 = arith.constant 0 : index
    %0 = vector.load %arg2[%c0, %c0_0] : memref<32x16xf32, #tpu.memory_space<vmem>>, vector<32x16xf32>
    %c0_1 = arith.constant 0 : index
    %c0_2 = arith.constant 0 : index
    %c0_3 = arith.constant 0 : index
    %1 = vector.load %arg1[%c0_1, %c0_2, %c0_3] : memref<5x16x16xf32, #tpu.memory_space<vmem>>, vector<1x16x16xf32>
    %2 = vector.shape_cast %1 : vector<1x16x16xf32> to vector<16x16xf32>
    %cst = arith.constant dense<0.000000e+00> : vector<32x16xf32>
    %3 = tpu.matmul %0, %2, %cst {dimension_numbers = #tpu.dot_dimension_numbers<[1], [0], [0], [1], [0, 0, 1, 1], [], []>} : vector<32x16xf32>, vector<16x16xf32>, vector<32x16xf32> -> vector<32x16xf32>
    %c0_4 = arith.constant 0 : index
    %c0_5 = arith.constant 0 : index
    %4 = vector.load %arg3[%c0_4, %c0_5] : memref<16x32xf32, #tpu.memory_space<vmem>>, vector<16x32xf32>
    %cst_6 = arith.constant dense<0.000000e+00> : vector<32x32xf32>
    %5 = tpu.matmul %3, %4, %cst_6 {dimension_numbers = #tpu.dot_dimension_numbers<[1], [0], [0], [1], [0, 0, 1, 1], [], []>} : vector<32x16xf32>, vector<16x32xf32>, vector<32x32xf32> -> vector<32x32xf32>
    %c0_7 = arith.constant 0 : index
    %c0_8 = arith.constant 0 : index
    %c0_9 = arith.constant 0 : index
    %6 = vector.load %arg4[%c0_7, %c0_8, %c0_9] : memref<5x32x32xf32, #tpu.memory_space<vmem>>, vector<1x32x32xf32>
    %7 = vector.shape_cast %6 : vector<1x32x32xf32> to vector<32x32xf32>
    %8 = vector.shape_cast %5 : vector<32x32xf32> to vector<1x32x32xf32>
    tpu.vector_store %arg4[%c0_7, %c0_8, %c0_9], %8 {strides = array<i32>} : memref<5x32x32xf32, #tpu.memory_space<vmem>>, vector<1x32x32xf32>,
    %c0_10 = arith.constant 0 : index
    %c0_11 = arith.constant 0 : index
    %9 = vector.load %arg2[%c0_10, %c0_11] : memref<32x16xf32, #tpu.memory_space<vmem>>, vector<32x16xf32>
    %c1 = arith.constant 1 : index
    %c0_12 = arith.constant 0 : index
    %c0_13 = arith.constant 0 : index
    %10 = vector.load %arg1[%c1, %c0_12, %c0_13] : memref<5x16x16xf32, #tpu.memory_space<vmem>>, vector<1x16x16xf32>
    %11 = vector.shape_cast %10 : vector<1x16x16xf32> to vector<16x16xf32>
    %cst_14 = arith.constant dense<0.000000e+00> : vector<32x16xf32>
    %12 = tpu.matmul %9, %11, %cst_14 {dimension_numbers = #tpu.dot_dimension_numbers<[1], [0], [0], [1], [0, 0, 1, 1], [], []>} : vector<32x16xf32>, vector<16x16xf32>, vector<32x16xf32> -> vector<32x16xf32>
    %c0_15 = arith.constant 0 : index
    %c0_16 = arith.constant 0 : index
    %13 = vector.load %arg3[%c0_15, %c0_16] : memref<16x32xf32, #tpu.memory_space<vmem>>, vector<16x32xf32>
    %cst_17 = arith.constant dense<0.000000e+00> : vector<32x32xf32>
    %14 = tpu.matmul %12, %13, %cst_17 {dimension_numbers = #tpu.dot_dimension_numbers<[1], [0], [0], [1], [0, 0, 1, 1], [], []>} : vector<32x16xf32>, vector<16x32xf32>, vector<32x32xf32> -> vector<32x32xf32>
    %c1_18 = arith.constant 1 : index
    %c0_19 = arith.constant 0 : index
    %c0_20 = arith.constant 0 : index
    %15 = vector.load %arg4[%c1_18, %c0_19, %c0_20] : memref<5x32x32xf32, #tpu.memory_space<vmem>>, vector<1x32x32xf32>
    %16 = vector.shape_cast %15 : vector<1x32x32xf32> to vector<32x32xf32>
    %17 = vector.shape_cast %14 : vector<32x32xf32> to vector<1x32x32xf32>
    tpu.vector_store %arg4[%c1_18, %c0_19, %c0_20], %17 {strides = array<i32>} : memref<5x32x32xf32, #tpu.memory_space<vmem>>, vector<1x32x32xf32>,
    %c0_21 = arith.constant 0 : index
    %c0_22 = arith.constant 0 : index
    %18 = vector.load %arg2[%c0_21, %c0_22] : memref<32x16xf32, #tpu.memory_space<vmem>>, vector<32x16xf32>
    %c2 = arith.constant 2 : index
    %c0_23 = arith.constant 0 : index
    %c0_24 = arith.constant 0 : index
    %19 = vector.load %arg1[%c2, %c0_23, %c0_24] : memref<5x16x16xf32, #tpu.memory_space<vmem>>, vector<1x16x16xf32>
    %20 = vector.shape_cast %19 : vector<1x16x16xf32> to vector<16x16xf32>
    %cst_25 = arith.constant dense<0.000000e+00> : vector<32x16xf32>
    %21 = tpu.matmul %18, %20, %cst_25 {dimension_numbers = #tpu.dot_dimension_numbers<[1], [0], [0], [1], [0, 0, 1, 1], [], []>} : vector<32x16xf32>, vector<16x16xf32>, vector<32x16xf32> -> vector<32x16xf32>
    %c0_26 = arith.constant 0 : index
    %c0_27 = arith.constant 0 : index
    %22 = vector.load %arg3[%c0_26, %c0_27] : memref<16x32xf32, #tpu.memory_space<vmem>>, vector<16x32xf32>
    %cst_28 = arith.constant dense<0.000000e+00> : vector<32x32xf32>
    %23 = tpu.matmul %21, %22, %cst_28 {dimension_numbers = #tpu.dot_dimension_numbers<[1], [0], [0], [1], [0, 0, 1, 1], [], []>} : vector<32x16xf32>, vector<16x32xf32>, vector<32x32xf32> -> vector<32x32xf32>
    %c2_29 = arith.constant 2 : index
    %c0_30 = arith.constant 0 : index
    %c0_31 = arith.constant 0 : index
    %24 = vector.load %arg4[%c2_29, %c0_30, %c0_31] : memref<5x32x32xf32, #tpu.memory_space<vmem>>, vector<1x32x32xf32>
    %25 = vector.shape_cast %24 : vector<1x32x32xf32> to vector<32x32xf32>
    %26 = vector.shape_cast %23 : vector<32x32xf32> to vector<1x32x32xf32>
    tpu.vector_store %arg4[%c2_29, %c0_30, %c0_31], %26 {strides = array<i32>} : memref<5x32x32xf32, #tpu.memory_space<vmem>>, vector<1x32x32xf32>,
    %c0_32 = arith.constant 0 : index
    %c0_33 = arith.constant 0 : index
    %27 = vector.load %arg2[%c0_32, %c0_33] : memref<32x16xf32, #tpu.memory_space<vmem>>, vector<32x16xf32>
    %c3 = arith.constant 3 : index
    %c0_34 = arith.constant 0 : index
    %c0_35 = arith.constant 0 : index
    %28 = vector.load %arg1[%c3, %c0_34, %c0_35] : memref<5x16x16xf32, #tpu.memory_space<vmem>>, vector<1x16x16xf32>
    %29 = vector.shape_cast %28 : vector<1x16x16xf32> to vector<16x16xf32>
    %cst_36 = arith.constant dense<0.000000e+00> : vector<32x16xf32>
    %30 = tpu.matmul %27, %29, %cst_36 {dimension_numbers = #tpu.dot_dimension_numbers<[1], [0], [0], [1], [0, 0, 1, 1], [], []>} : vector<32x16xf32>, vector<16x16xf32>, vector<32x16xf32> -> vector<32x16xf32>
    %c0_37 = arith.constant 0 : index
    %c0_38 = arith.constant 0 : index
    %31 = vector.load %arg3[%c0_37, %c0_38] : memref<16x32xf32, #tpu.memory_space<vmem>>, vector<16x32xf32>
    %cst_39 = arith.constant dense<0.000000e+00> : vector<32x32xf32>
    %32 = tpu.matmul %30, %31, %cst_39 {dimension_numbers = #tpu.dot_dimension_numbers<[1], [0], [0], [1], [0, 0, 1, 1], [], []>} : vector<32x16xf32>, vector<16x32xf32>, vector<32x32xf32> -> vector<32x32xf32>
    %c3_40 = arith.constant 3 : index
    %c0_41 = arith.constant 0 : index
    %c0_42 = arith.constant 0 : index
    %33 = vector.load %arg4[%c3_40, %c0_41, %c0_42] : memref<5x32x32xf32, #tpu.memory_space<vmem>>, vector<1x32x32xf32>
    %34 = vector.shape_cast %33 : vector<1x32x32xf32> to vector<32x32xf32>
    %35 = vector.shape_cast %32 : vector<32x32xf32> to vector<1x32x32xf32>
    tpu.vector_store %arg4[%c3_40, %c0_41, %c0_42], %35 {strides = array<i32>} : memref<5x32x32xf32, #tpu.memory_space<vmem>>, vector<1x32x32xf32>,
    %c0_43 = arith.constant 0 : index
    %c0_44 = arith.constant 0 : index
    %36 = vector.load %arg2[%c0_43, %c0_44] : memref<32x16xf32, #tpu.memory_space<vmem>>, vector<32x16xf32>
    %c4 = arith.constant 4 : index
    %c0_45 = arith.constant 0 : index
    %c0_46 = arith.constant 0 : index
    %37 = vector.load %arg1[%c4, %c0_45, %c0_46] : memref<5x16x16xf32, #tpu.memory_space<vmem>>, vector<1x16x16xf32>
    %38 = vector.shape_cast %37 : vector<1x16x16xf32> to vector<16x16xf32>
    %cst_47 = arith.constant dense<0.000000e+00> : vector<32x16xf32>
    %39 = tpu.matmul %36, %38, %cst_47 {dimension_numbers = #tpu.dot_dimension_numbers<[1], [0], [0], [1], [0, 0, 1, 1], [], []>} : vector<32x16xf32>, vector<16x16xf32>, vector<32x16xf32> -> vector<32x16xf32>
    %c0_48 = arith.constant 0 : index
    %c0_49 = arith.constant 0 : index
    %40 = vector.load %arg3[%c0_48, %c0_49] : memref<16x32xf32, #tpu.memory_space<vmem>>, vector<16x32xf32>
    %cst_50 = arith.constant dense<0.000000e+00> : vector<32x32xf32>
    %41 = tpu.matmul %39, %40, %cst_50 {dimension_numbers = #tpu.dot_dimension_numbers<[1], [0], [0], [1], [0, 0, 1, 1], [], []>} : vector<32x16xf32>, vector<16x32xf32>, vector<32x32xf32> -> vector<32x32xf32>
    %c4_51 = arith.constant 4 : index
    %c0_52 = arith.constant 0 : index
    %c0_53 = arith.constant 0 : index
    %42 = vector.load %arg4[%c4_51, %c0_52, %c0_53] : memref<5x32x32xf32, #tpu.memory_space<vmem>>, vector<1x32x32xf32>
    %43 = vector.shape_cast %42 : vector<1x32x32xf32> to vector<32x32xf32>
    %44 = vector.shape_cast %41 : vector<32x32xf32> to vector<1x32x32xf32>
    tpu.vector_store %arg4[%c4_51, %c0_52, %c0_53], %44 {strides = array<i32>} : memref<5x32x32xf32, #tpu.memory_space<vmem>>, vector<1x32x32xf32>,
    return
  }
  func.func @transform_0(%arg0: i32) -> (i32, i32, i32) {
    %c0_i32 = arith.constant 0 : i32
    %c0_i32_0 = arith.constant 0 : i32
    %c0_i32_1 = arith.constant 0 : i32
    return %arg0, %c0_i32, %c0_i32_0 : i32, i32, i32
  }
  func.func @transform_1(%arg0: i32) -> (i32, i32) {
    %c0_i32 = arith.constant 0 : i32
    %c0_i32_0 = arith.constant 0 : i32
    %c0_i32_1 = arith.constant 0 : i32
    return %c0_i32, %c0_i32_0 : i32, i32
  }
  func.func @transform_2(%arg0: i32) -> (i32, i32) {
    %c0_i32 = arith.constant 0 : i32
    %c0_i32_0 = arith.constant 0 : i32
    %c0_i32_1 = arith.constant 0 : i32
    return %c0_i32, %c0_i32_0 : i32, i32
  }
  func.func @transform_3(%arg0: i32) -> (i32, i32, i32) {
    %c0_i32 = arith.constant 0 : i32
    %c0_i32_0 = arith.constant 0 : i32
    %c0_i32_1 = arith.constant 0 : i32
    return %arg0, %c0_i32, %c0_i32_0 : i32, i32, i32
  }
}

</mosaic_0001>

<llo_original>
// kernel: tile.18
$region0: #{tile.18}
  #allocation0 [shape = 's32[1]{0}', space=sflag, size = 0x4, scoped, tag = 'scoped memory for tile.18']
  %s0 = inlined_call_operand.vmem [shape: f32[64], index: 0, kind: input, shape index: {}]
  %s1 = inlined_call_operand.vmem [shape: f32[4,64], index: 1, kind: output, shape index: {}]
  // Predicated region
  $region2: #{tile.18} parent=0 // pred_check
    _
  $region3: #{tile.18} parent=0 // pred_check_branch
    %3 = sbr.rel (0) target = $region5
  $region4: #{tile.18} parent=0 // pred_region
    _
  $region5: #{tile.18} parent=0 // pred_fallthru
    _
  %v4 = vld [vmem:[%s0] ss:$0 sm:$0xff]
  %5 = vst [vmem:[%s1] sm:$0xf] %v4

// kernel: tile.19
$region0: #{tile.19}
  %s0 = inlined_call_operand.vmem [shape: f32[4,64], index: 0, kind: input, shape index: {}]
  %s1 = inlined_call_operand.vmem [shape: f32[1,256], index: 1, kind: output, shape index: {}]
  $region1: #{tile.19} parent=0
    #allocation0 [shape = 'u8[8192]{0}', space=vmem, size = 0x2000, scoped, tag = 'scoped mem for output reshape']
    #allocation1 [shape = 'u8[4096]{0}', space=vmem, size = 0x1000, scoped, tag = 'scoped mem for input reshape']
    %s3 = sshllo.u32 0, 4
    %v4 = vld [vmem:[%s0] sm:%s3]
    %5 = vst [vmem:[#allocation1] sm:%s3] %v4
    %s6 = smov 3
    %v7 = vld [vmem:[#allocation1] ss:$2 sm:%s6]
    %vm8 = vcmask 523264
    %9 = vst.msk [vmem:[#allocation0] ss:$8 sm:$0x3] %vm8, %v7
    %s10 = scalar_lea.vmem [#allocation1], 1
    %s11 = smov 3
    %v12 = vld [vmem:[%s10] ss:$2 sm:%s11]
    %13 = vrot.lane.b32.xlu0 %v12, 64
    %v14 = vpop.permute.xlu0 %13
    %vm15 = vcmask 1048064
    %16 = vst.msk [vmem:[#allocation0] ss:$8 sm:$0x3] %vm15, %v14
    %s18 = sshllo.u32 0, 1
    %v20 = vld [vmem:[#allocation0] sm:%s18]
    %s21 = sshllo.u32 0, 1
    %22 = vst [vmem:[%s1] sm:%s21] %v20
    %s23 = scalar_lea.vmem [#allocation0], 8
    %v24 = vld [vmem:[%s23] sm:%s18]
    %s25 = sshllo.u32 0, 1
    %s26 = scalar_lea.vmem %s1, 1
    %27 = vst [vmem:[%s26] sm:%s25] %v24

// kernel: segmentation_vit_forward.8
$region0: #{segmentation_vit_forward.8}
  #allocation0 [shape = 'u32[]', space=smem, size = 0x4, offset = 0x4, fixed_abs, tag = 'smem constant byte address 0x4 - core index']
  #allocation1 [shape = 'u32[144,128]{1,0:T(1,128)}', space=vmem, size = 0x12000, scoped, tag = 'internal scratch']
  #allocation2 [shape = 'f32[16,128]{1,0:T(8,128)}', space=vmem, size = 0x2000, scoped, tag = 'scratch operand']
  %s0 = inlined_call_operand.vmem [shape: bf16[32,256], index: 0, kind: input, shape index: {}]
  %s1 = inlined_call_operand.vmem [shape: bf16[256,128], index: 1, kind: input, shape index: {}]
  %s2 = inlined_call_operand.vmem [shape: f32[1,128], index: 2, kind: input, shape index: {}]
  %s3 = inlined_call_operand.vmem [shape: f32[32,128], index: 3, kind: output, shape index: {}]
  %s4 = sld [smem:[#allocation0]]
  $region53: #{segmentation_vit_forward.8} parent=0
    _
  %s6 = ssub.s32 1, %s4
  %s7 = scalar_select 0, %s6, %s4
  loop: start=0, step=1, limit=4
  $region2: #{segmentation_vit_forward.8} parent=0 // loop_pre_header
    _
  $region3: #{segmentation_vit_forward.8} parent=0 // loop_header
    %s9 = sphi 0, %s13
    %p10 = scmp.ge.s32.totalorder %s9, 4
    %s16 = sphi 0, %s35
    %s17 = sphi 0, %s31
    %s18 = sphi 0, %s27
    %s19 = sphi 0, %s16
    %s20 = sphi 0, %s17
    %s21 = sphi 0, %s18
    %s22 = sphi 0, %s19
    %s23 = sphi 0, %s20
    %s24 = sphi 0, %s21
    %s40 = sphi 0, %s42
    %s43 = sphi 0, %s40
    %s44 = sphi 0, %s43
    %s60 = sphi 0, %s44
    %s68 = sphi 0, %s70
    %s71 = sphi 0, %s68
    %s72 = sphi 0, %s71
    %s88 = sphi 0, %s72
    %s94 = sphi 0, %s96
    %s97 = sphi 0, %s94
    %s98 = sphi 0, %s97
    %s114 = sphi 0, %s98
    %s122 = sphi 0, %s124
    %s125 = sphi 0, %s122
    %s126 = sphi 0, %s125
    %s142 = sphi 0, %s126
  $region4: #{segmentation_vit_forward.8} parent=0 // loop_header_branch
    %12 = sbr.rel (%p10) target = $region8
  $region5: #{segmentation_vit_forward.8} parent=0 // loop_body
    %s14 = ssub.s32 %s9, 1
    %s15 = ssub.s32 %s9, 2
    %s25 = sadd.s32 1, %s18
    %p26 = scmp.ge.s32.totalorder %s25, 1
    %s27 = scalar_select %p26, 0, %s25
    %s28 = sadd.s32 1, %s17
    %s29 = scalar_select %p26, %s28, %s17
    %p30 = scmp.ge.s32.totalorder %s29, 1
    %s31 = scalar_select %p30, 0, %s29
    %s32 = sadd.s32 1, %s16
    %s33 = scalar_select %p30, %s32, %s16
    %p34 = scmp.ge.s32.totalorder %s33, 2
    %s35 = scalar_select %p34, 0, %s33
    %s36 = ssub.s32 %s16, %s35
    %s37 = ssub.s32 %s18, %s27
    %s38 = sor.u32 %s36, %s37
    %p39 = scmp.eq.s32.totalorder %s38, 0
    %s41 = sadd.s32 %s40, 1
    %s42 = scalar_select %p39, %s40, %s41
    %p45 = pneg %p39
    %p46 = scmp.eq.s32.totalorder %s9, 1
    %p47 = por %p45, %p46
    %p48 = scmp.ne.s32.totalorder %s40, %s43
    %p49 = scmp.eq.s32.totalorder %s9, 0
    %p50 = por %p48, %p49
    %p51 = scmp.ne.s32.totalorder %s40, %s43
    %p52 = scmp.eq.s32.totalorder %s14, 1
    %p53 = por %p51, %p52
    %p54 = scmp.ne.s32.totalorder %s43, %s44
    %p55 = scmp.eq.s32.totalorder %s14, 0
    %p56 = por %p54, %p55
    %p57 = scmp.ne.s32.totalorder %s43, %s44
    %p58 = scmp.eq.s32.totalorder %s15, 1
    %p59 = por %p57, %p58
    %p61 = scmp.ne.s32.totalorder %s44, %s60
    %p62 = scmp.eq.s32.totalorder %s15, 0
    %p63 = por %p61, %p62
    %s64 = ssub.s32 %s18, %s27
    %s65 = ssub.s32 %s17, %s31
    %s66 = sor.u32 %s64, %s65
    %p67 = scmp.eq.s32.totalorder %s66, 0
    %s69 = sadd.s32 %s68, 1
    %s70 = scalar_select %p67, %s68, %s69
    %p73 = pneg %p67
    %p74 = scmp.eq.s32.totalorder %s9, 1
    %p75 = por %p73, %p74
    %p76 = scmp.ne.s32.totalorder %s68, %s71
    %p77 = scmp.eq.s32.totalorder %s9, 0
    %p78 = por %p76, %p77
    %p79 = scmp.ne.s32.totalorder %s68, %s71
    %p80 = scmp.eq.s32.totalorder %s14, 1
    %p81 = por %p79, %p80
    %p82 = scmp.ne.s32.totalorder %s71, %s72
    %p83 = scmp.eq.s32.totalorder %s14, 0
    %p84 = por %p82, %p83
    %p85 = scmp.ne.s32.totalorder %s71, %s72
    %p86 = scmp.eq.s32.totalorder %s15, 1
    %p87 = por %p85, %p86
    %p89 = scmp.ne.s32.totalorder %s72, %s88
    %p90 = scmp.eq.s32.totalorder %s15, 0
    %p91 = por %p89, %p90
    %s92 = ssub.s32 %s17, %s31
    %p93 = scmp.eq.s32.totalorder %s92, 0
    %s95 = sadd.s32 %s94, 1
    %s96 = scalar_select %p93, %s94, %s95
    %p99 = pneg %p93
    %p100 = scmp.eq.s32.totalorder %s9, 1
    %p101 = por %p99, %p100
    %p102 = scmp.ne.s32.totalorder %s94, %s97
    %p103 = scmp.eq.s32.totalorder %s9, 0
    %p104 = por %p102, %p103
    %p105 = scmp.ne.s32.totalorder %s94, %s97
    %p106 = scmp.eq.s32.totalorder %s14, 1
    %p107 = por %p105, %p106
    %p108 = scmp.ne.s32.totalorder %s97, %s98
    %p109 = scmp.eq.s32.totalorder %s14, 0
    %p110 = por %p108, %p109
    %p111 = scmp.ne.s32.totalorder %s97, %s98
    %p112 = scmp.eq.s32.totalorder %s15, 1
    %p113 = por %p111, %p112
    %p115 = scmp.ne.s32.totalorder %s98, %s114
    %p116 = scmp.eq.s32.totalorder %s15, 0
    %p117 = por %p115, %p116
    %s118 = ssub.s32 %s16, %s35
    %s119 = ssub.s32 %s17, %s31
    %s120 = sor.u32 %s118, %s119
    %p121 = scmp.eq.s32.totalorder %s120, 0
    %s123 = sadd.s32 %s122, 1
    %s124 = scalar_select %p121, %s122, %s123
    %p127 = pneg %p121
    %p128 = scmp.eq.s32.totalorder %s9, 1
    %p129 = por %p127, %p128
    %p130 = scmp.ne.s32.totalorder %s122, %s125
    %p131 = scmp.eq.s32.totalorder %s9, 0
    %p132 = por %p130, %p131
    %p133 = scmp.ne.s32.totalorder %s122, %s125
    %p134 = scmp.eq.s32.totalorder %s14, 1
    %p135 = por %p133, %p134
    %p136 = scmp.ne.s32.totalorder %s125, %s126
    %p137 = scmp.eq.s32.totalorder %s14, 0
    %p138 = por %p136, %p137
    %p139 = scmp.ne.s32.totalorder %s125, %s126
    %p140 = scmp.eq.s32.totalorder %s15, 1
    %p141 = por %p139, %p140
    %p143 = scmp.ne.s32.totalorder %s126, %s142
    %p144 = scmp.eq.s32.totalorder %s15, 0
    %p145 = por %p143, %p144
    %p146 = scmp.le.s32.totalorder 1, %s9
    %p147 = scmp.lt.s32.totalorder %s9, 3
    %p148 = pnand %p146, %p147
    %p149 = pneg %p148
    // Predicated region
    $region9: #{segmentation_vit_forward.8} parent=5 // pred_check
      _
    $region10: #{segmentation_vit_forward.8} parent=5 // pred_check_branch
      %151 = sbr.rel (%p148) target = $region12
    $region11: #{segmentation_vit_forward.8} parent=5 // pred_region
      %s152 = ssub.s32 %s9, 1
      // Predicated region
      $region13: #{segmentation_vit_forward.8} parent=11 // pred_check
        %p153 = pneg %p84
      $region14: #{segmentation_vit_forward.8} parent=11 // pred_check_branch
        %155 = sbr.rel (%p153) target = $region16
      $region15: #{segmentation_vit_forward.8} parent=11 // pred_region
        %s156 = smul.u32 32, %s21
        %p157 = scmp.lt.s32.totalorder %s156, 31
        %s158 = scalar_select %p157, %s156, 31
        %p159 = scmp.lt.s32.totalorder %s20, 0
        %s160 = scalar_select %p159, %s20, 0
        %s161 = sadd.s32 %s160, %s158
        %s162 = smul.addr %s161, 4
        %s163 = scalar_lea.vmem %s1, %s162
        %s164 = smul.u32 32, %s21
      $region16: #{segmentation_vit_forward.8} parent=11 // pred_fallthru
        _
      // Predicated region
      $region17: #{segmentation_vit_forward.8} parent=11 // pred_check
        %p165 = pneg %p110
      $region18: #{segmentation_vit_forward.8} parent=11 // pred_check_branch
        %167 = sbr.rel (%p165) target = $region20
      $region19: #{segmentation_vit_forward.8} parent=11 // pred_region
        %p168 = scmp.lt.s32.totalorder %s20, 0
        %s169 = scalar_select %p168, %s20, 0
        %s170 = scalar_lea.vmem %s2, %s169
      $region20: #{segmentation_vit_forward.8} parent=11 // pred_fallthru
        _
    $region12: #{segmentation_vit_forward.8} parent=5 // pred_fallthru
      _
    %p171 = scmp.lt.s32.totalorder %s9, 2
    // Predicated region
    $region21: #{segmentation_vit_forward.8} parent=5 // pred_check
      %p172 = pneg %p171
    $region22: #{segmentation_vit_forward.8} parent=5 // pred_check_branch
      %174 = sbr.rel (%p172) target = $region24
    $region23: #{segmentation_vit_forward.8} parent=5 // pred_region
      // Predicated region
      $region25: #{segmentation_vit_forward.8} parent=23 // pred_check
        %p175 = pneg %p50
      $region26: #{segmentation_vit_forward.8} parent=23 // pred_check_branch
        %177 = sbr.rel (%p175) target = $region28
      $region27: #{segmentation_vit_forward.8} parent=23 // pred_region
        %s178 = smul.u32 2, %s16
        %s179 = smul.u32 2, %s18
        %p180 = scmp.lt.s32.totalorder %s178, 3
        %s181 = scalar_select %p180, %s178, 3
        %p182 = scmp.lt.s32.totalorder %s179, 1
        %s183 = scalar_select %p182, %s179, 1
        %s184 = smul.addr %s181, 2
        %s185 = sadd.s32 %s183, %s184
        %s186 = smul.addr %s185, 4
        %s187 = scalar_lea.vmem %s0, %s186
        %s188 = smul.u32 2, %s16
        %s189 = smul.u32 2, %s18
      $region28: #{segmentation_vit_forward.8} parent=23 // pred_fallthru
        _
    $region24: #{segmentation_vit_forward.8} parent=5 // pred_fallthru
      _
    %p190 = scmp.le.s32.totalorder 1, %s9
    %p191 = scmp.lt.s32.totalorder %s9, 3
    %p192 = pnand %p190, %p191
    %p193 = pneg %p192
    // Predicated region
    $region29: #{segmentation_vit_forward.8} parent=5 // pred_check
      _
    $region30: #{segmentation_vit_forward.8} parent=5 // pred_check_branch
      %195 = sbr.rel (%p192) target = $region32
    $region31: #{segmentation_vit_forward.8} parent=5 // pred_region
      %s196 = ssub.s32 %s9, 1
      %s197 = smul.u32 2, %s19
      %s198 = smul.u32 2, %s21
      %p199 = scmp.lt.s32.totalorder %s197, 3
      %s200 = scalar_select %p199, %s197, 3
      %p201 = scmp.lt.s32.totalorder %s198, 1
      %s202 = scalar_select %p201, %s198, 1
      %s203 = smul.addr %s200, 2
      %s204 = sadd.s32 %s202, %s203
      %s205 = smul.addr %s204, 4
      %s206 = scalar_lea.vmem %s0, %s205
      %p207 = pneg %p56
      %p208 = pneg %p53
      %s209 = smul.u32 32, %s21
      %p210 = scmp.lt.s32.totalorder %s209, 31
      %s211 = scalar_select %p210, %s209, 31
      %p212 = scmp.lt.s32.totalorder %s20, 0
      %s213 = scalar_select %p212, %s20, 0
      %s214 = sadd.s32 %s213, %s211
      %s215 = smul.addr %s214, 4
      %s216 = scalar_lea.vmem %s1, %s215
      %p217 = pneg %p84
      %p218 = pneg %p81
      %p219 = scmp.lt.s32.totalorder %s20, 0
      %s220 = scalar_select %p219, %s20, 0
      %s221 = scalar_lea.vmem %s2, %s220
      %p222 = pneg %p110
      %p223 = pneg %p107
      %p224 = pneg %p138
      %p225 = pneg %p135
      %s226 = smul.u32 2, %s19
      %p227 = scmp.lt.s32.totalorder %s226, 3
      %s228 = scalar_select %p227, %s226, 3
      %p229 = scmp.lt.s32.totalorder %s20, 0
      %s230 = scalar_select %p229, %s20, 0
      %s231 = sadd.s32 %s230, %s228
      %s232 = smul.addr %s231, 8
      %s233 = scalar_lea.vmem %s3, %s232
      %s234 = smul.u32 2, %s19
      %s235 = smul.u32 2, %s21
      %p236 = scmp.lt.s32.totalorder %s234, 3
      %s237 = scalar_select %p236, %s234, 3
      %p238 = scmp.lt.s32.totalorder %s235, 1
      %s239 = scalar_select %p238, %s235, 1
      %s240 = smul.addr %s237, 2
      %s241 = sadd.s32 %s239, %s240
      %s242 = smul.addr %s241, 4
      %s243 = scalar_lea.vmem %s0, %s242
      %s244 = smul.u32 2, %s19
      %s245 = smul.u32 2, %s21
      %s246 = smul.u32 32, %s21
      %p247 = scmp.lt.s32.totalorder %s246, 31
      %s248 = scalar_select %p247, %s246, 31
      %p249 = scmp.lt.s32.totalorder %s20, 0
      %s250 = scalar_select %p249, %s20, 0
      %s251 = sadd.s32 %s250, %s248
      %s252 = smul.addr %s251, 4
      %s253 = scalar_lea.vmem %s1, %s252
      %s254 = smul.u32 32, %s21
      %p255 = scmp.lt.s32.totalorder %s20, 0
      %s256 = scalar_select %p255, %s20, 0
      %s257 = scalar_lea.vmem %s2, %s256
      %s258 = smul.u32 2, %s19
      %p259 = scmp.lt.s32.totalorder %s258, 3
      %s260 = scalar_select %p259, %s258, 3
      %p261 = scmp.lt.s32.totalorder %s20, 0
      %s262 = scalar_select %p261, %s20, 0
      %s263 = sadd.s32 %s262, %s260
      %s264 = smul.addr %s263, 8
      %s265 = scalar_lea.vmem %s3, %s264
      %s266 = smul.u32 2, %s19
      %p268 = scmp.eq.s32.totalorder %s21, 0
      // Predicated region
      $region33: #{segmentation_vit_forward.8} parent=31 // pred_check
        %p269 = pneg %p268
      $region34: #{segmentation_vit_forward.8} parent=31 // pred_check_branch
        %271 = sbr.rel (%p269) target = $region36
      $region35: #{segmentation_vit_forward.8} parent=31 // pred_region
        %272 = vst [vmem:[#allocation2] sm:$0xff] 0.0
        %273 = vst [vmem:[#allocation2 + $0x8] sm:$0xff] 0.0
      $region36: #{segmentation_vit_forward.8} parent=31 // pred_fallthru
        _
      %v274 = vld [vmem:[%s243] sm:$0xff]
      %v275 = vld [vmem:[%s243 + $0x8] sm:$0xff]
      %v276 = vld [vmem:[#allocation2] sm:$0xff]
      %v277 = vld [vmem:[#allocation2 + $0x8] sm:$0xff]
      %v278 = vld [vmem:[%s253] sm:$0xf]
      %v279 = vld [vmem:[%s253 + $0x4] sm:$0xf]
      %v280 = vld [vmem:[%s253 + $0x8] sm:$0xf]
      %v281 = vld [vmem:[%s253 + $0xc] sm:$0xf]
      %v282 = vld [vmem:[%s253 + $0x10] sm:$0xf]
      %v283 = vld [vmem:[%s253 + $0x14] sm:$0xf]
      %v284 = vld [vmem:[%s253 + $0x18] sm:$0xf]
      %v285 = vld [vmem:[%s253 + $0x1c] sm:$0xf]
      %v286 = vld [vmem:[%s253 + $0x20] sm:$0xf]
      %v287 = vld [vmem:[%s253 + $0x24] sm:$0xf]
      %v288 = vld [vmem:[%s253 + $0x28] sm:$0xf]
      %v289 = vld [vmem:[%s253 + $0x2c] sm:$0xf]
      %v290 = vld [vmem:[%s253 + $0x30] sm:$0xf]
      %v291 = vld [vmem:[%s253 + $0x34] sm:$0xf]
      %v292 = vld [vmem:[%s253 + $0x38] sm:$0xf]
      %v293 = vld [vmem:[%s253 + $0x3c] sm:$0xf]
      %v294 = vld [vmem:[%s253 + $0x40] sm:$0xf]
      %v295 = vld [vmem:[%s253 + $0x44] sm:$0xf]
      %v296 = vld [vmem:[%s253 + $0x48] sm:$0xf]
      %v297 = vld [vmem:[%s253 + $0x4c] sm:$0xf]
      %v298 = vld [vmem:[%s253 + $0x50] sm:$0xf]
      %v299 = vld [vmem:[%s253 + $0x54] sm:$0xf]
      %v300 = vld [vmem:[%s253 + $0x58] sm:$0xf]
      %v301 = vld [vmem:[%s253 + $0x5c] sm:$0xf]
      %v302 = vld [vmem:[%s253 + $0x60] sm:$0xf]
      %v303 = vld [vmem:[%s253 + $0x64] sm:$0xf]
      %v304 = vld [vmem:[%s253 + $0x68] sm:$0xf]
      %v305 = vld [vmem:[%s253 + $0x6c] sm:$0xf]
      %v306 = vld [vmem:[%s253 + $0x70] sm:$0xf]
      %v307 = vld [vmem:[%s253 + $0x74] sm:$0xf]
      %v308 = vld [vmem:[%s253 + $0x78] sm:$0xf]
      %v309 = vld [vmem:[%s253 + $0x7c] sm:$0xf]
      %v312 = vunpack.c.l.b16 %v274
      %v313 = vunpack.c.h.b16 %v274
      %v314 = vunpack.c.l.b16 %v275
      %v315 = vunpack.c.h.b16 %v275
      %v316 = vpack.c.b16 %v314, %v312
      %v317 = vpack.c.b16 %v315, %v313
      %v352 = vunpack.c.l.b16 %v278
      %v353 = vunpack.c.l.b16 %v279
      %v354 = vunpack.c.l.b16 %v280
      %v355 = vunpack.c.l.b16 %v281
      %v356 = vunpack.c.l.b16 %v282
      %v357 = vunpack.c.l.b16 %v283
      %v358 = vunpack.c.l.b16 %v284
      %v359 = vunpack.c.l.b16 %v285
      %v360 = vunpack.c.l.b16 %v286
      %v361 = vunpack.c.l.b16 %v287
      %v362 = vunpack.c.l.b16 %v288
      %v363 = vunpack.c.l.b16 %v289
      %v364 = vunpack.c.l.b16 %v290
      %v365 = vunpack.c.l.b16 %v291
      %v366 = vunpack.c.l.b16 %v292
      %v367 = vunpack.c.l.b16 %v293
      %v368 = vunpack.c.l.b16 %v294
      %v369 = vunpack.c.l.b16 %v295
      %v370 = vunpack.c.l.b16 %v296
      %v371 = vunpack.c.l.b16 %v297
      %v372 = vunpack.c.l.b16 %v298
      %v373 = vunpack.c.l.b16 %v299
      %v374 = vunpack.c.l.b16 %v300
      %v375 = vunpack.c.l.b16 %v301
      %v376 = vunpack.c.l.b16 %v302
      %v377 = vunpack.c.l.b16 %v303
      %v378 = vunpack.c.l.b16 %v304
      %v379 = vunpack.c.l.b16 %v305
      %v380 = vunpack.c.l.b16 %v306
      %v381 = vunpack.c.l.b16 %v307
      %v382 = vunpack.c.l.b16 %v308
      %v383 = vunpack.c.l.b16 %v309
      %v384 = vpack.c.b16 %v353, %v352
      %v385 = vpack.c.b16 %v355, %v354
      %v386 = vpack.c.b16 %v357, %v356
      %v387 = vpack.c.b16 %v359, %v358
      %v388 = vpack.c.b16 %v361, %v360
      %v389 = vpack.c.b16 %v363, %v362
      %v390 = vpack.c.b16 %v365, %v364
      %v391 = vpack.c.b16 %v367, %v366
      %v392 = vpack.c.b16 %v369, %v368
      %v393 = vpack.c.b16 %v371, %v370
      %v394 = vpack.c.b16 %v373, %v372
      %v395 = vpack.c.b16 %v375, %v374
      %v396 = vpack.c.b16 %v377, %v376
      %v397 = vpack.c.b16 %v379, %v378
      %v398 = vpack.c.b16 %v381, %v380
      %v399 = vpack.c.b16 %v383, %v382
      %416 = vmatprep.subr.bf16.mxu0 0
      %417 = vmatpush1.bf16.msra.mxu0 %v384
      %418 = vmatprep.subr.bf16.mxu0 0
      %419 = vmatpush1.bf16.msra.mxu0 %v385
      %420 = vmatprep.subr.bf16.mxu0 0
      %421 = vmatpush1.bf16.msra.mxu0 %v386
      %422 = vmatprep.subr.bf16.mxu0 0
      %423 = vmatpush1.bf16.msra.mxu0 %v387
      %424 = vmatprep.subr.bf16.mxu0 0
      %425 = vmatpush1.bf16.msra.mxu0 %v388
      %426 = vmatprep.subr.bf16.mxu0 0
      %427 = vmatpush1.bf16.msra.mxu0 %v389
      %428 = vmatprep.subr.bf16.mxu0 0
      %429 = vmatpush1.bf16.msra.mxu0 %v390
      %430 = vmatprep.subr.bf16.mxu0 0
      %431 = vmatpush1.bf16.msra.mxu0 %v391
      %432 = vmatprep.subr.bf16.mxu0 0
      %433 = vmatpush1.bf16.msra.mxu0 %v392
      %434 = vmatprep.subr.bf16.mxu0 0
      %435 = vmatpush1.bf16.msra.mxu0 %v393
      %436 = vmatprep.subr.bf16.mxu0 0
      %437 = vmatpush1.bf16.msra.mxu0 %v394
      %438 = vmatprep.subr.bf16.mxu0 0
      %439 = vmatpush1.bf16.msra.mxu0 %v395
      %440 = vmatprep.subr.bf16.mxu0 0
      %441 = vmatpush1.bf16.msra.mxu0 %v396
      %442 = vmatprep.subr.bf16.mxu0 0
      %443 = vmatpush1.bf16.msra.mxu0 %v397
      %444 = vmatprep.subr.bf16.mxu0 0
      %445 = vmatpush1.bf16.msra.mxu0 %v398
      %446 = vmatprep.subr.bf16.mxu0 0
      %447 = vmatpush1.bf16.msra.mxu0 %v399
      %448 = vmatprep.mubr.bf16.mxu0 %v317
      %449 = vmatmul.mubr.bf16.gmra.mrb[0].mxu0 %v316
      %v450 = vpop.f32.mrb[0].mxu0
      %v451 = vadd.f32 0.0, %v450
      %v452 = vpop.f32.mrb[0].mxu0
      %v453 = vpop.f32.mrb[0].mxu0
      %v454 = vadd.f32 0.0, %v453
      %v455 = vpop.f32.mrb[0].mxu0
      %456 = vdwg.mxu0
      %v457 = vadd.f32 %v276, %v451
      %v458 = vadd.f32 %v277, %v454
      %459 = vst [vmem:[#allocation2] sm:$0xff] %v457
      %460 = vst [vmem:[#allocation2 + $0x8] sm:$0xff] %v458
      // Predicated region
      $region37: #{segmentation_vit_forward.8} parent=31 // pred_check
        %p461 = pneg %p268
      $region38: #{segmentation_vit_forward.8} parent=31 // pred_check_branch
        %463 = sbr.rel (%p461) target = $region40
      $region39: #{segmentation_vit_forward.8} parent=31 // pred_region
        %v464 = vld [vmem:[#allocation2] sm:$0xff]
        %v465 = vld [vmem:[#allocation2 + $0x8] sm:$0xff]
        %v466 = vld [vmem:[%s257] sm:$0x1]
        %v468 = vlaneseq
        %v469 = vshrl.u32 %v468, 7
        %v470 = vsub.s32 0, %v469
        %v471 = vrot.slane %v466, %v470
        %v473 = vadd.f32 %v464, %v471
        %v474 = vadd.f32 %v465, %v471
        %475 = vst [vmem:[%s265] sm:$0xff] %v473
        %476 = vst [vmem:[%s265 + $0x8] sm:$0xff] %v474
      $region40: #{segmentation_vit_forward.8} parent=31 // pred_fallthru
        _
      %s477 = smul.u32 2, %s19
      %p478 = scmp.lt.s32.totalorder %s477, 3
      %s479 = scalar_select %p478, %s477, 3
      %p480 = scmp.lt.s32.totalorder %s20, 0
      %s481 = scalar_select %p480, %s20, 0
      %s482 = sadd.s32 %s481, %s479
      %s483 = smul.addr %s482, 8
      %s484 = scalar_lea.vmem %s3, %s483
      // Predicated region
      $region41: #{segmentation_vit_forward.8} parent=31 // pred_check
        %p485 = pneg %p135
      $region42: #{segmentation_vit_forward.8} parent=31 // pred_check_branch
        %487 = sbr.rel (%p485) target = $region44
      $region43: #{segmentation_vit_forward.8} parent=31 // pred_region
        %s488 = smul.u32 2, %s19
      $region44: #{segmentation_vit_forward.8} parent=31 // pred_fallthru
        _
    $region32: #{segmentation_vit_forward.8} parent=5 // pred_fallthru
      _
    %p489 = scmp.le.s32.totalorder 2, %s9
    // Predicated region
    $region45: #{segmentation_vit_forward.8} parent=5 // pred_check
      %p490 = pneg %p489
    $region46: #{segmentation_vit_forward.8} parent=5 // pred_check_branch
      %492 = sbr.rel (%p490) target = $region48
    $region47: #{segmentation_vit_forward.8} parent=5 // pred_region
      %s493 = ssub.s32 %s9, 2
      // Predicated region
      $region49: #{segmentation_vit_forward.8} parent=47 // pred_check
        %p494 = pneg %p141
      $region50: #{segmentation_vit_forward.8} parent=47 // pred_check_branch
        %496 = sbr.rel (%p494) target = $region52
      $region51: #{segmentation_vit_forward.8} parent=47 // pred_region
        %s497 = smul.u32 2, %s22
        %p498 = scmp.lt.s32.totalorder %s497, 3
        %s499 = scalar_select %p498, %s497, 3
        %p500 = scmp.lt.s32.totalorder %s23, 0
        %s501 = scalar_select %p500, %s23, 0
        %s502 = sadd.s32 %s501, %s499
        %s503 = smul.addr %s502, 8
        %s504 = scalar_lea.vmem %s3, %s503
      $region52: #{segmentation_vit_forward.8} parent=47 // pred_fallthru
        _
    $region48: #{segmentation_vit_forward.8} parent=5 // pred_fallthru
      _
  $region6: #{segmentation_vit_forward.8} parent=0 // loop_footer
    %s13 = sadd.s32 1, %s9
  $region7: #{segmentation_vit_forward.8} parent=0 // loop_footer_branch
    %8 = sbr.rel target = $region3
  $region8: #{segmentation_vit_forward.8} parent=0 // loop_exit
    _

// kernel: segmentation_vit_forward.10
$region0: #{segmentation_vit_forward.10}
  #allocation0 [shape = 'u32[]', space=smem, size = 0x4, offset = 0x4, fixed_abs, tag = 'smem constant byte address 0x4 - core index']
  #allocation1 [shape = 'u32[144,128]{1,0:T(1,128)}', space=vmem, size = 0x12000, scoped, tag = 'internal scratch']
  %s0 = inlined_call_operand.vmem [shape: bf16[32,128], index: 0, kind: input, shape index: {}]
  %s1 = inlined_call_operand.vmem [shape: f32[1,128], index: 1, kind: input, shape index: {}]
  %s2 = inlined_call_operand.vmem [shape: f32[1,128], index: 2, kind: input, shape index: {}]
  %s3 = inlined_call_operand.vmem [shape: bf16[128,64], index: 3, kind: input, shape index: {}]
  %s4 = inlined_call_operand.vmem [shape: f32[1,64], index: 4, kind: input, shape index: {}]
  %s5 = inlined_call_operand.vmem [shape: bf16[64,128], index: 5, kind: input, shape index: {}]
  %s6 = inlined_call_operand.vmem [shape: f32[1,128], index: 6, kind: input, shape index: {}]
  %s7 = inlined_call_operand.vmem [shape: bf16[32,128], index: 7, kind: output, shape index: {}]
  %s8 = sld [smem:[#allocation0]]
  $region61: #{segmentation_vit_forward.10} parent=0
    _
  %s10 = ssub.s32 1, %s8
  %s11 = scalar_select 0, %s10, %s8
  loop: start=0, step=1, limit=4
  $region2: #{segmentation_vit_forward.10} parent=0 // loop_pre_header
    _
  $region3: #{segmentation_vit_forward.10} parent=0 // loop_header
    %s13 = sphi 0, %s17
    %p14 = scmp.ge.s32.totalorder %s13, 4
    %s23 = sphi 0, %s25
    %s26 = sphi 0, %s23
    %s27 = sphi 0, %s26
    %s43 = sphi 0, %s27
    %s47 = sphi 0, %s47
    %s49 = sphi 0, %s47
    %s50 = sphi 0, %s49
    %s64 = sphi 0, %s50
    %s68 = sphi 0, %s68
    %s70 = sphi 0, %s68
    %s71 = sphi 0, %s70
    %s85 = sphi 0, %s71
    %s89 = sphi 0, %s89
    %s91 = sphi 0, %s89
    %s92 = sphi 0, %s91
    %s106 = sphi 0, %s92
    %s110 = sphi 0, %s110
    %s112 = sphi 0, %s110
    %s113 = sphi 0, %s112
    %s127 = sphi 0, %s113
    %s131 = sphi 0, %s131
    %s133 = sphi 0, %s131
    %s134 = sphi 0, %s133
    %s148 = sphi 0, %s134
    %s152 = sphi 0, %s152
    %s154 = sphi 0, %s152
    %s155 = sphi 0, %s154
    %s169 = sphi 0, %s155
    %s175 = sphi 0, %s177
    %s178 = sphi 0, %s175
    %s179 = sphi 0, %s178
    %s195 = sphi 0, %s179
  $region4: #{segmentation_vit_forward.10} parent=0 // loop_header_branch
    %16 = sbr.rel (%p14) target = $region8
  $region5: #{segmentation_vit_forward.10} parent=0 // loop_body
    %s18 = ssub.s32 %s13, 1
    %s19 = ssub.s32 %s13, 2
    %s20 = sadd.s32 %s13, 1
    %s21 = ssub.s32 %s13, %s20
    %p22 = scmp.eq.s32.totalorder %s21, 0
    %s24 = sadd.s32 %s23, 1
    %s25 = scalar_select %p22, %s23, %s24
    %p28 = pneg %p22
    %p29 = scmp.eq.s32.totalorder %s13, 1
    %p30 = por %p28, %p29
    %p31 = scmp.ne.s32.totalorder %s23, %s26
    %p32 = scmp.eq.s32.totalorder %s13, 0
    %p33 = por %p31, %p32
    %p34 = scmp.ne.s32.totalorder %s23, %s26
    %p35 = scmp.eq.s32.totalorder %s18, 1
    %p36 = por %p34, %p35
    %p37 = scmp.ne.s32.totalorder %s26, %s27
    %p38 = scmp.eq.s32.totalorder %s18, 0
    %p39 = por %p37, %p38
    %p40 = scmp.ne.s32.totalorder %s26, %s27
    %p41 = scmp.eq.s32.totalorder %s19, 1
    %p42 = por %p40, %p41
    %p44 = scmp.ne.s32.totalorder %s27, %s43
    %p45 = scmp.eq.s32.totalorder %s19, 0
    %p46 = por %p44, %p45
    %s48 = sadd.s32 %s47, 1
    %p51 = scmp.eq.s32.totalorder %s13, 1
    %p52 = scmp.ne.s32.totalorder %s47, %s49
    %p53 = scmp.eq.s32.totalorder %s13, 0
    %p54 = por %p52, %p53
    %p55 = scmp.ne.s32.totalorder %s47, %s49
    %p56 = scmp.eq.s32.totalorder %s18, 1
    %p57 = por %p55, %p56
    %p58 = scmp.ne.s32.totalorder %s49, %s50
    %p59 = scmp.eq.s32.totalorder %s18, 0
    %p60 = por %p58, %p59
    %p61 = scmp.ne.s32.totalorder %s49, %s50
    %p62 = scmp.eq.s32.totalorder %s19, 1
    %p63 = por %p61, %p62
    %p65 = scmp.ne.s32.totalorder %s50, %s64
    %p66 = scmp.eq.s32.totalorder %s19, 0
    %p67 = por %p65, %p66
    %s69 = sadd.s32 %s68, 1
    %p72 = scmp.eq.s32.totalorder %s13, 1
    %p73 = scmp.ne.s32.totalorder %s68, %s70
    %p74 = scmp.eq.s32.totalorder %s13, 0
    %p75 = por %p73, %p74
    %p76 = scmp.ne.s32.totalorder %s68, %s70
    %p77 = scmp.eq.s32.totalorder %s18, 1
    %p78 = por %p76, %p77
    %p79 = scmp.ne.s32.totalorder %s70, %s71
    %p80 = scmp.eq.s32.totalorder %s18, 0
    %p81 = por %p79, %p80
    %p82 = scmp.ne.s32.totalorder %s70, %s71
    %p83 = scmp.eq.s32.totalorder %s19, 1
    %p84 = por %p82, %p83
    %p86 = scmp.ne.s32.totalorder %s71, %s85
    %p87 = scmp.eq.s32.totalorder %s19, 0
    %p88 = por %p86, %p87
    %s90 = sadd.s32 %s89, 1
    %p93 = scmp.eq.s32.totalorder %s13, 1
    %p94 = scmp.ne.s32.totalorder %s89, %s91
    %p95 = scmp.eq.s32.totalorder %s13, 0
    %p96 = por %p94, %p95
    %p97 = scmp.ne.s32.totalorder %s89, %s91
    %p98 = scmp.eq.s32.totalorder %s18, 1
    %p99 = por %p97, %p98
    %p100 = scmp.ne.s32.totalorder %s91, %s92
    %p101 = scmp.eq.s32.totalorder %s18, 0
    %p102 = por %p100, %p101
    %p103 = scmp.ne.s32.totalorder %s91, %s92
    %p104 = scmp.eq.s32.totalorder %s19, 1
    %p105 = por %p103, %p104
    %p107 = scmp.ne.s32.totalorder %s92, %s106
    %p108 = scmp.eq.s32.totalorder %s19, 0
    %p109 = por %p107, %p108
    %s111 = sadd.s32 %s110, 1
    %p114 = scmp.eq.s32.totalorder %s13, 1
    %p115 = scmp.ne.s32.totalorder %s110, %s112
    %p116 = scmp.eq.s32.totalorder %s13, 0
    %p117 = por %p115, %p116
    %p118 = scmp.ne.s32.totalorder %s110, %s112
    %p119 = scmp.eq.s32.totalorder %s18, 1
    %p120 = por %p118, %p119
    %p121 = scmp.ne.s32.totalorder %s112, %s113
    %p122 = scmp.eq.s32.totalorder %s18, 0
    %p123 = por %p121, %p122
    %p124 = scmp.ne.s32.totalorder %s112, %s113
    %p125 = scmp.eq.s32.totalorder %s19, 1
    %p126 = por %p124, %p125
    %p128 = scmp.ne.s32.totalorder %s113, %s127
    %p129 = scmp.eq.s32.totalorder %s19, 0
    %p130 = por %p128, %p129
    %s132 = sadd.s32 %s131, 1
    %p135 = scmp.eq.s32.totalorder %s13, 1
    %p136 = scmp.ne.s32.totalorder %s131, %s133
    %p137 = scmp.eq.s32.totalorder %s13, 0
    %p138 = por %p136, %p137
    %p139 = scmp.ne.s32.totalorder %s131, %s133
    %p140 = scmp.eq.s32.totalorder %s18, 1
    %p141 = por %p139, %p140
    %p142 = scmp.ne.s32.totalorder %s133, %s134
    %p143 = scmp.eq.s32.totalorder %s18, 0
    %p144 = por %p142, %p143
    %p145 = scmp.ne.s32.totalorder %s133, %s134
    %p146 = scmp.eq.s32.totalorder %s19, 1
    %p147 = por %p145, %p146
    %p149 = scmp.ne.s32.totalorder %s134, %s148
    %p150 = scmp.eq.s32.totalorder %s19, 0
    %p151 = por %p149, %p150
    %s153 = sadd.s32 %s152, 1
    %p156 = scmp.eq.s32.totalorder %s13, 1
    %p157 = scmp.ne.s32.totalorder %s152, %s154
    %p158 = scmp.eq.s32.totalorder %s13, 0
    %p159 = por %p157, %p158
    %p160 = scmp.ne.s32.totalorder %s152, %s154
    %p161 = scmp.eq.s32.totalorder %s18, 1
    %p162 = por %p160, %p161
    %p163 = scmp.ne.s32.totalorder %s154, %s155
    %p164 = scmp.eq.s32.totalorder %s18, 0
    %p165 = por %p163, %p164
    %p166 = scmp.ne.s32.totalorder %s154, %s155
    %p167 = scmp.eq.s32.totalorder %s19, 1
    %p168 = por %p166, %p167
    %p170 = scmp.ne.s32.totalorder %s155, %s169
    %p171 = scmp.eq.s32.totalorder %s19, 0
    %p172 = por %p170, %p171
    %s173 = ssub.s32 %s13, %s20
    %p174 = scmp.eq.s32.totalorder %s173, 0
    %s176 = sadd.s32 %s175, 1
    %s177 = scalar_select %p174, %s175, %s176
    %p180 = pneg %p174
    %p181 = scmp.eq.s32.totalorder %s13, 1
    %p182 = por %p180, %p181
    %p183 = scmp.ne.s32.totalorder %s175, %s178
    %p184 = scmp.eq.s32.totalorder %s13, 0
    %p185 = por %p183, %p184
    %p186 = scmp.ne.s32.totalorder %s175, %s178
    %p187 = scmp.eq.s32.totalorder %s18, 1
    %p188 = por %p186, %p187
    %p189 = scmp.ne.s32.totalorder %s178, %s179
    %p190 = scmp.eq.s32.totalorder %s18, 0
    %p191 = por %p189, %p190
    %p192 = scmp.ne.s32.totalorder %s178, %s179
    %p193 = scmp.eq.s32.totalorder %s19, 1
    %p194 = por %p192, %p193
    %p196 = scmp.ne.s32.totalorder %s179, %s195
    %p197 = scmp.eq.s32.totalorder %s19, 0
    %p198 = por %p196, %p197
    %p199 = scmp.le.s32.totalorder 1, %s13
    %p200 = scmp.lt.s32.totalorder %s13, 3
    %p201 = pnand %p199, %p200
    %p202 = pneg %p201
    // Predicated region
    $region9: #{segmentation_vit_forward.10} parent=5 // pred_check
      _
    $region10: #{segmentation_vit_forward.10} parent=5 // pred_check_branch
      %204 = sbr.rel (%p201) target = $region12
    $region11: #{segmentation_vit_forward.10} parent=5 // pred_region
      %s205 = ssub.s32 %s13, 1
      // Predicated region
      $region13: #{segmentation_vit_forward.10} parent=11 // pred_check
        %p206 = pneg %p60
      $region14: #{segmentation_vit_forward.10} parent=11 // pred_check_branch
        %208 = sbr.rel (%p206) target = $region16
      $region15: #{segmentation_vit_forward.10} parent=11 // pred_region
        _
      $region16: #{segmentation_vit_forward.10} parent=11 // pred_fallthru
        _
      // Predicated region
      $region17: #{segmentation_vit_forward.10} parent=11 // pred_check
        %p209 = pneg %p81
      $region18: #{segmentation_vit_forward.10} parent=11 // pred_check_branch
        %211 = sbr.rel (%p209) target = $region20
      $region19: #{segmentation_vit_forward.10} parent=11 // pred_region
        _
      $region20: #{segmentation_vit_forward.10} parent=11 // pred_fallthru
        _
      // Predicated region
      $region21: #{segmentation_vit_forward.10} parent=11 // pred_check
        %p212 = pneg %p102
      $region22: #{segmentation_vit_forward.10} parent=11 // pred_check_branch
        %214 = sbr.rel (%p212) target = $region24
      $region23: #{segmentation_vit_forward.10} parent=11 // pred_region
        _
      $region24: #{segmentation_vit_forward.10} parent=11 // pred_fallthru
        _
      // Predicated region
      $region25: #{segmentation_vit_forward.10} parent=11 // pred_check
        %p215 = pneg %p123
      $region26: #{segmentation_vit_forward.10} parent=11 // pred_check_branch
        %217 = sbr.rel (%p215) target = $region28
      $region27: #{segmentation_vit_forward.10} parent=11 // pred_region
        _
      $region28: #{segmentation_vit_forward.10} parent=11 // pred_fallthru
        _
      // Predicated region
      $region29: #{segmentation_vit_forward.10} parent=11 // pred_check
        %p218 = pneg %p144
      $region30: #{segmentation_vit_forward.10} parent=11 // pred_check_branch
        %220 = sbr.rel (%p218) target = $region32
      $region31: #{segmentation_vit_forward.10} parent=11 // pred_region
        _
      $region32: #{segmentation_vit_forward.10} parent=11 // pred_fallthru
        _
      // Predicated region
      $region33: #{segmentation_vit_forward.10} parent=11 // pred_check
        %p221 = pneg %p165
      $region34: #{segmentation_vit_forward.10} parent=11 // pred_check_branch
        %223 = sbr.rel (%p221) target = $region36
      $region35: #{segmentation_vit_forward.10} parent=11 // pred_region
        _
      $region36: #{segmentation_vit_forward.10} parent=11 // pred_fallthru
        _
    $region12: #{segmentation_vit_forward.10} parent=5 // pred_fallthru
      _
    %p224 = scmp.lt.s32.totalorder %s13, 2
    // Predicated region
    $region37: #{segmentation_vit_forward.10} parent=5 // pred_check
      %p225 = pneg %p224
    $region38: #{segmentation_vit_forward.10} parent=5 // pred_check_branch
      %227 = sbr.rel (%p225) target = $region40
    $region39: #{segmentation_vit_forward.10} parent=5 // pred_region
      // Predicated region
      $region41: #{segmentation_vit_forward.10} parent=39 // pred_check
        %p228 = pneg %p33
      $region42: #{segmentation_vit_forward.10} parent=39 // pred_check_branch
        %230 = sbr.rel (%p228) target = $region44
      $region43: #{segmentation_vit_forward.10} parent=39 // pred_region
        %s231 = smul.u32 2, %s13
        %p232 = scmp.lt.s32.totalorder %s231, 3
        %s233 = scalar_select %p232, %s231, 3
        %s234 = smul.addr %s233, 4
        %s235 = scalar_lea.vmem %s0, %s234
        %s236 = smul.u32 2, %s13
      $region44: #{segmentation_vit_forward.10} parent=39 // pred_fallthru
        _
    $region40: #{segmentation_vit_forward.10} parent=5 // pred_fallthru
      _
    %p237 = scmp.le.s32.totalorder 1, %s13
    %p238 = scmp.lt.s32.totalorder %s13, 3
    %p239 = pnand %p237, %p238
    %p240 = pneg %p239
    // Predicated region
    $region45: #{segmentation_vit_forward.10} parent=5 // pred_check
      _
    $region46: #{segmentation_vit_forward.10} parent=5 // pred_check_branch
      %242 = sbr.rel (%p239) target = $region48
    $region47: #{segmentation_vit_forward.10} parent=5 // pred_region
      %s243 = ssub.s32 %s13, 1
      %s244 = smul.u32 2, %s18
      %p245 = scmp.lt.s32.totalorder %s244, 3
      %s246 = scalar_select %p245, %s244, 3
      %s247 = smul.addr %s246, 4
      %s248 = scalar_lea.vmem %s0, %s247
      %p249 = pneg %p39
      %p250 = pneg %p36
      %p251 = pneg %p60
      %p252 = pneg %p57
      %p253 = pneg %p81
      %p254 = pneg %p78
      %p255 = pneg %p102
      %p256 = pneg %p99
      %p257 = pneg %p123
      %p258 = pneg %p120
      %p259 = pneg %p144
      %p260 = pneg %p141
      %p261 = pneg %p165
      %p262 = pneg %p162
      %p263 = pneg %p191
      %p264 = pneg %p188
      %s265 = smul.u32 2, %s18
      %p266 = scmp.lt.s32.totalorder %s265, 3
      %s267 = scalar_select %p266, %s265, 3
      %s268 = smul.addr %s267, 4
      %s269 = scalar_lea.vmem %s7, %s268
      %s270 = smul.u32 2, %s18
      %p271 = scmp.lt.s32.totalorder %s270, 3
      %s272 = scalar_select %p271, %s270, 3
      %s273 = smul.addr %s272, 4
      %s274 = scalar_lea.vmem %s0, %s273
      %s275 = smul.u32 2, %s18
      %s276 = smul.u32 2, %s18
      %p277 = scmp.lt.s32.totalorder %s276, 3
      %s278 = scalar_select %p277, %s276, 3
      %s279 = smul.addr %s278, 4
      %s280 = scalar_lea.vmem %s7, %s279
      %s281 = smul.u32 2, %s18
      %v283 = vld [vmem:[%s274] sm:$0xf]
      %v284 = vld [vmem:[%s274 + $0x4] sm:$0xf]
      %v285 = vunpack.c.l.bf16 %v283
      %v286 = vunpack.c.l.bf16 %v284
      %287 = vadd.xlane.f32.xlu0 %v285
      %v288 = vpop.xlane.xlu0 %287
      %289 = vadd.xlane.f32.xlu0 %v286
      %v290 = vpop.xlane.xlu0 %289
      %v291 = vrcp.pop 128.0
      %v292 = vmul.f32 %v288, %v291
      %v293 = vmul.f32 %v290, %v291
      %v294 = vsub.f32 %v285, %v292
      %v295 = vsub.f32 %v286, %v293
      %v296 = vmul.f32 %v294, %v294
      %v297 = vmul.f32 %v295, %v295
      %298 = vadd.xlane.f32.xlu0 %v296
      %v299 = vpop.xlane.xlu0 %298
      %300 = vadd.xlane.f32.xlu0 %v297
      %v301 = vpop.xlane.xlu0 %300
      %v302 = vmul.f32 %v299, %v291
      %v303 = vmul.f32 %v301, %v291
      %v304 = vadd.f32 %v302, 1e-05
      %v305 = vadd.f32 %v303, 1e-05
      %v306 = vrsqrt.pop %v304
      %v307 = vrsqrt.pop %v305
      %v308 = vmul.f32 %v294, %v306
      %v309 = vmul.f32 %v295, %v307
      %v310 = vld [vmem:[%s1] sm:$0x1]
      %v312 = vlaneseq
      %v313 = vshrl.u32 %v312, 7
      %v314 = vsub.s32 0, %v313
      %v315 = vrot.slane %v310, %v314
      %v317 = vmul.f32 %v308, %v315
      %v318 = vmul.f32 %v309, %v315
      %v319 = vld [vmem:[%s2] sm:$0x1]
      %v321 = vlaneseq
      %v322 = vshrl.u32 %v321, 7
      %v323 = vsub.s32 0, %v322
      %v324 = vrot.slane %v319, %v323
      %v326 = vadd.f32 %v317, %v324
      %v327 = vadd.f32 %v318, %v324
      %v328 = vpack.c.bf16 %v327, %v326
      %v329 = vld [vmem:[%s3] sm:$0xf]
      %v330 = vld [vmem:[%s3 + $0x4] sm:$0xf]
      %v331 = vld [vmem:[%s3 + $0x8] sm:$0xf]
      %v332 = vld [vmem:[%s3 + $0xc] sm:$0xf]
      %v333 = vld [vmem:[%s3 + $0x10] sm:$0xf]
      %v334 = vld [vmem:[%s3 + $0x14] sm:$0xf]
      %v335 = vld [vmem:[%s3 + $0x18] sm:$0xf]
      %v336 = vld [vmem:[%s3 + $0x1c] sm:$0xf]
      %v337 = vld [vmem:[%s3 + $0x20] sm:$0xf]
      %v338 = vld [vmem:[%s3 + $0x24] sm:$0xf]
      %v339 = vld [vmem:[%s3 + $0x28] sm:$0xf]
      %v340 = vld [vmem:[%s3 + $0x2c] sm:$0xf]
      %v341 = vld [vmem:[%s3 + $0x30] sm:$0xf]
      %v342 = vld [vmem:[%s3 + $0x34] sm:$0xf]
      %v343 = vld [vmem:[%s3 + $0x38] sm:$0xf]
      %v344 = vld [vmem:[%s3 + $0x3c] sm:$0xf]
      %v345 = vld [vmem:[%s4] sm:$0x1]
      %v347 = vlaneseq
      %v348 = vshrl.u32 %v347, 7
      %v349 = vsub.s32 0, %v348
      %v350 = vrot.slane %v345, %v349
      %v368 = vunpack.c.l.b16 %v329
      %v369 = vunpack.c.l.b16 %v330
      %v370 = vunpack.c.l.b16 %v331
      %v371 = vunpack.c.l.b16 %v332
      %v372 = vunpack.c.l.b16 %v333
      %v373 = vunpack.c.l.b16 %v334
      %v374 = vunpack.c.l.b16 %v335
      %v375 = vunpack.c.l.b16 %v336
      %v376 = vunpack.c.l.b16 %v337
      %v377 = vunpack.c.l.b16 %v338
      %v378 = vunpack.c.l.b16 %v339
      %v379 = vunpack.c.l.b16 %v340
      %v380 = vunpack.c.l.b16 %v341
      %v381 = vunpack.c.l.b16 %v342
      %v382 = vunpack.c.l.b16 %v343
      %v383 = vunpack.c.l.b16 %v344
      %v384 = vpack.c.b16 %v369, %v368
      %v385 = vpack.c.b16 %v371, %v370
      %v386 = vpack.c.b16 %v373, %v372
      %v387 = vpack.c.b16 %v375, %v374
      %v388 = vpack.c.b16 %v377, %v376
      %v389 = vpack.c.b16 %v379, %v378
      %v390 = vpack.c.b16 %v381, %v380
      %v391 = vpack.c.b16 %v383, %v382
      %400 = vmatprep.subr.bf16.mxu0 0
      %401 = vmatpush1.bf16.msra.mxu0 %v384
      %402 = vmatprep.subr.bf16.mxu0 0
      %403 = vmatpush1.bf16.msra.mxu0 %v385
      %404 = vmatprep.subr.bf16.mxu0 0
      %405 = vmatpush1.bf16.msra.mxu0 %v386
      %406 = vmatprep.subr.bf16.mxu0 0
      %407 = vmatpush1.bf16.msra.mxu0 %v387
      %408 = vmatprep.subr.bf16.mxu0 0
      %409 = vmatpush1.bf16.msra.mxu0 %v388
      %410 = vmatprep.subr.bf16.mxu0 0
      %411 = vmatpush1.bf16.msra.mxu0 %v389
      %412 = vmatprep.subr.bf16.mxu0 0
      %413 = vmatpush1.bf16.msra.mxu0 %v390
      %414 = vmatprep.subr.bf16.mxu0 0
      %415 = vmatpush1.bf16.msra.mxu0 %v391
      %416 = vmatprep.subr.bf16.mxu0 0
      %417 = vmatpush1.bf16.msra.mxu0 0
      %418 = vmatprep.subr.bf16.mxu0 0
      %419 = vmatpush1.bf16.msra.mxu0 0
      %420 = vmatprep.subr.bf16.mxu0 0
      %421 = vmatpush1.bf16.msra.mxu0 0
      %422 = vmatprep.subr.bf16.mxu0 0
      %423 = vmatpush1.bf16.msra.mxu0 0
      %424 = vmatprep.subr.bf16.mxu0 0
      %425 = vmatpush1.bf16.msra.mxu0 0
      %426 = vmatprep.subr.bf16.mxu0 0
      %427 = vmatpush1.bf16.msra.mxu0 0
      %428 = vmatprep.subr.bf16.mxu0 0
      %429 = vmatpush1.bf16.msra.mxu0 0
      %430 = vmatprep.subr.bf16.mxu0 0
      %431 = vmatpush1.bf16.msra.mxu0 0
      %432 = vmatprep.mubr.bf16.mxu0 0
      %433 = vmatmul.mubr.bf16.gmra.mrb[0].mxu0 %v328
      %v434 = vpop.f32.mrb[0].mxu0
      %v435 = vadd.f32 %v350, %v434
      %v436 = vpop.f32.mrb[0].mxu0
      %v437 = vpop.f32.mrb[0].mxu0
      %v438 = vadd.f32 %v350, %v437
      %v439 = vpop.f32.mrb[0].mxu0
      %440 = vdwg.mxu0
      %v441 = vmul.f32 %v435, 0.5
      %v442 = vmul.f32 %v438, 0.5
      %v443 = vmul.f32 %v435, 0.044715
      %v444 = vmul.f32 %v438, 0.044715
      %v445 = vmul.f32 %v443, %v435
      %v446 = vmul.f32 %v444, %v438
      %v447 = vmul.f32 %v445, %v435
      %v448 = vmul.f32 %v446, %v438
      %v449 = vadd.f32 %v435, %v447
      %v450 = vadd.f32 %v438, %v448
      %v451 = vmul.f32 %v449, 0.7978846
      %v452 = vmul.f32 %v450, 0.7978846
      %v453 = vtanh.pop %v451
      %v454 = vtanh.pop %v452
      %v455 = vadd.f32 %v453, 1.0
      %v456 = vadd.f32 %v454, 1.0
      %v457 = vmul.f32 %v441, %v455
      %v458 = vmul.f32 %v442, %v456
      %v459 = vpack.c.bf16 %v458, %v457
      %v460 = vld [vmem:[%s5] sm:$0xf]
      %v461 = vld [vmem:[%s5 + $0x4] sm:$0xf]
      %v462 = vld [vmem:[%s5 + $0x8] sm:$0xf]
      %v463 = vld [vmem:[%s5 + $0xc] sm:$0xf]
      %v464 = vld [vmem:[%s5 + $0x10] sm:$0xf]
      %v465 = vld [vmem:[%s5 + $0x14] sm:$0xf]
      %v466 = vld [vmem:[%s5 + $0x18] sm:$0xf]
      %v467 = vld [vmem:[%s5 + $0x1c] sm:$0xf]
      %v468 = vld [vmem:[%s6] sm:$0x1]
      %v470 = vlaneseq
      %v471 = vshrl.u32 %v470, 7
      %v472 = vsub.s32 0, %v471
      %v473 = vrot.slane %v468, %v472
      %v483 = vunpack.c.l.b16 %v460
      %v484 = vunpack.c.l.b16 %v461
      %v485 = vunpack.c.l.b16 %v462
      %v486 = vunpack.c.l.b16 %v463
      %v487 = vunpack.c.l.b16 %v464
      %v488 = vunpack.c.l.b16 %v465
      %v489 = vunpack.c.l.b16 %v466
      %v490 = vunpack.c.l.b16 %v467
      %v491 = vpack.c.b16 %v484, %v483
      %v492 = vpack.c.b16 %v486, %v485
      %v493 = vpack.c.b16 %v488, %v487
      %v494 = vpack.c.b16 %v490, %v489
      %vm499 = vcmask 523264
      %v501 = vsel %vm499, %v459, 0
      %503 = vmatprep.subr.bf16.mxu0 0
      %504 = vmatpush1.bf16.msra.mxu0 %v491
      %505 = vmatprep.subr.bf16.mxu0 0
      %506 = vmatpush1.bf16.msra.mxu0 %v492
      %507 = vmatprep.subr.bf16.mxu0 0
      %508 = vmatpush1.bf16.msra.mxu0 %v493
      %509 = vmatprep.subr.bf16.mxu0 0
      %510 = vmatpush1.bf16.msra.mxu0 %v494
      %511 = vmatprep.subr.bf16.mxu0 0
      %512 = vmatpush1.bf16.msra.mxu0 0
      %513 = vmatprep.subr.bf16.mxu0 0
      %514 = vmatpush1.bf16.msra.mxu0 0
      %515 = vmatprep.subr.bf16.mxu0 0
      %516 = vmatpush1.bf16.msra.mxu0 0
      %517 = vmatprep.subr.bf16.mxu0 0
      %518 = vmatpush1.bf16.msra.mxu0 0
      %519 = vmatprep.subr.bf16.mxu0 0
      %520 = vmatpush1.bf16.msra.mxu0 0
      %521 = vmatprep.subr.bf16.mxu0 0
      %522 = vmatpush1.bf16.msra.mxu0 0
      %523 = vmatprep.subr.bf16.mxu0 0
      %524 = vmatpush1.bf16.msra.mxu0 0
      %525 = vmatprep.subr.bf16.mxu0 0
      %526 = vmatpush1.bf16.msra.mxu0 0
      %527 = vmatprep.subr.bf16.mxu0 0
      %528 = vmatpush1.bf16.msra.mxu0 0
      %529 = vmatprep.subr.bf16.mxu0 0
      %530 = vmatpush1.bf16.msra.mxu0 0
      %531 = vmatprep.subr.bf16.mxu0 0
      %532 = vmatpush1.bf16.msra.mxu0 0
      %533 = vmatprep.subr.bf16.mxu0 0
      %534 = vmatpush1.bf16.msra.mxu0 0
      %535 = vmatprep.mubr.bf16.mxu0 0
      %536 = vmatmul.mubr.bf16.gmra.mrb[0].mxu0 %v501
      %v537 = vpop.f32.mrb[0].mxu0
      %v538 = vadd.f32 %v473, %v537
      %v539 = vpop.f32.mrb[0].mxu0
      %v540 = vpop.f32.mrb[0].mxu0
      %v541 = vadd.f32 %v473, %v540
      %v542 = vpop.f32.mrb[0].mxu0
      %543 = vdwg.mxu0
      %v544 = vadd.f32 %v538, %v285
      %v545 = vadd.f32 %v541, %v286
      %v546 = vpack.c.bf16 %v545, %v544
      %v548 = vunpack.c.l.b16 %v546
      %v549 = vunpack.c.h.b16 %v546
      %v550 = vpack.c.b16 %v548, %v548
      %v551 = vpack.c.b16 %v549, %v549
      %554 = vst [vmem:[%s280] sm:$0xf] %v550
      %555 = vst [vmem:[%s280 + $0x4] sm:$0xf] %v551
      %s556 = smul.u32 2, %s18
      %p557 = scmp.lt.s32.totalorder %s556, 3
      %s558 = scalar_select %p557, %s556, 3
      %s559 = smul.addr %s558, 4
      %s560 = scalar_lea.vmem %s7, %s559
      // Predicated region
      $region49: #{segmentation_vit_forward.10} parent=47 // pred_check
        %p561 = pneg %p188
      $region50: #{segmentation_vit_forward.10} parent=47 // pred_check_branch
        %563 = sbr.rel (%p561) target = $region52
      $region51: #{segmentation_vit_forward.10} parent=47 // pred_region
        %s564 = smul.u32 2, %s18
      $region52: #{segmentation_vit_forward.10} parent=47 // pred_fallthru
        _
    $region48: #{segmentation_vit_forward.10} parent=5 // pred_fallthru
      _
    %p565 = scmp.le.s32.totalorder 2, %s13
    // Predicated region
    $region53: #{segmentation_vit_forward.10} parent=5 // pred_check
      %p566 = pneg %p565
    $region54: #{segmentation_vit_forward.10} parent=5 // pred_check_branch
      %568 = sbr.rel (%p566) target = $region56
    $region55: #{segmentation_vit_forward.10} parent=5 // pred_region
      %s569 = ssub.s32 %s13, 2
      // Predicated region
      $region57: #{segmentation_vit_forward.10} parent=55 // pred_check
        %p570 = pneg %p194
      $region58: #{segmentation_vit_forward.10} parent=55 // pred_check_branch
        %572 = sbr.rel (%p570) target = $region60
      $region59: #{segmentation_vit_forward.10} parent=55 // pred_region
        %s573 = smul.u32 2, %s19
        %p574 = scmp.lt.s32.totalorder %s573, 3
        %s575 = scalar_select %p574, %s573, 3
        %s576 = smul.addr %s575, 4
        %s577 = scalar_lea.vmem %s7, %s576
      $region60: #{segmentation_vit_forward.10} parent=55 // pred_fallthru
        _
    $region56: #{segmentation_vit_forward.10} parent=5 // pred_fallthru
      _
  $region6: #{segmentation_vit_forward.10} parent=0 // loop_footer
    %s17 = sadd.s32 1, %s13
  $region7: #{segmentation_vit_forward.10} parent=0 // loop_footer_branch
    %12 = sbr.rel target = $region3
  $region8: #{segmentation_vit_forward.10} parent=0 // loop_exit
    _

// kernel: tile.23
$region0: #{tile.23}
  #allocation0 [shape = 's32[1]{0}', space=sflag, size = 0x4, scoped, tag = 'scoped memory for tile.23']
  %s0 = inlined_call_operand.vmem [shape: f32[32], index: 0, kind: input, shape index: {}]
  %s1 = inlined_call_operand.vmem [shape: f32[4,32], index: 1, kind: output, shape index: {}]
  // Predicated region
  $region2: #{tile.23} parent=0 // pred_check
    _
  $region3: #{tile.23} parent=0 // pred_check_branch
    %3 = sbr.rel (0) target = $region5
  $region4: #{tile.23} parent=0 // pred_region
    _
  $region5: #{tile.23} parent=0 // pred_fallthru
    _
  %v4 = vld [vmem:[%s0] ss:$0 sm:$0xff]
  %5 = vst [vmem:[%s1] sm:$0xf] %v4

// kernel: segmentation_vit_forward.13
$region0: #{segmentation_vit_forward.13}
  #allocation0 [shape = 'u32[]', space=smem, size = 0x4, offset = 0x4, fixed_abs, tag = 'smem constant byte address 0x4 - core index']
  #allocation1 [shape = 'u32[144,128]{1,0:T(1,128)}', space=vmem, size = 0x12000, scoped, tag = 'internal scratch']
  #allocation2 [shape = 'f32[16,256]{1,0:T(8,128)}', space=vmem, size = 0x4000, scoped, tag = 'scratch operand']
  %s0 = inlined_call_operand.vmem [shape: bf16[32,128], index: 0, kind: input, shape index: {}]
  %s1 = inlined_call_operand.vmem [shape: bf16[128,256], index: 1, kind: input, shape index: {}]
  %s2 = inlined_call_operand.vmem [shape: f32[1,256], index: 2, kind: input, shape index: {}]
  %s3 = inlined_call_operand.vmem [shape: f32[1,128], index: 3, kind: input, shape index: {}]
  %s4 = inlined_call_operand.vmem [shape: f32[1,128], index: 4, kind: input, shape index: {}]
  %s5 = inlined_call_operand.vmem [shape: bf16[32,256], index: 5, kind: output, shape index: {}]
  %s6 = sld [smem:[#allocation0]]
  $region61: #{segmentation_vit_forward.13} parent=0
    _
  %s8 = ssub.s32 1, %s6
  %s9 = scalar_select 0, %s8, %s6
  loop: start=0, step=1, limit=4
  $region2: #{segmentation_vit_forward.13} parent=0 // loop_pre_header
    _
  $region3: #{segmentation_vit_forward.13} parent=0 // loop_header
    %s11 = sphi 0, %s15
    %p12 = scmp.ge.s32.totalorder %s11, 4
    %s18 = sphi 0, %s37
    %s19 = sphi 0, %s33
    %s20 = sphi 0, %s29
    %s21 = sphi 0, %s18
    %s22 = sphi 0, %s19
    %s23 = sphi 0, %s20
    %s24 = sphi 0, %s21
    %s25 = sphi 0, %s22
    %s26 = sphi 0, %s23
    %s42 = sphi 0, %s44
    %s45 = sphi 0, %s42
    %s46 = sphi 0, %s45
    %s62 = sphi 0, %s46
    %s70 = sphi 0, %s72
    %s73 = sphi 0, %s70
    %s74 = sphi 0, %s73
    %s90 = sphi 0, %s74
    %s96 = sphi 0, %s98
    %s99 = sphi 0, %s96
    %s100 = sphi 0, %s99
    %s116 = sphi 0, %s100
    %s120 = sphi 0, %s120
    %s122 = sphi 0, %s120
    %s123 = sphi 0, %s122
    %s137 = sphi 0, %s123
    %s141 = sphi 0, %s141
    %s143 = sphi 0, %s141
    %s144 = sphi 0, %s143
    %s158 = sphi 0, %s144
    %s166 = sphi 0, %s168
    %s169 = sphi 0, %s166
    %s170 = sphi 0, %s169
    %s186 = sphi 0, %s170
  $region4: #{segmentation_vit_forward.13} parent=0 // loop_header_branch
    %14 = sbr.rel (%p12) target = $region8
  $region5: #{segmentation_vit_forward.13} parent=0 // loop_body
    %s16 = ssub.s32 %s11, 1
    %s17 = ssub.s32 %s11, 2
    %s27 = sadd.s32 1, %s20
    %p28 = scmp.ge.s32.totalorder %s27, 1
    %s29 = scalar_select %p28, 0, %s27
    %s30 = sadd.s32 1, %s19
    %s31 = scalar_select %p28, %s30, %s19
    %p32 = scmp.ge.s32.totalorder %s31, 1
    %s33 = scalar_select %p32, 0, %s31
    %s34 = sadd.s32 1, %s18
    %s35 = scalar_select %p32, %s34, %s18
    %p36 = scmp.ge.s32.totalorder %s35, 2
    %s37 = scalar_select %p36, 0, %s35
    %s38 = ssub.s32 %s18, %s37
    %s39 = ssub.s32 %s20, %s29
    %s40 = sor.u32 %s38, %s39
    %p41 = scmp.eq.s32.totalorder %s40, 0
    %s43 = sadd.s32 %s42, 1
    %s44 = scalar_select %p41, %s42, %s43
    %p47 = pneg %p41
    %p48 = scmp.eq.s32.totalorder %s11, 1
    %p49 = por %p47, %p48
    %p50 = scmp.ne.s32.totalorder %s42, %s45
    %p51 = scmp.eq.s32.totalorder %s11, 0
    %p52 = por %p50, %p51
    %p53 = scmp.ne.s32.totalorder %s42, %s45
    %p54 = scmp.eq.s32.totalorder %s16, 1
    %p55 = por %p53, %p54
    %p56 = scmp.ne.s32.totalorder %s45, %s46
    %p57 = scmp.eq.s32.totalorder %s16, 0
    %p58 = por %p56, %p57
    %p59 = scmp.ne.s32.totalorder %s45, %s46
    %p60 = scmp.eq.s32.totalorder %s17, 1
    %p61 = por %p59, %p60
    %p63 = scmp.ne.s32.totalorder %s46, %s62
    %p64 = scmp.eq.s32.totalorder %s17, 0
    %p65 = por %p63, %p64
    %s66 = ssub.s32 %s20, %s29
    %s67 = ssub.s32 %s19, %s33
    %s68 = sor.u32 %s66, %s67
    %p69 = scmp.eq.s32.totalorder %s68, 0
    %s71 = sadd.s32 %s70, 1
    %s72 = scalar_select %p69, %s70, %s71
    %p75 = pneg %p69
    %p76 = scmp.eq.s32.totalorder %s11, 1
    %p77 = por %p75, %p76
    %p78 = scmp.ne.s32.totalorder %s70, %s73
    %p79 = scmp.eq.s32.totalorder %s11, 0
    %p80 = por %p78, %p79
    %p81 = scmp.ne.s32.totalorder %s70, %s73
    %p82 = scmp.eq.s32.totalorder %s16, 1
    %p83 = por %p81, %p82
    %p84 = scmp.ne.s32.totalorder %s73, %s74
    %p85 = scmp.eq.s32.totalorder %s16, 0
    %p86 = por %p84, %p85
    %p87 = scmp.ne.s32.totalorder %s73, %s74
    %p88 = scmp.eq.s32.totalorder %s17, 1
    %p89 = por %p87, %p88
    %p91 = scmp.ne.s32.totalorder %s74, %s90
    %p92 = scmp.eq.s32.totalorder %s17, 0
    %p93 = por %p91, %p92
    %s94 = ssub.s32 %s19, %s33
    %p95 = scmp.eq.s32.totalorder %s94, 0
    %s97 = sadd.s32 %s96, 1
    %s98 = scalar_select %p95, %s96, %s97
    %p101 = pneg %p95
    %p102 = scmp.eq.s32.totalorder %s11, 1
    %p103 = por %p101, %p102
    %p104 = scmp.ne.s32.totalorder %s96, %s99
    %p105 = scmp.eq.s32.totalorder %s11, 0
    %p106 = por %p104, %p105
    %p107 = scmp.ne.s32.totalorder %s96, %s99
    %p108 = scmp.eq.s32.totalorder %s16, 1
    %p109 = por %p107, %p108
    %p110 = scmp.ne.s32.totalorder %s99, %s100
    %p111 = scmp.eq.s32.totalorder %s16, 0
    %p112 = por %p110, %p111
    %p113 = scmp.ne.s32.totalorder %s99, %s100
    %p114 = scmp.eq.s32.totalorder %s17, 1
    %p115 = por %p113, %p114
    %p117 = scmp.ne.s32.totalorder %s100, %s116
    %p118 = scmp.eq.s32.totalorder %s17, 0
    %p119 = por %p117, %p118
    %s121 = sadd.s32 %s120, 1
    %p124 = scmp.eq.s32.totalorder %s11, 1
    %p125 = scmp.ne.s32.totalorder %s120, %s122
    %p126 = scmp.eq.s32.totalorder %s11, 0
    %p127 = por %p125, %p126
    %p128 = scmp.ne.s32.totalorder %s120, %s122
    %p129 = scmp.eq.s32.totalorder %s16, 1
    %p130 = por %p128, %p129
    %p131 = scmp.ne.s32.totalorder %s122, %s123
    %p132 = scmp.eq.s32.totalorder %s16, 0
    %p133 = por %p131, %p132
    %p134 = scmp.ne.s32.totalorder %s122, %s123
    %p135 = scmp.eq.s32.totalorder %s17, 1
    %p136 = por %p134, %p135
    %p138 = scmp.ne.s32.totalorder %s123, %s137
    %p139 = scmp.eq.s32.totalorder %s17, 0
    %p140 = por %p138, %p139
    %s142 = sadd.s32 %s141, 1
    %p145 = scmp.eq.s32.totalorder %s11, 1
    %p146 = scmp.ne.s32.totalorder %s141, %s143
    %p147 = scmp.eq.s32.totalorder %s11, 0
    %p148 = por %p146, %p147
    %p149 = scmp.ne.s32.totalorder %s141, %s143
    %p150 = scmp.eq.s32.totalorder %s16, 1
    %p151 = por %p149, %p150
    %p152 = scmp.ne.s32.totalorder %s143, %s144
    %p153 = scmp.eq.s32.totalorder %s16, 0
    %p154 = por %p152, %p153
    %p155 = scmp.ne.s32.totalorder %s143, %s144
    %p156 = scmp.eq.s32.totalorder %s17, 1
    %p157 = por %p155, %p156
    %p159 = scmp.ne.s32.totalorder %s144, %s158
    %p160 = scmp.eq.s32.totalorder %s17, 0
    %p161 = por %p159, %p160
    %s162 = ssub.s32 %s18, %s37
    %s163 = ssub.s32 %s19, %s33
    %s164 = sor.u32 %s162, %s163
    %p165 = scmp.eq.s32.totalorder %s164, 0
    %s167 = sadd.s32 %s166, 1
    %s168 = scalar_select %p165, %s166, %s167
    %p171 = pneg %p165
    %p172 = scmp.eq.s32.totalorder %s11, 1
    %p173 = por %p171, %p172
    %p174 = scmp.ne.s32.totalorder %s166, %s169
    %p175 = scmp.eq.s32.totalorder %s11, 0
    %p176 = por %p174, %p175
    %p177 = scmp.ne.s32.totalorder %s166, %s169
    %p178 = scmp.eq.s32.totalorder %s16, 1
    %p179 = por %p177, %p178
    %p180 = scmp.ne.s32.totalorder %s169, %s170
    %p181 = scmp.eq.s32.totalorder %s16, 0
    %p182 = por %p180, %p181
    %p183 = scmp.ne.s32.totalorder %s169, %s170
    %p184 = scmp.eq.s32.totalorder %s17, 1
    %p185 = por %p183, %p184
    %p187 = scmp.ne.s32.totalorder %s170, %s186
    %p188 = scmp.eq.s32.totalorder %s17, 0
    %p189 = por %p187, %p188
    %p190 = scmp.le.s32.totalorder 1, %s11
    %p191 = scmp.lt.s32.totalorder %s11, 3
    %p192 = pnand %p190, %p191
    %p193 = pneg %p192
    // Predicated region
    $region9: #{segmentation_vit_forward.13} parent=5 // pred_check
      _
    $region10: #{segmentation_vit_forward.13} parent=5 // pred_check_branch
      %195 = sbr.rel (%p192) target = $region12
    $region11: #{segmentation_vit_forward.13} parent=5 // pred_region
      %s196 = ssub.s32 %s11, 1
      // Predicated region
      $region13: #{segmentation_vit_forward.13} parent=11 // pred_check
        %p197 = pneg %p86
      $region14: #{segmentation_vit_forward.13} parent=11 // pred_check_branch
        %199 = sbr.rel (%p197) target = $region16
      $region15: #{segmentation_vit_forward.13} parent=11 // pred_region
        %s200 = smul.u32 16, %s23
        %s201 = smul.u32 2, %s22
        %p202 = scmp.lt.s32.totalorder %s200, 15
        %s203 = scalar_select %p202, %s200, 15
        %p204 = scmp.lt.s32.totalorder %s201, 1
        %s205 = scalar_select %p204, %s201, 1
        %s206 = smul.addr %s203, 2
        %s207 = sadd.s32 %s205, %s206
        %s208 = smul.addr %s207, 4
        %s209 = scalar_lea.vmem %s1, %s208
        %s210 = smul.u32 16, %s23
        %s211 = smul.u32 2, %s22
      $region16: #{segmentation_vit_forward.13} parent=11 // pred_fallthru
        _
      // Predicated region
      $region17: #{segmentation_vit_forward.13} parent=11 // pred_check
        %p212 = pneg %p112
      $region18: #{segmentation_vit_forward.13} parent=11 // pred_check_branch
        %214 = sbr.rel (%p212) target = $region20
      $region19: #{segmentation_vit_forward.13} parent=11 // pred_region
        %s215 = smul.u32 2, %s22
        %p216 = scmp.lt.s32.totalorder %s215, 1
        %s217 = scalar_select %p216, %s215, 1
        %s218 = scalar_lea.vmem %s2, %s217
        %s219 = smul.u32 2, %s22
      $region20: #{segmentation_vit_forward.13} parent=11 // pred_fallthru
        _
      // Predicated region
      $region21: #{segmentation_vit_forward.13} parent=11 // pred_check
        %p220 = pneg %p133
      $region22: #{segmentation_vit_forward.13} parent=11 // pred_check_branch
        %222 = sbr.rel (%p220) target = $region24
      $region23: #{segmentation_vit_forward.13} parent=11 // pred_region
        _
      $region24: #{segmentation_vit_forward.13} parent=11 // pred_fallthru
        _
      // Predicated region
      $region25: #{segmentation_vit_forward.13} parent=11 // pred_check
        %p223 = pneg %p154
      $region26: #{segmentation_vit_forward.13} parent=11 // pred_check_branch
        %225 = sbr.rel (%p223) target = $region28
      $region27: #{segmentation_vit_forward.13} parent=11 // pred_region
        _
      $region28: #{segmentation_vit_forward.13} parent=11 // pred_fallthru
        _
    $region12: #{segmentation_vit_forward.13} parent=5 // pred_fallthru
      _
    %p226 = scmp.lt.s32.totalorder %s11, 2
    // Predicated region
    $region29: #{segmentation_vit_forward.13} parent=5 // pred_check
      %p227 = pneg %p226
    $region30: #{segmentation_vit_forward.13} parent=5 // pred_check_branch
      %229 = sbr.rel (%p227) target = $region32
    $region31: #{segmentation_vit_forward.13} parent=5 // pred_region
      // Predicated region
      $region33: #{segmentation_vit_forward.13} parent=31 // pred_check
        %p230 = pneg %p52
      $region34: #{segmentation_vit_forward.13} parent=31 // pred_check_branch
        %232 = sbr.rel (%p230) target = $region36
      $region35: #{segmentation_vit_forward.13} parent=31 // pred_region
        %s233 = smul.u32 2, %s18
        %p234 = scmp.lt.s32.totalorder %s233, 3
        %s235 = scalar_select %p234, %s233, 3
        %p236 = scmp.lt.s32.totalorder %s20, 0
        %s237 = scalar_select %p236, %s20, 0
        %s238 = sadd.s32 %s237, %s235
        %s239 = smul.addr %s238, 4
        %s240 = scalar_lea.vmem %s0, %s239
        %s241 = smul.u32 2, %s18
      $region36: #{segmentation_vit_forward.13} parent=31 // pred_fallthru
        _
    $region32: #{segmentation_vit_forward.13} parent=5 // pred_fallthru
      _
    %p242 = scmp.le.s32.totalorder 1, %s11
    %p243 = scmp.lt.s32.totalorder %s11, 3
    %p244 = pnand %p242, %p243
    %p245 = pneg %p244
    // Predicated region
    $region37: #{segmentation_vit_forward.13} parent=5 // pred_check
      _
    $region38: #{segmentation_vit_forward.13} parent=5 // pred_check_branch
      %247 = sbr.rel (%p244) target = $region40
    $region39: #{segmentation_vit_forward.13} parent=5 // pred_region
      %s248 = ssub.s32 %s11, 1
      %s249 = smul.u32 2, %s21
      %p250 = scmp.lt.s32.totalorder %s249, 3
      %s251 = scalar_select %p250, %s249, 3
      %p252 = scmp.lt.s32.totalorder %s23, 0
      %s253 = scalar_select %p252, %s23, 0
      %s254 = sadd.s32 %s253, %s251
      %s255 = smul.addr %s254, 4
      %s256 = scalar_lea.vmem %s0, %s255
      %p257 = pneg %p58
      %p258 = pneg %p55
      %s259 = smul.u32 16, %s23
      %s260 = smul.u32 2, %s22
      %p261 = scmp.lt.s32.totalorder %s259, 15
      %s262 = scalar_select %p261, %s259, 15
      %p263 = scmp.lt.s32.totalorder %s260, 1
      %s264 = scalar_select %p263, %s260, 1
      %s265 = smul.addr %s262, 2
      %s266 = sadd.s32 %s264, %s265
      %s267 = smul.addr %s266, 4
      %s268 = scalar_lea.vmem %s1, %s267
      %p269 = pneg %p86
      %p270 = pneg %p83
      %s271 = smul.u32 2, %s22
      %p272 = scmp.lt.s32.totalorder %s271, 1
      %s273 = scalar_select %p272, %s271, 1
      %s274 = scalar_lea.vmem %s2, %s273
      %p275 = pneg %p112
      %p276 = pneg %p109
      %p277 = pneg %p133
      %p278 = pneg %p130
      %p279 = pneg %p154
      %p280 = pneg %p151
      %p281 = pneg %p182
      %p282 = pneg %p179
      %s283 = smul.u32 2, %s21
      %s284 = smul.u32 2, %s22
      %p285 = scmp.lt.s32.totalorder %s283, 3
      %s286 = scalar_select %p285, %s283, 3
      %p287 = scmp.lt.s32.totalorder %s284, 1
      %s288 = scalar_select %p287, %s284, 1
      %s289 = smul.addr %s286, 2
      %s290 = sadd.s32 %s288, %s289
      %s291 = smul.addr %s290, 4
      %s292 = scalar_lea.vmem %s5, %s291
      %s293 = smul.u32 2, %s21
      %p294 = scmp.lt.s32.totalorder %s293, 3
      %s295 = scalar_select %p294, %s293, 3
      %p296 = scmp.lt.s32.totalorder %s23, 0
      %s297 = scalar_select %p296, %s23, 0
      %s298 = sadd.s32 %s297, %s295
      %s299 = smul.addr %s298, 4
      %s300 = scalar_lea.vmem %s0, %s299
      %s301 = smul.u32 2, %s21
      %s302 = smul.u32 16, %s23
      %s303 = smul.u32 2, %s22
      %p304 = scmp.lt.s32.totalorder %s302, 15
      %s305 = scalar_select %p304, %s302, 15
      %p306 = scmp.lt.s32.totalorder %s303, 1
      %s307 = scalar_select %p306, %s303, 1
      %s308 = smul.addr %s305, 2
      %s309 = sadd.s32 %s307, %s308
      %s310 = smul.addr %s309, 4
      %s311 = scalar_lea.vmem %s1, %s310
      %s312 = smul.u32 16, %s23
      %s313 = smul.u32 2, %s22
      %s314 = smul.u32 2, %s22
      %p315 = scmp.lt.s32.totalorder %s314, 1
      %s316 = scalar_select %p315, %s314, 1
      %s317 = scalar_lea.vmem %s2, %s316
      %s318 = smul.u32 2, %s22
      %s319 = smul.u32 2, %s21
      %s320 = smul.u32 2, %s22
      %p321 = scmp.lt.s32.totalorder %s319, 3
      %s322 = scalar_select %p321, %s319, 3
      %p323 = scmp.lt.s32.totalorder %s320, 1
      %s324 = scalar_select %p323, %s320, 1
      %s325 = smul.addr %s322, 2
      %s326 = sadd.s32 %s324, %s325
      %s327 = smul.addr %s326, 4
      %s328 = scalar_lea.vmem %s5, %s327
      %s329 = smul.u32 2, %s21
      %s330 = smul.u32 2, %s22
      %p332 = scmp.eq.s32.totalorder %s23, 0
      // Predicated region
      $region41: #{segmentation_vit_forward.13} parent=39 // pred_check
        %p333 = pneg %p332
      $region42: #{segmentation_vit_forward.13} parent=39 // pred_check_branch
        %335 = sbr.rel (%p333) target = $region44
      $region43: #{segmentation_vit_forward.13} parent=39 // pred_region
        %336 = vst [vmem:[#allocation2] sm:$0xff] 0.0
        %337 = vst [vmem:[#allocation2 + $0x8] sm:$0xff] 0.0
        %338 = vst [vmem:[#allocation2 + $0x10] sm:$0xff] 0.0
        %339 = vst [vmem:[#allocation2 + $0x18] sm:$0xff] 0.0
      $region44: #{segmentation_vit_forward.13} parent=39 // pred_fallthru
        _
      %v340 = vld [vmem:[%s300] sm:$0xf]
      %v341 = vld [vmem:[%s300 + $0x4] sm:$0xf]
      %v342 = vunpack.c.l.bf16 %v340
      %v343 = vunpack.c.l.bf16 %v341
      %344 = vadd.xlane.f32.xlu0 %v342
      %v345 = vpop.xlane.xlu0 %344
      %346 = vadd.xlane.f32.xlu0 %v343
      %v347 = vpop.xlane.xlu0 %346
      %v348 = vrcp.pop 128.0
      %v349 = vmul.f32 %v345, %v348
      %v350 = vmul.f32 %v347, %v348
      %v351 = vsub.f32 %v342, %v349
      %v352 = vsub.f32 %v343, %v350
      %v353 = vmul.f32 %v351, %v351
      %v354 = vmul.f32 %v352, %v352
      %355 = vadd.xlane.f32.xlu0 %v353
      %v356 = vpop.xlane.xlu0 %355
      %357 = vadd.xlane.f32.xlu0 %v354
      %v358 = vpop.xlane.xlu0 %357
      %v359 = vmul.f32 %v356, %v348
      %v360 = vmul.f32 %v358, %v348
      %v361 = vadd.f32 %v359, 1e-05
      %v362 = vadd.f32 %v360, 1e-05
      %v363 = vrsqrt.pop %v361
      %v364 = vrsqrt.pop %v362
      %v365 = vmul.f32 %v351, %v363
      %v366 = vmul.f32 %v352, %v364
      %v367 = vld [vmem:[%s3] sm:$0x1]
      %v369 = vlaneseq
      %v370 = vshrl.u32 %v369, 7
      %v371 = vsub.s32 0, %v370
      %v372 = vrot.slane %v367, %v371
      %v374 = vmul.f32 %v365, %v372
      %v375 = vmul.f32 %v366, %v372
      %v376 = vld [vmem:[%s4] sm:$0x1]
      %v378 = vlaneseq
      %v379 = vshrl.u32 %v378, 7
      %v380 = vsub.s32 0, %v379
      %v381 = vrot.slane %v376, %v380
      %v383 = vadd.f32 %v374, %v381
      %v384 = vadd.f32 %v375, %v381
      %v385 = vld [vmem:[#allocation2] sm:$0xff]
      %v386 = vld [vmem:[#allocation2 + $0x8] sm:$0xff]
      %v387 = vld [vmem:[#allocation2 + $0x10] sm:$0xff]
      %v388 = vld [vmem:[#allocation2 + $0x18] sm:$0xff]
      %v389 = vpack.c.bf16 %v384, %v383
      %v390 = vld [vmem:[%s311] sm:$0xff]
      %v391 = vld [vmem:[%s311 + $0x8] sm:$0xff]
      %v392 = vld [vmem:[%s311 + $0x10] sm:$0xff]
      %v393 = vld [vmem:[%s311 + $0x18] sm:$0xff]
      %v394 = vld [vmem:[%s311 + $0x20] sm:$0xff]
      %v395 = vld [vmem:[%s311 + $0x28] sm:$0xff]
      %v396 = vld [vmem:[%s311 + $0x30] sm:$0xff]
      %v397 = vld [vmem:[%s311 + $0x38] sm:$0xff]
      %v398 = vld [vmem:[%s311 + $0x40] sm:$0xff]
      %v399 = vld [vmem:[%s311 + $0x48] sm:$0xff]
      %v400 = vld [vmem:[%s311 + $0x50] sm:$0xff]
      %v401 = vld [vmem:[%s311 + $0x58] sm:$0xff]
      %v402 = vld [vmem:[%s311 + $0x60] sm:$0xff]
      %v403 = vld [vmem:[%s311 + $0x68] sm:$0xff]
      %v404 = vld [vmem:[%s311 + $0x70] sm:$0xff]
      %v405 = vld [vmem:[%s311 + $0x78] sm:$0xff]
      %v422 = vunpack.c.l.b16 %v390
      %v423 = vunpack.c.h.b16 %v390
      %v424 = vunpack.c.l.b16 %v391
      %v425 = vunpack.c.h.b16 %v391
      %v426 = vunpack.c.l.b16 %v392
      %v427 = vunpack.c.h.b16 %v392
      %v428 = vunpack.c.l.b16 %v393
      %v429 = vunpack.c.h.b16 %v393
      %v430 = vunpack.c.l.b16 %v394
      %v431 = vunpack.c.h.b16 %v394
      %v432 = vunpack.c.l.b16 %v395
      %v433 = vunpack.c.h.b16 %v395
      %v434 = vunpack.c.l.b16 %v396
      %v435 = vunpack.c.h.b16 %v396
      %v436 = vunpack.c.l.b16 %v397
      %v437 = vunpack.c.h.b16 %v397
      %v438 = vunpack.c.l.b16 %v398
      %v439 = vunpack.c.h.b16 %v398
      %v440 = vunpack.c.l.b16 %v399
      %v441 = vunpack.c.h.b16 %v399
      %v442 = vunpack.c.l.b16 %v400
      %v443 = vunpack.c.h.b16 %v400
      %v444 = vunpack.c.l.b16 %v401
      %v445 = vunpack.c.h.b16 %v401
      %v446 = vunpack.c.l.b16 %v402
      %v447 = vunpack.c.h.b16 %v402
      %v448 = vunpack.c.l.b16 %v403
      %v449 = vunpack.c.h.b16 %v403
      %v450 = vunpack.c.l.b16 %v404
      %v451 = vunpack.c.h.b16 %v404
      %v452 = vunpack.c.l.b16 %v405
      %v453 = vunpack.c.h.b16 %v405
      %v454 = vpack.c.b16 %v424, %v422
      %v455 = vpack.c.b16 %v425, %v423
      %v456 = vpack.c.b16 %v428, %v426
      %v457 = vpack.c.b16 %v429, %v427
      %v458 = vpack.c.b16 %v432, %v430
      %v459 = vpack.c.b16 %v433, %v431
      %v460 = vpack.c.b16 %v436, %v434
      %v461 = vpack.c.b16 %v437, %v435
      %v462 = vpack.c.b16 %v440, %v438
      %v463 = vpack.c.b16 %v441, %v439
      %v464 = vpack.c.b16 %v444, %v442
      %v465 = vpack.c.b16 %v445, %v443
      %v466 = vpack.c.b16 %v448, %v446
      %v467 = vpack.c.b16 %v449, %v447
      %v468 = vpack.c.b16 %v452, %v450
      %v469 = vpack.c.b16 %v453, %v451
      %486 = vmatprep.subr.bf16.mxu0 %v455
      %487 = vmatpush1.bf16.msra.mxu0 %v454
      %488 = vmatprep.subr.bf16.mxu0 %v457
      %489 = vmatpush1.bf16.msra.mxu0 %v456
      %490 = vmatprep.subr.bf16.mxu0 %v459
      %491 = vmatpush1.bf16.msra.mxu0 %v458
      %492 = vmatprep.subr.bf16.mxu0 %v461
      %493 = vmatpush1.bf16.msra.mxu0 %v460
      %494 = vmatprep.subr.bf16.mxu0 %v463
      %495 = vmatpush1.bf16.msra.mxu0 %v462
      %496 = vmatprep.subr.bf16.mxu0 %v465
      %497 = vmatpush1.bf16.msra.mxu0 %v464
      %498 = vmatprep.subr.bf16.mxu0 %v467
      %499 = vmatpush1.bf16.msra.mxu0 %v466
      %500 = vmatprep.subr.bf16.mxu0 %v469
      %501 = vmatpush1.bf16.msra.mxu0 %v468
      %502 = vmatprep.subr.bf16.mxu0 0
      %503 = vmatpush1.bf16.msra.mxu0 0
      %504 = vmatprep.subr.bf16.mxu0 0
      %505 = vmatpush1.bf16.msra.mxu0 0
      %506 = vmatprep.subr.bf16.mxu0 0
      %507 = vmatpush1.bf16.msra.mxu0 0
      %508 = vmatprep.subr.bf16.mxu0 0
      %509 = vmatpush1.bf16.msra.mxu0 0
      %510 = vmatprep.subr.bf16.mxu0 0
      %511 = vmatpush1.bf16.msra.mxu0 0
      %512 = vmatprep.subr.bf16.mxu0 0
      %513 = vmatpush1.bf16.msra.mxu0 0
      %514 = vmatprep.subr.bf16.mxu0 0
      %515 = vmatpush1.bf16.msra.mxu0 0
      %516 = vmatprep.subr.bf16.mxu0 0
      %517 = vmatpush1.bf16.msra.mxu0 0
      %518 = vmatprep.mubr.bf16.mxu0 0
      %519 = vmatmul.mubr.bf16.gmra.mrb[0].mxu0 %v389
      %v520 = vpop.f32.mrb[0].mxu0
      %v521 = vadd.f32 0.0, %v520
      %v522 = vpop.f32.mrb[0].mxu0
      %v523 = vadd.f32 0.0, %v522
      %v524 = vpop.f32.mrb[0].mxu0
      %v525 = vadd.f32 0.0, %v524
      %v526 = vpop.f32.mrb[0].mxu0
      %v527 = vadd.f32 0.0, %v526
      %528 = vdwg.mxu0
      %v529 = vadd.f32 %v385, %v521
      %v530 = vadd.f32 %v386, %v523
      %v531 = vadd.f32 %v387, %v525
      %v532 = vadd.f32 %v388, %v527
      %533 = vst [vmem:[#allocation2] sm:$0xff] %v529
      %534 = vst [vmem:[#allocation2 + $0x8] sm:$0xff] %v530
      %535 = vst [vmem:[#allocation2 + $0x10] sm:$0xff] %v531
      %536 = vst [vmem:[#allocation2 + $0x18] sm:$0xff] %v532
      // Predicated region
      $region45: #{segmentation_vit_forward.13} parent=39 // pred_check
        %p537 = pneg %p332
      $region46: #{segmentation_vit_forward.13} parent=39 // pred_check_branch
        %539 = sbr.rel (%p537) target = $region48
      $region47: #{segmentation_vit_forward.13} parent=39 // pred_region
        %v540 = vld [vmem:[#allocation2] sm:$0xff]
        %v541 = vld [vmem:[#allocation2 + $0x8] sm:$0xff]
        %v542 = vld [vmem:[#allocation2 + $0x10] sm:$0xff]
        %v543 = vld [vmem:[#allocation2 + $0x18] sm:$0xff]
        %v544 = vld [vmem:[%s317] sm:$0x3]
        %v546 = vlaneseq
        %v547 = vshrl.u32 %v546, 7
        %v548 = vsub.s32 0, %v547
        %v549 = vrot.slane %v544, %v548
        %v550 = vlaneseq
        %v551 = vshrl.u32 %v550, 7
        %v552 = vsub.s32 1, %v551
        %v553 = vrot.slane %v544, %v552
        %v556 = vadd.f32 %v540, %v549
        %v557 = vadd.f32 %v541, %v553
        %v558 = vadd.f32 %v542, %v549
        %v559 = vadd.f32 %v543, %v553
        %v560 = vmax.f32 %v556, 0.0
        %v561 = vmax.f32 %v557, 0.0
        %v562 = vmax.f32 %v558, 0.0
        %v563 = vmax.f32 %v559, 0.0
        %v564 = vpack.c.bf16 %v562, %v560
        %v565 = vpack.c.bf16 %v563, %v561
        %v568 = vunpack.c.l.b16 %v564
        %v569 = vunpack.c.l.b16 %v565
        %v570 = vunpack.c.h.b16 %v564
        %v571 = vunpack.c.h.b16 %v565
        %v572 = vpack.c.b16 %v569, %v568
        %v573 = vpack.c.b16 %v571, %v570
        %576 = vst [vmem:[%s328] sm:$0xff] %v572
        %577 = vst [vmem:[%s328 + $0x8] sm:$0xff] %v573
      $region48: #{segmentation_vit_forward.13} parent=39 // pred_fallthru
        _
      %s578 = smul.u32 2, %s21
      %s579 = smul.u32 2, %s22
      %p580 = scmp.lt.s32.totalorder %s578, 3
      %s581 = scalar_select %p580, %s578, 3
      %p582 = scmp.lt.s32.totalorder %s579, 1
      %s583 = scalar_select %p582, %s579, 1
      %s584 = smul.addr %s581, 2
      %s585 = sadd.s32 %s583, %s584
      %s586 = smul.addr %s585, 4
      %s587 = scalar_lea.vmem %s5, %s586
      // Predicated region
      $region49: #{segmentation_vit_forward.13} parent=39 // pred_check
        %p588 = pneg %p179
      $region50: #{segmentation_vit_forward.13} parent=39 // pred_check_branch
        %590 = sbr.rel (%p588) target = $region52
      $region51: #{segmentation_vit_forward.13} parent=39 // pred_region
        %s591 = smul.u32 2, %s21
        %s592 = smul.u32 2, %s22
      $region52: #{segmentation_vit_forward.13} parent=39 // pred_fallthru
        _
    $region40: #{segmentation_vit_forward.13} parent=5 // pred_fallthru
      _
    %p593 = scmp.le.s32.totalorder 2, %s11
    // Predicated region
    $region53: #{segmentation_vit_forward.13} parent=5 // pred_check
      %p594 = pneg %p593
    $region54: #{segmentation_vit_forward.13} parent=5 // pred_check_branch
      %596 = sbr.rel (%p594) target = $region56
    $region55: #{segmentation_vit_forward.13} parent=5 // pred_region
      %s597 = ssub.s32 %s11, 2
      // Predicated region
      $region57: #{segmentation_vit_forward.13} parent=55 // pred_check
        %p598 = pneg %p185
      $region58: #{segmentation_vit_forward.13} parent=55 // pred_check_branch
        %600 = sbr.rel (%p598) target = $region60
      $region59: #{segmentation_vit_forward.13} parent=55 // pred_region
        %s601 = smul.u32 2, %s24
        %s602 = smul.u32 2, %s25
        %p603 = scmp.lt.s32.totalorder %s601, 3
        %s604 = scalar_select %p603, %s601, 3
        %p605 = scmp.lt.s32.totalorder %s602, 1
        %s606 = scalar_select %p605, %s602, 1
        %s607 = smul.addr %s604, 2
        %s608 = sadd.s32 %s606, %s607
        %s609 = smul.addr %s608, 4
        %s610 = scalar_lea.vmem %s5, %s609
      $region60: #{segmentation_vit_forward.13} parent=55 // pred_fallthru
        _
    $region56: #{segmentation_vit_forward.13} parent=5 // pred_fallthru
      _
  $region6: #{segmentation_vit_forward.13} parent=0 // loop_footer
    %s15 = sadd.s32 1, %s11
  $region7: #{segmentation_vit_forward.13} parent=0 // loop_footer_branch
    %10 = sbr.rel target = $region3
  $region8: #{segmentation_vit_forward.13} parent=0 // loop_exit
    _

// kernel: tile.28
$region0: #{tile.28}
  %s0 = inlined_call_operand.vmem [shape: f32[4,32], index: 0, kind: input, shape index: {}]
  %s1 = inlined_call_operand.vmem [shape: f32[1,128], index: 1, kind: output, shape index: {}]
  $region1: #{tile.28} parent=0
    #allocation0 [shape = 'u8[4096]{0}', space=vmem, size = 0x1000, scoped, tag = 'scoped mem for output reshape']
    #allocation1 [shape = 'u8[4096]{0}', space=vmem, size = 0x1000, scoped, tag = 'scoped mem for input reshape']
    %s3 = sshllo.u32 0, 4
    %v4 = vld [vmem:[%s0] sm:%s3]
    %5 = vst [vmem:[#allocation1] sm:%s3] %v4
    %v6 = vld [vmem:[#allocation1] sm:$0x1]
    %vm7 = vcmask 261120
    %8 = vst.msk [vmem:[#allocation0] sm:$0x1] %vm7, %v6
    %s9 = scalar_lea.vmem [#allocation1], 3
    %v10 = vld [vmem:[%s9] sm:$0x1]
    %11 = vrot.lane.b32.xlu0 %v10, 96
    %v12 = vpop.permute.xlu0 %11
    %vm13 = vcmask 1048320
    %14 = vst.msk [vmem:[#allocation0] sm:$0x1] %vm13, %v12
    %s15 = scalar_lea.vmem [#allocation1], 2
    %v16 = vld [vmem:[%s15] sm:$0x1]
    %17 = vrot.lane.b32.xlu0 %v16, 64
    %v18 = vpop.permute.xlu0 %17
    %vm19 = vcmask 785920
    %20 = vst.msk [vmem:[#allocation0] sm:$0x1] %vm19, %v18
    %s21 = scalar_lea.vmem [#allocation1], 1
    %v22 = vld [vmem:[%s21] sm:$0x1]
    %23 = vrot.lane.b32.xlu0 %v22, 32
    %v24 = vpop.permute.xlu0 %23
    %vm25 = vcmask 523520
    %26 = vst.msk [vmem:[#allocation0] sm:$0x1] %vm25, %v24
    %s28 = sshllo.u32 0, 1
    %v30 = vld [vmem:[#allocation0] sm:%s28]
    %s31 = sshllo.u32 0, 1
    %32 = vst [vmem:[%s1] sm:%s31] %v30

// kernel: tile.27
$region0: #{tile.27}
  #allocation0 [shape = 's32[1]{0}', space=sflag, size = 0x4, scoped, tag = 'scoped memory for tile.27']
  %s0 = inlined_call_operand.vmem [shape: f32[5], index: 0, kind: input, shape index: {}]
  %s1 = inlined_call_operand.vmem [shape: f32[4,5], index: 1, kind: output, shape index: {}]
  // Predicated region
  $region2: #{tile.27} parent=0 // pred_check
    _
  $region3: #{tile.27} parent=0 // pred_check_branch
    %3 = sbr.rel (0) target = $region5
  $region4: #{tile.27} parent=0 // pred_region
    _
  $region5: #{tile.27} parent=0 // pred_fallthru
    _
  %v4 = vld [vmem:[%s0] ss:$0 sm:$0xff]
  %5 = vst [vmem:[%s1] sm:$0xf] %v4

// kernel: tile.29
$region0: #{tile.29}
  %s0 = inlined_call_operand.vmem [shape: f32[4,5], index: 0, kind: input, shape index: {}]
  %s1 = inlined_call_operand.vmem [shape: f32[1,20], index: 1, kind: output, shape index: {}]
  $region1: #{tile.29} parent=0
    #allocation0 [shape = 'u8[4096]{0}', space=vmem, size = 0x1000, scoped, tag = 'scoped mem for output reshape']
    #allocation1 [shape = 'u8[4096]{0}', space=vmem, size = 0x1000, scoped, tag = 'scoped mem for input reshape']
    %s3 = sshllo.u32 0, 4
    %v4 = vld [vmem:[%s0] sm:%s3]
    %5 = vst [vmem:[#allocation1] sm:%s3] %v4
    %v6 = vld [vmem:[#allocation1] sm:$0x1]
    %vm7 = vcmask 39936
    %8 = vst.msk [vmem:[#allocation0] sm:$0x1] %vm7, %v6
    %s9 = scalar_lea.vmem [#allocation1], 3
    %v10 = vld [vmem:[%s9] sm:$0x1]
    %11 = vrot.lane.b32.xlu0 %v10, 15
    %v12 = vpop.permute.xlu0 %11
    %vm13 = vcmask 162936
    %14 = vst.msk [vmem:[#allocation0] sm:$0x1] %vm13, %v12
    %s15 = scalar_lea.vmem [#allocation1], 2
    %v16 = vld [vmem:[%s15] sm:$0x1]
    %17 = vrot.lane.b32.xlu0 %v16, 10
    %v18 = vpop.permute.xlu0 %17
    %vm19 = vcmask 121936
    %20 = vst.msk [vmem:[#allocation0] sm:$0x1] %vm19, %v18
    %s21 = scalar_lea.vmem [#allocation1], 1
    %v22 = vld [vmem:[%s21] sm:$0x1]
    %23 = vrot.lane.b32.xlu0 %v22, 5
    %v24 = vpop.permute.xlu0 %23
    %vm25 = vcmask 80936
    %26 = vst.msk [vmem:[#allocation0] sm:$0x1] %vm25, %v24
    %s28 = sshllo.u32 0, 1
    %v30 = vld [vmem:[#allocation0] sm:%s28]
    %s31 = sshllo.u32 0, 1
    %32 = vst [vmem:[%s1] sm:%s31] %v30

// kernel: segmentation_vit_forward.9
$region0: #{segmentation_vit_forward.9}
  #allocation0 [shape = 'u32[]', space=smem, size = 0x4, offset = 0x4, fixed_abs, tag = 'smem constant byte address 0x4 - core index']
  #allocation1 [shape = 'u32[144,128]{1,0:T(1,128)}', space=vmem, size = 0x12000, scoped, tag = 'internal scratch']
  %s0 = inlined_call_operand.vmem [shape: bf16[32,128], index: 0, kind: input, shape index: {}]
  %s1 = inlined_call_operand.vmem [shape: f32[1,128], index: 1, kind: input, shape index: {}]
  %s2 = inlined_call_operand.vmem [shape: f32[1,128], index: 2, kind: input, shape index: {}]
  %s3 = inlined_call_operand.vmem [shape: bf16[3,4,128,32], index: 3, kind: input, shape index: {}]
  %s4 = inlined_call_operand.vmem [shape: f32[3,4,1,32], index: 4, kind: input, shape index: {}]
  %s5 = inlined_call_operand.vmem [shape: bf16[4,32,128], index: 5, kind: input, shape index: {}]
  %s6 = inlined_call_operand.vmem [shape: f32[1,128], index: 6, kind: input, shape index: {}]
  %s7 = inlined_call_operand.vmem [shape: bf16[32,128], index: 7, kind: output, shape index: {}]
  %s8 = sld [smem:[#allocation0]]
  $region61: #{segmentation_vit_forward.9} parent=0
    _
  %s10 = ssub.s32 1, %s8
  %s11 = scalar_select 0, %s10, %s8
  loop: start=0, step=1, limit=4
  $region2: #{segmentation_vit_forward.9} parent=0 // loop_pre_header
    _
  $region3: #{segmentation_vit_forward.9} parent=0 // loop_header
    %s13 = sphi 0, %s17
    %p14 = scmp.ge.s32.totalorder %s13, 4
    %s23 = sphi 0, %s25
    %s26 = sphi 0, %s23
    %s27 = sphi 0, %s26
    %s43 = sphi 0, %s27
    %s47 = sphi 0, %s47
    %s49 = sphi 0, %s47
    %s50 = sphi 0, %s49
    %s64 = sphi 0, %s50
    %s68 = sphi 0, %s68
    %s70 = sphi 0, %s68
    %s71 = sphi 0, %s70
    %s85 = sphi 0, %s71
    %s89 = sphi 0, %s89
    %s91 = sphi 0, %s89
    %s92 = sphi 0, %s91
    %s106 = sphi 0, %s92
    %s110 = sphi 0, %s110
    %s112 = sphi 0, %s110
    %s113 = sphi 0, %s112
    %s127 = sphi 0, %s113
    %s131 = sphi 0, %s131
    %s133 = sphi 0, %s131
    %s134 = sphi 0, %s133
    %s148 = sphi 0, %s134
    %s152 = sphi 0, %s152
    %s154 = sphi 0, %s152
    %s155 = sphi 0, %s154
    %s169 = sphi 0, %s155
    %s175 = sphi 0, %s177
    %s178 = sphi 0, %s175
    %s179 = sphi 0, %s178
    %s195 = sphi 0, %s179
  $region4: #{segmentation_vit_forward.9} parent=0 // loop_header_branch
    %16 = sbr.rel (%p14) target = $region8
  $region5: #{segmentation_vit_forward.9} parent=0 // loop_body
    %s18 = ssub.s32 %s13, 1
    %s19 = ssub.s32 %s13, 2
    %s20 = sadd.s32 %s13, 1
    %s21 = ssub.s32 %s13, %s20
    %p22 = scmp.eq.s32.totalorder %s21, 0
    %s24 = sadd.s32 %s23, 1
    %s25 = scalar_select %p22, %s23, %s24
    %p28 = pneg %p22
    %p29 = scmp.eq.s32.totalorder %s13, 1
    %p30 = por %p28, %p29
    %p31 = scmp.ne.s32.totalorder %s23, %s26
    %p32 = scmp.eq.s32.totalorder %s13, 0
    %p33 = por %p31, %p32
    %p34 = scmp.ne.s32.totalorder %s23, %s26
    %p35 = scmp.eq.s32.totalorder %s18, 1
    %p36 = por %p34, %p35
    %p37 = scmp.ne.s32.totalorder %s26, %s27
    %p38 = scmp.eq.s32.totalorder %s18, 0
    %p39 = por %p37, %p38
    %p40 = scmp.ne.s32.totalorder %s26, %s27
    %p41 = scmp.eq.s32.totalorder %s19, 1
    %p42 = por %p40, %p41
    %p44 = scmp.ne.s32.totalorder %s27, %s43
    %p45 = scmp.eq.s32.totalorder %s19, 0
    %p46 = por %p44, %p45
    %s48 = sadd.s32 %s47, 1
    %p51 = scmp.eq.s32.totalorder %s13, 1
    %p52 = scmp.ne.s32.totalorder %s47, %s49
    %p53 = scmp.eq.s32.totalorder %s13, 0
    %p54 = por %p52, %p53
    %p55 = scmp.ne.s32.totalorder %s47, %s49
    %p56 = scmp.eq.s32.totalorder %s18, 1
    %p57 = por %p55, %p56
    %p58 = scmp.ne.s32.totalorder %s49, %s50
    %p59 = scmp.eq.s32.totalorder %s18, 0
    %p60 = por %p58, %p59
    %p61 = scmp.ne.s32.totalorder %s49, %s50
    %p62 = scmp.eq.s32.totalorder %s19, 1
    %p63 = por %p61, %p62
    %p65 = scmp.ne.s32.totalorder %s50, %s64
    %p66 = scmp.eq.s32.totalorder %s19, 0
    %p67 = por %p65, %p66
    %s69 = sadd.s32 %s68, 1
    %p72 = scmp.eq.s32.totalorder %s13, 1
    %p73 = scmp.ne.s32.totalorder %s68, %s70
    %p74 = scmp.eq.s32.totalorder %s13, 0
    %p75 = por %p73, %p74
    %p76 = scmp.ne.s32.totalorder %s68, %s70
    %p77 = scmp.eq.s32.totalorder %s18, 1
    %p78 = por %p76, %p77
    %p79 = scmp.ne.s32.totalorder %s70, %s71
    %p80 = scmp.eq.s32.totalorder %s18, 0
    %p81 = por %p79, %p80
    %p82 = scmp.ne.s32.totalorder %s70, %s71
    %p83 = scmp.eq.s32.totalorder %s19, 1
    %p84 = por %p82, %p83
    %p86 = scmp.ne.s32.totalorder %s71, %s85
    %p87 = scmp.eq.s32.totalorder %s19, 0
    %p88 = por %p86, %p87
    %s90 = sadd.s32 %s89, 1
    %p93 = scmp.eq.s32.totalorder %s13, 1
    %p94 = scmp.ne.s32.totalorder %s89, %s91
    %p95 = scmp.eq.s32.totalorder %s13, 0
    %p96 = por %p94, %p95
    %p97 = scmp.ne.s32.totalorder %s89, %s91
    %p98 = scmp.eq.s32.totalorder %s18, 1
    %p99 = por %p97, %p98
    %p100 = scmp.ne.s32.totalorder %s91, %s92
    %p101 = scmp.eq.s32.totalorder %s18, 0
    %p102 = por %p100, %p101
    %p103 = scmp.ne.s32.totalorder %s91, %s92
    %p104 = scmp.eq.s32.totalorder %s19, 1
    %p105 = por %p103, %p104
    %p107 = scmp.ne.s32.totalorder %s92, %s106
    %p108 = scmp.eq.s32.totalorder %s19, 0
    %p109 = por %p107, %p108
    %s111 = sadd.s32 %s110, 1
    %p114 = scmp.eq.s32.totalorder %s13, 1
    %p115 = scmp.ne.s32.totalorder %s110, %s112
    %p116 = scmp.eq.s32.totalorder %s13, 0
    %p117 = por %p115, %p116
    %p118 = scmp.ne.s32.totalorder %s110, %s112
    %p119 = scmp.eq.s32.totalorder %s18, 1
    %p120 = por %p118, %p119
    %p121 = scmp.ne.s32.totalorder %s112, %s113
    %p122 = scmp.eq.s32.totalorder %s18, 0
    %p123 = por %p121, %p122
    %p124 = scmp.ne.s32.totalorder %s112, %s113
    %p125 = scmp.eq.s32.totalorder %s19, 1
    %p126 = por %p124, %p125
    %p128 = scmp.ne.s32.totalorder %s113, %s127
    %p129 = scmp.eq.s32.totalorder %s19, 0
    %p130 = por %p128, %p129
    %s132 = sadd.s32 %s131, 1
    %p135 = scmp.eq.s32.totalorder %s13, 1
    %p136 = scmp.ne.s32.totalorder %s131, %s133
    %p137 = scmp.eq.s32.totalorder %s13, 0
    %p138 = por %p136, %p137
    %p139 = scmp.ne.s32.totalorder %s131, %s133
    %p140 = scmp.eq.s32.totalorder %s18, 1
    %p141 = por %p139, %p140
    %p142 = scmp.ne.s32.totalorder %s133, %s134
    %p143 = scmp.eq.s32.totalorder %s18, 0
    %p144 = por %p142, %p143
    %p145 = scmp.ne.s32.totalorder %s133, %s134
    %p146 = scmp.eq.s32.totalorder %s19, 1
    %p147 = por %p145, %p146
    %p149 = scmp.ne.s32.totalorder %s134, %s148
    %p150 = scmp.eq.s32.totalorder %s19, 0
    %p151 = por %p149, %p150
    %s153 = sadd.s32 %s152, 1
    %p156 = scmp.eq.s32.totalorder %s13, 1
    %p157 = scmp.ne.s32.totalorder %s152, %s154
    %p158 = scmp.eq.s32.totalorder %s13, 0
    %p159 = por %p157, %p158
    %p160 = scmp.ne.s32.totalorder %s152, %s154
    %p161 = scmp.eq.s32.totalorder %s18, 1
    %p162 = por %p160, %p161
    %p163 = scmp.ne.s32.totalorder %s154, %s155
    %p164 = scmp.eq.s32.totalorder %s18, 0
    %p165 = por %p163, %p164
    %p166 = scmp.ne.s32.totalorder %s154, %s155
    %p167 = scmp.eq.s32.totalorder %s19, 1
    %p168 = por %p166, %p167
    %p170 = scmp.ne.s32.totalorder %s155, %s169
    %p171 = scmp.eq.s32.totalorder %s19, 0
    %p172 = por %p170, %p171
    %s173 = ssub.s32 %s13, %s20
    %p174 = scmp.eq.s32.totalorder %s173, 0
    %s176 = sadd.s32 %s175, 1
    %s177 = scalar_select %p174, %s175, %s176
    %p180 = pneg %p174
    %p181 = scmp.eq.s32.totalorder %s13, 1
    %p182 = por %p180, %p181
    %p183 = scmp.ne.s32.totalorder %s175, %s178
    %p184 = scmp.eq.s32.totalorder %s13, 0
    %p185 = por %p183, %p184
    %p186 = scmp.ne.s32.totalorder %s175, %s178
    %p187 = scmp.eq.s32.totalorder %s18, 1
    %p188 = por %p186, %p187
    %p189 = scmp.ne.s32.totalorder %s178, %s179
    %p190 = scmp.eq.s32.totalorder %s18, 0
    %p191 = por %p189, %p190
    %p192 = scmp.ne.s32.totalorder %s178, %s179
    %p193 = scmp.eq.s32.totalorder %s19, 1
    %p194 = por %p192, %p193
    %p196 = scmp.ne.s32.totalorder %s179, %s195
    %p197 = scmp.eq.s32.totalorder %s19, 0
    %p198 = por %p196, %p197
    %p199 = scmp.le.s32.totalorder 1, %s13
    %p200 = scmp.lt.s32.totalorder %s13, 3
    %p201 = pnand %p199, %p200
    %p202 = pneg %p201
    // Predicated region
    $region9: #{segmentation_vit_forward.9} parent=5 // pred_check
      _
    $region10: #{segmentation_vit_forward.9} parent=5 // pred_check_branch
      %204 = sbr.rel (%p201) target = $region12
    $region11: #{segmentation_vit_forward.9} parent=5 // pred_region
      %s205 = ssub.s32 %s13, 1
      // Predicated region
      $region13: #{segmentation_vit_forward.9} parent=11 // pred_check
        %p206 = pneg %p60
      $region14: #{segmentation_vit_forward.9} parent=11 // pred_check_branch
        %208 = sbr.rel (%p206) target = $region16
      $region15: #{segmentation_vit_forward.9} parent=11 // pred_region
        _
      $region16: #{segmentation_vit_forward.9} parent=11 // pred_fallthru
        _
      // Predicated region
      $region17: #{segmentation_vit_forward.9} parent=11 // pred_check
        %p209 = pneg %p81
      $region18: #{segmentation_vit_forward.9} parent=11 // pred_check_branch
        %211 = sbr.rel (%p209) target = $region20
      $region19: #{segmentation_vit_forward.9} parent=11 // pred_region
        _
      $region20: #{segmentation_vit_forward.9} parent=11 // pred_fallthru
        _
      // Predicated region
      $region21: #{segmentation_vit_forward.9} parent=11 // pred_check
        %p212 = pneg %p102
      $region22: #{segmentation_vit_forward.9} parent=11 // pred_check_branch
        %214 = sbr.rel (%p212) target = $region24
      $region23: #{segmentation_vit_forward.9} parent=11 // pred_region
        _
      $region24: #{segmentation_vit_forward.9} parent=11 // pred_fallthru
        _
      // Predicated region
      $region25: #{segmentation_vit_forward.9} parent=11 // pred_check
        %p215 = pneg %p123
      $region26: #{segmentation_vit_forward.9} parent=11 // pred_check_branch
        %217 = sbr.rel (%p215) target = $region28
      $region27: #{segmentation_vit_forward.9} parent=11 // pred_region
        _
      $region28: #{segmentation_vit_forward.9} parent=11 // pred_fallthru
        _
      // Predicated region
      $region29: #{segmentation_vit_forward.9} parent=11 // pred_check
        %p218 = pneg %p144
      $region30: #{segmentation_vit_forward.9} parent=11 // pred_check_branch
        %220 = sbr.rel (%p218) target = $region32
      $region31: #{segmentation_vit_forward.9} parent=11 // pred_region
        _
      $region32: #{segmentation_vit_forward.9} parent=11 // pred_fallthru
        _
      // Predicated region
      $region33: #{segmentation_vit_forward.9} parent=11 // pred_check
        %p221 = pneg %p165
      $region34: #{segmentation_vit_forward.9} parent=11 // pred_check_branch
        %223 = sbr.rel (%p221) target = $region36
      $region35: #{segmentation_vit_forward.9} parent=11 // pred_region
        _
      $region36: #{segmentation_vit_forward.9} parent=11 // pred_fallthru
        _
    $region12: #{segmentation_vit_forward.9} parent=5 // pred_fallthru
      _
    %p224 = scmp.lt.s32.totalorder %s13, 2
    // Predicated region
    $region37: #{segmentation_vit_forward.9} parent=5 // pred_check
      %p225 = pneg %p224
    $region38: #{segmentation_vit_forward.9} parent=5 // pred_check_branch
      %227 = sbr.rel (%p225) target = $region40
    $region39: #{segmentation_vit_forward.9} parent=5 // pred_region
      // Predicated region
      $region41: #{segmentation_vit_forward.9} parent=39 // pred_check
        %p228 = pneg %p33
      $region42: #{segmentation_vit_forward.9} parent=39 // pred_check_branch
        %230 = sbr.rel (%p228) target = $region44
      $region43: #{segmentation_vit_forward.9} parent=39 // pred_region
        %s231 = smul.u32 2, %s13
        %p232 = scmp.lt.s32.totalorder %s231, 3
        %s233 = scalar_select %p232, %s231, 3
        %s234 = smul.addr %s233, 4
        %s235 = scalar_lea.vmem %s0, %s234
        %s236 = smul.u32 2, %s13
      $region44: #{segmentation_vit_forward.9} parent=39 // pred_fallthru
        _
    $region40: #{segmentation_vit_forward.9} parent=5 // pred_fallthru
      _
    %p237 = scmp.le.s32.totalorder 1, %s13
    %p238 = scmp.lt.s32.totalorder %s13, 3
    %p239 = pnand %p237, %p238
    %p240 = pneg %p239
    // Predicated region
    $region45: #{segmentation_vit_forward.9} parent=5 // pred_check
      _
    $region46: #{segmentation_vit_forward.9} parent=5 // pred_check_branch
      %242 = sbr.rel (%p239) target = $region48
    $region47: #{segmentation_vit_forward.9} parent=5 // pred_region
      %s243 = ssub.s32 %s13, 1
      %s244 = smul.u32 2, %s18
      %p245 = scmp.lt.s32.totalorder %s244, 3
      %s246 = scalar_select %p245, %s244, 3
      %s247 = smul.addr %s246, 4
      %s248 = scalar_lea.vmem %s0, %s247
      %p249 = pneg %p39
      %p250 = pneg %p36
      %p251 = pneg %p60
      %p252 = pneg %p57
      %p253 = pneg %p81
      %p254 = pneg %p78
      %p255 = pneg %p102
      %p256 = pneg %p99
      %p257 = pneg %p123
      %p258 = pneg %p120
      %p259 = pneg %p144
      %p260 = pneg %p141
      %p261 = pneg %p165
      %p262 = pneg %p162
      %p263 = pneg %p191
      %p264 = pneg %p188
      %s265 = smul.u32 2, %s18
      %p266 = scmp.lt.s32.totalorder %s265, 3
      %s267 = scalar_select %p266, %s265, 3
      %s268 = smul.addr %s267, 4
      %s269 = scalar_lea.vmem %s7, %s268
      %s270 = smul.u32 2, %s18
      %p271 = scmp.lt.s32.totalorder %s270, 3
      %s272 = scalar_select %p271, %s270, 3
      %s273 = smul.addr %s272, 4
      %s274 = scalar_lea.vmem %s0, %s273
      %s275 = smul.u32 2, %s18
      %s276 = smul.u32 2, %s18
      %p277 = scmp.lt.s32.totalorder %s276, 3
      %s278 = scalar_select %p277, %s276, 3
      %s279 = smul.addr %s278, 4
      %s280 = scalar_lea.vmem %s7, %s279
      %s281 = smul.u32 2, %s18
      %v283 = vld [vmem:[%s274] sm:$0xf]
      %v284 = vld [vmem:[%s274 + $0x4] sm:$0xf]
      %v285 = vunpack.c.l.bf16 %v283
      %v286 = vunpack.c.l.bf16 %v284
      %287 = vadd.xlane.f32.xlu0 %v285
      %v288 = vpop.xlane.xlu0 %287
      %289 = vadd.xlane.f32.xlu0 %v286
      %v290 = vpop.xlane.xlu0 %289
      %v291 = vrcp.pop 128.0
      %v292 = vmul.f32 %v288, %v291
      %v293 = vmul.f32 %v290, %v291
      %v294 = vsub.f32 %v285, %v292
      %v295 = vsub.f32 %v286, %v293
      %v296 = vmul.f32 %v294, %v294
      %v297 = vmul.f32 %v295, %v295
      %298 = vadd.xlane.f32.xlu0 %v296
      %v299 = vpop.xlane.xlu0 %298
      %300 = vadd.xlane.f32.xlu0 %v297
      %v301 = vpop.xlane.xlu0 %300
      %v302 = vmul.f32 %v299, %v291
      %v303 = vmul.f32 %v301, %v291
      %v304 = vadd.f32 %v302, 1e-05
      %v305 = vadd.f32 %v303, 1e-05
      %v306 = vrsqrt.pop %v304
      %v307 = vrsqrt.pop %v305
      %v308 = vmul.f32 %v294, %v306
      %v309 = vmul.f32 %v295, %v307
      %v310 = vld [vmem:[%s1] sm:$0x1]
      %v312 = vlaneseq
      %v313 = vshrl.u32 %v312, 7
      %v314 = vsub.s32 0, %v313
      %v315 = vrot.slane %v310, %v314
      %v317 = vmul.f32 %v308, %v315
      %v318 = vmul.f32 %v309, %v315
      %v319 = vld [vmem:[%s2] sm:$0x1]
      %v321 = vlaneseq
      %v322 = vshrl.u32 %v321, 7
      %v323 = vsub.s32 0, %v322
      %v324 = vrot.slane %v319, %v323
      %v326 = vadd.f32 %v317, %v324
      %v327 = vadd.f32 %v318, %v324
      %v328 = vpack.c.bf16 %v327, %v326
      %v329 = vld [vmem:[%s6] sm:$0x1]
      %v331 = vlaneseq
      %v332 = vshrl.u32 %v331, 7
      %v333 = vsub.s32 0, %v332
      %v334 = vrot.slane %v329, %v333
      %v336 = vadd.f32 %v285, %v334
      %v337 = vadd.f32 %v286, %v334
      %v338 = vld [vmem:[%s3] sm:$0xf]
      %v339 = vld [vmem:[%s3 + $0x4] sm:$0xf]
      %v340 = vld [vmem:[%s3 + $0x8] sm:$0xf]
      %v341 = vld [vmem:[%s3 + $0xc] sm:$0xf]
      %v342 = vld [vmem:[%s3 + $0x10] sm:$0xf]
      %v343 = vld [vmem:[%s3 + $0x14] sm:$0xf]
      %v344 = vld [vmem:[%s3 + $0x18] sm:$0xf]
      %v345 = vld [vmem:[%s3 + $0x1c] sm:$0xf]
      %v346 = vld [vmem:[%s3 + $0x20] sm:$0xf]
      %v347 = vld [vmem:[%s3 + $0x24] sm:$0xf]
      %v348 = vld [vmem:[%s3 + $0x28] sm:$0xf]
      %v349 = vld [vmem:[%s3 + $0x2c] sm:$0xf]
      %v350 = vld [vmem:[%s3 + $0x30] sm:$0xf]
      %v351 = vld [vmem:[%s3 + $0x34] sm:$0xf]
      %v352 = vld [vmem:[%s3 + $0x38] sm:$0xf]
      %v353 = vld [vmem:[%s3 + $0x3c] sm:$0xf]
      %v354 = vld [vmem:[%s4] sm:$0x1]
      %v356 = vlaneseq
      %v357 = vshrl.u32 %v356, 7
      %v358 = vsub.s32 0, %v357
      %v359 = vrot.slane %v354, %v358
      %v377 = vunpack.c.l.b16 %v338
      %v378 = vunpack.c.l.b16 %v339
      %v379 = vunpack.c.l.b16 %v340
      %v380 = vunpack.c.l.b16 %v341
      %v381 = vunpack.c.l.b16 %v342
      %v382 = vunpack.c.l.b16 %v343
      %v383 = vunpack.c.l.b16 %v344
      %v384 = vunpack.c.l.b16 %v345
      %v385 = vunpack.c.l.b16 %v346
      %v386 = vunpack.c.l.b16 %v347
      %v387 = vunpack.c.l.b16 %v348
      %v388 = vunpack.c.l.b16 %v349
      %v389 = vunpack.c.l.b16 %v350
      %v390 = vunpack.c.l.b16 %v351
      %v391 = vunpack.c.l.b16 %v352
      %v392 = vunpack.c.l.b16 %v353
      %v393 = vpack.c.b16 %v378, %v377
      %v394 = vpack.c.b16 %v380, %v379
      %v395 = vpack.c.b16 %v382, %v381
      %v396 = vpack.c.b16 %v384, %v383
      %v397 = vpack.c.b16 %v386, %v385
      %v398 = vpack.c.b16 %v388, %v387
      %v399 = vpack.c.b16 %v390, %v389
      %v400 = vpack.c.b16 %v392, %v391
      %409 = vmatprep.subr.bf16.mxu0 0
      %410 = vmatpush1.bf16.msra.mxu0 %v393
      %411 = vmatprep.subr.bf16.mxu0 0
      %412 = vmatpush1.bf16.msra.mxu0 %v394
      %413 = vmatprep.subr.bf16.mxu0 0
      %414 = vmatpush1.bf16.msra.mxu0 %v395
      %415 = vmatprep.subr.bf16.mxu0 0
      %416 = vmatpush1.bf16.msra.mxu0 %v396
      %417 = vmatprep.subr.bf16.mxu0 0
      %418 = vmatpush1.bf16.msra.mxu0 %v397
      %419 = vmatprep.subr.bf16.mxu0 0
      %420 = vmatpush1.bf16.msra.mxu0 %v398
      %421 = vmatprep.subr.bf16.mxu0 0
      %422 = vmatpush1.bf16.msra.mxu0 %v399
      %423 = vmatprep.subr.bf16.mxu0 0
      %424 = vmatpush1.bf16.msra.mxu0 %v400
      %425 = vmatprep.subr.bf16.mxu0 0
      %426 = vmatpush1.bf16.msra.mxu0 0
      %427 = vmatprep.subr.bf16.mxu0 0
      %428 = vmatpush1.bf16.msra.mxu0 0
      %429 = vmatprep.subr.bf16.mxu0 0
      %430 = vmatpush1.bf16.msra.mxu0 0
      %431 = vmatprep.subr.bf16.mxu0 0
      %432 = vmatpush1.bf16.msra.mxu0 0
      %433 = vmatprep.subr.bf16.mxu0 0
      %434 = vmatpush1.bf16.msra.mxu0 0
      %435 = vmatprep.subr.bf16.mxu0 0
      %436 = vmatpush1.bf16.msra.mxu0 0
      %437 = vmatprep.subr.bf16.mxu0 0
      %438 = vmatpush1.bf16.msra.mxu0 0
      %439 = vmatprep.subr.bf16.mxu0 0
      %440 = vmatpush1.bf16.msra.mxu0 0
      %441 = vmatprep.mubr.bf16.mxu0 0
      %442 = vmatmul.mubr.bf16.gmra.mrb[0].mxu0 %v328
      %v443 = vpop.f32.mrb[0].mxu0
      %v444 = vadd.f32 %v359, %v443
      %v445 = vpop.f32.mrb[0].mxu0
      %v446 = vpop.f32.mrb[0].mxu0
      %v447 = vadd.f32 %v359, %v446
      %v448 = vpop.f32.mrb[0].mxu0
      %449 = vdwg.mxu0
      %v450 = vmul.f32 %v444, 0.17677669
      %v451 = vmul.f32 %v447, 0.17677669
      %s452 = scalar_lea.vmem %s3, 256
      %v453 = vld [vmem:[%s452] sm:$0xf]
      %v454 = vld [vmem:[%s452 + $0x4] sm:$0xf]
      %v455 = vld [vmem:[%s452 + $0x8] sm:$0xf]
      %v456 = vld [vmem:[%s452 + $0xc] sm:$0xf]
      %v457 = vld [vmem:[%s452 + $0x10] sm:$0xf]
      %v458 = vld [vmem:[%s452 + $0x14] sm:$0xf]
      %v459 = vld [vmem:[%s452 + $0x18] sm:$0xf]
      %v460 = vld [vmem:[%s452 + $0x1c] sm:$0xf]
      %v461 = vld [vmem:[%s452 + $0x20] sm:$0xf]
      %v462 = vld [vmem:[%s452 + $0x24] sm:$0xf]
      %v463 = vld [vmem:[%s452 + $0x28] sm:$0xf]
      %v464 = vld [vmem:[%s452 + $0x2c] sm:$0xf]
      %v465 = vld [vmem:[%s452 + $0x30] sm:$0xf]
      %v466 = vld [vmem:[%s452 + $0x34] sm:$0xf]
      %v467 = vld [vmem:[%s452 + $0x38] sm:$0xf]
      %v468 = vld [vmem:[%s452 + $0x3c] sm:$0xf]
      %s469 = scalar_lea.vmem %s4, 4
      %v470 = vld [vmem:[%s469] sm:$0x1]
      %v472 = vlaneseq
      %v473 = vshrl.u32 %v472, 7
      %v474 = vsub.s32 0, %v473
      %v475 = vrot.slane %v470, %v474
      %v493 = vunpack.c.l.b16 %v453
      %v494 = vunpack.c.l.b16 %v454
      %v495 = vunpack.c.l.b16 %v455
      %v496 = vunpack.c.l.b16 %v456
      %v497 = vunpack.c.l.b16 %v457
      %v498 = vunpack.c.l.b16 %v458
      %v499 = vunpack.c.l.b16 %v459
      %v500 = vunpack.c.l.b16 %v460
      %v501 = vunpack.c.l.b16 %v461
      %v502 = vunpack.c.l.b16 %v462
      %v503 = vunpack.c.l.b16 %v463
      %v504 = vunpack.c.l.b16 %v464
      %v505 = vunpack.c.l.b16 %v465
      %v506 = vunpack.c.l.b16 %v466
      %v507 = vunpack.c.l.b16 %v467
      %v508 = vunpack.c.l.b16 %v468
      %v509 = vpack.c.b16 %v494, %v493
      %v510 = vpack.c.b16 %v496, %v495
      %v511 = vpack.c.b16 %v498, %v497
      %v512 = vpack.c.b16 %v500, %v499
      %v513 = vpack.c.b16 %v502, %v501
      %v514 = vpack.c.b16 %v504, %v503
      %v515 = vpack.c.b16 %v506, %v505
      %v516 = vpack.c.b16 %v508, %v507
      %525 = vmatprep.subr.bf16.mxu0 0
      %526 = vmatpush1.bf16.msra.mxu0 %v509
      %527 = vmatprep.subr.bf16.mxu0 0
      %528 = vmatpush1.bf16.msra.mxu0 %v510
      %529 = vmatprep.subr.bf16.mxu0 0
      %530 = vmatpush1.bf16.msra.mxu0 %v511
      %531 = vmatprep.subr.bf16.mxu0 0
      %532 = vmatpush1.bf16.msra.mxu0 %v512
      %533 = vmatprep.subr.bf16.mxu0 0
      %534 = vmatpush1.bf16.msra.mxu0 %v513
      %535 = vmatprep.subr.bf16.mxu0 0
      %536 = vmatpush1.bf16.msra.mxu0 %v514
      %537 = vmatprep.subr.bf16.mxu0 0
      %538 = vmatpush1.bf16.msra.mxu0 %v515
      %539 = vmatprep.subr.bf16.mxu0 0
      %540 = vmatpush1.bf16.msra.mxu0 %v516
      %541 = vmatprep.subr.bf16.mxu0 0
      %542 = vmatpush1.bf16.msra.mxu0 0
      %543 = vmatprep.subr.bf16.mxu0 0
      %544 = vmatpush1.bf16.msra.mxu0 0
      %545 = vmatprep.subr.bf16.mxu0 0
      %546 = vmatpush1.bf16.msra.mxu0 0
      %547 = vmatprep.subr.bf16.mxu0 0
      %548 = vmatpush1.bf16.msra.mxu0 0
      %549 = vmatprep.subr.bf16.mxu0 0
      %550 = vmatpush1.bf16.msra.mxu0 0
      %551 = vmatprep.subr.bf16.mxu0 0
      %552 = vmatpush1.bf16.msra.mxu0 0
      %553 = vmatprep.subr.bf16.mxu0 0
      %554 = vmatpush1.bf16.msra.mxu0 0
      %555 = vmatprep.subr.bf16.mxu0 0
      %556 = vmatpush1.bf16.msra.mxu0 0
      %557 = vmatprep.mubr.bf16.mxu0 0
      %558 = vmatmul.mubr.bf16.gmra.mrb[0].mxu0 %v328
      %v559 = vpop.f32.mrb[0].mxu0
      %v560 = vadd.f32 %v475, %v559
      %v561 = vpop.f32.mrb[0].mxu0
      %v562 = vpop.f32.mrb[0].mxu0
      %v563 = vadd.f32 %v475, %v562
      %v564 = vpop.f32.mrb[0].mxu0
      %565 = vdwg.mxu0
      %s566 = scalar_lea.vmem %s3, 512
      %v567 = vld [vmem:[%s566] sm:$0xf]
      %v568 = vld [vmem:[%s566 + $0x4] sm:$0xf]
      %v569 = vld [vmem:[%s566 + $0x8] sm:$0xf]
      %v570 = vld [vmem:[%s566 + $0xc] sm:$0xf]
      %v571 = vld [vmem:[%s566 + $0x10] sm:$0xf]
      %v572 = vld [vmem:[%s566 + $0x14] sm:$0xf]
      %v573 = vld [vmem:[%s566 + $0x18] sm:$0xf]
      %v574 = vld [vmem:[%s566 + $0x1c] sm:$0xf]
      %v575 = vld [vmem:[%s566 + $0x20] sm:$0xf]
      %v576 = vld [vmem:[%s566 + $0x24] sm:$0xf]
      %v577 = vld [vmem:[%s566 + $0x28] sm:$0xf]
      %v578 = vld [vmem:[%s566 + $0x2c] sm:$0xf]
      %v579 = vld [vmem:[%s566 + $0x30] sm:$0xf]
      %v580 = vld [vmem:[%s566 + $0x34] sm:$0xf]
      %v581 = vld [vmem:[%s566 + $0x38] sm:$0xf]
      %v582 = vld [vmem:[%s566 + $0x3c] sm:$0xf]
      %s583 = scalar_lea.vmem %s4, 8
      %v584 = vld [vmem:[%s583] sm:$0x1]
      %v586 = vlaneseq
      %v587 = vshrl.u32 %v586, 7
      %v588 = vsub.s32 0, %v587
      %v589 = vrot.slane %v584, %v588
      %v607 = vunpack.c.l.b16 %v567
      %v608 = vunpack.c.l.b16 %v568
      %v609 = vunpack.c.l.b16 %v569
      %v610 = vunpack.c.l.b16 %v570
      %v611 = vunpack.c.l.b16 %v571
      %v612 = vunpack.c.l.b16 %v572
      %v613 = vunpack.c.l.b16 %v573
      %v614 = vunpack.c.l.b16 %v574
      %v615 = vunpack.c.l.b16 %v575
      %v616 = vunpack.c.l.b16 %v576
      %v617 = vunpack.c.l.b16 %v577
      %v618 = vunpack.c.l.b16 %v578
      %v619 = vunpack.c.l.b16 %v579
      %v620 = vunpack.c.l.b16 %v580
      %v621 = vunpack.c.l.b16 %v581
      %v622 = vunpack.c.l.b16 %v582
      %v623 = vpack.c.b16 %v608, %v607
      %v624 = vpack.c.b16 %v610, %v609
      %v625 = vpack.c.b16 %v612, %v611
      %v626 = vpack.c.b16 %v614, %v613
      %v627 = vpack.c.b16 %v616, %v615
      %v628 = vpack.c.b16 %v618, %v617
      %v629 = vpack.c.b16 %v620, %v619
      %v630 = vpack.c.b16 %v622, %v621
      %639 = vmatprep.subr.bf16.mxu0 0
      %640 = vmatpush1.bf16.msra.mxu0 %v623
      %641 = vmatprep.subr.bf16.mxu0 0
      %642 = vmatpush1.bf16.msra.mxu0 %v624
      %643 = vmatprep.subr.bf16.mxu0 0
      %644 = vmatpush1.bf16.msra.mxu0 %v625
      %645 = vmatprep.subr.bf16.mxu0 0
      %646 = vmatpush1.bf16.msra.mxu0 %v626
      %647 = vmatprep.subr.bf16.mxu0 0
      %648 = vmatpush1.bf16.msra.mxu0 %v627
      %649 = vmatprep.subr.bf16.mxu0 0
      %650 = vmatpush1.bf16.msra.mxu0 %v628
      %651 = vmatprep.subr.bf16.mxu0 0
      %652 = vmatpush1.bf16.msra.mxu0 %v629
      %653 = vmatprep.subr.bf16.mxu0 0
      %654 = vmatpush1.bf16.msra.mxu0 %v630
      %655 = vmatprep.subr.bf16.mxu0 0
      %656 = vmatpush1.bf16.msra.mxu0 0
      %657 = vmatprep.subr.bf16.mxu0 0
      %658 = vmatpush1.bf16.msra.mxu0 0
      %659 = vmatprep.subr.bf16.mxu0 0
      %660 = vmatpush1.bf16.msra.mxu0 0
      %661 = vmatprep.subr.bf16.mxu0 0
      %662 = vmatpush1.bf16.msra.mxu0 0
      %663 = vmatprep.subr.bf16.mxu0 0
      %664 = vmatpush1.bf16.msra.mxu0 0
      %665 = vmatprep.subr.bf16.mxu0 0
      %666 = vmatpush1.bf16.msra.mxu0 0
      %667 = vmatprep.subr.bf16.mxu0 0
      %668 = vmatpush1.bf16.msra.mxu0 0
      %669 = vmatprep.subr.bf16.mxu0 0
      %670 = vmatpush1.bf16.msra.mxu0 0
      %671 = vmatprep.mubr.bf16.mxu0 0
      %672 = vmatmul.mubr.bf16.gmra.mrb[0].mxu0 %v328
      %v673 = vpop.f32.mrb[0].mxu0
      %v674 = vadd.f32 %v589, %v673
      %v675 = vpop.f32.mrb[0].mxu0
      %v676 = vpop.f32.mrb[0].mxu0
      %v677 = vadd.f32 %v589, %v676
      %v678 = vpop.f32.mrb[0].mxu0
      %679 = vdwg.mxu0
      %v680 = vpack.c.bf16 %v451, %v450
      %v681 = vpack.c.bf16 %v563, %v560
      %v682 = vpack.c.bf16 %v677, %v674
      %vm683 = vcmask 261120
      %v685 = vsel %vm683, %v680, 0
      %v688 = vsel %vm683, %v681, 0
      %690 = vmatprep.subr.bf16.mxu0 0
      %691 = vmatpush1.bf16.xpose.msra.mxu0 %v688
      %692 = vmatprep.subr.bf16.mxu0 0
      %693 = vmatpush1.bf16.xpose.msra.mxu0 0
      %694 = vmatprep.subr.bf16.mxu0 0
      %695 = vmatpush1.bf16.xpose.msra.mxu0 0
      %696 = vmatprep.subr.bf16.mxu0 0
      %697 = vmatpush1.bf16.xpose.msra.mxu0 0
      %698 = vmatprep.subr.bf16.mxu0 0
      %699 = vmatpush1.bf16.xpose.msra.mxu0 0
      %700 = vmatprep.subr.bf16.mxu0 0
      %701 = vmatpush1.bf16.xpose.msra.mxu0 0
      %702 = vmatprep.subr.bf16.mxu0 0
      %703 = vmatpush1.bf16.xpose.msra.mxu0 0
      %704 = vmatprep.subr.bf16.mxu0 0
      %705 = vmatpush1.bf16.xpose.msra.mxu0 0
      %706 = vmatprep.subr.bf16.mxu0 0
      %707 = vmatpush1.bf16.xpose.msra.mxu0 0
      %708 = vmatprep.subr.bf16.mxu0 0
      %709 = vmatpush1.bf16.xpose.msra.mxu0 0
      %710 = vmatprep.subr.bf16.mxu0 0
      %711 = vmatpush1.bf16.xpose.msra.mxu0 0
      %712 = vmatprep.subr.bf16.mxu0 0
      %713 = vmatpush1.bf16.xpose.msra.mxu0 0
      %714 = vmatprep.subr.bf16.mxu0 0
      %715 = vmatpush1.bf16.xpose.msra.mxu0 0
      %716 = vmatprep.subr.bf16.mxu0 0
      %717 = vmatpush1.bf16.xpose.msra.mxu0 0
      %718 = vmatprep.subr.bf16.mxu0 0
      %719 = vmatpush1.bf16.xpose.msra.mxu0 0
      %720 = vmatprep.subr.bf16.mxu0 0
      %721 = vmatpush1.bf16.xpose.msra.mxu0 0
      %722 = vmatprep.mubr.bf16.mxu0 0
      %723 = vmatmul.mubr.bf16.gmra.mrb[0].mxu0 %v685
      %v724 = vpop.f32.mrb[0].mxu0
      %v725 = vadd.f32 0.0, %v724
      %v726 = vpop.f32.mrb[0].mxu0
      %v727 = vpop.f32.mrb[0].mxu0
      %v728 = vadd.f32 0.0, %v727
      %v729 = vpop.f32.mrb[0].mxu0
      %730 = vdwg.mxu0
      %vm731 = vcmask 130048
      %v732 = vsel %vm731, %v725, -inf
      %733 = vmax.xlane.f32.xlu0 %v732
      %v734 = vpop.xlane.xlu0 %733
      %v735 = vsel %vm731, %v728, -inf
      %736 = vmax.xlane.f32.xlu0 %v735
      %v737 = vpop.xlane.xlu0 %736
      %v738 = vsub.f32 %v725, %v734
      %v739 = vsub.f32 %v728, %v737
      %v740 = vmul.f32 %v738, 1.442695
      %v741 = vpow.pop %v740
      %v742 = vmul.f32 %v739, 1.442695
      %v743 = vpow.pop %v742
      %v744 = vsel %vm731, %v741, 0.0
      %745 = vadd.xlane.f32.xlu0 %v744
      %v746 = vpop.xlane.xlu0 %745
      %v747 = vsel %vm731, %v743, 0.0
      %748 = vadd.xlane.f32.xlu0 %v747
      %v749 = vpop.xlane.xlu0 %748
      %v750 = vpack.c.bf16 %v743, %v741
      %v752 = vsel %vm731, %v750, 0
      %754 = vmatprep.subr.bf16.mxu0 0
      %755 = vmatpush1.bf16.msra.mxu0 %v682
      %756 = vmatprep.subr.bf16.mxu0 0
      %757 = vmatpush1.bf16.msra.mxu0 0
      %758 = vmatprep.subr.bf16.mxu0 0
      %759 = vmatpush1.bf16.msra.mxu0 0
      %760 = vmatprep.subr.bf16.mxu0 0
      %761 = vmatpush1.bf16.msra.mxu0 0
      %762 = vmatprep.subr.bf16.mxu0 0
      %763 = vmatpush1.bf16.msra.mxu0 0
      %764 = vmatprep.subr.bf16.mxu0 0
      %765 = vmatpush1.bf16.msra.mxu0 0
      %766 = vmatprep.subr.bf16.mxu0 0
      %767 = vmatpush1.bf16.msra.mxu0 0
      %768 = vmatprep.subr.bf16.mxu0 0
      %769 = vmatpush1.bf16.msra.mxu0 0
      %770 = vmatprep.subr.bf16.mxu0 0
      %771 = vmatpush1.bf16.msra.mxu0 0
      %772 = vmatprep.subr.bf16.mxu0 0
      %773 = vmatpush1.bf16.msra.mxu0 0
      %774 = vmatprep.subr.bf16.mxu0 0
      %775 = vmatpush1.bf16.msra.mxu0 0
      %776 = vmatprep.subr.bf16.mxu0 0
      %777 = vmatpush1.bf16.msra.mxu0 0
      %778 = vmatprep.subr.bf16.mxu0 0
      %779 = vmatpush1.bf16.msra.mxu0 0
      %780 = vmatprep.subr.bf16.mxu0 0
      %781 = vmatpush1.bf16.msra.mxu0 0
      %782 = vmatprep.subr.bf16.mxu0 0
      %783 = vmatpush1.bf16.msra.mxu0 0
      %784 = vmatprep.subr.bf16.mxu0 0
      %785 = vmatpush1.bf16.msra.mxu0 0
      %786 = vmatprep.mubr.bf16.mxu0 0
      %787 = vmatmul.mubr.bf16.gmra.mrb[0].mxu0 %v752
      %v788 = vpop.f32.mrb[0].mxu0
      %v789 = vadd.f32 0.0, %v788
      %v790 = vpop.f32.mrb[0].mxu0
      %v791 = vpop.f32.mrb[0].mxu0
      %v792 = vadd.f32 0.0, %v791
      %v793 = vpop.f32.mrb[0].mxu0
      %794 = vdwg.mxu0
      %v795 = vrcp.pop %v746
      %v796 = vmul.f32 %v789, %v795
      %v797 = vrcp.pop %v749
      %v798 = vmul.f32 %v792, %v797
      %v799 = vpack.c.bf16 %v798, %v796
      %v800 = vld [vmem:[%s5] sm:$0xf]
      %v801 = vld [vmem:[%s5 + $0x4] sm:$0xf]
      %v802 = vld [vmem:[%s5 + $0x8] sm:$0xf]
      %v803 = vld [vmem:[%s5 + $0xc] sm:$0xf]
      %v808 = vunpack.c.l.b16 %v800
      %v809 = vunpack.c.l.b16 %v801
      %v810 = vunpack.c.l.b16 %v802
      %v811 = vunpack.c.l.b16 %v803
      %v812 = vpack.c.b16 %v809, %v808
      %v813 = vpack.c.b16 %v811, %v810
      %v817 = vsel %vm683, %v799, 0
      %819 = vmatprep.subr.bf16.mxu0 0
      %820 = vmatpush1.bf16.msra.mxu0 %v812
      %821 = vmatprep.subr.bf16.mxu0 0
      %822 = vmatpush1.bf16.msra.mxu0 %v813
      %823 = vmatprep.subr.bf16.mxu0 0
      %824 = vmatpush1.bf16.msra.mxu0 0
      %825 = vmatprep.subr.bf16.mxu0 0
      %826 = vmatpush1.bf16.msra.mxu0 0
      %827 = vmatprep.subr.bf16.mxu0 0
      %828 = vmatpush1.bf16.msra.mxu0 0
      %829 = vmatprep.subr.bf16.mxu0 0
      %830 = vmatpush1.bf16.msra.mxu0 0
      %831 = vmatprep.subr.bf16.mxu0 0
      %832 = vmatpush1.bf16.msra.mxu0 0
      %833 = vmatprep.subr.bf16.mxu0 0
      %834 = vmatpush1.bf16.msra.mxu0 0
      %835 = vmatprep.subr.bf16.mxu0 0
      %836 = vmatpush1.bf16.msra.mxu0 0
      %837 = vmatprep.subr.bf16.mxu0 0
      %838 = vmatpush1.bf16.msra.mxu0 0
      %839 = vmatprep.subr.bf16.mxu0 0
      %840 = vmatpush1.bf16.msra.mxu0 0
      %841 = vmatprep.subr.bf16.mxu0 0
      %842 = vmatpush1.bf16.msra.mxu0 0
      %843 = vmatprep.subr.bf16.mxu0 0
      %844 = vmatpush1.bf16.msra.mxu0 0
      %845 = vmatprep.subr.bf16.mxu0 0
      %846 = vmatpush1.bf16.msra.mxu0 0
      %847 = vmatprep.subr.bf16.mxu0 0
      %848 = vmatpush1.bf16.msra.mxu0 0
      %849 = vmatprep.subr.bf16.mxu0 0
      %850 = vmatpush1.bf16.msra.mxu0 0
      %851 = vmatprep.mubr.bf16.mxu0 0
      %852 = vmatmul.mubr.bf16.gmra.mrb[0].mxu0 %v817
      %v853 = vpop.f32.mrb[0].mxu0
      %v854 = vadd.f32 0.0, %v853
      %v855 = vpop.f32.mrb[0].mxu0
      %v856 = vpop.f32.mrb[0].mxu0
      %v857 = vadd.f32 0.0, %v856
      %v858 = vpop.f32.mrb[0].mxu0
      %859 = vdwg.mxu0
      %v860 = vadd.f32 %v336, %v854
      %v861 = vadd.f32 %v337, %v857
      %s862 = scalar_lea.vmem %s3, 64
      %v863 = vld [vmem:[%s862] sm:$0xf]
      %v864 = vld [vmem:[%s862 + $0x4] sm:$0xf]
      %v865 = vld [vmem:[%s862 + $0x8] sm:$0xf]
      %v866 = vld [vmem:[%s862 + $0xc] sm:$0xf]
      %v867 = vld [vmem:[%s862 + $0x10] sm:$0xf]
      %v868 = vld [vmem:[%s862 + $0x14] sm:$0xf]
      %v869 = vld [vmem:[%s862 + $0x18] sm:$0xf]
      %v870 = vld [vmem:[%s862 + $0x1c] sm:$0xf]
      %v871 = vld [vmem:[%s862 + $0x20] sm:$0xf]
      %v872 = vld [vmem:[%s862 + $0x24] sm:$0xf]
      %v873 = vld [vmem:[%s862 + $0x28] sm:$0xf]
      %v874 = vld [vmem:[%s862 + $0x2c] sm:$0xf]
      %v875 = vld [vmem:[%s862 + $0x30] sm:$0xf]
      %v876 = vld [vmem:[%s862 + $0x34] sm:$0xf]
      %v877 = vld [vmem:[%s862 + $0x38] sm:$0xf]
      %v878 = vld [vmem:[%s862 + $0x3c] sm:$0xf]
      %s879 = scalar_lea.vmem %s4, 1
      %v880 = vld [vmem:[%s879] sm:$0x1]
      %v882 = vlaneseq
      %v883 = vshrl.u32 %v882, 7
      %v884 = vsub.s32 0, %v883
      %v885 = vrot.slane %v880, %v884
      %v903 = vunpack.c.l.b16 %v863
      %v904 = vunpack.c.l.b16 %v864
      %v905 = vunpack.c.l.b16 %v865
      %v906 = vunpack.c.l.b16 %v866
      %v907 = vunpack.c.l.b16 %v867
      %v908 = vunpack.c.l.b16 %v868
      %v909 = vunpack.c.l.b16 %v869
      %v910 = vunpack.c.l.b16 %v870
      %v911 = vunpack.c.l.b16 %v871
      %v912 = vunpack.c.l.b16 %v872
      %v913 = vunpack.c.l.b16 %v873
      %v914 = vunpack.c.l.b16 %v874
      %v915 = vunpack.c.l.b16 %v875
      %v916 = vunpack.c.l.b16 %v876
      %v917 = vunpack.c.l.b16 %v877
      %v918 = vunpack.c.l.b16 %v878
      %v919 = vpack.c.b16 %v904, %v903
      %v920 = vpack.c.b16 %v906, %v905
      %v921 = vpack.c.b16 %v908, %v907
      %v922 = vpack.c.b16 %v910, %v909
      %v923 = vpack.c.b16 %v912, %v911
      %v924 = vpack.c.b16 %v914, %v913
      %v925 = vpack.c.b16 %v916, %v915
      %v926 = vpack.c.b16 %v918, %v917
      %935 = vmatprep.subr.bf16.mxu0 0
      %936 = vmatpush1.bf16.msra.mxu0 %v919
      %937 = vmatprep.subr.bf16.mxu0 0
      %938 = vmatpush1.bf16.msra.mxu0 %v920
      %939 = vmatprep.subr.bf16.mxu0 0
      %940 = vmatpush1.bf16.msra.mxu0 %v921
      %941 = vmatprep.subr.bf16.mxu0 0
      %942 = vmatpush1.bf16.msra.mxu0 %v922
      %943 = vmatprep.subr.bf16.mxu0 0
      %944 = vmatpush1.bf16.msra.mxu0 %v923
      %945 = vmatprep.subr.bf16.mxu0 0
      %946 = vmatpush1.bf16.msra.mxu0 %v924
      %947 = vmatprep.subr.bf16.mxu0 0
      %948 = vmatpush1.bf16.msra.mxu0 %v925
      %949 = vmatprep.subr.bf16.mxu0 0
      %950 = vmatpush1.bf16.msra.mxu0 %v926
      %951 = vmatprep.subr.bf16.mxu0 0
      %952 = vmatpush1.bf16.msra.mxu0 0
      %953 = vmatprep.subr.bf16.mxu0 0
      %954 = vmatpush1.bf16.msra.mxu0 0
      %955 = vmatprep.subr.bf16.mxu0 0
      %956 = vmatpush1.bf16.msra.mxu0 0
      %957 = vmatprep.subr.bf16.mxu0 0
      %958 = vmatpush1.bf16.msra.mxu0 0
      %959 = vmatprep.subr.bf16.mxu0 0
      %960 = vmatpush1.bf16.msra.mxu0 0
      %961 = vmatprep.subr.bf16.mxu0 0
      %962 = vmatpush1.bf16.msra.mxu0 0
      %963 = vmatprep.subr.bf16.mxu0 0
      %964 = vmatpush1.bf16.msra.mxu0 0
      %965 = vmatprep.subr.bf16.mxu0 0
      %966 = vmatpush1.bf16.msra.mxu0 0
      %967 = vmatprep.mubr.bf16.mxu0 0
      %968 = vmatmul.mubr.bf16.gmra.mrb[0].mxu0 %v328
      %v969 = vpop.f32.mrb[0].mxu0
      %v970 = vadd.f32 %v885, %v969
      %v971 = vpop.f32.mrb[0].mxu0
      %v972 = vpop.f32.mrb[0].mxu0
      %v973 = vadd.f32 %v885, %v972
      %v974 = vpop.f32.mrb[0].mxu0
      %975 = vdwg.mxu0
      %v976 = vmul.f32 %v970, 0.17677669
      %v977 = vmul.f32 %v973, 0.17677669
      %s978 = scalar_lea.vmem %s3, 320
      %v979 = vld [vmem:[%s978] sm:$0xf]
      %v980 = vld [vmem:[%s978 + $0x4] sm:$0xf]
      %v981 = vld [vmem:[%s978 + $0x8] sm:$0xf]
      %v982 = vld [vmem:[%s978 + $0xc] sm:$0xf]
      %v983 = vld [vmem:[%s978 + $0x10] sm:$0xf]
      %v984 = vld [vmem:[%s978 + $0x14] sm:$0xf]
      %v985 = vld [vmem:[%s978 + $0x18] sm:$0xf]
      %v986 = vld [vmem:[%s978 + $0x1c] sm:$0xf]
      %v987 = vld [vmem:[%s978 + $0x20] sm:$0xf]
      %v988 = vld [vmem:[%s978 + $0x24] sm:$0xf]
      %v989 = vld [vmem:[%s978 + $0x28] sm:$0xf]
      %v990 = vld [vmem:[%s978 + $0x2c] sm:$0xf]
      %v991 = vld [vmem:[%s978 + $0x30] sm:$0xf]
      %v992 = vld [vmem:[%s978 + $0x34] sm:$0xf]
      %v993 = vld [vmem:[%s978 + $0x38] sm:$0xf]
      %v994 = vld [vmem:[%s978 + $0x3c] sm:$0xf]
      %s995 = scalar_lea.vmem %s4, 5
      %v996 = vld [vmem:[%s995] sm:$0x1]
      %v998 = vlaneseq
      %v999 = vshrl.u32 %v998, 7
      %v1000 = vsub.s32 0, %v999
      %v1001 = vrot.slane %v996, %v1000
      %v1019 = vunpack.c.l.b16 %v979
      %v1020 = vunpack.c.l.b16 %v980
      %v1021 = vunpack.c.l.b16 %v981
      %v1022 = vunpack.c.l.b16 %v982
      %v1023 = vunpack.c.l.b16 %v983
      %v1024 = vunpack.c.l.b16 %v984
      %v1025 = vunpack.c.l.b16 %v985
      %v1026 = vunpack.c.l.b16 %v986
      %v1027 = vunpack.c.l.b16 %v987
      %v1028 = vunpack.c.l.b16 %v988
      %v1029 = vunpack.c.l.b16 %v989
      %v1030 = vunpack.c.l.b16 %v990
      %v1031 = vunpack.c.l.b16 %v991
      %v1032 = vunpack.c.l.b16 %v992
      %v1033 = vunpack.c.l.b16 %v993
      %v1034 = vunpack.c.l.b16 %v994
      %v1035 = vpack.c.b16 %v1020, %v1019
      %v1036 = vpack.c.b16 %v1022, %v1021
      %v1037 = vpack.c.b16 %v1024, %v1023
      %v1038 = vpack.c.b16 %v1026, %v1025
      %v1039 = vpack.c.b16 %v1028, %v1027
      %v1040 = vpack.c.b16 %v1030, %v1029
      %v1041 = vpack.c.b16 %v1032, %v1031
      %v1042 = vpack.c.b16 %v1034, %v1033
      %1051 = vmatprep.subr.bf16.mxu0 0
      %1052 = vmatpush1.bf16.msra.mxu0 %v1035
      %1053 = vmatprep.subr.bf16.mxu0 0
      %1054 = vmatpush1.bf16.msra.mxu0 %v1036
      %1055 = vmatprep.subr.bf16.mxu0 0
      %1056 = vmatpush1.bf16.msra.mxu0 %v1037
      %1057 = vmatprep.subr.bf16.mxu0 0
      %1058 = vmatpush1.bf16.msra.mxu0 %v1038
      %1059 = vmatprep.subr.bf16.mxu0 0
      %1060 = vmatpush1.bf16.msra.mxu0 %v1039
      %1061 = vmatprep.subr.bf16.mxu0 0
      %1062 = vmatpush1.bf16.msra.mxu0 %v1040
      %1063 = vmatprep.subr.bf16.mxu0 0
      %1064 = vmatpush1.bf16.msra.mxu0 %v1041
      %1065 = vmatprep.subr.bf16.mxu0 0
      %1066 = vmatpush1.bf16.msra.mxu0 %v1042
      %1067 = vmatprep.subr.bf16.mxu0 0
      %1068 = vmatpush1.bf16.msra.mxu0 0
      %1069 = vmatprep.subr.bf16.mxu0 0
      %1070 = vmatpush1.bf16.msra.mxu0 0
      %1071 = vmatprep.subr.bf16.mxu0 0
      %1072 = vmatpush1.bf16.msra.mxu0 0
      %1073 = vmatprep.subr.bf16.mxu0 0
      %1074 = vmatpush1.bf16.msra.mxu0 0
      %1075 = vmatprep.subr.bf16.mxu0 0
      %1076 = vmatpush1.bf16.msra.mxu0 0
      %1077 = vmatprep.subr.bf16.mxu0 0
      %1078 = vmatpush1.bf16.msra.mxu0 0
      %1079 = vmatprep.subr.bf16.mxu0 0
      %1080 = vmatpush1.bf16.msra.mxu0 0
      %1081 = vmatprep.subr.bf16.mxu0 0
      %1082 = vmatpush1.bf16.msra.mxu0 0
      %1083 = vmatprep.mubr.bf16.mxu0 0
      %1084 = vmatmul.mubr.bf16.gmra.mrb[0].mxu0 %v328
      %v1085 = vpop.f32.mrb[0].mxu0
      %v1086 = vadd.f32 %v1001, %v1085
      %v1087 = vpop.f32.mrb[0].mxu0
      %v1088 = vpop.f32.mrb[0].mxu0
      %v1089 = vadd.f32 %v1001, %v1088
      %v1090 = vpop.f32.mrb[0].mxu0
      %1091 = vdwg.mxu0
      %s1092 = scalar_lea.vmem %s3, 576
      %v1093 = vld [vmem:[%s1092] sm:$0xf]
      %v1094 = vld [vmem:[%s1092 + $0x4] sm:$0xf]
      %v1095 = vld [vmem:[%s1092 + $0x8] sm:$0xf]
      %v1096 = vld [vmem:[%s1092 + $0xc] sm:$0xf]
      %v1097 = vld [vmem:[%s1092 + $0x10] sm:$0xf]
      %v1098 = vld [vmem:[%s1092 + $0x14] sm:$0xf]
      %v1099 = vld [vmem:[%s1092 + $0x18] sm:$0xf]
      %v1100 = vld [vmem:[%s1092 + $0x1c] sm:$0xf]
      %v1101 = vld [vmem:[%s1092 + $0x20] sm:$0xf]
      %v1102 = vld [vmem:[%s1092 + $0x24] sm:$0xf]
      %v1103 = vld [vmem:[%s1092 + $0x28] sm:$0xf]
      %v1104 = vld [vmem:[%s1092 + $0x2c] sm:$0xf]
      %v1105 = vld [vmem:[%s1092 + $0x30] sm:$0xf]
      %v1106 = vld [vmem:[%s1092 + $0x34] sm:$0xf]
      %v1107 = vld [vmem:[%s1092 + $0x38] sm:$0xf]
      %v1108 = vld [vmem:[%s1092 + $0x3c] sm:$0xf]
      %s1109 = scalar_lea.vmem %s4, 9
      %v1110 = vld [vmem:[%s1109] sm:$0x1]
      %v1112 = vlaneseq
      %v1113 = vshrl.u32 %v1112, 7
      %v1114 = vsub.s32 0, %v1113
      %v1115 = vrot.slane %v1110, %v1114
      %v1133 = vunpack.c.l.b16 %v1093
      %v1134 = vunpack.c.l.b16 %v1094
      %v1135 = vunpack.c.l.b16 %v1095
      %v1136 = vunpack.c.l.b16 %v1096
      %v1137 = vunpack.c.l.b16 %v1097
      %v1138 = vunpack.c.l.b16 %v1098
      %v1139 = vunpack.c.l.b16 %v1099
      %v1140 = vunpack.c.l.b16 %v1100
      %v1141 = vunpack.c.l.b16 %v1101
      %v1142 = vunpack.c.l.b16 %v1102
      %v1143 = vunpack.c.l.b16 %v1103
      %v1144 = vunpack.c.l.b16 %v1104
      %v1145 = vunpack.c.l.b16 %v1105
      %v1146 = vunpack.c.l.b16 %v1106
      %v1147 = vunpack.c.l.b16 %v1107
      %v1148 = vunpack.c.l.b16 %v1108
      %v1149 = vpack.c.b16 %v1134, %v1133
      %v1150 = vpack.c.b16 %v1136, %v1135
      %v1151 = vpack.c.b16 %v1138, %v1137
      %v1152 = vpack.c.b16 %v1140, %v1139
      %v1153 = vpack.c.b16 %v1142, %v1141
      %v1154 = vpack.c.b16 %v1144, %v1143
      %v1155 = vpack.c.b16 %v1146, %v1145
      %v1156 = vpack.c.b16 %v1148, %v1147
      %1165 = vmatprep.subr.bf16.mxu0 0
      %1166 = vmatpush1.bf16.msra.mxu0 %v1149
      %1167 = vmatprep.subr.bf16.mxu0 0
      %1168 = vmatpush1.bf16.msra.mxu0 %v1150
      %1169 = vmatprep.subr.bf16.mxu0 0
      %1170 = vmatpush1.bf16.msra.mxu0 %v1151
      %1171 = vmatprep.subr.bf16.mxu0 0
      %1172 = vmatpush1.bf16.msra.mxu0 %v1152
      %1173 = vmatprep.subr.bf16.mxu0 0
      %1174 = vmatpush1.bf16.msra.mxu0 %v1153
      %1175 = vmatprep.subr.bf16.mxu0 0
      %1176 = vmatpush1.bf16.msra.mxu0 %v1154
      %1177 = vmatprep.subr.bf16.mxu0 0
      %1178 = vmatpush1.bf16.msra.mxu0 %v1155
      %1179 = vmatprep.subr.bf16.mxu0 0
      %1180 = vmatpush1.bf16.msra.mxu0 %v1156
      %1181 = vmatprep.subr.bf16.mxu0 0
      %1182 = vmatpush1.bf16.msra.mxu0 0
      %1183 = vmatprep.subr.bf16.mxu0 0
      %1184 = vmatpush1.bf16.msra.mxu0 0
      %1185 = vmatprep.subr.bf16.mxu0 0
      %1186 = vmatpush1.bf16.msra.mxu0 0
      %1187 = vmatprep.subr.bf16.mxu0 0
      %1188 = vmatpush1.bf16.msra.mxu0 0
      %1189 = vmatprep.subr.bf16.mxu0 0
      %1190 = vmatpush1.bf16.msra.mxu0 0
      %1191 = vmatprep.subr.bf16.mxu0 0
      %1192 = vmatpush1.bf16.msra.mxu0 0
      %1193 = vmatprep.subr.bf16.mxu0 0
      %1194 = vmatpush1.bf16.msra.mxu0 0
      %1195 = vmatprep.subr.bf16.mxu0 0
      %1196 = vmatpush1.bf16.msra.mxu0 0
      %1197 = vmatprep.mubr.bf16.mxu0 0
      %1198 = vmatmul.mubr.bf16.gmra.mrb[0].mxu0 %v328
      %v1199 = vpop.f32.mrb[0].mxu0
      %v1200 = vadd.f32 %v1115, %v1199
      %v1201 = vpop.f32.mrb[0].mxu0
      %v1202 = vpop.f32.mrb[0].mxu0
      %v1203 = vadd.f32 %v1115, %v1202
      %v1204 = vpop.f32.mrb[0].mxu0
      %1205 = vdwg.mxu0
      %v1206 = vpack.c.bf16 %v977, %v976
      %v1207 = vpack.c.bf16 %v1089, %v1086
      %v1208 = vpack.c.bf16 %v1203, %v1200
      %v1210 = vsel %vm683, %v1206, 0
      %v1213 = vsel %vm683, %v1207, 0
      %1215 = vmatprep.subr.bf16.mxu0 0
      %1216 = vmatpush1.bf16.xpose.msra.mxu0 %v1213
      %1217 = vmatprep.subr.bf16.mxu0 0
      %1218 = vmatpush1.bf16.xpose.msra.mxu0 0
      %1219 = vmatprep.subr.bf16.mxu0 0
      %1220 = vmatpush1.bf16.xpose.msra.mxu0 0
      %1221 = vmatprep.subr.bf16.mxu0 0
      %1222 = vmatpush1.bf16.xpose.msra.mxu0 0
      %1223 = vmatprep.subr.bf16.mxu0 0
      %1224 = vmatpush1.bf16.xpose.msra.mxu0 0
      %1225 = vmatprep.subr.bf16.mxu0 0
      %1226 = vmatpush1.bf16.xpose.msra.mxu0 0
      %1227 = vmatprep.subr.bf16.mxu0 0
      %1228 = vmatpush1.bf16.xpose.msra.mxu0 0
      %1229 = vmatprep.subr.bf16.mxu0 0
      %1230 = vmatpush1.bf16.xpose.msra.mxu0 0
      %1231 = vmatprep.subr.bf16.mxu0 0
      %1232 = vmatpush1.bf16.xpose.msra.mxu0 0
      %1233 = vmatprep.subr.bf16.mxu0 0
      %1234 = vmatpush1.bf16.xpose.msra.mxu0 0
      %1235 = vmatprep.subr.bf16.mxu0 0
      %1236 = vmatpush1.bf16.xpose.msra.mxu0 0
      %1237 = vmatprep.subr.bf16.mxu0 0
      %1238 = vmatpush1.bf16.xpose.msra.mxu0 0
      %1239 = vmatprep.subr.bf16.mxu0 0
      %1240 = vmatpush1.bf16.xpose.msra.mxu0 0
      %1241 = vmatprep.subr.bf16.mxu0 0
      %1242 = vmatpush1.bf16.xpose.msra.mxu0 0
      %1243 = vmatprep.subr.bf16.mxu0 0
      %1244 = vmatpush1.bf16.xpose.msra.mxu0 0
      %1245 = vmatprep.subr.bf16.mxu0 0
      %1246 = vmatpush1.bf16.xpose.msra.mxu0 0
      %1247 = vmatprep.mubr.bf16.mxu0 0
      %1248 = vmatmul.mubr.bf16.gmra.mrb[0].mxu0 %v1210
      %v1249 = vpop.f32.mrb[0].mxu0
      %v1250 = vadd.f32 0.0, %v1249
      %v1251 = vpop.f32.mrb[0].mxu0
      %v1252 = vpop.f32.mrb[0].mxu0
      %v1253 = vadd.f32 0.0, %v1252
      %v1254 = vpop.f32.mrb[0].mxu0
      %1255 = vdwg.mxu0
      %v1256 = vsel %vm731, %v1250, -inf
      %1257 = vmax.xlane.f32.xlu0 %v1256
      %v1258 = vpop.xlane.xlu0 %1257
      %v1259 = vsel %vm731, %v1253, -inf
      %1260 = vmax.xlane.f32.xlu0 %v1259
      %v1261 = vpop.xlane.xlu0 %1260
      %v1262 = vsub.f32 %v1250, %v1258
      %v1263 = vsub.f32 %v1253, %v1261
      %v1264 = vmul.f32 %v1262, 1.442695
      %v1265 = vpow.pop %v1264
      %v1266 = vmul.f32 %v1263, 1.442695
      %v1267 = vpow.pop %v1266
      %v1268 = vsel %vm731, %v1265, 0.0
      %1269 = vadd.xlane.f32.xlu0 %v1268
      %v1270 = vpop.xlane.xlu0 %1269
      %v1271 = vsel %vm731, %v1267, 0.0
      %1272 = vadd.xlane.f32.xlu0 %v1271
      %v1273 = vpop.xlane.xlu0 %1272
      %v1274 = vpack.c.bf16 %v1267, %v1265
      %v1276 = vsel %vm731, %v1274, 0
      %1278 = vmatprep.subr.bf16.mxu0 0
      %1279 = vmatpush1.bf16.msra.mxu0 %v1208
      %1280 = vmatprep.subr.bf16.mxu0 0
      %1281 = vmatpush1.bf16.msra.mxu0 0
      %1282 = vmatprep.subr.bf16.mxu0 0
      %1283 = vmatpush1.bf16.msra.mxu0 0
      %1284 = vmatprep.subr.bf16.mxu0 0
      %1285 = vmatpush1.bf16.msra.mxu0 0
      %1286 = vmatprep.subr.bf16.mxu0 0
      %1287 = vmatpush1.bf16.msra.mxu0 0
      %1288 = vmatprep.subr.bf16.mxu0 0
      %1289 = vmatpush1.bf16.msra.mxu0 0
      %1290 = vmatprep.subr.bf16.mxu0 0
      %1291 = vmatpush1.bf16.msra.mxu0 0
      %1292 = vmatprep.subr.bf16.mxu0 0
      %1293 = vmatpush1.bf16.msra.mxu0 0
      %1294 = vmatprep.subr.bf16.mxu0 0
      %1295 = vmatpush1.bf16.msra.mxu0 0
      %1296 = vmatprep.subr.bf16.mxu0 0
      %1297 = vmatpush1.bf16.msra.mxu0 0
      %1298 = vmatprep.subr.bf16.mxu0 0
      %1299 = vmatpush1.bf16.msra.mxu0 0
      %1300 = vmatprep.subr.bf16.mxu0 0
      %1301 = vmatpush1.bf16.msra.mxu0 0
      %1302 = vmatprep.subr.bf16.mxu0 0
      %1303 = vmatpush1.bf16.msra.mxu0 0
      %1304 = vmatprep.subr.bf16.mxu0 0
      %1305 = vmatpush1.bf16.msra.mxu0 0
      %1306 = vmatprep.subr.bf16.mxu0 0
      %1307 = vmatpush1.bf16.msra.mxu0 0
      %1308 = vmatprep.subr.bf16.mxu0 0
      %1309 = vmatpush1.bf16.msra.mxu0 0
      %1310 = vmatprep.mubr.bf16.mxu0 0
      %1311 = vmatmul.mubr.bf16.gmra.mrb[0].mxu0 %v1276
      %v1312 = vpop.f32.mrb[0].mxu0
      %v1313 = vadd.f32 0.0, %v1312
      %v1314 = vpop.f32.mrb[0].mxu0
      %v1315 = vpop.f32.mrb[0].mxu0
      %v1316 = vadd.f32 0.0, %v1315
      %v1317 = vpop.f32.mrb[0].mxu0
      %1318 = vdwg.mxu0
      %v1319 = vrcp.pop %v1270
      %v1320 = vmul.f32 %v1313, %v1319
      %v1321 = vrcp.pop %v1273
      %v1322 = vmul.f32 %v1316, %v1321
      %v1323 = vpack.c.bf16 %v1322, %v1320
      %s1324 = scalar_lea.vmem %s5, 16
      %v1325 = vld [vmem:[%s1324] sm:$0xf]
      %v1326 = vld [vmem:[%s1324 + $0x4] sm:$0xf]
      %v1327 = vld [vmem:[%s1324 + $0x8] sm:$0xf]
      %v1328 = vld [vmem:[%s1324 + $0xc] sm:$0xf]
      %v1333 = vunpack.c.l.b16 %v1325
      %v1334 = vunpack.c.l.b16 %v1326
      %v1335 = vunpack.c.l.b16 %v1327
      %v1336 = vunpack.c.l.b16 %v1328
      %v1337 = vpack.c.b16 %v1334, %v1333
      %v1338 = vpack.c.b16 %v1336, %v1335
      %v1342 = vsel %vm683, %v1323, 0
      %1344 = vmatprep.subr.bf16.mxu0 0
      %1345 = vmatpush1.bf16.msra.mxu0 %v1337
      %1346 = vmatprep.subr.bf16.mxu0 0
      %1347 = vmatpush1.bf16.msra.mxu0 %v1338
      %1348 = vmatprep.subr.bf16.mxu0 0
      %1349 = vmatpush1.bf16.msra.mxu0 0
      %1350 = vmatprep.subr.bf16.mxu0 0
      %1351 = vmatpush1.bf16.msra.mxu0 0
      %1352 = vmatprep.subr.bf16.mxu0 0
      %1353 = vmatpush1.bf16.msra.mxu0 0
      %1354 = vmatprep.subr.bf16.mxu0 0
      %1355 = vmatpush1.bf16.msra.mxu0 0
      %1356 = vmatprep.subr.bf16.mxu0 0
      %1357 = vmatpush1.bf16.msra.mxu0 0
      %1358 = vmatprep.subr.bf16.mxu0 0
      %1359 = vmatpush1.bf16.msra.mxu0 0
      %1360 = vmatprep.subr.bf16.mxu0 0
      %1361 = vmatpush1.bf16.msra.mxu0 0
      %1362 = vmatprep.subr.bf16.mxu0 0
      %1363 = vmatpush1.bf16.msra.mxu0 0
      %1364 = vmatprep.subr.bf16.mxu0 0
      %1365 = vmatpush1.bf16.msra.mxu0 0
      %1366 = vmatprep.subr.bf16.mxu0 0
      %1367 = vmatpush1.bf16.msra.mxu0 0
      %1368 = vmatprep.subr.bf16.mxu0 0
      %1369 = vmatpush1.bf16.msra.mxu0 0
      %1370 = vmatprep.subr.bf16.mxu0 0
      %1371 = vmatpush1.bf16.msra.mxu0 0
      %1372 = vmatprep.subr.bf16.mxu0 0
      %1373 = vmatpush1.bf16.msra.mxu0 0
      %1374 = vmatprep.subr.bf16.mxu0 0
      %1375 = vmatpush1.bf16.msra.mxu0 0
      %1376 = vmatprep.mubr.bf16.mxu0 0
      %1377 = vmatmul.mubr.bf16.gmra.mrb[0].mxu0 %v1342
      %v1378 = vpop.f32.mrb[0].mxu0
      %v1379 = vadd.f32 0.0, %v1378
      %v1380 = vpop.f32.mrb[0].mxu0
      %v1381 = vpop.f32.mrb[0].mxu0
      %v1382 = vadd.f32 0.0, %v1381
      %v1383 = vpop.f32.mrb[0].mxu0
      %1384 = vdwg.mxu0
      %v1385 = vadd.f32 %v860, %v1379
      %v1386 = vadd.f32 %v861, %v1382
      %s1387 = scalar_lea.vmem %s3, 128
      %v1388 = vld [vmem:[%s1387] sm:$0xf]
      %v1389 = vld [vmem:[%s1387 + $0x4] sm:$0xf]
      %v1390 = vld [vmem:[%s1387 + $0x8] sm:$0xf]
      %v1391 = vld [vmem:[%s1387 + $0xc] sm:$0xf]
      %v1392 = vld [vmem:[%s1387 + $0x10] sm:$0xf]
      %v1393 = vld [vmem:[%s1387 + $0x14] sm:$0xf]
      %v1394 = vld [vmem:[%s1387 + $0x18] sm:$0xf]
      %v1395 = vld [vmem:[%s1387 + $0x1c] sm:$0xf]
      %v1396 = vld [vmem:[%s1387 + $0x20] sm:$0xf]
      %v1397 = vld [vmem:[%s1387 + $0x24] sm:$0xf]
      %v1398 = vld [vmem:[%s1387 + $0x28] sm:$0xf]
      %v1399 = vld [vmem:[%s1387 + $0x2c] sm:$0xf]
      %v1400 = vld [vmem:[%s1387 + $0x30] sm:$0xf]
      %v1401 = vld [vmem:[%s1387 + $0x34] sm:$0xf]
      %v1402 = vld [vmem:[%s1387 + $0x38] sm:$0xf]
      %v1403 = vld [vmem:[%s1387 + $0x3c] sm:$0xf]
      %s1404 = scalar_lea.vmem %s4, 2
      %v1405 = vld [vmem:[%s1404] sm:$0x1]
      %v1407 = vlaneseq
      %v1408 = vshrl.u32 %v1407, 7
      %v1409 = vsub.s32 0, %v1408
      %v1410 = vrot.slane %v1405, %v1409
      %v1428 = vunpack.c.l.b16 %v1388
      %v1429 = vunpack.c.l.b16 %v1389
      %v1430 = vunpack.c.l.b16 %v1390
      %v1431 = vunpack.c.l.b16 %v1391
      %v1432 = vunpack.c.l.b16 %v1392
      %v1433 = vunpack.c.l.b16 %v1393
      %v1434 = vunpack.c.l.b16 %v1394
      %v1435 = vunpack.c.l.b16 %v1395
      %v1436 = vunpack.c.l.b16 %v1396
      %v1437 = vunpack.c.l.b16 %v1397
      %v1438 = vunpack.c.l.b16 %v1398
      %v1439 = vunpack.c.l.b16 %v1399
      %v1440 = vunpack.c.l.b16 %v1400
      %v1441 = vunpack.c.l.b16 %v1401
      %v1442 = vunpack.c.l.b16 %v1402
      %v1443 = vunpack.c.l.b16 %v1403
      %v1444 = vpack.c.b16 %v1429, %v1428
      %v1445 = vpack.c.b16 %v1431, %v1430
      %v1446 = vpack.c.b16 %v1433, %v1432
      %v1447 = vpack.c.b16 %v1435, %v1434
      %v1448 = vpack.c.b16 %v1437, %v1436
      %v1449 = vpack.c.b16 %v1439, %v1438
      %v1450 = vpack.c.b16 %v1441, %v1440
      %v1451 = vpack.c.b16 %v1443, %v1442
      %1460 = vmatprep.subr.bf16.mxu0 0
      %1461 = vmatpush1.bf16.msra.mxu0 %v1444
      %1462 = vmatprep.subr.bf16.mxu0 0
      %1463 = vmatpush1.bf16.msra.mxu0 %v1445
      %1464 = vmatprep.subr.bf16.mxu0 0
      %1465 = vmatpush1.bf16.msra.mxu0 %v1446
      %1466 = vmatprep.subr.bf16.mxu0 0
      %1467 = vmatpush1.bf16.msra.mxu0 %v1447
      %1468 = vmatprep.subr.bf16.mxu0 0
      %1469 = vmatpush1.bf16.msra.mxu0 %v1448
      %1470 = vmatprep.subr.bf16.mxu0 0
      %1471 = vmatpush1.bf16.msra.mxu0 %v1449
      %1472 = vmatprep.subr.bf16.mxu0 0
      %1473 = vmatpush1.bf16.msra.mxu0 %v1450
      %1474 = vmatprep.subr.bf16.mxu0 0
      %1475 = vmatpush1.bf16.msra.mxu0 %v1451
      %1476 = vmatprep.subr.bf16.mxu0 0
      %1477 = vmatpush1.bf16.msra.mxu0 0
      %1478 = vmatprep.subr.bf16.mxu0 0
      %1479 = vmatpush1.bf16.msra.mxu0 0
      %1480 = vmatprep.subr.bf16.mxu0 0
      %1481 = vmatpush1.bf16.msra.mxu0 0
      %1482 = vmatprep.subr.bf16.mxu0 0
      %1483 = vmatpush1.bf16.msra.mxu0 0
      %1484 = vmatprep.subr.bf16.mxu0 0
      %1485 = vmatpush1.bf16.msra.mxu0 0
      %1486 = vmatprep.subr.bf16.mxu0 0
      %1487 = vmatpush1.bf16.msra.mxu0 0
      %1488 = vmatprep.subr.bf16.mxu0 0
      %1489 = vmatpush1.bf16.msra.mxu0 0
      %1490 = vmatprep.subr.bf16.mxu0 0
      %1491 = vmatpush1.bf16.msra.mxu0 0
      %1492 = vmatprep.mubr.bf16.mxu0 0
      %1493 = vmatmul.mubr.bf16.gmra.mrb[0].mxu0 %v328
      %v1494 = vpop.f32.mrb[0].mxu0
      %v1495 = vadd.f32 %v1410, %v1494
      %v1496 = vpop.f32.mrb[0].mxu0
      %v1497 = vpop.f32.mrb[0].mxu0
      %v1498 = vadd.f32 %v1410, %v1497
      %v1499 = vpop.f32.mrb[0].mxu0
      %1500 = vdwg.mxu0
      %v1501 = vmul.f32 %v1495, 0.17677669
      %v1502 = vmul.f32 %v1498, 0.17677669
      %s1503 = scalar_lea.vmem %s3, 384
      %v1504 = vld [vmem:[%s1503] sm:$0xf]
      %v1505 = vld [vmem:[%s1503 + $0x4] sm:$0xf]
      %v1506 = vld [vmem:[%s1503 + $0x8] sm:$0xf]
      %v1507 = vld [vmem:[%s1503 + $0xc] sm:$0xf]
      %v1508 = vld [vmem:[%s1503 + $0x10] sm:$0xf]
      %v1509 = vld [vmem:[%s1503 + $0x14] sm:$0xf]
      %v1510 = vld [vmem:[%s1503 + $0x18] sm:$0xf]
      %v1511 = vld [vmem:[%s1503 + $0x1c] sm:$0xf]
      %v1512 = vld [vmem:[%s1503 + $0x20] sm:$0xf]
      %v1513 = vld [vmem:[%s1503 + $0x24] sm:$0xf]
      %v1514 = vld [vmem:[%s1503 + $0x28] sm:$0xf]
      %v1515 = vld [vmem:[%s1503 + $0x2c] sm:$0xf]
      %v1516 = vld [vmem:[%s1503 + $0x30] sm:$0xf]
      %v1517 = vld [vmem:[%s1503 + $0x34] sm:$0xf]
      %v1518 = vld [vmem:[%s1503 + $0x38] sm:$0xf]
      %v1519 = vld [vmem:[%s1503 + $0x3c] sm:$0xf]
      %s1520 = scalar_lea.vmem %s4, 6
      %v1521 = vld [vmem:[%s1520] sm:$0x1]
      %v1523 = vlaneseq
      %v1524 = vshrl.u32 %v1523, 7
      %v1525 = vsub.s32 0, %v1524
      %v1526 = vrot.slane %v1521, %v1525
      %v1544 = vunpack.c.l.b16 %v1504
      %v1545 = vunpack.c.l.b16 %v1505
      %v1546 = vunpack.c.l.b16 %v1506
      %v1547 = vunpack.c.l.b16 %v1507
      %v1548 = vunpack.c.l.b16 %v1508
      %v1549 = vunpack.c.l.b16 %v1509
      %v1550 = vunpack.c.l.b16 %v1510
      %v1551 = vunpack.c.l.b16 %v1511
      %v1552 = vunpack.c.l.b16 %v1512
      %v1553 = vunpack.c.l.b16 %v1513
      %v1554 = vunpack.c.l.b16 %v1514
      %v1555 = vunpack.c.l.b16 %v1515
      %v1556 = vunpack.c.l.b16 %v1516
      %v1557 = vunpack.c.l.b16 %v1517
      %v1558 = vunpack.c.l.b16 %v1518
      %v1559 = vunpack.c.l.b16 %v1519
      %v1560 = vpack.c.b16 %v1545, %v1544
      %v1561 = vpack.c.b16 %v1547, %v1546
      %v1562 = vpack.c.b16 %v1549, %v1548
      %v1563 = vpack.c.b16 %v1551, %v1550
      %v1564 = vpack.c.b16 %v1553, %v1552
      %v1565 = vpack.c.b16 %v1555, %v1554
      %v1566 = vpack.c.b16 %v1557, %v1556
      %v1567 = vpack.c.b16 %v1559, %v1558
      %1576 = vmatprep.subr.bf16.mxu0 0
      %1577 = vmatpush1.bf16.msra.mxu0 %v1560
      %1578 = vmatprep.subr.bf16.mxu0 0
      %1579 = vmatpush1.bf16.msra.mxu0 %v1561
      %1580 = vmatprep.subr.bf16.mxu0 0
      %1581 = vmatpush1.bf16.msra.mxu0 %v1562
      %1582 = vmatprep.subr.bf16.mxu0 0
      %1583 = vmatpush1.bf16.msra.mxu0 %v1563
      %1584 = vmatprep.subr.bf16.mxu0 0
      %1585 = vmatpush1.bf16.msra.mxu0 %v1564
      %1586 = vmatprep.subr.bf16.mxu0 0
      %1587 = vmatpush1.bf16.msra.mxu0 %v1565
      %1588 = vmatprep.subr.bf16.mxu0 0
      %1589 = vmatpush1.bf16.msra.mxu0 %v1566
      %1590 = vmatprep.subr.bf16.mxu0 0
      %1591 = vmatpush1.bf16.msra.mxu0 %v1567
      %1592 = vmatprep.subr.bf16.mxu0 0
      %1593 = vmatpush1.bf16.msra.mxu0 0
      %1594 = vmatprep.subr.bf16.mxu0 0
      %1595 = vmatpush1.bf16.msra.mxu0 0
      %1596 = vmatprep.subr.bf16.mxu0 0
      %1597 = vmatpush1.bf16.msra.mxu0 0
      %1598 = vmatprep.subr.bf16.mxu0 0
      %1599 = vmatpush1.bf16.msra.mxu0 0
      %1600 = vmatprep.subr.bf16.mxu0 0
      %1601 = vmatpush1.bf16.msra.mxu0 0
      %1602 = vmatprep.subr.bf16.mxu0 0
      %1603 = vmatpush1.bf16.msra.mxu0 0
      %1604 = vmatprep.subr.bf16.mxu0 0
      %1605 = vmatpush1.bf16.msra.mxu0 0
      %1606 = vmatprep.subr.bf16.mxu0 0
      %1607 = vmatpush1.bf16.msra.mxu0 0
      %1608 = vmatprep.mubr.bf16.mxu0 0
      %1609 = vmatmul.mubr.bf16.gmra.mrb[0].mxu0 %v328
      %v1610 = vpop.f32.mrb[0].mxu0
      %v1611 = vadd.f32 %v1526, %v1610
      %v1612 = vpop.f32.mrb[0].mxu0
      %v1613 = vpop.f32.mrb[0].mxu0
      %v1614 = vadd.f32 %v1526, %v1613
      %v1615 = vpop.f32.mrb[0].mxu0
      %1616 = vdwg.mxu0
      %s1617 = scalar_lea.vmem %s3, 640
      %v1618 = vld [vmem:[%s1617] sm:$0xf]
      %v1619 = vld [vmem:[%s1617 + $0x4] sm:$0xf]
      %v1620 = vld [vmem:[%s1617 + $0x8] sm:$0xf]
      %v1621 = vld [vmem:[%s1617 + $0xc] sm:$0xf]
      %v1622 = vld [vmem:[%s1617 + $0x10] sm:$0xf]
      %v1623 = vld [vmem:[%s1617 + $0x14] sm:$0xf]
      %v1624 = vld [vmem:[%s1617 + $0x18] sm:$0xf]
      %v1625 = vld [vmem:[%s1617 + $0x1c] sm:$0xf]
      %v1626 = vld [vmem:[%s1617 + $0x20] sm:$0xf]
      %v1627 = vld [vmem:[%s1617 + $0x24] sm:$0xf]
      %v1628 = vld [vmem:[%s1617 + $0x28] sm:$0xf]
      %v1629 = vld [vmem:[%s1617 + $0x2c] sm:$0xf]
      %v1630 = vld [vmem:[%s1617 + $0x30] sm:$0xf]
      %v1631 = vld [vmem:[%s1617 + $0x34] sm:$0xf]
      %v1632 = vld [vmem:[%s1617 + $0x38] sm:$0xf]
      %v1633 = vld [vmem:[%s1617 + $0x3c] sm:$0xf]
      %s1634 = scalar_lea.vmem %s4, 10
      %v1635 = vld [vmem:[%s1634] sm:$0x1]
      %v1637 = vlaneseq
      %v1638 = vshrl.u32 %v1637, 7
      %v1639 = vsub.s32 0, %v1638
      %v1640 = vrot.slane %v1635, %v1639
      %v1658 = vunpack.c.l.b16 %v1618
      %v1659 = vunpack.c.l.b16 %v1619
      %v1660 = vunpack.c.l.b16 %v1620
      %v1661 = vunpack.c.l.b16 %v1621
      %v1662 = vunpack.c.l.b16 %v1622
      %v1663 = vunpack.c.l.b16 %v1623
      %v1664 = vunpack.c.l.b16 %v1624
      %v1665 = vunpack.c.l.b16 %v1625
      %v1666 = vunpack.c.l.b16 %v1626
      %v1667 = vunpack.c.l.b16 %v1627
      %v1668 = vunpack.c.l.b16 %v1628
      %v1669 = vunpack.c.l.b16 %v1629
      %v1670 = vunpack.c.l.b16 %v1630
      %v1671 = vunpack.c.l.b16 %v1631
      %v1672 = vunpack.c.l.b16 %v1632
      %v1673 = vunpack.c.l.b16 %v1633
      %v1674 = vpack.c.b16 %v1659, %v1658
      %v1675 = vpack.c.b16 %v1661, %v1660
      %v1676 = vpack.c.b16 %v1663, %v1662
      %v1677 = vpack.c.b16 %v1665, %v1664
      %v1678 = vpack.c.b16 %v1667, %v1666
      %v1679 = vpack.c.b16 %v1669, %v1668
      %v1680 = vpack.c.b16 %v1671, %v1670
      %v1681 = vpack.c.b16 %v1673, %v1672
      %1690 = vmatprep.subr.bf16.mxu0 0
      %1691 = vmatpush1.bf16.msra.mxu0 %v1674
      %1692 = vmatprep.subr.bf16.mxu0 0
      %1693 = vmatpush1.bf16.msra.mxu0 %v1675
      %1694 = vmatprep.subr.bf16.mxu0 0
      %1695 = vmatpush1.bf16.msra.mxu0 %v1676
      %1696 = vmatprep.subr.bf16.mxu0 0
      %1697 = vmatpush1.bf16.msra.mxu0 %v1677
      %1698 = vmatprep.subr.bf16.mxu0 0
      %1699 = vmatpush1.bf16.msra.mxu0 %v1678
      %1700 = vmatprep.subr.bf16.mxu0 0
      %1701 = vmatpush1.bf16.msra.mxu0 %v1679
      %1702 = vmatprep.subr.bf16.mxu0 0
      %1703 = vmatpush1.bf16.msra.mxu0 %v1680
      %1704 = vmatprep.subr.bf16.mxu0 0
      %1705 = vmatpush1.bf16.msra.mxu0 %v1681
      %1706 = vmatprep.subr.bf16.mxu0 0
      %1707 = vmatpush1.bf16.msra.mxu0 0
      %1708 = vmatprep.subr.bf16.mxu0 0
      %1709 = vmatpush1.bf16.msra.mxu0 0
      %1710 = vmatprep.subr.bf16.mxu0 0
      %1711 = vmatpush1.bf16.msra.mxu0 0
      %1712 = vmatprep.subr.bf16.mxu0 0
      %1713 = vmatpush1.bf16.msra.mxu0 0
      %1714 = vmatprep.subr.bf16.mxu0 0
      %1715 = vmatpush1.bf16.msra.mxu0 0
      %1716 = vmatprep.subr.bf16.mxu0 0
      %1717 = vmatpush1.bf16.msra.mxu0 0
      %1718 = vmatprep.subr.bf16.mxu0 0
      %1719 = vmatpush1.bf16.msra.mxu0 0
      %1720 = vmatprep.subr.bf16.mxu0 0
      %1721 = vmatpush1.bf16.msra.mxu0 0
      %1722 = vmatprep.mubr.bf16.mxu0 0
      %1723 = vmatmul.mubr.bf16.gmra.mrb[0].mxu0 %v328
      %v1724 = vpop.f32.mrb[0].mxu0
      %v1725 = vadd.f32 %v1640, %v1724
      %v1726 = vpop.f32.mrb[0].mxu0
      %v1727 = vpop.f32.mrb[0].mxu0
      %v1728 = vadd.f32 %v1640, %v1727
      %v1729 = vpop.f32.mrb[0].mxu0
      %1730 = vdwg.mxu0
      %v1731 = vpack.c.bf16 %v1502, %v1501
      %v1732 = vpack.c.bf16 %v1614, %v1611
      %v1733 = vpack.c.bf16 %v1728, %v1725
      %v1735 = vsel %vm683, %v1731, 0
      %v1738 = vsel %vm683, %v1732, 0
      %1740 = vmatprep.subr.bf16.mxu0 0
      %1741 = vmatpush1.bf16.xpose.msra.mxu0 %v1738
      %1742 = vmatprep.subr.bf16.mxu0 0
      %1743 = vmatpush1.bf16.xpose.msra.mxu0 0
      %1744 = vmatprep.subr.bf16.mxu0 0
      %1745 = vmatpush1.bf16.xpose.msra.mxu0 0
      %1746 = vmatprep.subr.bf16.mxu0 0
      %1747 = vmatpush1.bf16.xpose.msra.mxu0 0
      %1748 = vmatprep.subr.bf16.mxu0 0
      %1749 = vmatpush1.bf16.xpose.msra.mxu0 0
      %1750 = vmatprep.subr.bf16.mxu0 0
      %1751 = vmatpush1.bf16.xpose.msra.mxu0 0
      %1752 = vmatprep.subr.bf16.mxu0 0
      %1753 = vmatpush1.bf16.xpose.msra.mxu0 0
      %1754 = vmatprep.subr.bf16.mxu0 0
      %1755 = vmatpush1.bf16.xpose.msra.mxu0 0
      %1756 = vmatprep.subr.bf16.mxu0 0
      %1757 = vmatpush1.bf16.xpose.msra.mxu0 0
      %1758 = vmatprep.subr.bf16.mxu0 0
      %1759 = vmatpush1.bf16.xpose.msra.mxu0 0
      %1760 = vmatprep.subr.bf16.mxu0 0
      %1761 = vmatpush1.bf16.xpose.msra.mxu0 0
      %1762 = vmatprep.subr.bf16.mxu0 0
      %1763 = vmatpush1.bf16.xpose.msra.mxu0 0
      %1764 = vmatprep.subr.bf16.mxu0 0
      %1765 = vmatpush1.bf16.xpose.msra.mxu0 0
      %1766 = vmatprep.subr.bf16.mxu0 0
      %1767 = vmatpush1.bf16.xpose.msra.mxu0 0
      %1768 = vmatprep.subr.bf16.mxu0 0
      %1769 = vmatpush1.bf16.xpose.msra.mxu0 0
      %1770 = vmatprep.subr.bf16.mxu0 0
      %1771 = vmatpush1.bf16.xpose.msra.mxu0 0
      %1772 = vmatprep.mubr.bf16.mxu0 0
      %1773 = vmatmul.mubr.bf16.gmra.mrb[0].mxu0 %v1735
      %v1774 = vpop.f32.mrb[0].mxu0
      %v1775 = vadd.f32 0.0, %v1774
      %v1776 = vpop.f32.mrb[0].mxu0
      %v1777 = vpop.f32.mrb[0].mxu0
      %v1778 = vadd.f32 0.0, %v1777
      %v1779 = vpop.f32.mrb[0].mxu0
      %1780 = vdwg.mxu0
      %v1781 = vsel %vm731, %v1775, -inf
      %1782 = vmax.xlane.f32.xlu0 %v1781
      %v1783 = vpop.xlane.xlu0 %1782
      %v1784 = vsel %vm731, %v1778, -inf
      %1785 = vmax.xlane.f32.xlu0 %v1784
      %v1786 = vpop.xlane.xlu0 %1785
      %v1787 = vsub.f32 %v1775, %v1783
      %v1788 = vsub.f32 %v1778, %v1786
      %v1789 = vmul.f32 %v1787, 1.442695
      %v1790 = vpow.pop %v1789
      %v1791 = vmul.f32 %v1788, 1.442695
      %v1792 = vpow.pop %v1791
      %v1793 = vsel %vm731, %v1790, 0.0
      %1794 = vadd.xlane.f32.xlu0 %v1793
      %v1795 = vpop.xlane.xlu0 %1794
      %v1796 = vsel %vm731, %v1792, 0.0
      %1797 = vadd.xlane.f32.xlu0 %v1796
      %v1798 = vpop.xlane.xlu0 %1797
      %v1799 = vpack.c.bf16 %v1792, %v1790
      %v1801 = vsel %vm731, %v1799, 0
      %1803 = vmatprep.subr.bf16.mxu0 0
      %1804 = vmatpush1.bf16.msra.mxu0 %v1733
      %1805 = vmatprep.subr.bf16.mxu0 0
      %1806 = vmatpush1.bf16.msra.mxu0 0
      %1807 = vmatprep.subr.bf16.mxu0 0
      %1808 = vmatpush1.bf16.msra.mxu0 0
      %1809 = vmatprep.subr.bf16.mxu0 0
      %1810 = vmatpush1.bf16.msra.mxu0 0
      %1811 = vmatprep.subr.bf16.mxu0 0
      %1812 = vmatpush1.bf16.msra.mxu0 0
      %1813 = vmatprep.subr.bf16.mxu0 0
      %1814 = vmatpush1.bf16.msra.mxu0 0
      %1815 = vmatprep.subr.bf16.mxu0 0
      %1816 = vmatpush1.bf16.msra.mxu0 0
      %1817 = vmatprep.subr.bf16.mxu0 0
      %1818 = vmatpush1.bf16.msra.mxu0 0
      %1819 = vmatprep.subr.bf16.mxu0 0
      %1820 = vmatpush1.bf16.msra.mxu0 0
      %1821 = vmatprep.subr.bf16.mxu0 0
      %1822 = vmatpush1.bf16.msra.mxu0 0
      %1823 = vmatprep.subr.bf16.mxu0 0
      %1824 = vmatpush1.bf16.msra.mxu0 0
      %1825 = vmatprep.subr.bf16.mxu0 0
      %1826 = vmatpush1.bf16.msra.mxu0 0
      %1827 = vmatprep.subr.bf16.mxu0 0
      %1828 = vmatpush1.bf16.msra.mxu0 0
      %1829 = vmatprep.subr.bf16.mxu0 0
      %1830 = vmatpush1.bf16.msra.mxu0 0
      %1831 = vmatprep.subr.bf16.mxu0 0
      %1832 = vmatpush1.bf16.msra.mxu0 0
      %1833 = vmatprep.subr.bf16.mxu0 0
      %1834 = vmatpush1.bf16.msra.mxu0 0
      %1835 = vmatprep.mubr.bf16.mxu0 0
      %1836 = vmatmul.mubr.bf16.gmra.mrb[0].mxu0 %v1801
      %v1837 = vpop.f32.mrb[0].mxu0
      %v1838 = vadd.f32 0.0, %v1837
      %v1839 = vpop.f32.mrb[0].mxu0
      %v1840 = vpop.f32.mrb[0].mxu0
      %v1841 = vadd.f32 0.0, %v1840
      %v1842 = vpop.f32.mrb[0].mxu0
      %1843 = vdwg.mxu0
      %v1844 = vrcp.pop %v1795
      %v1845 = vmul.f32 %v1838, %v1844
      %v1846 = vrcp.pop %v1798
      %v1847 = vmul.f32 %v1841, %v1846
      %v1848 = vpack.c.bf16 %v1847, %v1845
      %s1849 = scalar_lea.vmem %s5, 32
      %v1850 = vld [vmem:[%s1849] sm:$0xf]
      %v1851 = vld [vmem:[%s1849 + $0x4] sm:$0xf]
      %v1852 = vld [vmem:[%s1849 + $0x8] sm:$0xf]
      %v1853 = vld [vmem:[%s1849 + $0xc] sm:$0xf]
      %v1858 = vunpack.c.l.b16 %v1850
      %v1859 = vunpack.c.l.b16 %v1851
      %v1860 = vunpack.c.l.b16 %v1852
      %v1861 = vunpack.c.l.b16 %v1853
      %v1862 = vpack.c.b16 %v1859, %v1858
      %v1863 = vpack.c.b16 %v1861, %v1860
      %v1867 = vsel %vm683, %v1848, 0
      %1869 = vmatprep.subr.bf16.mxu0 0
      %1870 = vmatpush1.bf16.msra.mxu0 %v1862
      %1871 = vmatprep.subr.bf16.mxu0 0
      %1872 = vmatpush1.bf16.msra.mxu0 %v1863
      %1873 = vmatprep.subr.bf16.mxu0 0
      %1874 = vmatpush1.bf16.msra.mxu0 0
      %1875 = vmatprep.subr.bf16.mxu0 0
      %1876 = vmatpush1.bf16.msra.mxu0 0
      %1877 = vmatprep.subr.bf16.mxu0 0
      %1878 = vmatpush1.bf16.msra.mxu0 0
      %1879 = vmatprep.subr.bf16.mxu0 0
      %1880 = vmatpush1.bf16.msra.mxu0 0
      %1881 = vmatprep.subr.bf16.mxu0 0
      %1882 = vmatpush1.bf16.msra.mxu0 0
      %1883 = vmatprep.subr.bf16.mxu0 0
      %1884 = vmatpush1.bf16.msra.mxu0 0
      %1885 = vmatprep.subr.bf16.mxu0 0
      %1886 = vmatpush1.bf16.msra.mxu0 0
      %1887 = vmatprep.subr.bf16.mxu0 0
      %1888 = vmatpush1.bf16.msra.mxu0 0
      %1889 = vmatprep.subr.bf16.mxu0 0
      %1890 = vmatpush1.bf16.msra.mxu0 0
      %1891 = vmatprep.subr.bf16.mxu0 0
      %1892 = vmatpush1.bf16.msra.mxu0 0
      %1893 = vmatprep.subr.bf16.mxu0 0
      %1894 = vmatpush1.bf16.msra.mxu0 0
      %1895 = vmatprep.subr.bf16.mxu0 0
      %1896 = vmatpush1.bf16.msra.mxu0 0
      %1897 = vmatprep.subr.bf16.mxu0 0
      %1898 = vmatpush1.bf16.msra.mxu0 0
      %1899 = vmatprep.subr.bf16.mxu0 0
      %1900 = vmatpush1.bf16.msra.mxu0 0
      %1901 = vmatprep.mubr.bf16.mxu0 0
      %1902 = vmatmul.mubr.bf16.gmra.mrb[0].mxu0 %v1867
      %v1903 = vpop.f32.mrb[0].mxu0
      %v1904 = vadd.f32 0.0, %v1903
      %v1905 = vpop.f32.mrb[0].mxu0
      %v1906 = vpop.f32.mrb[0].mxu0
      %v1907 = vadd.f32 0.0, %v1906
      %v1908 = vpop.f32.mrb[0].mxu0
      %1909 = vdwg.mxu0
      %v1910 = vadd.f32 %v1385, %v1904
      %v1911 = vadd.f32 %v1386, %v1907
      %s1912 = scalar_lea.vmem %s3, 192
      %v1913 = vld [vmem:[%s1912] sm:$0xf]
      %v1914 = vld [vmem:[%s1912 + $0x4] sm:$0xf]
      %v1915 = vld [vmem:[%s1912 + $0x8] sm:$0xf]
      %v1916 = vld [vmem:[%s1912 + $0xc] sm:$0xf]
      %v1917 = vld [vmem:[%s1912 + $0x10] sm:$0xf]
      %v1918 = vld [vmem:[%s1912 + $0x14] sm:$0xf]
      %v1919 = vld [vmem:[%s1912 + $0x18] sm:$0xf]
      %v1920 = vld [vmem:[%s1912 + $0x1c] sm:$0xf]
      %v1921 = vld [vmem:[%s1912 + $0x20] sm:$0xf]
      %v1922 = vld [vmem:[%s1912 + $0x24] sm:$0xf]
      %v1923 = vld [vmem:[%s1912 + $0x28] sm:$0xf]
      %v1924 = vld [vmem:[%s1912 + $0x2c] sm:$0xf]
      %v1925 = vld [vmem:[%s1912 + $0x30] sm:$0xf]
      %v1926 = vld [vmem:[%s1912 + $0x34] sm:$0xf]
      %v1927 = vld [vmem:[%s1912 + $0x38] sm:$0xf]
      %v1928 = vld [vmem:[%s1912 + $0x3c] sm:$0xf]
      %s1929 = scalar_lea.vmem %s4, 3
      %v1930 = vld [vmem:[%s1929] sm:$0x1]
      %v1932 = vlaneseq
      %v1933 = vshrl.u32 %v1932, 7
      %v1934 = vsub.s32 0, %v1933
      %v1935 = vrot.slane %v1930, %v1934
      %v1953 = vunpack.c.l.b16 %v1913
      %v1954 = vunpack.c.l.b16 %v1914
      %v1955 = vunpack.c.l.b16 %v1915
      %v1956 = vunpack.c.l.b16 %v1916
      %v1957 = vunpack.c.l.b16 %v1917
      %v1958 = vunpack.c.l.b16 %v1918
      %v1959 = vunpack.c.l.b16 %v1919
      %v1960 = vunpack.c.l.b16 %v1920
      %v1961 = vunpack.c.l.b16 %v1921
      %v1962 = vunpack.c.l.b16 %v1922
      %v1963 = vunpack.c.l.b16 %v1923
      %v1964 = vunpack.c.l.b16 %v1924
      %v1965 = vunpack.c.l.b16 %v1925
      %v1966 = vunpack.c.l.b16 %v1926
      %v1967 = vunpack.c.l.b16 %v1927
      %v1968 = vunpack.c.l.b16 %v1928
      %v1969 = vpack.c.b16 %v1954, %v1953
      %v1970 = vpack.c.b16 %v1956, %v1955
      %v1971 = vpack.c.b16 %v1958, %v1957
      %v1972 = vpack.c.b16 %v1960, %v1959
      %v1973 = vpack.c.b16 %v1962, %v1961
      %v1974 = vpack.c.b16 %v1964, %v1963
      %v1975 = vpack.c.b16 %v1966, %v1965
      %v1976 = vpack.c.b16 %v1968, %v1967
      %1985 = vmatprep.subr.bf16.mxu0 0
      %1986 = vmatpush1.bf16.msra.mxu0 %v1969
      %1987 = vmatprep.subr.bf16.mxu0 0
      %1988 = vmatpush1.bf16.msra.mxu0 %v1970
      %1989 = vmatprep.subr.bf16.mxu0 0
      %1990 = vmatpush1.bf16.msra.mxu0 %v1971
      %1991 = vmatprep.subr.bf16.mxu0 0
      %1992 = vmatpush1.bf16.msra.mxu0 %v1972
      %1993 = vmatprep.subr.bf16.mxu0 0
      %1994 = vmatpush1.bf16.msra.mxu0 %v1973
      %1995 = vmatprep.subr.bf16.mxu0 0
      %1996 = vmatpush1.bf16.msra.mxu0 %v1974
      %1997 = vmatprep.subr.bf16.mxu0 0
      %1998 = vmatpush1.bf16.msra.mxu0 %v1975
      %1999 = vmatprep.subr.bf16.mxu0 0
      %2000 = vmatpush1.bf16.msra.mxu0 %v1976
      %2001 = vmatprep.subr.bf16.mxu0 0
      %2002 = vmatpush1.bf16.msra.mxu0 0
      %2003 = vmatprep.subr.bf16.mxu0 0
      %2004 = vmatpush1.bf16.msra.mxu0 0
      %2005 = vmatprep.subr.bf16.mxu0 0
      %2006 = vmatpush1.bf16.msra.mxu0 0
      %2007 = vmatprep.subr.bf16.mxu0 0
      %2008 = vmatpush1.bf16.msra.mxu0 0
      %2009 = vmatprep.subr.bf16.mxu0 0
      %2010 = vmatpush1.bf16.msra.mxu0 0
      %2011 = vmatprep.subr.bf16.mxu0 0
      %2012 = vmatpush1.bf16.msra.mxu0 0
      %2013 = vmatprep.subr.bf16.mxu0 0
      %2014 = vmatpush1.bf16.msra.mxu0 0
      %2015 = vmatprep.subr.bf16.mxu0 0
      %2016 = vmatpush1.bf16.msra.mxu0 0
      %2017 = vmatprep.mubr.bf16.mxu0 0
      %2018 = vmatmul.mubr.bf16.gmra.mrb[0].mxu0 %v328
      %v2019 = vpop.f32.mrb[0].mxu0
      %v2020 = vadd.f32 %v1935, %v2019
      %v2021 = vpop.f32.mrb[0].mxu0
      %v2022 = vpop.f32.mrb[0].mxu0
      %v2023 = vadd.f32 %v1935, %v2022
      %v2024 = vpop.f32.mrb[0].mxu0
      %2025 = vdwg.mxu0
      %v2026 = vmul.f32 %v2020, 0.17677669
      %v2027 = vmul.f32 %v2023, 0.17677669
      %s2028 = scalar_lea.vmem %s3, 448
      %v2029 = vld [vmem:[%s2028] sm:$0xf]
      %v2030 = vld [vmem:[%s2028 + $0x4] sm:$0xf]
      %v2031 = vld [vmem:[%s2028 + $0x8] sm:$0xf]
      %v2032 = vld [vmem:[%s2028 + $0xc] sm:$0xf]
      %v2033 = vld [vmem:[%s2028 + $0x10] sm:$0xf]
      %v2034 = vld [vmem:[%s2028 + $0x14] sm:$0xf]
      %v2035 = vld [vmem:[%s2028 + $0x18] sm:$0xf]
      %v2036 = vld [vmem:[%s2028 + $0x1c] sm:$0xf]
      %v2037 = vld [vmem:[%s2028 + $0x20] sm:$0xf]
      %v2038 = vld [vmem:[%s2028 + $0x24] sm:$0xf]
      %v2039 = vld [vmem:[%s2028 + $0x28] sm:$0xf]
      %v2040 = vld [vmem:[%s2028 + $0x2c] sm:$0xf]
      %v2041 = vld [vmem:[%s2028 + $0x30] sm:$0xf]
      %v2042 = vld [vmem:[%s2028 + $0x34] sm:$0xf]
      %v2043 = vld [vmem:[%s2028 + $0x38] sm:$0xf]
      %v2044 = vld [vmem:[%s2028 + $0x3c] sm:$0xf]
      %s2045 = scalar_lea.vmem %s4, 7
      %v2046 = vld [vmem:[%s2045] sm:$0x1]
      %v2048 = vlaneseq
      %v2049 = vshrl.u32 %v2048, 7
      %v2050 = vsub.s32 0, %v2049
      %v2051 = vrot.slane %v2046, %v2050
      %v2069 = vunpack.c.l.b16 %v2029
      %v2070 = vunpack.c.l.b16 %v2030
      %v2071 = vunpack.c.l.b16 %v2031
      %v2072 = vunpack.c.l.b16 %v2032
      %v2073 = vunpack.c.l.b16 %v2033
      %v2074 = vunpack.c.l.b16 %v2034
      %v2075 = vunpack.c.l.b16 %v2035
      %v2076 = vunpack.c.l.b16 %v2036
      %v2077 = vunpack.c.l.b16 %v2037
      %v2078 = vunpack.c.l.b16 %v2038
      %v2079 = vunpack.c.l.b16 %v2039
      %v2080 = vunpack.c.l.b16 %v2040
      %v2081 = vunpack.c.l.b16 %v2041
      %v2082 = vunpack.c.l.b16 %v2042
      %v2083 = vunpack.c.l.b16 %v2043
      %v2084 = vunpack.c.l.b16 %v2044
      %v2085 = vpack.c.b16 %v2070, %v2069
      %v2086 = vpack.c.b16 %v2072, %v2071
      %v2087 = vpack.c.b16 %v2074, %v2073
      %v2088 = vpack.c.b16 %v2076, %v2075
      %v2089 = vpack.c.b16 %v2078, %v2077
      %v2090 = vpack.c.b16 %v2080, %v2079
      %v2091 = vpack.c.b16 %v2082, %v2081
      %v2092 = vpack.c.b16 %v2084, %v2083
      %2101 = vmatprep.subr.bf16.mxu0 0
      %2102 = vmatpush1.bf16.msra.mxu0 %v2085
      %2103 = vmatprep.subr.bf16.mxu0 0
      %2104 = vmatpush1.bf16.msra.mxu0 %v2086
      %2105 = vmatprep.subr.bf16.mxu0 0
      %2106 = vmatpush1.bf16.msra.mxu0 %v2087
      %2107 = vmatprep.subr.bf16.mxu0 0
      %2108 = vmatpush1.bf16.msra.mxu0 %v2088
      %2109 = vmatprep.subr.bf16.mxu0 0
      %2110 = vmatpush1.bf16.msra.mxu0 %v2089
      %2111 = vmatprep.subr.bf16.mxu0 0
      %2112 = vmatpush1.bf16.msra.mxu0 %v2090
      %2113 = vmatprep.subr.bf16.mxu0 0
      %2114 = vmatpush1.bf16.msra.mxu0 %v2091
      %2115 = vmatprep.subr.bf16.mxu0 0
      %2116 = vmatpush1.bf16.msra.mxu0 %v2092
      %2117 = vmatprep.subr.bf16.mxu0 0
      %2118 = vmatpush1.bf16.msra.mxu0 0
      %2119 = vmatprep.subr.bf16.mxu0 0
      %2120 = vmatpush1.bf16.msra.mxu0 0
      %2121 = vmatprep.subr.bf16.mxu0 0
      %2122 = vmatpush1.bf16.msra.mxu0 0
      %2123 = vmatprep.subr.bf16.mxu0 0
      %2124 = vmatpush1.bf16.msra.mxu0 0
      %2125 = vmatprep.subr.bf16.mxu0 0
      %2126 = vmatpush1.bf16.msra.mxu0 0
      %2127 = vmatprep.subr.bf16.mxu0 0
      %2128 = vmatpush1.bf16.msra.mxu0 0
      %2129 = vmatprep.subr.bf16.mxu0 0
      %2130 = vmatpush1.bf16.msra.mxu0 0
      %2131 = vmatprep.subr.bf16.mxu0 0
      %2132 = vmatpush1.bf16.msra.mxu0 0
      %2133 = vmatprep.mubr.bf16.mxu0 0
      %2134 = vmatmul.mubr.bf16.gmra.mrb[0].mxu0 %v328
      %v2135 = vpop.f32.mrb[0].mxu0
      %v2136 = vadd.f32 %v2051, %v2135
      %v2137 = vpop.f32.mrb[0].mxu0
      %v2138 = vpop.f32.mrb[0].mxu0
      %v2139 = vadd.f32 %v2051, %v2138
      %v2140 = vpop.f32.mrb[0].mxu0
      %2141 = vdwg.mxu0
      %s2142 = scalar_lea.vmem %s3, 704
      %v2143 = vld [vmem:[%s2142] sm:$0xf]
      %v2144 = vld [vmem:[%s2142 + $0x4] sm:$0xf]
      %v2145 = vld [vmem:[%s2142 + $0x8] sm:$0xf]
      %v2146 = vld [vmem:[%s2142 + $0xc] sm:$0xf]
      %v2147 = vld [vmem:[%s2142 + $0x10] sm:$0xf]
      %v2148 = vld [vmem:[%s2142 + $0x14] sm:$0xf]
      %v2149 = vld [vmem:[%s2142 + $0x18] sm:$0xf]
      %v2150 = vld [vmem:[%s2142 + $0x1c] sm:$0xf]
      %v2151 = vld [vmem:[%s2142 + $0x20] sm:$0xf]
      %v2152 = vld [vmem:[%s2142 + $0x24] sm:$0xf]
      %v2153 = vld [vmem:[%s2142 + $0x28] sm:$0xf]
      %v2154 = vld [vmem:[%s2142 + $0x2c] sm:$0xf]
      %v2155 = vld [vmem:[%s2142 + $0x30] sm:$0xf]
      %v2156 = vld [vmem:[%s2142 + $0x34] sm:$0xf]
      %v2157 = vld [vmem:[%s2142 + $0x38] sm:$0xf]
      %v2158 = vld [vmem:[%s2142 + $0x3c] sm:$0xf]
      %s2159 = scalar_lea.vmem %s4, 11
      %v2160 = vld [vmem:[%s2159] sm:$0x1]
      %v2162 = vlaneseq
      %v2163 = vshrl.u32 %v2162, 7
      %v2164 = vsub.s32 0, %v2163
      %v2165 = vrot.slane %v2160, %v2164
      %v2183 = vunpack.c.l.b16 %v2143
      %v2184 = vunpack.c.l.b16 %v2144
      %v2185 = vunpack.c.l.b16 %v2145
      %v2186 = vunpack.c.l.b16 %v2146
      %v2187 = vunpack.c.l.b16 %v2147
      %v2188 = vunpack.c.l.b16 %v2148
      %v2189 = vunpack.c.l.b16 %v2149
      %v2190 = vunpack.c.l.b16 %v2150
      %v2191 = vunpack.c.l.b16 %v2151
      %v2192 = vunpack.c.l.b16 %v2152
      %v2193 = vunpack.c.l.b16 %v2153
      %v2194 = vunpack.c.l.b16 %v2154
      %v2195 = vunpack.c.l.b16 %v2155
      %v2196 = vunpack.c.l.b16 %v2156
      %v2197 = vunpack.c.l.b16 %v2157
      %v2198 = vunpack.c.l.b16 %v2158
      %v2199 = vpack.c.b16 %v2184, %v2183
      %v2200 = vpack.c.b16 %v2186, %v2185
      %v2201 = vpack.c.b16 %v2188, %v2187
      %v2202 = vpack.c.b16 %v2190, %v2189
      %v2203 = vpack.c.b16 %v2192, %v2191
      %v2204 = vpack.c.b16 %v2194, %v2193
      %v2205 = vpack.c.b16 %v2196, %v2195
      %v2206 = vpack.c.b16 %v2198, %v2197
      %2215 = vmatprep.subr.bf16.mxu0 0
      %2216 = vmatpush1.bf16.msra.mxu0 %v2199
      %2217 = vmatprep.subr.bf16.mxu0 0
      %2218 = vmatpush1.bf16.msra.mxu0 %v2200
      %2219 = vmatprep.subr.bf16.mxu0 0
      %2220 = vmatpush1.bf16.msra.mxu0 %v2201
      %2221 = vmatprep.subr.bf16.mxu0 0
      %2222 = vmatpush1.bf16.msra.mxu0 %v2202
      %2223 = vmatprep.subr.bf16.mxu0 0
      %2224 = vmatpush1.bf16.msra.mxu0 %v2203
      %2225 = vmatprep.subr.bf16.mxu0 0
      %2226 = vmatpush1.bf16.msra.mxu0 %v2204
      %2227 = vmatprep.subr.bf16.mxu0 0
      %2228 = vmatpush1.bf16.msra.mxu0 %v2205
      %2229 = vmatprep.subr.bf16.mxu0 0
      %2230 = vmatpush1.bf16.msra.mxu0 %v2206
      %2231 = vmatprep.subr.bf16.mxu0 0
      %2232 = vmatpush1.bf16.msra.mxu0 0
      %2233 = vmatprep.subr.bf16.mxu0 0
      %2234 = vmatpush1.bf16.msra.mxu0 0
      %2235 = vmatprep.subr.bf16.mxu0 0
      %2236 = vmatpush1.bf16.msra.mxu0 0
      %2237 = vmatprep.subr.bf16.mxu0 0
      %2238 = vmatpush1.bf16.msra.mxu0 0
      %2239 = vmatprep.subr.bf16.mxu0 0
      %2240 = vmatpush1.bf16.msra.mxu0 0
      %2241 = vmatprep.subr.bf16.mxu0 0
      %2242 = vmatpush1.bf16.msra.mxu0 0
      %2243 = vmatprep.subr.bf16.mxu0 0
      %2244 = vmatpush1.bf16.msra.mxu0 0
      %2245 = vmatprep.subr.bf16.mxu0 0
      %2246 = vmatpush1.bf16.msra.mxu0 0
      %2247 = vmatprep.mubr.bf16.mxu0 0
      %2248 = vmatmul.mubr.bf16.gmra.mrb[0].mxu0 %v328
      %v2249 = vpop.f32.mrb[0].mxu0
      %v2250 = vadd.f32 %v2165, %v2249
      %v2251 = vpop.f32.mrb[0].mxu0
      %v2252 = vpop.f32.mrb[0].mxu0
      %v2253 = vadd.f32 %v2165, %v2252
      %v2254 = vpop.f32.mrb[0].mxu0
      %2255 = vdwg.mxu0
      %v2256 = vpack.c.bf16 %v2027, %v2026
      %v2257 = vpack.c.bf16 %v2139, %v2136
      %v2258 = vpack.c.bf16 %v2253, %v2250
      %v2260 = vsel %vm683, %v2256, 0
      %v2263 = vsel %vm683, %v2257, 0
      %2265 = vmatprep.subr.bf16.mxu0 0
      %2266 = vmatpush1.bf16.xpose.msra.mxu0 %v2263
      %2267 = vmatprep.subr.bf16.mxu0 0
      %2268 = vmatpush1.bf16.xpose.msra.mxu0 0
      %2269 = vmatprep.subr.bf16.mxu0 0
      %2270 = vmatpush1.bf16.xpose.msra.mxu0 0
      %2271 = vmatprep.subr.bf16.mxu0 0
      %2272 = vmatpush1.bf16.xpose.msra.mxu0 0
      %2273 = vmatprep.subr.bf16.mxu0 0
      %2274 = vmatpush1.bf16.xpose.msra.mxu0 0
      %2275 = vmatprep.subr.bf16.mxu0 0
      %2276 = vmatpush1.bf16.xpose.msra.mxu0 0
      %2277 = vmatprep.subr.bf16.mxu0 0
      %2278 = vmatpush1.bf16.xpose.msra.mxu0 0
      %2279 = vmatprep.subr.bf16.mxu0 0
      %2280 = vmatpush1.bf16.xpose.msra.mxu0 0
      %2281 = vmatprep.subr.bf16.mxu0 0
      %2282 = vmatpush1.bf16.xpose.msra.mxu0 0
      %2283 = vmatprep.subr.bf16.mxu0 0
      %2284 = vmatpush1.bf16.xpose.msra.mxu0 0
      %2285 = vmatprep.subr.bf16.mxu0 0
      %2286 = vmatpush1.bf16.xpose.msra.mxu0 0
      %2287 = vmatprep.subr.bf16.mxu0 0
      %2288 = vmatpush1.bf16.xpose.msra.mxu0 0
      %2289 = vmatprep.subr.bf16.mxu0 0
      %2290 = vmatpush1.bf16.xpose.msra.mxu0 0
      %2291 = vmatprep.subr.bf16.mxu0 0
      %2292 = vmatpush1.bf16.xpose.msra.mxu0 0
      %2293 = vmatprep.subr.bf16.mxu0 0
      %2294 = vmatpush1.bf16.xpose.msra.mxu0 0
      %2295 = vmatprep.subr.bf16.mxu0 0
      %2296 = vmatpush1.bf16.xpose.msra.mxu0 0
      %2297 = vmatprep.mubr.bf16.mxu0 0
      %2298 = vmatmul.mubr.bf16.gmra.mrb[0].mxu0 %v2260
      %v2299 = vpop.f32.mrb[0].mxu0
      %v2300 = vadd.f32 0.0, %v2299
      %v2301 = vpop.f32.mrb[0].mxu0
      %v2302 = vpop.f32.mrb[0].mxu0
      %v2303 = vadd.f32 0.0, %v2302
      %v2304 = vpop.f32.mrb[0].mxu0
      %2305 = vdwg.mxu0
      %v2306 = vsel %vm731, %v2300, -inf
      %2307 = vmax.xlane.f32.xlu0 %v2306
      %v2308 = vpop.xlane.xlu0 %2307
      %v2309 = vsel %vm731, %v2303, -inf
      %2310 = vmax.xlane.f32.xlu0 %v2309
      %v2311 = vpop.xlane.xlu0 %2310
      %v2312 = vsub.f32 %v2300, %v2308
      %v2313 = vsub.f32 %v2303, %v2311
      %v2314 = vmul.f32 %v2312, 1.442695
      %v2315 = vpow.pop %v2314
      %v2316 = vmul.f32 %v2313, 1.442695
      %v2317 = vpow.pop %v2316
      %v2318 = vsel %vm731, %v2315, 0.0
      %2319 = vadd.xlane.f32.xlu0 %v2318
      %v2320 = vpop.xlane.xlu0 %2319
      %v2321 = vsel %vm731, %v2317, 0.0
      %2322 = vadd.xlane.f32.xlu0 %v2321
      %v2323 = vpop.xlane.xlu0 %2322
      %v2324 = vpack.c.bf16 %v2317, %v2315
      %v2326 = vsel %vm731, %v2324, 0
      %2328 = vmatprep.subr.bf16.mxu0 0
      %2329 = vmatpush1.bf16.msra.mxu0 %v2258
      %2330 = vmatprep.subr.bf16.mxu0 0
      %2331 = vmatpush1.bf16.msra.mxu0 0
      %2332 = vmatprep.subr.bf16.mxu0 0
      %2333 = vmatpush1.bf16.msra.mxu0 0
      %2334 = vmatprep.subr.bf16.mxu0 0
      %2335 = vmatpush1.bf16.msra.mxu0 0
      %2336 = vmatprep.subr.bf16.mxu0 0
      %2337 = vmatpush1.bf16.msra.mxu0 0
      %2338 = vmatprep.subr.bf16.mxu0 0
      %2339 = vmatpush1.bf16.msra.mxu0 0
      %2340 = vmatprep.subr.bf16.mxu0 0
      %2341 = vmatpush1.bf16.msra.mxu0 0
      %2342 = vmatprep.subr.bf16.mxu0 0
      %2343 = vmatpush1.bf16.msra.mxu0 0
      %2344 = vmatprep.subr.bf16.mxu0 0
      %2345 = vmatpush1.bf16.msra.mxu0 0
      %2346 = vmatprep.subr.bf16.mxu0 0
      %2347 = vmatpush1.bf16.msra.mxu0 0
      %2348 = vmatprep.subr.bf16.mxu0 0
      %2349 = vmatpush1.bf16.msra.mxu0 0
      %2350 = vmatprep.subr.bf16.mxu0 0
      %2351 = vmatpush1.bf16.msra.mxu0 0
      %2352 = vmatprep.subr.bf16.mxu0 0
      %2353 = vmatpush1.bf16.msra.mxu0 0
      %2354 = vmatprep.subr.bf16.mxu0 0
      %2355 = vmatpush1.bf16.msra.mxu0 0
      %2356 = vmatprep.subr.bf16.mxu0 0
      %2357 = vmatpush1.bf16.msra.mxu0 0
      %2358 = vmatprep.subr.bf16.mxu0 0
      %2359 = vmatpush1.bf16.msra.mxu0 0
      %2360 = vmatprep.mubr.bf16.mxu0 0
      %2361 = vmatmul.mubr.bf16.gmra.mrb[0].mxu0 %v2326
      %v2362 = vpop.f32.mrb[0].mxu0
      %v2363 = vadd.f32 0.0, %v2362
      %v2364 = vpop.f32.mrb[0].mxu0
      %v2365 = vpop.f32.mrb[0].mxu0
      %v2366 = vadd.f32 0.0, %v2365
      %v2367 = vpop.f32.mrb[0].mxu0
      %2368 = vdwg.mxu0
      %v2369 = vrcp.pop %v2320
      %v2370 = vmul.f32 %v2363, %v2369
      %v2371 = vrcp.pop %v2323
      %v2372 = vmul.f32 %v2366, %v2371
      %v2373 = vpack.c.bf16 %v2372, %v2370
      %s2374 = scalar_lea.vmem %s5, 48
      %v2375 = vld [vmem:[%s2374] sm:$0xf]
      %v2376 = vld [vmem:[%s2374 + $0x4] sm:$0xf]
      %v2377 = vld [vmem:[%s2374 + $0x8] sm:$0xf]
      %v2378 = vld [vmem:[%s2374 + $0xc] sm:$0xf]
      %v2383 = vunpack.c.l.b16 %v2375
      %v2384 = vunpack.c.l.b16 %v2376
      %v2385 = vunpack.c.l.b16 %v2377
      %v2386 = vunpack.c.l.b16 %v2378
      %v2387 = vpack.c.b16 %v2384, %v2383
      %v2388 = vpack.c.b16 %v2386, %v2385
      %v2392 = vsel %vm683, %v2373, 0
      %2394 = vmatprep.subr.bf16.mxu0 0
      %2395 = vmatpush1.bf16.msra.mxu0 %v2387
      %2396 = vmatprep.subr.bf16.mxu0 0
      %2397 = vmatpush1.bf16.msra.mxu0 %v2388
      %2398 = vmatprep.subr.bf16.mxu0 0
      %2399 = vmatpush1.bf16.msra.mxu0 0
      %2400 = vmatprep.subr.bf16.mxu0 0
      %2401 = vmatpush1.bf16.msra.mxu0 0
      %2402 = vmatprep.subr.bf16.mxu0 0
      %2403 = vmatpush1.bf16.msra.mxu0 0
      %2404 = vmatprep.subr.bf16.mxu0 0
      %2405 = vmatpush1.bf16.msra.mxu0 0
      %2406 = vmatprep.subr.bf16.mxu0 0
      %2407 = vmatpush1.bf16.msra.mxu0 0
      %2408 = vmatprep.subr.bf16.mxu0 0
      %2409 = vmatpush1.bf16.msra.mxu0 0
      %2410 = vmatprep.subr.bf16.mxu0 0
      %2411 = vmatpush1.bf16.msra.mxu0 0
      %2412 = vmatprep.subr.bf16.mxu0 0
      %2413 = vmatpush1.bf16.msra.mxu0 0
      %2414 = vmatprep.subr.bf16.mxu0 0
      %2415 = vmatpush1.bf16.msra.mxu0 0
      %2416 = vmatprep.subr.bf16.mxu0 0
      %2417 = vmatpush1.bf16.msra.mxu0 0
      %2418 = vmatprep.subr.bf16.mxu0 0
      %2419 = vmatpush1.bf16.msra.mxu0 0
      %2420 = vmatprep.subr.bf16.mxu0 0
      %2421 = vmatpush1.bf16.msra.mxu0 0
      %2422 = vmatprep.subr.bf16.mxu0 0
      %2423 = vmatpush1.bf16.msra.mxu0 0
      %2424 = vmatprep.subr.bf16.mxu0 0
      %2425 = vmatpush1.bf16.msra.mxu0 0
      %2426 = vmatprep.mubr.bf16.mxu0 0
      %2427 = vmatmul.mubr.bf16.gmra.mrb[0].mxu0 %v2392
      %v2428 = vpop.f32.mrb[0].mxu0
      %v2429 = vadd.f32 0.0, %v2428
      %v2430 = vpop.f32.mrb[0].mxu0
      %v2431 = vpop.f32.mrb[0].mxu0
      %v2432 = vadd.f32 0.0, %v2431
      %v2433 = vpop.f32.mrb[0].mxu0
      %2434 = vdwg.mxu0
      %v2435 = vadd.f32 %v1910, %v2429
      %v2436 = vadd.f32 %v1911, %v2432
      %v2437 = vpack.c.bf16 %v2436, %v2435
      %v2439 = vunpack.c.l.b16 %v2437
      %v2440 = vunpack.c.h.b16 %v2437
      %v2441 = vpack.c.b16 %v2439, %v2439
      %v2442 = vpack.c.b16 %v2440, %v2440
      %2445 = vst [vmem:[%s280] sm:$0xf] %v2441
      %2446 = vst [vmem:[%s280 + $0x4] sm:$0xf] %v2442
      %s2447 = smul.u32 2, %s18
      %p2448 = scmp.lt.s32.totalorder %s2447, 3
      %s2449 = scalar_select %p2448, %s2447, 3
      %s2450 = smul.addr %s2449, 4
      %s2451 = scalar_lea.vmem %s7, %s2450
      // Predicated region
      $region49: #{segmentation_vit_forward.9} parent=47 // pred_check
        %p2452 = pneg %p188
      $region50: #{segmentation_vit_forward.9} parent=47 // pred_check_branch
        %2454 = sbr.rel (%p2452) target = $region52
      $region51: #{segmentation_vit_forward.9} parent=47 // pred_region
        %s2455 = smul.u32 2, %s18
      $region52: #{segmentation_vit_forward.9} parent=47 // pred_fallthru
        _
    $region48: #{segmentation_vit_forward.9} parent=5 // pred_fallthru
      _
    %p2456 = scmp.le.s32.totalorder 2, %s13
    // Predicated region
    $region53: #{segmentation_vit_forward.9} parent=5 // pred_check
      %p2457 = pneg %p2456
    $region54: #{segmentation_vit_forward.9} parent=5 // pred_check_branch
      %2459 = sbr.rel (%p2457) target = $region56
    $region55: #{segmentation_vit_forward.9} parent=5 // pred_region
      %s2460 = ssub.s32 %s13, 2
      // Predicated region
      $region57: #{segmentation_vit_forward.9} parent=55 // pred_check
        %p2461 = pneg %p194
      $region58: #{segmentation_vit_forward.9} parent=55 // pred_check_branch
        %2463 = sbr.rel (%p2461) target = $region60
      $region59: #{segmentation_vit_forward.9} parent=55 // pred_region
        %s2464 = smul.u32 2, %s19
        %p2465 = scmp.lt.s32.totalorder %s2464, 3
        %s2466 = scalar_select %p2465, %s2464, 3
        %s2467 = smul.addr %s2466, 4
        %s2468 = scalar_lea.vmem %s7, %s2467
      $region60: #{segmentation_vit_forward.9} parent=55 // pred_fallthru
        _
    $region56: #{segmentation_vit_forward.9} parent=5 // pred_fallthru
      _
  $region6: #{segmentation_vit_forward.9} parent=0 // loop_footer
    %s17 = sadd.s32 1, %s13
  $region7: #{segmentation_vit_forward.9} parent=0 // loop_footer_branch
    %12 = sbr.rel target = $region3
  $region8: #{segmentation_vit_forward.9} parent=0 // loop_exit
    _

// kernel: segmentation_vit_forward.14
$region0: #{segmentation_vit_forward.14}
  #allocation0 [shape = 'u32[]', space=smem, size = 0x4, offset = 0x4, fixed_abs, tag = 'smem constant byte address 0x4 - core index']
  #allocation1 [shape = 'u32[144,128]{1,0:T(1,128)}', space=vmem, size = 0x12000, scoped, tag = 'internal scratch']
  %s0 = inlined_call_operand.vmem [shape: bf16[128,64], index: 0, kind: input, shape index: {}]
  %s1 = inlined_call_operand.vmem [shape: bf16[64,128], index: 1, kind: input, shape index: {}]
  %s2 = inlined_call_operand.vmem [shape: f32[1,128], index: 2, kind: input, shape index: {}]
  %s3 = inlined_call_operand.vmem [shape: bf16[128,20], index: 3, kind: input, shape index: {}]
  %s4 = inlined_call_operand.vmem [shape: f32[1,20], index: 4, kind: input, shape index: {}]
  %s5 = inlined_call_operand.vmem [shape: f32[128,20], index: 5, kind: output, shape index: {}]
  %s6 = sld [smem:[#allocation0]]
  $region53: #{segmentation_vit_forward.14} parent=0
    _
  %s8 = ssub.s32 1, %s6
  %s9 = scalar_select 0, %s8, %s6
  loop: start=0, step=1, limit=4
  $region2: #{segmentation_vit_forward.14} parent=0 // loop_pre_header
    _
  $region3: #{segmentation_vit_forward.14} parent=0 // loop_header
    %s11 = sphi 0, %s15
    %p12 = scmp.ge.s32.totalorder %s11, 4
    %s21 = sphi 0, %s23
    %s24 = sphi 0, %s21
    %s25 = sphi 0, %s24
    %s41 = sphi 0, %s25
    %s45 = sphi 0, %s45
    %s47 = sphi 0, %s45
    %s48 = sphi 0, %s47
    %s62 = sphi 0, %s48
    %s66 = sphi 0, %s66
    %s68 = sphi 0, %s66
    %s69 = sphi 0, %s68
    %s83 = sphi 0, %s69
    %s87 = sphi 0, %s87
    %s89 = sphi 0, %s87
    %s90 = sphi 0, %s89
    %s104 = sphi 0, %s90
    %s108 = sphi 0, %s108
    %s110 = sphi 0, %s108
    %s111 = sphi 0, %s110
    %s125 = sphi 0, %s111
    %s131 = sphi 0, %s133
    %s134 = sphi 0, %s131
    %s135 = sphi 0, %s134
    %s151 = sphi 0, %s135
  $region4: #{segmentation_vit_forward.14} parent=0 // loop_header_branch
    %14 = sbr.rel (%p12) target = $region8
  $region5: #{segmentation_vit_forward.14} parent=0 // loop_body
    %s16 = ssub.s32 %s11, 1
    %s17 = ssub.s32 %s11, 2
    %s18 = sadd.s32 %s11, 1
    %s19 = ssub.s32 %s11, %s18
    %p20 = scmp.eq.s32.totalorder %s19, 0
    %s22 = sadd.s32 %s21, 1
    %s23 = scalar_select %p20, %s21, %s22
    %p26 = pneg %p20
    %p27 = scmp.eq.s32.totalorder %s11, 1
    %p28 = por %p26, %p27
    %p29 = scmp.ne.s32.totalorder %s21, %s24
    %p30 = scmp.eq.s32.totalorder %s11, 0
    %p31 = por %p29, %p30
    %p32 = scmp.ne.s32.totalorder %s21, %s24
    %p33 = scmp.eq.s32.totalorder %s16, 1
    %p34 = por %p32, %p33
    %p35 = scmp.ne.s32.totalorder %s24, %s25
    %p36 = scmp.eq.s32.totalorder %s16, 0
    %p37 = por %p35, %p36
    %p38 = scmp.ne.s32.totalorder %s24, %s25
    %p39 = scmp.eq.s32.totalorder %s17, 1
    %p40 = por %p38, %p39
    %p42 = scmp.ne.s32.totalorder %s25, %s41
    %p43 = scmp.eq.s32.totalorder %s17, 0
    %p44 = por %p42, %p43
    %s46 = sadd.s32 %s45, 1
    %p49 = scmp.eq.s32.totalorder %s11, 1
    %p50 = scmp.ne.s32.totalorder %s45, %s47
    %p51 = scmp.eq.s32.totalorder %s11, 0
    %p52 = por %p50, %p51
    %p53 = scmp.ne.s32.totalorder %s45, %s47
    %p54 = scmp.eq.s32.totalorder %s16, 1
    %p55 = por %p53, %p54
    %p56 = scmp.ne.s32.totalorder %s47, %s48
    %p57 = scmp.eq.s32.totalorder %s16, 0
    %p58 = por %p56, %p57
    %p59 = scmp.ne.s32.totalorder %s47, %s48
    %p60 = scmp.eq.s32.totalorder %s17, 1
    %p61 = por %p59, %p60
    %p63 = scmp.ne.s32.totalorder %s48, %s62
    %p64 = scmp.eq.s32.totalorder %s17, 0
    %p65 = por %p63, %p64
    %s67 = sadd.s32 %s66, 1
    %p70 = scmp.eq.s32.totalorder %s11, 1
    %p71 = scmp.ne.s32.totalorder %s66, %s68
    %p72 = scmp.eq.s32.totalorder %s11, 0
    %p73 = por %p71, %p72
    %p74 = scmp.ne.s32.totalorder %s66, %s68
    %p75 = scmp.eq.s32.totalorder %s16, 1
    %p76 = por %p74, %p75
    %p77 = scmp.ne.s32.totalorder %s68, %s69
    %p78 = scmp.eq.s32.totalorder %s16, 0
    %p79 = por %p77, %p78
    %p80 = scmp.ne.s32.totalorder %s68, %s69
    %p81 = scmp.eq.s32.totalorder %s17, 1
    %p82 = por %p80, %p81
    %p84 = scmp.ne.s32.totalorder %s69, %s83
    %p85 = scmp.eq.s32.totalorder %s17, 0
    %p86 = por %p84, %p85
    %s88 = sadd.s32 %s87, 1
    %p91 = scmp.eq.s32.totalorder %s11, 1
    %p92 = scmp.ne.s32.totalorder %s87, %s89
    %p93 = scmp.eq.s32.totalorder %s11, 0
    %p94 = por %p92, %p93
    %p95 = scmp.ne.s32.totalorder %s87, %s89
    %p96 = scmp.eq.s32.totalorder %s16, 1
    %p97 = por %p95, %p96
    %p98 = scmp.ne.s32.totalorder %s89, %s90
    %p99 = scmp.eq.s32.totalorder %s16, 0
    %p100 = por %p98, %p99
    %p101 = scmp.ne.s32.totalorder %s89, %s90
    %p102 = scmp.eq.s32.totalorder %s17, 1
    %p103 = por %p101, %p102
    %p105 = scmp.ne.s32.totalorder %s90, %s104
    %p106 = scmp.eq.s32.totalorder %s17, 0
    %p107 = por %p105, %p106
    %s109 = sadd.s32 %s108, 1
    %p112 = scmp.eq.s32.totalorder %s11, 1
    %p113 = scmp.ne.s32.totalorder %s108, %s110
    %p114 = scmp.eq.s32.totalorder %s11, 0
    %p115 = por %p113, %p114
    %p116 = scmp.ne.s32.totalorder %s108, %s110
    %p117 = scmp.eq.s32.totalorder %s16, 1
    %p118 = por %p116, %p117
    %p119 = scmp.ne.s32.totalorder %s110, %s111
    %p120 = scmp.eq.s32.totalorder %s16, 0
    %p121 = por %p119, %p120
    %p122 = scmp.ne.s32.totalorder %s110, %s111
    %p123 = scmp.eq.s32.totalorder %s17, 1
    %p124 = por %p122, %p123
    %p126 = scmp.ne.s32.totalorder %s111, %s125
    %p127 = scmp.eq.s32.totalorder %s17, 0
    %p128 = por %p126, %p127
    %s129 = ssub.s32 %s11, %s18
    %p130 = scmp.eq.s32.totalorder %s129, 0
    %s132 = sadd.s32 %s131, 1
    %s133 = scalar_select %p130, %s131, %s132
    %p136 = pneg %p130
    %p137 = scmp.eq.s32.totalorder %s11, 1
    %p138 = por %p136, %p137
    %p139 = scmp.ne.s32.totalorder %s131, %s134
    %p140 = scmp.eq.s32.totalorder %s11, 0
    %p141 = por %p139, %p140
    %p142 = scmp.ne.s32.totalorder %s131, %s134
    %p143 = scmp.eq.s32.totalorder %s16, 1
    %p144 = por %p142, %p143
    %p145 = scmp.ne.s32.totalorder %s134, %s135
    %p146 = scmp.eq.s32.totalorder %s16, 0
    %p147 = por %p145, %p146
    %p148 = scmp.ne.s32.totalorder %s134, %s135
    %p149 = scmp.eq.s32.totalorder %s17, 1
    %p150 = por %p148, %p149
    %p152 = scmp.ne.s32.totalorder %s135, %s151
    %p153 = scmp.eq.s32.totalorder %s17, 0
    %p154 = por %p152, %p153
    %p155 = scmp.le.s32.totalorder 1, %s11
    %p156 = scmp.lt.s32.totalorder %s11, 3
    %p157 = pnand %p155, %p156
    %p158 = pneg %p157
    // Predicated region
    $region9: #{segmentation_vit_forward.14} parent=5 // pred_check
      _
    $region10: #{segmentation_vit_forward.14} parent=5 // pred_check_branch
      %160 = sbr.rel (%p157) target = $region12
    $region11: #{segmentation_vit_forward.14} parent=5 // pred_region
      %s161 = ssub.s32 %s11, 1
      // Predicated region
      $region13: #{segmentation_vit_forward.14} parent=11 // pred_check
        %p162 = pneg %p58
      $region14: #{segmentation_vit_forward.14} parent=11 // pred_check_branch
        %164 = sbr.rel (%p162) target = $region16
      $region15: #{segmentation_vit_forward.14} parent=11 // pred_region
        _
      $region16: #{segmentation_vit_forward.14} parent=11 // pred_fallthru
        _
      // Predicated region
      $region17: #{segmentation_vit_forward.14} parent=11 // pred_check
        %p165 = pneg %p79
      $region18: #{segmentation_vit_forward.14} parent=11 // pred_check_branch
        %167 = sbr.rel (%p165) target = $region20
      $region19: #{segmentation_vit_forward.14} parent=11 // pred_region
        _
      $region20: #{segmentation_vit_forward.14} parent=11 // pred_fallthru
        _
      // Predicated region
      $region21: #{segmentation_vit_forward.14} parent=11 // pred_check
        %p168 = pneg %p100
      $region22: #{segmentation_vit_forward.14} parent=11 // pred_check_branch
        %170 = sbr.rel (%p168) target = $region24
      $region23: #{segmentation_vit_forward.14} parent=11 // pred_region
        _
      $region24: #{segmentation_vit_forward.14} parent=11 // pred_fallthru
        _
      // Predicated region
      $region25: #{segmentation_vit_forward.14} parent=11 // pred_check
        %p171 = pneg %p121
      $region26: #{segmentation_vit_forward.14} parent=11 // pred_check_branch
        %173 = sbr.rel (%p171) target = $region28
      $region27: #{segmentation_vit_forward.14} parent=11 // pred_region
        _
      $region28: #{segmentation_vit_forward.14} parent=11 // pred_fallthru
        _
    $region12: #{segmentation_vit_forward.14} parent=5 // pred_fallthru
      _
    %p174 = scmp.lt.s32.totalorder %s11, 2
    // Predicated region
    $region29: #{segmentation_vit_forward.14} parent=5 // pred_check
      %p175 = pneg %p174
    $region30: #{segmentation_vit_forward.14} parent=5 // pred_check_branch
      %177 = sbr.rel (%p175) target = $region32
    $region31: #{segmentation_vit_forward.14} parent=5 // pred_region
      // Predicated region
      $region33: #{segmentation_vit_forward.14} parent=31 // pred_check
        %p178 = pneg %p31
      $region34: #{segmentation_vit_forward.14} parent=31 // pred_check_branch
        %180 = sbr.rel (%p178) target = $region36
      $region35: #{segmentation_vit_forward.14} parent=31 // pred_region
        %s181 = smul.u32 8, %s11
        %p182 = scmp.lt.s32.totalorder %s181, 15
        %s183 = scalar_select %p182, %s181, 15
        %s184 = smul.addr %s183, 4
        %s185 = scalar_lea.vmem %s0, %s184
        %s186 = smul.u32 8, %s11
      $region36: #{segmentation_vit_forward.14} parent=31 // pred_fallthru
        _
    $region32: #{segmentation_vit_forward.14} parent=5 // pred_fallthru
      _
    %p187 = scmp.le.s32.totalorder 1, %s11
    %p188 = scmp.lt.s32.totalorder %s11, 3
    %p189 = pnand %p187, %p188
    %p190 = pneg %p189
    // Predicated region
    $region37: #{segmentation_vit_forward.14} parent=5 // pred_check
      _
    $region38: #{segmentation_vit_forward.14} parent=5 // pred_check_branch
      %192 = sbr.rel (%p189) target = $region40
    $region39: #{segmentation_vit_forward.14} parent=5 // pred_region
      %s193 = ssub.s32 %s11, 1
      %s194 = smul.u32 8, %s16
      %p195 = scmp.lt.s32.totalorder %s194, 15
      %s196 = scalar_select %p195, %s194, 15
      %s197 = smul.addr %s196, 4
      %s198 = scalar_lea.vmem %s0, %s197
      %p199 = pneg %p37
      %p200 = pneg %p34
      %p201 = pneg %p58
      %p202 = pneg %p55
      %p203 = pneg %p79
      %p204 = pneg %p76
      %p205 = pneg %p100
      %p206 = pneg %p97
      %p207 = pneg %p121
      %p208 = pneg %p118
      %p209 = pneg %p147
      %p210 = pneg %p144
      %s211 = smul.u32 8, %s16
      %p212 = scmp.lt.s32.totalorder %s211, 15
      %s213 = scalar_select %p212, %s211, 15
      %s214 = smul.addr %s213, 8
      %s215 = scalar_lea.vmem %s5, %s214
      %s216 = smul.u32 8, %s16
      %p217 = scmp.lt.s32.totalorder %s216, 15
      %s218 = scalar_select %p217, %s216, 15
      %s219 = smul.addr %s218, 4
      %s220 = scalar_lea.vmem %s0, %s219
      %s221 = smul.u32 8, %s16
      %s222 = smul.u32 8, %s16
      %p223 = scmp.lt.s32.totalorder %s222, 15
      %s224 = scalar_select %p223, %s222, 15
      %s225 = smul.addr %s224, 8
      %s226 = scalar_lea.vmem %s5, %s225
      %s227 = smul.u32 8, %s16
      %v229 = vld [vmem:[%s220] sm:$0xf]
      %v230 = vld [vmem:[%s220 + $0x4] sm:$0xf]
      %v231 = vld [vmem:[%s220 + $0x8] sm:$0xf]
      %v232 = vld [vmem:[%s220 + $0xc] sm:$0xf]
      %v233 = vld [vmem:[%s220 + $0x10] sm:$0xf]
      %v234 = vld [vmem:[%s220 + $0x14] sm:$0xf]
      %v235 = vld [vmem:[%s220 + $0x18] sm:$0xf]
      %v236 = vld [vmem:[%s220 + $0x1c] sm:$0xf]
      %v237 = vld [vmem:[%s1] sm:$0xf]
      %v238 = vld [vmem:[%s1 + $0x4] sm:$0xf]
      %v239 = vld [vmem:[%s1 + $0x8] sm:$0xf]
      %v240 = vld [vmem:[%s1 + $0xc] sm:$0xf]
      %v241 = vld [vmem:[%s1 + $0x10] sm:$0xf]
      %v242 = vld [vmem:[%s1 + $0x14] sm:$0xf]
      %v243 = vld [vmem:[%s1 + $0x18] sm:$0xf]
      %v244 = vld [vmem:[%s1 + $0x1c] sm:$0xf]
      %v245 = vld [vmem:[%s2] sm:$0x1]
      %v247 = vlaneseq
      %v248 = vshrl.u32 %v247, 7
      %v249 = vsub.s32 0, %v248
      %v250 = vrot.slane %v245, %v249
      %v260 = vunpack.c.l.b16 %v229
      %v261 = vunpack.c.l.b16 %v230
      %v262 = vunpack.c.l.b16 %v231
      %v263 = vunpack.c.l.b16 %v232
      %v264 = vunpack.c.l.b16 %v233
      %v265 = vunpack.c.l.b16 %v234
      %v266 = vunpack.c.l.b16 %v235
      %v267 = vunpack.c.l.b16 %v236
      %v268 = vpack.c.b16 %v261, %v260
      %v269 = vpack.c.b16 %v263, %v262
      %v270 = vpack.c.b16 %v265, %v264
      %v271 = vpack.c.b16 %v267, %v266
      %v280 = vunpack.c.l.b16 %v237
      %v281 = vunpack.c.l.b16 %v238
      %v282 = vunpack.c.l.b16 %v239
      %v283 = vunpack.c.l.b16 %v240
      %v284 = vunpack.c.l.b16 %v241
      %v285 = vunpack.c.l.b16 %v242
      %v286 = vunpack.c.l.b16 %v243
      %v287 = vunpack.c.l.b16 %v244
      %v288 = vpack.c.b16 %v281, %v280
      %v289 = vpack.c.b16 %v283, %v282
      %v290 = vpack.c.b16 %v285, %v284
      %v291 = vpack.c.b16 %v287, %v286
      %vm296 = vcmask 523264
      %v298 = vsel %vm296, %v268, 0
      %v301 = vsel %vm296, %v269, 0
      %v304 = vsel %vm296, %v270, 0
      %v307 = vsel %vm296, %v271, 0
      %309 = vmatprep.subr.bf16.mxu0 0
      %310 = vmatpush1.bf16.msra.mxu0 %v288
      %311 = vmatprep.subr.bf16.mxu0 0
      %312 = vmatpush1.bf16.msra.mxu0 %v289
      %313 = vmatprep.subr.bf16.mxu0 0
      %314 = vmatpush1.bf16.msra.mxu0 %v290
      %315 = vmatprep.subr.bf16.mxu0 0
      %316 = vmatpush1.bf16.msra.mxu0 %v291
      %317 = vmatprep.subr.bf16.mxu0 0
      %318 = vmatpush1.bf16.msra.mxu0 0
      %319 = vmatprep.subr.bf16.mxu0 0
      %320 = vmatpush1.bf16.msra.mxu0 0
      %321 = vmatprep.subr.bf16.mxu0 0
      %322 = vmatpush1.bf16.msra.mxu0 0
      %323 = vmatprep.subr.bf16.mxu0 0
      %324 = vmatpush1.bf16.msra.mxu0 0
      %325 = vmatprep.subr.bf16.mxu0 0
      %326 = vmatpush1.bf16.msra.mxu0 0
      %327 = vmatprep.subr.bf16.mxu0 0
      %328 = vmatpush1.bf16.msra.mxu0 0
      %329 = vmatprep.subr.bf16.mxu0 0
      %330 = vmatpush1.bf16.msra.mxu0 0
      %331 = vmatprep.subr.bf16.mxu0 0
      %332 = vmatpush1.bf16.msra.mxu0 0
      %333 = vmatprep.subr.bf16.mxu0 0
      %334 = vmatpush1.bf16.msra.mxu0 0
      %335 = vmatprep.subr.bf16.mxu0 0
      %336 = vmatpush1.bf16.msra.mxu0 0
      %337 = vmatprep.subr.bf16.mxu0 0
      %338 = vmatpush1.bf16.msra.mxu0 0
      %339 = vmatprep.subr.bf16.mxu0 0
      %340 = vmatpush1.bf16.msra.mxu0 0
      %341 = vmatprep.mubr.bf16.mxu0 0
      %342 = vmatmul.mubr.bf16.gmra.mrb[0].mxu0 %v298
      %v343 = vpop.f32.mrb[0].mxu0
      %v344 = vadd.f32 %v250, %v343
      %v345 = vpop.f32.mrb[0].mxu0
      %v346 = vpop.f32.mrb[0].mxu0
      %v347 = vadd.f32 %v250, %v346
      %v348 = vpop.f32.mrb[0].mxu0
      %349 = vmatprep.mubr.bf16.mxu0 0
      %350 = vmatmul.mubr.bf16.gmra.mrb[0].mxu0 %v301
      %v351 = vpop.f32.mrb[0].mxu0
      %v352 = vadd.f32 %v250, %v351
      %v353 = vpop.f32.mrb[0].mxu0
      %v354 = vpop.f32.mrb[0].mxu0
      %v355 = vadd.f32 %v250, %v354
      %v356 = vpop.f32.mrb[0].mxu0
      %357 = vmatprep.mubr.bf16.mxu0 0
      %358 = vmatmul.mubr.bf16.gmra.mrb[0].mxu0 %v304
      %v359 = vpop.f32.mrb[0].mxu0
      %v360 = vadd.f32 %v250, %v359
      %v361 = vpop.f32.mrb[0].mxu0
      %v362 = vpop.f32.mrb[0].mxu0
      %v363 = vadd.f32 %v250, %v362
      %v364 = vpop.f32.mrb[0].mxu0
      %365 = vmatprep.mubr.bf16.mxu0 0
      %366 = vmatmul.mubr.bf16.gmra.mrb[0].mxu0 %v307
      %v367 = vpop.f32.mrb[0].mxu0
      %v368 = vadd.f32 %v250, %v367
      %v369 = vpop.f32.mrb[0].mxu0
      %v370 = vpop.f32.mrb[0].mxu0
      %v371 = vadd.f32 %v250, %v370
      %v372 = vpop.f32.mrb[0].mxu0
      %373 = vdwg.mxu0
      %v374 = vmax.f32 %v344, 0.0
      %v375 = vmax.f32 %v347, 0.0
      %v376 = vmax.f32 %v352, 0.0
      %v377 = vmax.f32 %v355, 0.0
      %v378 = vmax.f32 %v360, 0.0
      %v379 = vmax.f32 %v363, 0.0
      %v380 = vmax.f32 %v368, 0.0
      %v381 = vmax.f32 %v371, 0.0
      %v382 = vpack.c.bf16 %v375, %v374
      %v383 = vpack.c.bf16 %v377, %v376
      %v384 = vpack.c.bf16 %v379, %v378
      %v385 = vpack.c.bf16 %v381, %v380
      %v386 = vld [vmem:[%s3] sm:$0xf]
      %v387 = vld [vmem:[%s3 + $0x4] sm:$0xf]
      %v388 = vld [vmem:[%s3 + $0x8] sm:$0xf]
      %v389 = vld [vmem:[%s3 + $0xc] sm:$0xf]
      %v390 = vld [vmem:[%s3 + $0x10] sm:$0xf]
      %v391 = vld [vmem:[%s3 + $0x14] sm:$0xf]
      %v392 = vld [vmem:[%s3 + $0x18] sm:$0xf]
      %v393 = vld [vmem:[%s3 + $0x1c] sm:$0xf]
      %v394 = vld [vmem:[%s3 + $0x20] sm:$0xf]
      %v395 = vld [vmem:[%s3 + $0x24] sm:$0xf]
      %v396 = vld [vmem:[%s3 + $0x28] sm:$0xf]
      %v397 = vld [vmem:[%s3 + $0x2c] sm:$0xf]
      %v398 = vld [vmem:[%s3 + $0x30] sm:$0xf]
      %v399 = vld [vmem:[%s3 + $0x34] sm:$0xf]
      %v400 = vld [vmem:[%s3 + $0x38] sm:$0xf]
      %v401 = vld [vmem:[%s3 + $0x3c] sm:$0xf]
      %v402 = vld [vmem:[%s4] sm:$0x1]
      %v404 = vlaneseq
      %v405 = vshrl.u32 %v404, 7
      %v406 = vsub.s32 0, %v405
      %v407 = vrot.slane %v402, %v406
      %v425 = vunpack.c.l.b16 %v386
      %v426 = vunpack.c.l.b16 %v387
      %v427 = vunpack.c.l.b16 %v388
      %v428 = vunpack.c.l.b16 %v389
      %v429 = vunpack.c.l.b16 %v390
      %v430 = vunpack.c.l.b16 %v391
      %v431 = vunpack.c.l.b16 %v392
      %v432 = vunpack.c.l.b16 %v393
      %v433 = vunpack.c.l.b16 %v394
      %v434 = vunpack.c.l.b16 %v395
      %v435 = vunpack.c.l.b16 %v396
      %v436 = vunpack.c.l.b16 %v397
      %v437 = vunpack.c.l.b16 %v398
      %v438 = vunpack.c.l.b16 %v399
      %v439 = vunpack.c.l.b16 %v400
      %v440 = vunpack.c.l.b16 %v401
      %v441 = vpack.c.b16 %v426, %v425
      %v442 = vpack.c.b16 %v428, %v427
      %v443 = vpack.c.b16 %v430, %v429
      %v444 = vpack.c.b16 %v432, %v431
      %v445 = vpack.c.b16 %v434, %v433
      %v446 = vpack.c.b16 %v436, %v435
      %v447 = vpack.c.b16 %v438, %v437
      %v448 = vpack.c.b16 %v440, %v439
      %457 = vmatprep.subr.bf16.mxu0 0
      %458 = vmatpush1.bf16.msra.mxu0 %v441
      %459 = vmatprep.subr.bf16.mxu0 0
      %460 = vmatpush1.bf16.msra.mxu0 %v442
      %461 = vmatprep.subr.bf16.mxu0 0
      %462 = vmatpush1.bf16.msra.mxu0 %v443
      %463 = vmatprep.subr.bf16.mxu0 0
      %464 = vmatpush1.bf16.msra.mxu0 %v444
      %465 = vmatprep.subr.bf16.mxu0 0
      %466 = vmatpush1.bf16.msra.mxu0 %v445
      %467 = vmatprep.subr.bf16.mxu0 0
      %468 = vmatpush1.bf16.msra.mxu0 %v446
      %469 = vmatprep.subr.bf16.mxu0 0
      %470 = vmatpush1.bf16.msra.mxu0 %v447
      %471 = vmatprep.subr.bf16.mxu0 0
      %472 = vmatpush1.bf16.msra.mxu0 %v448
      %473 = vmatprep.subr.bf16.mxu0 0
      %474 = vmatpush1.bf16.msra.mxu0 0
      %475 = vmatprep.subr.bf16.mxu0 0
      %476 = vmatpush1.bf16.msra.mxu0 0
      %477 = vmatprep.subr.bf16.mxu0 0
      %478 = vmatpush1.bf16.msra.mxu0 0
      %479 = vmatprep.subr.bf16.mxu0 0
      %480 = vmatpush1.bf16.msra.mxu0 0
      %481 = vmatprep.subr.bf16.mxu0 0
      %482 = vmatpush1.bf16.msra.mxu0 0
      %483 = vmatprep.subr.bf16.mxu0 0
      %484 = vmatpush1.bf16.msra.mxu0 0
      %485 = vmatprep.subr.bf16.mxu0 0
      %486 = vmatpush1.bf16.msra.mxu0 0
      %487 = vmatprep.subr.bf16.mxu0 0
      %488 = vmatpush1.bf16.msra.mxu0 0
      %489 = vmatprep.mubr.bf16.mxu0 0
      %490 = vmatmul.mubr.bf16.gmra.mrb[0].mxu0 %v382
      %v491 = vpop.f32.mrb[0].mxu0
      %v492 = vadd.f32 %v407, %v491
      %v493 = vpop.f32.mrb[0].mxu0
      %v494 = vpop.f32.mrb[0].mxu0
      %v495 = vadd.f32 %v407, %v494
      %v496 = vpop.f32.mrb[0].mxu0
      %497 = vmatprep.mubr.bf16.mxu0 0
      %498 = vmatmul.mubr.bf16.gmra.mrb[0].mxu0 %v383
      %v499 = vpop.f32.mrb[0].mxu0
      %v500 = vadd.f32 %v407, %v499
      %v501 = vpop.f32.mrb[0].mxu0
      %v502 = vpop.f32.mrb[0].mxu0
      %v503 = vadd.f32 %v407, %v502
      %v504 = vpop.f32.mrb[0].mxu0
      %505 = vmatprep.mubr.bf16.mxu0 0
      %506 = vmatmul.mubr.bf16.gmra.mrb[0].mxu0 %v384
      %v507 = vpop.f32.mrb[0].mxu0
      %v508 = vadd.f32 %v407, %v507
      %v509 = vpop.f32.mrb[0].mxu0
      %v510 = vpop.f32.mrb[0].mxu0
      %v511 = vadd.f32 %v407, %v510
      %v512 = vpop.f32.mrb[0].mxu0
      %513 = vmatprep.mubr.bf16.mxu0 0
      %514 = vmatmul.mubr.bf16.gmra.mrb[0].mxu0 %v385
      %v515 = vpop.f32.mrb[0].mxu0
      %v516 = vadd.f32 %v407, %v515
      %v517 = vpop.f32.mrb[0].mxu0
      %v518 = vpop.f32.mrb[0].mxu0
      %v519 = vadd.f32 %v407, %v518
      %v520 = vpop.f32.mrb[0].mxu0
      %521 = vdwg.mxu0
      %vm522 = vcmask 162816
      %523 = vst.msk [vmem:[%s226] sm:$0xff] %vm522, %v492
      %524 = vst.msk [vmem:[%s226 + $0x8] sm:$0xff] %vm522, %v495
      %525 = vst.msk [vmem:[%s226 + $0x10] sm:$0xff] %vm522, %v500
      %526 = vst.msk [vmem:[%s226 + $0x18] sm:$0xff] %vm522, %v503
      %527 = vst.msk [vmem:[%s226 + $0x20] sm:$0xff] %vm522, %v508
      %528 = vst.msk [vmem:[%s226 + $0x28] sm:$0xff] %vm522, %v511
      %529 = vst.msk [vmem:[%s226 + $0x30] sm:$0xff] %vm522, %v516
      %530 = vst.msk [vmem:[%s226 + $0x38] sm:$0xff] %vm522, %v519
      %s531 = smul.u32 8, %s16
      %p532 = scmp.lt.s32.totalorder %s531, 15
      %s533 = scalar_select %p532, %s531, 15
      %s534 = smul.addr %s533, 8
      %s535 = scalar_lea.vmem %s5, %s534
      // Predicated region
      $region41: #{segmentation_vit_forward.14} parent=39 // pred_check
        %p536 = pneg %p144
      $region42: #{segmentation_vit_forward.14} parent=39 // pred_check_branch
        %538 = sbr.rel (%p536) target = $region44
      $region43: #{segmentation_vit_forward.14} parent=39 // pred_region
        %s539 = smul.u32 8, %s16
      $region44: #{segmentation_vit_forward.14} parent=39 // pred_fallthru
        _
    $region40: #{segmentation_vit_forward.14} parent=5 // pred_fallthru
      _
    %p540 = scmp.le.s32.totalorder 2, %s11
    // Predicated region
    $region45: #{segmentation_vit_forward.14} parent=5 // pred_check
      %p541 = pneg %p540
    $region46: #{segmentation_vit_forward.14} parent=5 // pred_check_branch
      %543 = sbr.rel (%p541) target = $region48
    $region47: #{segmentation_vit_forward.14} parent=5 // pred_region
      %s544 = ssub.s32 %s11, 2
      // Predicated region
      $region49: #{segmentation_vit_forward.14} parent=47 // pred_check
        %p545 = pneg %p150
      $region50: #{segmentation_vit_forward.14} parent=47 // pred_check_branch
        %547 = sbr.rel (%p545) target = $region52
      $region51: #{segmentation_vit_forward.14} parent=47 // pred_region
        %s548 = smul.u32 8, %s17
        %p549 = scmp.lt.s32.totalorder %s548, 15
        %s550 = scalar_select %p549, %s548, 15
        %s551 = smul.addr %s550, 8
        %s552 = scalar_lea.vmem %s5, %s551
      $region52: #{segmentation_vit_forward.14} parent=47 // pred_fallthru
        _
    $region48: #{segmentation_vit_forward.14} parent=5 // pred_fallthru
      _
  $region6: #{segmentation_vit_forward.14} parent=0 // loop_footer
    %s15 = sadd.s32 1, %s11
  $region7: #{segmentation_vit_forward.14} parent=0 // loop_footer_branch
    %10 = sbr.rel target = $region3
  $region8: #{segmentation_vit_forward.14} parent=0 // loop_exit
    _

// kernel: segmentation_vit_forward.15
$region0: #{segmentation_vit_forward.15}
  #allocation0 [shape = 'u32[]', space=smem, size = 0x4, offset = 0x4, fixed_abs, tag = 'smem constant byte address 0x4 - core index']
  #allocation1 [shape = 'u32[144,128]{1,0:T(1,128)}', space=vmem, size = 0x12000, scoped, tag = 'internal scratch']
  %s0 = inlined_call_operand.vmem [shape: f32[10,16,16], index: 0, kind: input, shape index: {}]
  %s1 = inlined_call_operand.vmem [shape: f32[32,16], index: 1, kind: input, shape index: {}]
  %s2 = inlined_call_operand.vmem [shape: f32[16,32], index: 2, kind: input, shape index: {}]
  %s3 = inlined_call_operand.hbm [shape: f32[10,32,32], index: 3, kind: output, shape index: {}]
  %s4 = sld [smem:[#allocation0]]
  $region45: #{segmentation_vit_forward.15} parent=0
    _
  %s6 = ssub.s32 1, %s4
  %s7 = scalar_select 0, %s6, %s4
  $region1: #{segmentation_vit_forward.15} parent=0
    #allocation2 [shape = 'u8[163840]{0}', space=vmem, size = 0x28000, scoped, tag = 'output window, operand 0']
    #allocation3 [shape = 's32[2]{0}', space=sflag, size = 0x8, scoped, tag = 'scoped memory for segmentation_vit_forward.15']
    %8 = vsyncpa [#allocation3], 0
    %s9 = scalar_lea.sflag [#allocation3], 1
    %10 = vsyncpa %s9, 0
    loop: start=0, step=1, limit=4
    $region2: #{segmentation_vit_forward.15} parent=1 // loop_pre_header
      _
    $region3: #{segmentation_vit_forward.15} parent=1 // loop_header
      %s12 = sphi 0, %s16
      %p13 = scmp.ge.s32.totalorder %s12, 4
      %s22 = sphi 0, %s24
      %s25 = sphi 0, %s22
      %s26 = sphi 0, %s25
      %s42 = sphi 0, %s26
      %s46 = sphi 0, %s46
      %s48 = sphi 0, %s46
      %s49 = sphi 0, %s48
      %s63 = sphi 0, %s49
      %s67 = sphi 0, %s67
      %s69 = sphi 0, %s67
      %s70 = sphi 0, %s69
      %s84 = sphi 0, %s70
      %s90 = sphi 0, %s92
      %s93 = sphi 0, %s90
      %s94 = sphi 0, %s93
      %s110 = sphi 0, %s94
    $region4: #{segmentation_vit_forward.15} parent=1 // loop_header_branch
      %15 = sbr.rel (%p13) target = $region8
    $region5: #{segmentation_vit_forward.15} parent=1 // loop_body
      %s17 = ssub.s32 %s12, 1
      %s18 = ssub.s32 %s12, 2
      %s19 = sadd.s32 %s12, 1
      %s20 = ssub.s32 %s12, %s19
      %p21 = scmp.eq.s32.totalorder %s20, 0
      %s23 = sadd.s32 %s22, 1
      %s24 = scalar_select %p21, %s22, %s23
      %p27 = pneg %p21
      %p28 = scmp.eq.s32.totalorder %s12, 1
      %p29 = por %p27, %p28
      %p30 = scmp.ne.s32.totalorder %s22, %s25
      %p31 = scmp.eq.s32.totalorder %s12, 0
      %p32 = por %p30, %p31
      %p33 = scmp.ne.s32.totalorder %s22, %s25
      %p34 = scmp.eq.s32.totalorder %s17, 1
      %p35 = por %p33, %p34
      %p36 = scmp.ne.s32.totalorder %s25, %s26
      %p37 = scmp.eq.s32.totalorder %s17, 0
      %p38 = por %p36, %p37
      %p39 = scmp.ne.s32.totalorder %s25, %s26
      %p40 = scmp.eq.s32.totalorder %s18, 1
      %p41 = por %p39, %p40
      %p43 = scmp.ne.s32.totalorder %s26, %s42
      %p44 = scmp.eq.s32.totalorder %s18, 0
      %p45 = por %p43, %p44
      %s47 = sadd.s32 %s46, 1
      %p50 = scmp.eq.s32.totalorder %s12, 1
      %p51 = scmp.ne.s32.totalorder %s46, %s48
      %p52 = scmp.eq.s32.totalorder %s12, 0
      %p53 = por %p51, %p52
      %p54 = scmp.ne.s32.totalorder %s46, %s48
      %p55 = scmp.eq.s32.totalorder %s17, 1
      %p56 = por %p54, %p55
      %p57 = scmp.ne.s32.totalorder %s48, %s49
      %p58 = scmp.eq.s32.totalorder %s17, 0
      %p59 = por %p57, %p58
      %p60 = scmp.ne.s32.totalorder %s48, %s49
      %p61 = scmp.eq.s32.totalorder %s18, 1
      %p62 = por %p60, %p61
      %p64 = scmp.ne.s32.totalorder %s49, %s63
      %p65 = scmp.eq.s32.totalorder %s18, 0
      %p66 = por %p64, %p65
      %s68 = sadd.s32 %s67, 1
      %p71 = scmp.eq.s32.totalorder %s12, 1
      %p72 = scmp.ne.s32.totalorder %s67, %s69
      %p73 = scmp.eq.s32.totalorder %s12, 0
      %p74 = por %p72, %p73
      %p75 = scmp.ne.s32.totalorder %s67, %s69
      %p76 = scmp.eq.s32.totalorder %s17, 1
      %p77 = por %p75, %p76
      %p78 = scmp.ne.s32.totalorder %s69, %s70
      %p79 = scmp.eq.s32.totalorder %s17, 0
      %p80 = por %p78, %p79
      %p81 = scmp.ne.s32.totalorder %s69, %s70
      %p82 = scmp.eq.s32.totalorder %s18, 1
      %p83 = por %p81, %p82
      %p85 = scmp.ne.s32.totalorder %s70, %s84
      %p86 = scmp.eq.s32.totalorder %s18, 0
      %p87 = por %p85, %p86
      %s88 = ssub.s32 %s12, %s19
      %p89 = scmp.eq.s32.totalorder %s88, 0
      %s91 = sadd.s32 %s90, 1
      %s92 = scalar_select %p89, %s90, %s91
      %p95 = pneg %p89
      %p96 = scmp.eq.s32.totalorder %s12, 1
      %p97 = por %p95, %p96
      %p98 = scmp.ne.s32.totalorder %s90, %s93
      %p99 = scmp.eq.s32.totalorder %s12, 0
      %p100 = por %p98, %p99
      %p101 = scmp.ne.s32.totalorder %s90, %s93
      %p102 = scmp.eq.s32.totalorder %s17, 1
      %p103 = por %p101, %p102
      %p104 = scmp.ne.s32.totalorder %s93, %s94
      %p105 = scmp.eq.s32.totalorder %s17, 0
      %p106 = por %p104, %p105
      %p107 = scmp.ne.s32.totalorder %s93, %s94
      %p108 = scmp.eq.s32.totalorder %s18, 1
      %p109 = por %p107, %p108
      %p111 = scmp.ne.s32.totalorder %s94, %s110
      %p112 = scmp.eq.s32.totalorder %s18, 0
      %p113 = por %p111, %p112
      %p114 = scmp.le.s32.totalorder 1, %s12
      %p115 = scmp.lt.s32.totalorder %s12, 3
      %p116 = pnand %p114, %p115
      %p117 = pneg %p116
      // Predicated region
      $region9: #{segmentation_vit_forward.15} parent=5 // pred_check
        _
      $region10: #{segmentation_vit_forward.15} parent=5 // pred_check_branch
        %119 = sbr.rel (%p116) target = $region12
      $region11: #{segmentation_vit_forward.15} parent=5 // pred_region
        %s120 = ssub.s32 %s12, 1
        // Predicated region
        $region13: #{segmentation_vit_forward.15} parent=11 // pred_check
          %p121 = pneg %p59
        $region14: #{segmentation_vit_forward.15} parent=11 // pred_check_branch
          %123 = sbr.rel (%p121) target = $region16
        $region15: #{segmentation_vit_forward.15} parent=11 // pred_region
          _
        $region16: #{segmentation_vit_forward.15} parent=11 // pred_fallthru
          _
        // Predicated region
        $region17: #{segmentation_vit_forward.15} parent=11 // pred_check
          %p124 = pneg %p80
        $region18: #{segmentation_vit_forward.15} parent=11 // pred_check_branch
          %126 = sbr.rel (%p124) target = $region20
        $region19: #{segmentation_vit_forward.15} parent=11 // pred_region
          _
        $region20: #{segmentation_vit_forward.15} parent=11 // pred_fallthru
          _
      $region12: #{segmentation_vit_forward.15} parent=5 // pred_fallthru
        _
      %p127 = scmp.lt.s32.totalorder %s12, 2
      // Predicated region
      $region21: #{segmentation_vit_forward.15} parent=5 // pred_check
        %p128 = pneg %p127
      $region22: #{segmentation_vit_forward.15} parent=5 // pred_check_branch
        %130 = sbr.rel (%p128) target = $region24
      $region23: #{segmentation_vit_forward.15} parent=5 // pred_region
        // Predicated region
        $region25: #{segmentation_vit_forward.15} parent=23 // pred_check
          %p131 = pneg %p32
        $region26: #{segmentation_vit_forward.15} parent=23 // pred_check_branch
          %133 = sbr.rel (%p131) target = $region28
        $region27: #{segmentation_vit_forward.15} parent=23 // pred_region
          %s134 = smul.u32 5, %s12
          %p135 = scmp.lt.s32.totalorder %s134, 9
          %s136 = scalar_select %p135, %s134, 9
          %s137 = smul.addr %s136, 2
          %s138 = smul.addr %s137, 8
          %s139 = scalar_lea.vmem %s0, %s138
          %s140 = smul.u32 5, %s12
        $region28: #{segmentation_vit_forward.15} parent=23 // pred_fallthru
          _
      $region24: #{segmentation_vit_forward.15} parent=5 // pred_fallthru
        _
      %p141 = scmp.le.s32.totalorder 1, %s12
      %p142 = scmp.lt.s32.totalorder %s12, 3
      %p143 = pnand %p141, %p142
      %p144 = pneg %p143
      // Predicated region
      $region29: #{segmentation_vit_forward.15} parent=5 // pred_check
        _
      $region30: #{segmentation_vit_forward.15} parent=5 // pred_check_branch
        %146 = sbr.rel (%p143) target = $region32
      $region31: #{segmentation_vit_forward.15} parent=5 // pred_region
        %s147 = ssub.s32 %s12, 1
        %s148 = smul.u32 5, %s17
        %p149 = scmp.lt.s32.totalorder %s148, 9
        %s150 = scalar_select %p149, %s148, 9
        %s151 = smul.addr %s150, 2
        %s152 = smul.addr %s151, 8
        %s153 = scalar_lea.vmem %s0, %s152
        %p154 = pneg %p38
        %p155 = pneg %p35
        %p156 = pneg %p59
        %p157 = pneg %p56
        %p158 = pneg %p80
        %p159 = pneg %p77
        %p160 = pneg %p106
        %p161 = pneg %p103
        %s162 = sand.u32 %s93, 1
        %s163 = scalar_lea.sflag [#allocation3], %s162
        %s164 = sand.u32 %s93, 1
        %s165 = smul.addr %s164, 160
        %s166 = scalar_lea.vmem [#allocation2], %s165
        %s167 = smul.u32 5, %s17
        %p168 = scmp.lt.s32.totalorder %s167, 9
        %s169 = scalar_select %p168, %s167, 9
        %s170 = smul.addr %s169, 2
        %s171 = smul.addr %s170, 8
        %s172 = scalar_lea.vmem %s0, %s171
        %s173 = smul.u32 5, %s17
        %s174 = smul.u32 5, %s17
        %v175 = vld [vmem:[%s1] sm:$0xff]
        %v176 = vld [vmem:[%s1 + $0x8] sm:$0xff]
        %v177 = vld [vmem:[%s1 + $0x10] sm:$0xff]
        %v178 = vld [vmem:[%s1 + $0x18] sm:$0xff]
        %v179 = vld [vmem:[%s172] sm:$0xff]
        %v180 = vld [vmem:[%s172 + $0x8] sm:$0xff]
        %vm181 = vcmask 130048
        %v183 = vsel %vm181, %v175, 0
        %v186 = vsel %vm181, %v176, 0
        %v189 = vsel %vm181, %v177, 0
        %v192 = vsel %vm181, %v178, 0
        %194 = vmatprep.subr.mxu0 0.0
        %195 = vmatpush1.msra.mxu0 %v179
        %196 = vmatprep.subr.mxu0 0.0
        %197 = vmatpush1.msra.mxu0 %v180
        %198 = vmatprep.subr.mxu0 0.0
        %199 = vmatpush1.msra.mxu0 0.0
        %200 = vmatprep.subr.mxu0 0.0
        %201 = vmatpush1.msra.mxu0 0.0
        %202 = vmatprep.subr.mxu0 0.0
        %203 = vmatpush1.msra.mxu0 0.0
        %204 = vmatprep.subr.mxu0 0.0
        %205 = vmatpush1.msra.mxu0 0.0
        %206 = vmatprep.subr.mxu0 0.0
        %207 = vmatpush1.msra.mxu0 0.0
        %208 = vmatprep.subr.mxu0 0.0
        %209 = vmatpush1.msra.mxu0 0.0
        %210 = vmatprep.subr.mxu0 0.0
        %211 = vmatpush1.msra.mxu0 0.0
        %212 = vmatprep.subr.mxu0 0.0
        %213 = vmatpush1.msra.mxu0 0.0
        %214 = vmatprep.subr.mxu0 0.0
        %215 = vmatpush1.msra.mxu0 0.0
        %216 = vmatprep.subr.mxu0 0.0
        %217 = vmatpush1.msra.mxu0 0.0
        %218 = vmatprep.subr.mxu0 0.0
        %219 = vmatpush1.msra.mxu0 0.0
        %220 = vmatprep.subr.mxu0 0.0
        %221 = vmatpush1.msra.mxu0 0.0
        %222 = vmatprep.subr.mxu0 0.0
        %223 = vmatpush1.msra.mxu0 0.0
        %224 = vmatprep.subr.mxu0 0.0
        %225 = vmatpush1.msra.mxu0 0.0
        %226 = vmatprep.subr.mxu0 0.0
        %227 = vmatpush1.msra.mxu0 0.0
        %228 = vmatprep.subr.mxu0 0.0
        %229 = vmatpush1.msra.mxu0 0.0
        %230 = vmatprep.subr.mxu0 0.0
        %231 = vmatpush1.msra.mxu0 0.0
        %232 = vmatprep.subr.mxu0 0.0
        %233 = vmatpush1.msra.mxu0 0.0
        %234 = vmatprep.subr.mxu0 0.0
        %235 = vmatpush1.msra.mxu0 0.0
        %236 = vmatprep.subr.mxu0 0.0
        %237 = vmatpush1.msra.mxu0 0.0
        %238 = vmatprep.subr.mxu0 0.0
        %239 = vmatpush1.msra.mxu0 0.0
        %240 = vmatprep.subr.mxu0 0.0
        %241 = vmatpush1.msra.mxu0 0.0
        %242 = vmatprep.subr.mxu0 0.0
        %243 = vmatpush1.msra.mxu0 0.0
        %244 = vmatprep.subr.mxu0 0.0
        %245 = vmatpush1.msra.mxu0 0.0
        %246 = vmatprep.subr.mxu0 0.0
        %247 = vmatpush1.msra.mxu0 0.0
        %248 = vmatprep.subr.mxu0 0.0
        %249 = vmatpush1.msra.mxu0 0.0
        %250 = vmatprep.subr.mxu0 0.0
        %251 = vmatpush1.msra.mxu0 0.0
        %252 = vmatprep.subr.mxu0 0.0
        %253 = vmatpush1.msra.mxu0 0.0
        %254 = vmatprep.subr.mxu0 0.0
        %255 = vmatpush1.msra.mxu0 0.0
        %256 = vmatprep.subr.mxu0 0.0
        %257 = vmatpush1.msra.mxu0 0.0
        %258 = vmatprep.mubr.f32.mxu0 0.0
        %259 = vmatmul.mubr.f32.gmra.mrb[0].mxu0 %v183
        %v260 = vpop.f32.mrb[0].mxu0
        %v261 = vadd.f32 0.0, %v260
        %v262 = vpop.f32.mrb[0].mxu0
        %263 = vmatprep.mubr.f32.mxu0 0.0
        %264 = vmatmul.mubr.f32.gmra.mrb[0].mxu0 %v186
        %v265 = vpop.f32.mrb[0].mxu0
        %v266 = vadd.f32 0.0, %v265
        %v267 = vpop.f32.mrb[0].mxu0
        %268 = vmatprep.mubr.f32.mxu0 0.0
        %269 = vmatmul.mubr.f32.gmra.mrb[0].mxu0 %v189
        %v270 = vpop.f32.mrb[0].mxu0
        %v271 = vadd.f32 0.0, %v270
        %v272 = vpop.f32.mrb[0].mxu0
        %273 = vmatprep.mubr.f32.mxu0 0.0
        %274 = vmatmul.mubr.f32.gmra.mrb[0].mxu0 %v192
        %v275 = vpop.f32.mrb[0].mxu0
        %v276 = vadd.f32 0.0, %v275
        %v277 = vpop.f32.mrb[0].mxu0
        %278 = vdwg.mxu0
        %v279 = vld [vmem:[%s2] sm:$0xff]
        %v280 = vld [vmem:[%s2 + $0x8] sm:$0xff]
        %v282 = vsel %vm181, %v261, 0
        %v285 = vsel %vm181, %v266, 0
        %v288 = vsel %vm181, %v271, 0
        %v291 = vsel %vm181, %v276, 0
        %293 = vmatprep.subr.mxu0 0.0
        %294 = vmatpush1.msra.mxu0 %v279
        %295 = vmatprep.subr.mxu0 0.0
        %296 = vmatpush1.msra.mxu0 %v280
        %297 = vmatprep.subr.mxu0 0.0
        %298 = vmatpush1.msra.mxu0 0.0
        %299 = vmatprep.subr.mxu0 0.0
        %300 = vmatpush1.msra.mxu0 0.0
        %301 = vmatprep.subr.mxu0 0.0
        %302 = vmatpush1.msra.mxu0 0.0
        %303 = vmatprep.subr.mxu0 0.0
        %304 = vmatpush1.msra.mxu0 0.0
        %305 = vmatprep.subr.mxu0 0.0
        %306 = vmatpush1.msra.mxu0 0.0
        %307 = vmatprep.subr.mxu0 0.0
        %308 = vmatpush1.msra.mxu0 0.0
        %309 = vmatprep.subr.mxu0 0.0
        %310 = vmatpush1.msra.mxu0 0.0
        %311 = vmatprep.subr.mxu0 0.0
        %312 = vmatpush1.msra.mxu0 0.0
        %313 = vmatprep.subr.mxu0 0.0
        %314 = vmatpush1.msra.mxu0 0.0
        %315 = vmatprep.subr.mxu0 0.0
        %316 = vmatpush1.msra.mxu0 0.0
        %317 = vmatprep.subr.mxu0 0.0
        %318 = vmatpush1.msra.mxu0 0.0
        %319 = vmatprep.subr.mxu0 0.0
        %320 = vmatpush1.msra.mxu0 0.0
        %321 = vmatprep.subr.mxu0 0.0
        %322 = vmatpush1.msra.mxu0 0.0
        %323 = vmatprep.subr.mxu0 0.0
        %324 = vmatpush1.msra.mxu0 0.0
        %325 = vmatprep.subr.mxu0 0.0
        %326 = vmatpush1.msra.mxu0 0.0
        %327 = vmatprep.subr.mxu0 0.0
        %328 = vmatpush1.msra.mxu0 0.0
        %329 = vmatprep.subr.mxu0 0.0
        %330 = vmatpush1.msra.mxu0 0.0
        %331 = vmatprep.subr.mxu0 0.0
        %332 = vmatpush1.msra.mxu0 0.0
        %333 = vmatprep.subr.mxu0 0.0
        %334 = vmatpush1.msra.mxu0 0.0
        %335 = vmatprep.subr.mxu0 0.0
        %336 = vmatpush1.msra.mxu0 0.0
        %337 = vmatprep.subr.mxu0 0.0
        %338 = vmatpush1.msra.mxu0 0.0
        %339 = vmatprep.subr.mxu0 0.0
        %340 = vmatpush1.msra.mxu0 0.0
        %341 = vmatprep.subr.mxu0 0.0
        %342 = vmatpush1.msra.mxu0 0.0
        %343 = vmatprep.subr.mxu0 0.0
        %344 = vmatpush1.msra.mxu0 0.0
        %345 = vmatprep.subr.mxu0 0.0
        %346 = vmatpush1.msra.mxu0 0.0
        %347 = vmatprep.subr.mxu0 0.0
        %348 = vmatpush1.msra.mxu0 0.0
        %349 = vmatprep.subr.mxu0 0.0
        %350 = vmatpush1.msra.mxu0 0.0
        %351 = vmatprep.subr.mxu0 0.0
        %352 = vmatpush1.msra.mxu0 0.0
        %353 = vmatprep.subr.mxu0 0.0
        %354 = vmatpush1.msra.mxu0 0.0
        %355 = vmatprep.subr.mxu0 0.0
        %356 = vmatpush1.msra.mxu0 0.0
        %357 = vmatprep.mubr.f32.mxu0 0.0
        %358 = vmatmul.mubr.f32.gmra.mrb[0].mxu0 %v282
        %v359 = vpop.f32.mrb[0].mxu0
        %v360 = vadd.f32 0.0, %v359
        %v361 = vpop.f32.mrb[0].mxu0
        %362 = vmatprep.mubr.f32.mxu0 0.0
        %363 = vmatmul.mubr.f32.gmra.mrb[0].mxu0 %v285
        %v364 = vpop.f32.mrb[0].mxu0
        %v365 = vadd.f32 0.0, %v364
        %v366 = vpop.f32.mrb[0].mxu0
        %367 = vmatprep.mubr.f32.mxu0 0.0
        %368 = vmatmul.mubr.f32.gmra.mrb[0].mxu0 %v288
        %v369 = vpop.f32.mrb[0].mxu0
        %v370 = vadd.f32 0.0, %v369
        %v371 = vpop.f32.mrb[0].mxu0
        %372 = vmatprep.mubr.f32.mxu0 0.0
        %373 = vmatmul.mubr.f32.gmra.mrb[0].mxu0 %v291
        %v374 = vpop.f32.mrb[0].mxu0
        %v375 = vadd.f32 0.0, %v374
        %v376 = vpop.f32.mrb[0].mxu0
        %377 = vdwg.mxu0
        %vm378 = vcmask 261120
        %379 = vst.msk [vmem:[%s166] sm:$0xff] %vm378, %v360
        %380 = vst.msk [vmem:[%s166 + $0x8] sm:$0xff] %vm378, %v365
        %381 = vst.msk [vmem:[%s166 + $0x10] sm:$0xff] %vm378, %v370
        %382 = vst.msk [vmem:[%s166 + $0x18] sm:$0xff] %vm378, %v375
        %v383 = vld [vmem:[%s1] sm:$0xff]
        %v384 = vld [vmem:[%s1 + $0x8] sm:$0xff]
        %v385 = vld [vmem:[%s1 + $0x10] sm:$0xff]
        %v386 = vld [vmem:[%s1 + $0x18] sm:$0xff]
        %s387 = scalar_lea.vmem %s172, 16
        %v388 = vld [vmem:[%s387] sm:$0xff]
        %v389 = vld [vmem:[%s387 + $0x8] sm:$0xff]
        %v391 = vsel %vm181, %v383, 0
        %v394 = vsel %vm181, %v384, 0
        %v397 = vsel %vm181, %v385, 0
        %v400 = vsel %vm181, %v386, 0
        %402 = vmatprep.subr.mxu0 0.0
        %403 = vmatpush1.msra.mxu0 %v388
        %404 = vmatprep.subr.mxu0 0.0
        %405 = vmatpush1.msra.mxu0 %v389
        %406 = vmatprep.subr.mxu0 0.0
        %407 = vmatpush1.msra.mxu0 0.0
        %408 = vmatprep.subr.mxu0 0.0
        %409 = vmatpush1.msra.mxu0 0.0
        %410 = vmatprep.subr.mxu0 0.0
        %411 = vmatpush1.msra.mxu0 0.0
        %412 = vmatprep.subr.mxu0 0.0
        %413 = vmatpush1.msra.mxu0 0.0
        %414 = vmatprep.subr.mxu0 0.0
        %415 = vmatpush1.msra.mxu0 0.0
        %416 = vmatprep.subr.mxu0 0.0
        %417 = vmatpush1.msra.mxu0 0.0
        %418 = vmatprep.subr.mxu0 0.0
        %419 = vmatpush1.msra.mxu0 0.0
        %420 = vmatprep.subr.mxu0 0.0
        %421 = vmatpush1.msra.mxu0 0.0
        %422 = vmatprep.subr.mxu0 0.0
        %423 = vmatpush1.msra.mxu0 0.0
        %424 = vmatprep.subr.mxu0 0.0
        %425 = vmatpush1.msra.mxu0 0.0
        %426 = vmatprep.subr.mxu0 0.0
        %427 = vmatpush1.msra.mxu0 0.0
        %428 = vmatprep.subr.mxu0 0.0
        %429 = vmatpush1.msra.mxu0 0.0
        %430 = vmatprep.subr.mxu0 0.0
        %431 = vmatpush1.msra.mxu0 0.0
        %432 = vmatprep.subr.mxu0 0.0
        %433 = vmatpush1.msra.mxu0 0.0
        %434 = vmatprep.subr.mxu0 0.0
        %435 = vmatpush1.msra.mxu0 0.0
        %436 = vmatprep.subr.mxu0 0.0
        %437 = vmatpush1.msra.mxu0 0.0
        %438 = vmatprep.subr.mxu0 0.0
        %439 = vmatpush1.msra.mxu0 0.0
        %440 = vmatprep.subr.mxu0 0.0
        %441 = vmatpush1.msra.mxu0 0.0
        %442 = vmatprep.subr.mxu0 0.0
        %443 = vmatpush1.msra.mxu0 0.0
        %444 = vmatprep.subr.mxu0 0.0
        %445 = vmatpush1.msra.mxu0 0.0
        %446 = vmatprep.subr.mxu0 0.0
        %447 = vmatpush1.msra.mxu0 0.0
        %448 = vmatprep.subr.mxu0 0.0
        %449 = vmatpush1.msra.mxu0 0.0
        %450 = vmatprep.subr.mxu0 0.0
        %451 = vmatpush1.msra.mxu0 0.0
        %452 = vmatprep.subr.mxu0 0.0
        %453 = vmatpush1.msra.mxu0 0.0
        %454 = vmatprep.subr.mxu0 0.0
        %455 = vmatpush1.msra.mxu0 0.0
        %456 = vmatprep.subr.mxu0 0.0
        %457 = vmatpush1.msra.mxu0 0.0
        %458 = vmatprep.subr.mxu0 0.0
        %459 = vmatpush1.msra.mxu0 0.0
        %460 = vmatprep.subr.mxu0 0.0
        %461 = vmatpush1.msra.mxu0 0.0
        %462 = vmatprep.subr.mxu0 0.0
        %463 = vmatpush1.msra.mxu0 0.0
        %464 = vmatprep.subr.mxu0 0.0
        %465 = vmatpush1.msra.mxu0 0.0
        %466 = vmatprep.mubr.f32.mxu0 0.0
        %467 = vmatmul.mubr.f32.gmra.mrb[0].mxu0 %v391
        %v468 = vpop.f32.mrb[0].mxu0
        %v469 = vadd.f32 0.0, %v468
        %v470 = vpop.f32.mrb[0].mxu0
        %471 = vmatprep.mubr.f32.mxu0 0.0
        %472 = vmatmul.mubr.f32.gmra.mrb[0].mxu0 %v394
        %v473 = vpop.f32.mrb[0].mxu0
        %v474 = vadd.f32 0.0, %v473
        %v475 = vpop.f32.mrb[0].mxu0
        %476 = vmatprep.mubr.f32.mxu0 0.0
        %477 = vmatmul.mubr.f32.gmra.mrb[0].mxu0 %v397
        %v478 = vpop.f32.mrb[0].mxu0
        %v479 = vadd.f32 0.0, %v478
        %v480 = vpop.f32.mrb[0].mxu0
        %481 = vmatprep.mubr.f32.mxu0 0.0
        %482 = vmatmul.mubr.f32.gmra.mrb[0].mxu0 %v400
        %v483 = vpop.f32.mrb[0].mxu0
        %v484 = vadd.f32 0.0, %v483
        %v485 = vpop.f32.mrb[0].mxu0
        %486 = vdwg.mxu0
        %v487 = vld [vmem:[%s2] sm:$0xff]
        %v488 = vld [vmem:[%s2 + $0x8] sm:$0xff]
        %v490 = vsel %vm181, %v469, 0
        %v493 = vsel %vm181, %v474, 0
        %v496 = vsel %vm181, %v479, 0
        %v499 = vsel %vm181, %v484, 0
        %501 = vmatprep.subr.mxu0 0.0
        %502 = vmatpush1.msra.mxu0 %v487
        %503 = vmatprep.subr.mxu0 0.0
        %504 = vmatpush1.msra.mxu0 %v488
        %505 = vmatprep.subr.mxu0 0.0
        %506 = vmatpush1.msra.mxu0 0.0
        %507 = vmatprep.subr.mxu0 0.0
        %508 = vmatpush1.msra.mxu0 0.0
        %509 = vmatprep.subr.mxu0 0.0
        %510 = vmatpush1.msra.mxu0 0.0
        %511 = vmatprep.subr.mxu0 0.0
        %512 = vmatpush1.msra.mxu0 0.0
        %513 = vmatprep.subr.mxu0 0.0
        %514 = vmatpush1.msra.mxu0 0.0
        %515 = vmatprep.subr.mxu0 0.0
        %516 = vmatpush1.msra.mxu0 0.0
        %517 = vmatprep.subr.mxu0 0.0
        %518 = vmatpush1.msra.mxu0 0.0
        %519 = vmatprep.subr.mxu0 0.0
        %520 = vmatpush1.msra.mxu0 0.0
        %521 = vmatprep.subr.mxu0 0.0
        %522 = vmatpush1.msra.mxu0 0.0
        %523 = vmatprep.subr.mxu0 0.0
        %524 = vmatpush1.msra.mxu0 0.0
        %525 = vmatprep.subr.mxu0 0.0
        %526 = vmatpush1.msra.mxu0 0.0
        %527 = vmatprep.subr.mxu0 0.0
        %528 = vmatpush1.msra.mxu0 0.0
        %529 = vmatprep.subr.mxu0 0.0
        %530 = vmatpush1.msra.mxu0 0.0
        %531 = vmatprep.subr.mxu0 0.0
        %532 = vmatpush1.msra.mxu0 0.0
        %533 = vmatprep.subr.mxu0 0.0
        %534 = vmatpush1.msra.mxu0 0.0
        %535 = vmatprep.subr.mxu0 0.0
        %536 = vmatpush1.msra.mxu0 0.0
        %537 = vmatprep.subr.mxu0 0.0
        %538 = vmatpush1.msra.mxu0 0.0
        %539 = vmatprep.subr.mxu0 0.0
        %540 = vmatpush1.msra.mxu0 0.0
        %541 = vmatprep.subr.mxu0 0.0
        %542 = vmatpush1.msra.mxu0 0.0
        %543 = vmatprep.subr.mxu0 0.0
        %544 = vmatpush1.msra.mxu0 0.0
        %545 = vmatprep.subr.mxu0 0.0
        %546 = vmatpush1.msra.mxu0 0.0
        %547 = vmatprep.subr.mxu0 0.0
        %548 = vmatpush1.msra.mxu0 0.0
        %549 = vmatprep.subr.mxu0 0.0
        %550 = vmatpush1.msra.mxu0 0.0
        %551 = vmatprep.subr.mxu0 0.0
        %552 = vmatpush1.msra.mxu0 0.0
        %553 = vmatprep.subr.mxu0 0.0
        %554 = vmatpush1.msra.mxu0 0.0
        %555 = vmatprep.subr.mxu0 0.0
        %556 = vmatpush1.msra.mxu0 0.0
        %557 = vmatprep.subr.mxu0 0.0
        %558 = vmatpush1.msra.mxu0 0.0
        %559 = vmatprep.subr.mxu0 0.0
        %560 = vmatpush1.msra.mxu0 0.0
        %561 = vmatprep.subr.mxu0 0.0
        %562 = vmatpush1.msra.mxu0 0.0
        %563 = vmatprep.subr.mxu0 0.0
        %564 = vmatpush1.msra.mxu0 0.0
        %565 = vmatprep.mubr.f32.mxu0 0.0
        %566 = vmatmul.mubr.f32.gmra.mrb[0].mxu0 %v490
        %v567 = vpop.f32.mrb[0].mxu0
        %v568 = vadd.f32 0.0, %v567
        %v569 = vpop.f32.mrb[0].mxu0
        %570 = vmatprep.mubr.f32.mxu0 0.0
        %571 = vmatmul.mubr.f32.gmra.mrb[0].mxu0 %v493
        %v572 = vpop.f32.mrb[0].mxu0
        %v573 = vadd.f32 0.0, %v572
        %v574 = vpop.f32.mrb[0].mxu0
        %575 = vmatprep.mubr.f32.mxu0 0.0
        %576 = vmatmul.mubr.f32.gmra.mrb[0].mxu0 %v496
        %v577 = vpop.f32.mrb[0].mxu0
        %v578 = vadd.f32 0.0, %v577
        %v579 = vpop.f32.mrb[0].mxu0
        %580 = vmatprep.mubr.f32.mxu0 0.0
        %581 = vmatmul.mubr.f32.gmra.mrb[0].mxu0 %v499
        %v582 = vpop.f32.mrb[0].mxu0
        %v583 = vadd.f32 0.0, %v582
        %v584 = vpop.f32.mrb[0].mxu0
        %585 = vdwg.mxu0
        %s586 = scalar_lea.vmem %s166, 32 [#allocation2]
        %587 = vst.msk [vmem:[%s586] sm:$0xff] %vm378, %v568
        %588 = vst.msk [vmem:[%s586 + $0x8] sm:$0xff] %vm378, %v573
        %589 = vst.msk [vmem:[%s586 + $0x10] sm:$0xff] %vm378, %v578
        %590 = vst.msk [vmem:[%s586 + $0x18] sm:$0xff] %vm378, %v583
        %v591 = vld [vmem:[%s1] sm:$0xff]
        %v592 = vld [vmem:[%s1 + $0x8] sm:$0xff]
        %v593 = vld [vmem:[%s1 + $0x10] sm:$0xff]
        %v594 = vld [vmem:[%s1 + $0x18] sm:$0xff]
        %s595 = scalar_lea.vmem %s172, 32
        %v596 = vld [vmem:[%s595] sm:$0xff]
        %v597 = vld [vmem:[%s595 + $0x8] sm:$0xff]
        %v599 = vsel %vm181, %v591, 0
        %v602 = vsel %vm181, %v592, 0
        %v605 = vsel %vm181, %v593, 0
        %v608 = vsel %vm181, %v594, 0
        %610 = vmatprep.subr.mxu0 0.0
        %611 = vmatpush1.msra.mxu0 %v596
        %612 = vmatprep.subr.mxu0 0.0
        %613 = vmatpush1.msra.mxu0 %v597
        %614 = vmatprep.subr.mxu0 0.0
        %615 = vmatpush1.msra.mxu0 0.0
        %616 = vmatprep.subr.mxu0 0.0
        %617 = vmatpush1.msra.mxu0 0.0
        %618 = vmatprep.subr.mxu0 0.0
        %619 = vmatpush1.msra.mxu0 0.0
        %620 = vmatprep.subr.mxu0 0.0
        %621 = vmatpush1.msra.mxu0 0.0
        %622 = vmatprep.subr.mxu0 0.0
        %623 = vmatpush1.msra.mxu0 0.0
        %624 = vmatprep.subr.mxu0 0.0
        %625 = vmatpush1.msra.mxu0 0.0
        %626 = vmatprep.subr.mxu0 0.0
        %627 = vmatpush1.msra.mxu0 0.0
        %628 = vmatprep.subr.mxu0 0.0
        %629 = vmatpush1.msra.mxu0 0.0
        %630 = vmatprep.subr.mxu0 0.0
        %631 = vmatpush1.msra.mxu0 0.0
        %632 = vmatprep.subr.mxu0 0.0
        %633 = vmatpush1.msra.mxu0 0.0
        %634 = vmatprep.subr.mxu0 0.0
        %635 = vmatpush1.msra.mxu0 0.0
        %636 = vmatprep.subr.mxu0 0.0
        %637 = vmatpush1.msra.mxu0 0.0
        %638 = vmatprep.subr.mxu0 0.0
        %639 = vmatpush1.msra.mxu0 0.0
        %640 = vmatprep.subr.mxu0 0.0
        %641 = vmatpush1.msra.mxu0 0.0
        %642 = vmatprep.subr.mxu0 0.0
        %643 = vmatpush1.msra.mxu0 0.0
        %644 = vmatprep.subr.mxu0 0.0
        %645 = vmatpush1.msra.mxu0 0.0
        %646 = vmatprep.subr.mxu0 0.0
        %647 = vmatpush1.msra.mxu0 0.0
        %648 = vmatprep.subr.mxu0 0.0
        %649 = vmatpush1.msra.mxu0 0.0
        %650 = vmatprep.subr.mxu0 0.0
        %651 = vmatpush1.msra.mxu0 0.0
        %652 = vmatprep.subr.mxu0 0.0
        %653 = vmatpush1.msra.mxu0 0.0
        %654 = vmatprep.subr.mxu0 0.0
        %655 = vmatpush1.msra.mxu0 0.0
        %656 = vmatprep.subr.mxu0 0.0
        %657 = vmatpush1.msra.mxu0 0.0
        %658 = vmatprep.subr.mxu0 0.0
        %659 = vmatpush1.msra.mxu0 0.0
        %660 = vmatprep.subr.mxu0 0.0
        %661 = vmatpush1.msra.mxu0 0.0
        %662 = vmatprep.subr.mxu0 0.0
        %663 = vmatpush1.msra.mxu0 0.0
        %664 = vmatprep.subr.mxu0 0.0
        %665 = vmatpush1.msra.mxu0 0.0
        %666 = vmatprep.subr.mxu0 0.0
        %667 = vmatpush1.msra.mxu0 0.0
        %668 = vmatprep.subr.mxu0 0.0
        %669 = vmatpush1.msra.mxu0 0.0
        %670 = vmatprep.subr.mxu0 0.0
        %671 = vmatpush1.msra.mxu0 0.0
        %672 = vmatprep.subr.mxu0 0.0
        %673 = vmatpush1.msra.mxu0 0.0
        %674 = vmatprep.mubr.f32.mxu0 0.0
        %675 = vmatmul.mubr.f32.gmra.mrb[0].mxu0 %v599
        %v676 = vpop.f32.mrb[0].mxu0
        %v677 = vadd.f32 0.0, %v676
        %v678 = vpop.f32.mrb[0].mxu0
        %679 = vmatprep.mubr.f32.mxu0 0.0
        %680 = vmatmul.mubr.f32.gmra.mrb[0].mxu0 %v602
        %v681 = vpop.f32.mrb[0].mxu0
        %v682 = vadd.f32 0.0, %v681
        %v683 = vpop.f32.mrb[0].mxu0
        %684 = vmatprep.mubr.f32.mxu0 0.0
        %685 = vmatmul.mubr.f32.gmra.mrb[0].mxu0 %v605
        %v686 = vpop.f32.mrb[0].mxu0
        %v687 = vadd.f32 0.0, %v686
        %v688 = vpop.f32.mrb[0].mxu0
        %689 = vmatprep.mubr.f32.mxu0 0.0
        %690 = vmatmul.mubr.f32.gmra.mrb[0].mxu0 %v608
        %v691 = vpop.f32.mrb[0].mxu0
        %v692 = vadd.f32 0.0, %v691
        %v693 = vpop.f32.mrb[0].mxu0
        %694 = vdwg.mxu0
        %v695 = vld [vmem:[%s2] sm:$0xff]
        %v696 = vld [vmem:[%s2 + $0x8] sm:$0xff]
        %v698 = vsel %vm181, %v677, 0
        %v701 = vsel %vm181, %v682, 0
        %v704 = vsel %vm181, %v687, 0
        %v707 = vsel %vm181, %v692, 0
        %709 = vmatprep.subr.mxu0 0.0
        %710 = vmatpush1.msra.mxu0 %v695
        %711 = vmatprep.subr.mxu0 0.0
        %712 = vmatpush1.msra.mxu0 %v696
        %713 = vmatprep.subr.mxu0 0.0
        %714 = vmatpush1.msra.mxu0 0.0
        %715 = vmatprep.subr.mxu0 0.0
        %716 = vmatpush1.msra.mxu0 0.0
        %717 = vmatprep.subr.mxu0 0.0
        %718 = vmatpush1.msra.mxu0 0.0
        %719 = vmatprep.subr.mxu0 0.0
        %720 = vmatpush1.msra.mxu0 0.0
        %721 = vmatprep.subr.mxu0 0.0
        %722 = vmatpush1.msra.mxu0 0.0
        %723 = vmatprep.subr.mxu0 0.0
        %724 = vmatpush1.msra.mxu0 0.0
        %725 = vmatprep.subr.mxu0 0.0
        %726 = vmatpush1.msra.mxu0 0.0
        %727 = vmatprep.subr.mxu0 0.0
        %728 = vmatpush1.msra.mxu0 0.0
        %729 = vmatprep.subr.mxu0 0.0
        %730 = vmatpush1.msra.mxu0 0.0
        %731 = vmatprep.subr.mxu0 0.0
        %732 = vmatpush1.msra.mxu0 0.0
        %733 = vmatprep.subr.mxu0 0.0
        %734 = vmatpush1.msra.mxu0 0.0
        %735 = vmatprep.subr.mxu0 0.0
        %736 = vmatpush1.msra.mxu0 0.0
        %737 = vmatprep.subr.mxu0 0.0
        %738 = vmatpush1.msra.mxu0 0.0
        %739 = vmatprep.subr.mxu0 0.0
        %740 = vmatpush1.msra.mxu0 0.0
        %741 = vmatprep.subr.mxu0 0.0
        %742 = vmatpush1.msra.mxu0 0.0
        %743 = vmatprep.subr.mxu0 0.0
        %744 = vmatpush1.msra.mxu0 0.0
        %745 = vmatprep.subr.mxu0 0.0
        %746 = vmatpush1.msra.mxu0 0.0
        %747 = vmatprep.subr.mxu0 0.0
        %748 = vmatpush1.msra.mxu0 0.0
        %749 = vmatprep.subr.mxu0 0.0
        %750 = vmatpush1.msra.mxu0 0.0
        %751 = vmatprep.subr.mxu0 0.0
        %752 = vmatpush1.msra.mxu0 0.0
        %753 = vmatprep.subr.mxu0 0.0
        %754 = vmatpush1.msra.mxu0 0.0
        %755 = vmatprep.subr.mxu0 0.0
        %756 = vmatpush1.msra.mxu0 0.0
        %757 = vmatprep.subr.mxu0 0.0
        %758 = vmatpush1.msra.mxu0 0.0
        %759 = vmatprep.subr.mxu0 0.0
        %760 = vmatpush1.msra.mxu0 0.0
        %761 = vmatprep.subr.mxu0 0.0
        %762 = vmatpush1.msra.mxu0 0.0
        %763 = vmatprep.subr.mxu0 0.0
        %764 = vmatpush1.msra.mxu0 0.0
        %765 = vmatprep.subr.mxu0 0.0
        %766 = vmatpush1.msra.mxu0 0.0
        %767 = vmatprep.subr.mxu0 0.0
        %768 = vmatpush1.msra.mxu0 0.0
        %769 = vmatprep.subr.mxu0 0.0
        %770 = vmatpush1.msra.mxu0 0.0
        %771 = vmatprep.subr.mxu0 0.0
        %772 = vmatpush1.msra.mxu0 0.0
        %773 = vmatprep.mubr.f32.mxu0 0.0
        %774 = vmatmul.mubr.f32.gmra.mrb[0].mxu0 %v698
        %v775 = vpop.f32.mrb[0].mxu0
        %v776 = vadd.f32 0.0, %v775
        %v777 = vpop.f32.mrb[0].mxu0
        %778 = vmatprep.mubr.f32.mxu0 0.0
        %779 = vmatmul.mubr.f32.gmra.mrb[0].mxu0 %v701
        %v780 = vpop.f32.mrb[0].mxu0
        %v781 = vadd.f32 0.0, %v780
        %v782 = vpop.f32.mrb[0].mxu0
        %783 = vmatprep.mubr.f32.mxu0 0.0
        %784 = vmatmul.mubr.f32.gmra.mrb[0].mxu0 %v704
        %v785 = vpop.f32.mrb[0].mxu0
        %v786 = vadd.f32 0.0, %v785
        %v787 = vpop.f32.mrb[0].mxu0
        %788 = vmatprep.mubr.f32.mxu0 0.0
        %789 = vmatmul.mubr.f32.gmra.mrb[0].mxu0 %v707
        %v790 = vpop.f32.mrb[0].mxu0
        %v791 = vadd.f32 0.0, %v790
        %v792 = vpop.f32.mrb[0].mxu0
        %793 = vdwg.mxu0
        %s794 = scalar_lea.vmem %s166, 64 [#allocation2]
        %795 = vst.msk [vmem:[%s794] sm:$0xff] %vm378, %v776
        %796 = vst.msk [vmem:[%s794 + $0x8] sm:$0xff] %vm378, %v781
        %797 = vst.msk [vmem:[%s794 + $0x10] sm:$0xff] %vm378, %v786
        %798 = vst.msk [vmem:[%s794 + $0x18] sm:$0xff] %vm378, %v791
        %v799 = vld [vmem:[%s1] sm:$0xff]
        %v800 = vld [vmem:[%s1 + $0x8] sm:$0xff]
        %v801 = vld [vmem:[%s1 + $0x10] sm:$0xff]
        %v802 = vld [vmem:[%s1 + $0x18] sm:$0xff]
        %s803 = scalar_lea.vmem %s172, 48
        %v804 = vld [vmem:[%s803] sm:$0xff]
        %v805 = vld [vmem:[%s803 + $0x8] sm:$0xff]
        %v807 = vsel %vm181, %v799, 0
        %v810 = vsel %vm181, %v800, 0
        %v813 = vsel %vm181, %v801, 0
        %v816 = vsel %vm181, %v802, 0
        %818 = vmatprep.subr.mxu0 0.0
        %819 = vmatpush1.msra.mxu0 %v804
        %820 = vmatprep.subr.mxu0 0.0
        %821 = vmatpush1.msra.mxu0 %v805
        %822 = vmatprep.subr.mxu0 0.0
        %823 = vmatpush1.msra.mxu0 0.0
        %824 = vmatprep.subr.mxu0 0.0
        %825 = vmatpush1.msra.mxu0 0.0
        %826 = vmatprep.subr.mxu0 0.0
        %827 = vmatpush1.msra.mxu0 0.0
        %828 = vmatprep.subr.mxu0 0.0
        %829 = vmatpush1.msra.mxu0 0.0
        %830 = vmatprep.subr.mxu0 0.0
        %831 = vmatpush1.msra.mxu0 0.0
        %832 = vmatprep.subr.mxu0 0.0
        %833 = vmatpush1.msra.mxu0 0.0
        %834 = vmatprep.subr.mxu0 0.0
        %835 = vmatpush1.msra.mxu0 0.0
        %836 = vmatprep.subr.mxu0 0.0
        %837 = vmatpush1.msra.mxu0 0.0
        %838 = vmatprep.subr.mxu0 0.0
        %839 = vmatpush1.msra.mxu0 0.0
        %840 = vmatprep.subr.mxu0 0.0
        %841 = vmatpush1.msra.mxu0 0.0
        %842 = vmatprep.subr.mxu0 0.0
        %843 = vmatpush1.msra.mxu0 0.0
        %844 = vmatprep.subr.mxu0 0.0
        %845 = vmatpush1.msra.mxu0 0.0
        %846 = vmatprep.subr.mxu0 0.0
        %847 = vmatpush1.msra.mxu0 0.0
        %848 = vmatprep.subr.mxu0 0.0
        %849 = vmatpush1.msra.mxu0 0.0
        %850 = vmatprep.subr.mxu0 0.0
        %851 = vmatpush1.msra.mxu0 0.0
        %852 = vmatprep.subr.mxu0 0.0
        %853 = vmatpush1.msra.mxu0 0.0
        %854 = vmatprep.subr.mxu0 0.0
        %855 = vmatpush1.msra.mxu0 0.0
        %856 = vmatprep.subr.mxu0 0.0
        %857 = vmatpush1.msra.mxu0 0.0
        %858 = vmatprep.subr.mxu0 0.0
        %859 = vmatpush1.msra.mxu0 0.0
        %860 = vmatprep.subr.mxu0 0.0
        %861 = vmatpush1.msra.mxu0 0.0
        %862 = vmatprep.subr.mxu0 0.0
        %863 = vmatpush1.msra.mxu0 0.0
        %864 = vmatprep.subr.mxu0 0.0
        %865 = vmatpush1.msra.mxu0 0.0
        %866 = vmatprep.subr.mxu0 0.0
        %867 = vmatpush1.msra.mxu0 0.0
        %868 = vmatprep.subr.mxu0 0.0
        %869 = vmatpush1.msra.mxu0 0.0
        %870 = vmatprep.subr.mxu0 0.0
        %871 = vmatpush1.msra.mxu0 0.0
        %872 = vmatprep.subr.mxu0 0.0
        %873 = vmatpush1.msra.mxu0 0.0
        %874 = vmatprep.subr.mxu0 0.0
        %875 = vmatpush1.msra.mxu0 0.0
        %876 = vmatprep.subr.mxu0 0.0
        %877 = vmatpush1.msra.mxu0 0.0
        %878 = vmatprep.subr.mxu0 0.0
        %879 = vmatpush1.msra.mxu0 0.0
        %880 = vmatprep.subr.mxu0 0.0
        %881 = vmatpush1.msra.mxu0 0.0
        %882 = vmatprep.mubr.f32.mxu0 0.0
        %883 = vmatmul.mubr.f32.gmra.mrb[0].mxu0 %v807
        %v884 = vpop.f32.mrb[0].mxu0
        %v885 = vadd.f32 0.0, %v884
        %v886 = vpop.f32.mrb[0].mxu0
        %887 = vmatprep.mubr.f32.mxu0 0.0
        %888 = vmatmul.mubr.f32.gmra.mrb[0].mxu0 %v810
        %v889 = vpop.f32.mrb[0].mxu0
        %v890 = vadd.f32 0.0, %v889
        %v891 = vpop.f32.mrb[0].mxu0
        %892 = vmatprep.mubr.f32.mxu0 0.0
        %893 = vmatmul.mubr.f32.gmra.mrb[0].mxu0 %v813
        %v894 = vpop.f32.mrb[0].mxu0
        %v895 = vadd.f32 0.0, %v894
        %v896 = vpop.f32.mrb[0].mxu0
        %897 = vmatprep.mubr.f32.mxu0 0.0
        %898 = vmatmul.mubr.f32.gmra.mrb[0].mxu0 %v816
        %v899 = vpop.f32.mrb[0].mxu0
        %v900 = vadd.f32 0.0, %v899
        %v901 = vpop.f32.mrb[0].mxu0
        %902 = vdwg.mxu0
        %v903 = vld [vmem:[%s2] sm:$0xff]
        %v904 = vld [vmem:[%s2 + $0x8] sm:$0xff]
        %v906 = vsel %vm181, %v885, 0
        %v909 = vsel %vm181, %v890, 0
        %v912 = vsel %vm181, %v895, 0
        %v915 = vsel %vm181, %v900, 0
        %917 = vmatprep.subr.mxu0 0.0
        %918 = vmatpush1.msra.mxu0 %v903
        %919 = vmatprep.subr.mxu0 0.0
        %920 = vmatpush1.msra.mxu0 %v904
        %921 = vmatprep.subr.mxu0 0.0
        %922 = vmatpush1.msra.mxu0 0.0
        %923 = vmatprep.subr.mxu0 0.0
        %924 = vmatpush1.msra.mxu0 0.0
        %925 = vmatprep.subr.mxu0 0.0
        %926 = vmatpush1.msra.mxu0 0.0
        %927 = vmatprep.subr.mxu0 0.0
        %928 = vmatpush1.msra.mxu0 0.0
        %929 = vmatprep.subr.mxu0 0.0
        %930 = vmatpush1.msra.mxu0 0.0
        %931 = vmatprep.subr.mxu0 0.0
        %932 = vmatpush1.msra.mxu0 0.0
        %933 = vmatprep.subr.mxu0 0.0
        %934 = vmatpush1.msra.mxu0 0.0
        %935 = vmatprep.subr.mxu0 0.0
        %936 = vmatpush1.msra.mxu0 0.0
        %937 = vmatprep.subr.mxu0 0.0
        %938 = vmatpush1.msra.mxu0 0.0
        %939 = vmatprep.subr.mxu0 0.0
        %940 = vmatpush1.msra.mxu0 0.0
        %941 = vmatprep.subr.mxu0 0.0
        %942 = vmatpush1.msra.mxu0 0.0
        %943 = vmatprep.subr.mxu0 0.0
        %944 = vmatpush1.msra.mxu0 0.0
        %945 = vmatprep.subr.mxu0 0.0
        %946 = vmatpush1.msra.mxu0 0.0
        %947 = vmatprep.subr.mxu0 0.0
        %948 = vmatpush1.msra.mxu0 0.0
        %949 = vmatprep.subr.mxu0 0.0
        %950 = vmatpush1.msra.mxu0 0.0
        %951 = vmatprep.subr.mxu0 0.0
        %952 = vmatpush1.msra.mxu0 0.0
        %953 = vmatprep.subr.mxu0 0.0
        %954 = vmatpush1.msra.mxu0 0.0
        %955 = vmatprep.subr.mxu0 0.0
        %956 = vmatpush1.msra.mxu0 0.0
        %957 = vmatprep.subr.mxu0 0.0
        %958 = vmatpush1.msra.mxu0 0.0
        %959 = vmatprep.subr.mxu0 0.0
        %960 = vmatpush1.msra.mxu0 0.0
        %961 = vmatprep.subr.mxu0 0.0
        %962 = vmatpush1.msra.mxu0 0.0
        %963 = vmatprep.subr.mxu0 0.0
        %964 = vmatpush1.msra.mxu0 0.0
        %965 = vmatprep.subr.mxu0 0.0
        %966 = vmatpush1.msra.mxu0 0.0
        %967 = vmatprep.subr.mxu0 0.0
        %968 = vmatpush1.msra.mxu0 0.0
        %969 = vmatprep.subr.mxu0 0.0
        %970 = vmatpush1.msra.mxu0 0.0
        %971 = vmatprep.subr.mxu0 0.0
        %972 = vmatpush1.msra.mxu0 0.0
        %973 = vmatprep.subr.mxu0 0.0
        %974 = vmatpush1.msra.mxu0 0.0
        %975 = vmatprep.subr.mxu0 0.0
        %976 = vmatpush1.msra.mxu0 0.0
        %977 = vmatprep.subr.mxu0 0.0
        %978 = vmatpush1.msra.mxu0 0.0
        %979 = vmatprep.subr.mxu0 0.0
        %980 = vmatpush1.msra.mxu0 0.0
        %981 = vmatprep.mubr.f32.mxu0 0.0
        %982 = vmatmul.mubr.f32.gmra.mrb[0].mxu0 %v906
        %v983 = vpop.f32.mrb[0].mxu0
        %v984 = vadd.f32 0.0, %v983
        %v985 = vpop.f32.mrb[0].mxu0
        %986 = vmatprep.mubr.f32.mxu0 0.0
        %987 = vmatmul.mubr.f32.gmra.mrb[0].mxu0 %v909
        %v988 = vpop.f32.mrb[0].mxu0
        %v989 = vadd.f32 0.0, %v988
        %v990 = vpop.f32.mrb[0].mxu0
        %991 = vmatprep.mubr.f32.mxu0 0.0
        %992 = vmatmul.mubr.f32.gmra.mrb[0].mxu0 %v912
        %v993 = vpop.f32.mrb[0].mxu0
        %v994 = vadd.f32 0.0, %v993
        %v995 = vpop.f32.mrb[0].mxu0
        %996 = vmatprep.mubr.f32.mxu0 0.0
        %997 = vmatmul.mubr.f32.gmra.mrb[0].mxu0 %v915
        %v998 = vpop.f32.mrb[0].mxu0
        %v999 = vadd.f32 0.0, %v998
        %v1000 = vpop.f32.mrb[0].mxu0
        %1001 = vdwg.mxu0
        %s1002 = scalar_lea.vmem %s166, 96 [#allocation2]
        %1003 = vst.msk [vmem:[%s1002] sm:$0xff] %vm378, %v984
        %1004 = vst.msk [vmem:[%s1002 + $0x8] sm:$0xff] %vm378, %v989
        %1005 = vst.msk [vmem:[%s1002 + $0x10] sm:$0xff] %vm378, %v994
        %1006 = vst.msk [vmem:[%s1002 + $0x18] sm:$0xff] %vm378, %v999
        %v1007 = vld [vmem:[%s1] sm:$0xff]
        %v1008 = vld [vmem:[%s1 + $0x8] sm:$0xff]
        %v1009 = vld [vmem:[%s1 + $0x10] sm:$0xff]
        %v1010 = vld [vmem:[%s1 + $0x18] sm:$0xff]
        %s1011 = scalar_lea.vmem %s172, 64
        %v1012 = vld [vmem:[%s1011] sm:$0xff]
        %v1013 = vld [vmem:[%s1011 + $0x8] sm:$0xff]
        %v1015 = vsel %vm181, %v1007, 0
        %v1018 = vsel %vm181, %v1008, 0
        %v1021 = vsel %vm181, %v1009, 0
        %v1024 = vsel %vm181, %v1010, 0
        %1026 = vmatprep.subr.mxu0 0.0
        %1027 = vmatpush1.msra.mxu0 %v1012
        %1028 = vmatprep.subr.mxu0 0.0
        %1029 = vmatpush1.msra.mxu0 %v1013
        %1030 = vmatprep.subr.mxu0 0.0
        %1031 = vmatpush1.msra.mxu0 0.0
        %1032 = vmatprep.subr.mxu0 0.0
        %1033 = vmatpush1.msra.mxu0 0.0
        %1034 = vmatprep.subr.mxu0 0.0
        %1035 = vmatpush1.msra.mxu0 0.0
        %1036 = vmatprep.subr.mxu0 0.0
        %1037 = vmatpush1.msra.mxu0 0.0
        %1038 = vmatprep.subr.mxu0 0.0
        %1039 = vmatpush1.msra.mxu0 0.0
        %1040 = vmatprep.subr.mxu0 0.0
        %1041 = vmatpush1.msra.mxu0 0.0
        %1042 = vmatprep.subr.mxu0 0.0
        %1043 = vmatpush1.msra.mxu0 0.0
        %1044 = vmatprep.subr.mxu0 0.0
        %1045 = vmatpush1.msra.mxu0 0.0
        %1046 = vmatprep.subr.mxu0 0.0
        %1047 = vmatpush1.msra.mxu0 0.0
        %1048 = vmatprep.subr.mxu0 0.0
        %1049 = vmatpush1.msra.mxu0 0.0
        %1050 = vmatprep.subr.mxu0 0.0
        %1051 = vmatpush1.msra.mxu0 0.0
        %1052 = vmatprep.subr.mxu0 0.0
        %1053 = vmatpush1.msra.mxu0 0.0
        %1054 = vmatprep.subr.mxu0 0.0
        %1055 = vmatpush1.msra.mxu0 0.0
        %1056 = vmatprep.subr.mxu0 0.0
        %1057 = vmatpush1.msra.mxu0 0.0
        %1058 = vmatprep.subr.mxu0 0.0
        %1059 = vmatpush1.msra.mxu0 0.0
        %1060 = vmatprep.subr.mxu0 0.0
        %1061 = vmatpush1.msra.mxu0 0.0
        %1062 = vmatprep.subr.mxu0 0.0
        %1063 = vmatpush1.msra.mxu0 0.0
        %1064 = vmatprep.subr.mxu0 0.0
        %1065 = vmatpush1.msra.mxu0 0.0
        %1066 = vmatprep.subr.mxu0 0.0
        %1067 = vmatpush1.msra.mxu0 0.0
        %1068 = vmatprep.subr.mxu0 0.0
        %1069 = vmatpush1.msra.mxu0 0.0
        %1070 = vmatprep.subr.mxu0 0.0
        %1071 = vmatpush1.msra.mxu0 0.0
        %1072 = vmatprep.subr.mxu0 0.0
        %1073 = vmatpush1.msra.mxu0 0.0
        %1074 = vmatprep.subr.mxu0 0.0
        %1075 = vmatpush1.msra.mxu0 0.0
        %1076 = vmatprep.subr.mxu0 0.0
        %1077 = vmatpush1.msra.mxu0 0.0
        %1078 = vmatprep.subr.mxu0 0.0
        %1079 = vmatpush1.msra.mxu0 0.0
        %1080 = vmatprep.subr.mxu0 0.0
        %1081 = vmatpush1.msra.mxu0 0.0
        %1082 = vmatprep.subr.mxu0 0.0
        %1083 = vmatpush1.msra.mxu0 0.0
        %1084 = vmatprep.subr.mxu0 0.0
        %1085 = vmatpush1.msra.mxu0 0.0
        %1086 = vmatprep.subr.mxu0 0.0
        %1087 = vmatpush1.msra.mxu0 0.0
        %1088 = vmatprep.subr.mxu0 0.0
        %1089 = vmatpush1.msra.mxu0 0.0
        %1090 = vmatprep.mubr.f32.mxu0 0.0
        %1091 = vmatmul.mubr.f32.gmra.mrb[0].mxu0 %v1015
        %v1092 = vpop.f32.mrb[0].mxu0
        %v1093 = vadd.f32 0.0, %v1092
        %v1094 = vpop.f32.mrb[0].mxu0
        %1095 = vmatprep.mubr.f32.mxu0 0.0
        %1096 = vmatmul.mubr.f32.gmra.mrb[0].mxu0 %v1018
        %v1097 = vpop.f32.mrb[0].mxu0
        %v1098 = vadd.f32 0.0, %v1097
        %v1099 = vpop.f32.mrb[0].mxu0
        %1100 = vmatprep.mubr.f32.mxu0 0.0
        %1101 = vmatmul.mubr.f32.gmra.mrb[0].mxu0 %v1021
        %v1102 = vpop.f32.mrb[0].mxu0
        %v1103 = vadd.f32 0.0, %v1102
        %v1104 = vpop.f32.mrb[0].mxu0
        %1105 = vmatprep.mubr.f32.mxu0 0.0
        %1106 = vmatmul.mubr.f32.gmra.mrb[0].mxu0 %v1024
        %v1107 = vpop.f32.mrb[0].mxu0
        %v1108 = vadd.f32 0.0, %v1107
        %v1109 = vpop.f32.mrb[0].mxu0
        %1110 = vdwg.mxu0
        %v1111 = vld [vmem:[%s2] sm:$0xff]
        %v1112 = vld [vmem:[%s2 + $0x8] sm:$0xff]
        %v1114 = vsel %vm181, %v1093, 0
        %v1117 = vsel %vm181, %v1098, 0
        %v1120 = vsel %vm181, %v1103, 0
        %v1123 = vsel %vm181, %v1108, 0
        %1125 = vmatprep.subr.mxu0 0.0
        %1126 = vmatpush1.msra.mxu0 %v1111
        %1127 = vmatprep.subr.mxu0 0.0
        %1128 = vmatpush1.msra.mxu0 %v1112
        %1129 = vmatprep.subr.mxu0 0.0
        %1130 = vmatpush1.msra.mxu0 0.0
        %1131 = vmatprep.subr.mxu0 0.0
        %1132 = vmatpush1.msra.mxu0 0.0
        %1133 = vmatprep.subr.mxu0 0.0
        %1134 = vmatpush1.msra.mxu0 0.0
        %1135 = vmatprep.subr.mxu0 0.0
        %1136 = vmatpush1.msra.mxu0 0.0
        %1137 = vmatprep.subr.mxu0 0.0
        %1138 = vmatpush1.msra.mxu0 0.0
        %1139 = vmatprep.subr.mxu0 0.0
        %1140 = vmatpush1.msra.mxu0 0.0
        %1141 = vmatprep.subr.mxu0 0.0
        %1142 = vmatpush1.msra.mxu0 0.0
        %1143 = vmatprep.subr.mxu0 0.0
        %1144 = vmatpush1.msra.mxu0 0.0
        %1145 = vmatprep.subr.mxu0 0.0
        %1146 = vmatpush1.msra.mxu0 0.0
        %1147 = vmatprep.subr.mxu0 0.0
        %1148 = vmatpush1.msra.mxu0 0.0
        %1149 = vmatprep.subr.mxu0 0.0
        %1150 = vmatpush1.msra.mxu0 0.0
        %1151 = vmatprep.subr.mxu0 0.0
        %1152 = vmatpush1.msra.mxu0 0.0
        %1153 = vmatprep.subr.mxu0 0.0
        %1154 = vmatpush1.msra.mxu0 0.0
        %1155 = vmatprep.subr.mxu0 0.0
        %1156 = vmatpush1.msra.mxu0 0.0
        %1157 = vmatprep.subr.mxu0 0.0
        %1158 = vmatpush1.msra.mxu0 0.0
        %1159 = vmatprep.subr.mxu0 0.0
        %1160 = vmatpush1.msra.mxu0 0.0
        %1161 = vmatprep.subr.mxu0 0.0
        %1162 = vmatpush1.msra.mxu0 0.0
        %1163 = vmatprep.subr.mxu0 0.0
        %1164 = vmatpush1.msra.mxu0 0.0
        %1165 = vmatprep.subr.mxu0 0.0
        %1166 = vmatpush1.msra.mxu0 0.0
        %1167 = vmatprep.subr.mxu0 0.0
        %1168 = vmatpush1.msra.mxu0 0.0
        %1169 = vmatprep.subr.mxu0 0.0
        %1170 = vmatpush1.msra.mxu0 0.0
        %1171 = vmatprep.subr.mxu0 0.0
        %1172 = vmatpush1.msra.mxu0 0.0
        %1173 = vmatprep.subr.mxu0 0.0
        %1174 = vmatpush1.msra.mxu0 0.0
        %1175 = vmatprep.subr.mxu0 0.0
        %1176 = vmatpush1.msra.mxu0 0.0
        %1177 = vmatprep.subr.mxu0 0.0
        %1178 = vmatpush1.msra.mxu0 0.0
        %1179 = vmatprep.subr.mxu0 0.0
        %1180 = vmatpush1.msra.mxu0 0.0
        %1181 = vmatprep.subr.mxu0 0.0
        %1182 = vmatpush1.msra.mxu0 0.0
        %1183 = vmatprep.subr.mxu0 0.0
        %1184 = vmatpush1.msra.mxu0 0.0
        %1185 = vmatprep.subr.mxu0 0.0
        %1186 = vmatpush1.msra.mxu0 0.0
        %1187 = vmatprep.subr.mxu0 0.0
        %1188 = vmatpush1.msra.mxu0 0.0
        %1189 = vmatprep.mubr.f32.mxu0 0.0
        %1190 = vmatmul.mubr.f32.gmra.mrb[0].mxu0 %v1114
        %v1191 = vpop.f32.mrb[0].mxu0
        %v1192 = vadd.f32 0.0, %v1191
        %v1193 = vpop.f32.mrb[0].mxu0
        %1194 = vmatprep.mubr.f32.mxu0 0.0
        %1195 = vmatmul.mubr.f32.gmra.mrb[0].mxu0 %v1117
        %v1196 = vpop.f32.mrb[0].mxu0
        %v1197 = vadd.f32 0.0, %v1196
        %v1198 = vpop.f32.mrb[0].mxu0
        %1199 = vmatprep.mubr.f32.mxu0 0.0
        %1200 = vmatmul.mubr.f32.gmra.mrb[0].mxu0 %v1120
        %v1201 = vpop.f32.mrb[0].mxu0
        %v1202 = vadd.f32 0.0, %v1201
        %v1203 = vpop.f32.mrb[0].mxu0
        %1204 = vmatprep.mubr.f32.mxu0 0.0
        %1205 = vmatmul.mubr.f32.gmra.mrb[0].mxu0 %v1123
        %v1206 = vpop.f32.mrb[0].mxu0
        %v1207 = vadd.f32 0.0, %v1206
        %v1208 = vpop.f32.mrb[0].mxu0
        %1209 = vdwg.mxu0
        %s1210 = scalar_lea.vmem %s166, 128 [#allocation2]
        %1211 = vst.msk [vmem:[%s1210] sm:$0xff] %vm378, %v1192
        %1212 = vst.msk [vmem:[%s1210 + $0x8] sm:$0xff] %vm378, %v1197
        %1213 = vst.msk [vmem:[%s1210 + $0x10] sm:$0xff] %vm378, %v1202
        %1214 = vst.msk [vmem:[%s1210 + $0x18] sm:$0xff] %vm378, %v1207
        %s1215 = sand.u32 %s93, 1
        %s1216 = scalar_lea.sflag [#allocation3], %s1215
        %s1217 = sand.u32 %s93, 1
        %s1218 = smul.addr %s1217, 160
        %s1219 = scalar_lea.vmem [#allocation2], %s1218
        // Predicated region
        $region33: #{segmentation_vit_forward.15} parent=31 // pred_check
          %p1220 = pneg %p103
        $region34: #{segmentation_vit_forward.15} parent=31 // pred_check_branch
          %1222 = sbr.rel (%p1220) target = $region36
        $region35: #{segmentation_vit_forward.15} parent=31 // pred_region
          %s1223 = smul.u32 5, %s17
          %s1225 = ssub.s32 2560, 2560
          %1226 = vsyncadd %s1216, %s1225
          %s1227 = smul.addr %s1223, 4
          %s1228 = smul.addr %s1227, 128
          %s1229 = scalar_lea.hbm %s3, %s1228
          %s1230 = sshll.u32 %s1219, 4
          %s1231 = int_to_ptr.vmem [resolvable:$true] %s1230
          %1236 = dma.vmem_to_hbm [thread:$0]  %s1231, 2560, %s1229, %s1216, 128, 128, 8
        $region36: #{segmentation_vit_forward.15} parent=31 // pred_fallthru
          _
      $region32: #{segmentation_vit_forward.15} parent=5 // pred_fallthru
        _
      %p1237 = scmp.le.s32.totalorder 2, %s12
      // Predicated region
      $region37: #{segmentation_vit_forward.15} parent=5 // pred_check
        %p1238 = pneg %p1237
      $region38: #{segmentation_vit_forward.15} parent=5 // pred_check_branch
        %1240 = sbr.rel (%p1238) target = $region40
      $region39: #{segmentation_vit_forward.15} parent=5 // pred_region
        %s1241 = ssub.s32 %s12, 2
        // Predicated region
        $region41: #{segmentation_vit_forward.15} parent=39 // pred_check
          %p1242 = pneg %p109
        $region42: #{segmentation_vit_forward.15} parent=39 // pred_check_branch
          %1244 = sbr.rel (%p1242) target = $region44
        $region43: #{segmentation_vit_forward.15} parent=39 // pred_region
          %s1245 = sand.u32 %s94, 1
          %s1246 = scalar_lea.sflag [#allocation3], %s1245
          %s1247 = sand.u32 %s94, 1
          %s1248 = smul.addr %s1247, 160
          %s1249 = scalar_lea.vmem [#allocation2], %s1248
          %1250 = dma.done %s1246, 2560
        $region44: #{segmentation_vit_forward.15} parent=39 // pred_fallthru
          _
      $region40: #{segmentation_vit_forward.15} parent=5 // pred_fallthru
        _
    $region6: #{segmentation_vit_forward.15} parent=1 // loop_footer
      %s16 = sadd.s32 1, %s12
    $region7: #{segmentation_vit_forward.15} parent=1 // loop_footer_branch
      %11 = sbr.rel target = $region3
    $region8: #{segmentation_vit_forward.15} parent=1 // loop_exit
      _
    %1251 = vsyncpa [#allocation3], 1
    %s1252 = scalar_lea.sflag [#allocation3], 1
    %1253 = vsyncpa %s1252, 1

</llo_original>
